<compile_context>
chip_gen: v7x
topology: tpu7x:2x2x1
jax: 0.10.0
libtpu: 0.0.40
codegen_flags: <defaults>
</compile_context>

<pallas_src>
import functools
import math

import jax
import jax.numpy as jnp
from jax.experimental import pallas as pl
from jax.experimental.pallas import tpu as pltpu

EMBED_DIM = 128
HIDDEN_DIM = 128
NUM_CLASSES = 3
NUM_LAYERS = 2


def _pick_time_block(T):
    """Largest time-chunk that divides T (keeps semantics exact without masking)."""
    for tb in (32, 16, 8, 4, 2, 1):
        if T % tb == 0:
            return tb
    return 1


# ----------------------------------------------------------------------------
# LSTM cell step: gates_x already holds x_t @ Wih + (b_ih + b_hh).
# ----------------------------------------------------------------------------
def _lstm_cell(gates_x, whh, h, c):
    H = h.shape[-1]
    gates = gates_x + jnp.dot(h, whh, preferred_element_type=jnp.float32)   # (B, 4H)
    i = jax.nn.sigmoid(gates[:, 0:H])
    f = jax.nn.sigmoid(gates[:, H:2 * H])
    g = jnp.tanh(gates[:, 2 * H:3 * H])
    o = jax.nn.sigmoid(gates[:, 3 * H:4 * H])
    c_new = f * c + i * g
    h_new = o * jnp.tanh(c_new)
    return h_new, c_new


def _project_chunk(x_ref, wih_ref, b_ref, xp_scr):
    """One MXU matmul for the whole chunk: (TB*B, in) @ (in, 4H) + bias -> VMEM scratch."""
    xp = jnp.dot(x_ref[...], wih_ref[0], preferred_element_type=jnp.float32)
    xp_scr[...] = xp + b_ref[0]            # b_ref[0]: (1, 4H) broadcasts over rows


# ----------------------------------------------------------------------------
# Fused bidirectional LSTM layer kernels.  Grid = (direction, time-chunk); the
# direction axis is "parallel" (dual-TC on v7x), time is "arbitrary".  Hidden /
# cell state live in VMEM scratch persisting across the chunk sweep of each
# direction and are re-initialized at chunk 0.  Inside a chunk, the bwd
# direction iterates rows TB-1 .. 0 (in-chunk time reversal).
# ----------------------------------------------------------------------------
def lstm_seq_kernel(x_ref, wih_ref, whh_ref, b_ref, out_ref, xp_scr, h_scr, c_scr):
    d = pl.program_id(0)
    ci = pl.program_id(1)
    B, _ = h_scr.shape
    tb = xp_scr.shape[0] // B

    @pl.when(ci == 0)
    def _():
        h_scr[...] = jnp.zeros_like(h_scr)
        c_scr[...] = jnp.zeros_like(c_scr)

    _project_chunk(x_ref, wih_ref, b_ref, xp_scr)

    @pl.loop(0, tb, unroll=True)
    def _(j):
        je = d * (tb - 1 - j) + (1 - d) * j           # in-chunk time reversal for bwd
        row = pl.multiple_of(je * B, B)
        h, c_new = _lstm_cell(xp_scr[pl.ds(row, B), :], whh_ref[0],
                              h_scr[...], c_scr[...])
        h_scr[...] = h
        c_scr[...] = c_new
        out_ref[pl.ds(row, B), :] = h.astype(out_ref.dtype)   # lands in [fwd|bwd] half


def lstm_pool_kernel(x_ref, wih_ref, whh_ref, b_ref, sum_ref, xp_scr, h_scr, c_scr):
    d = pl.program_id(0)
    ci = pl.program_id(1)
    B, _ = h_scr.shape
    tb = xp_scr.shape[0] // B

    @pl.when(ci == 0)
    def _():
        h_scr[...] = jnp.zeros_like(h_scr)
        c_scr[...] = jnp.zeros_like(c_scr)
        sum_ref[...] = jnp.zeros_like(sum_ref)

    _project_chunk(x_ref, wih_ref, b_ref, xp_scr)

    @pl.loop(0, tb, unroll=True)
    def _(j):
        je = d * (tb - 1 - j) + (1 - d) * j
        row = pl.multiple_of(je * B, B)
        h, c_new = _lstm_cell(xp_scr[pl.ds(row, B), :], whh_ref[0],
                              h_scr[...], c_scr[...])
        h_scr[...] = h
        c_scr[...] = c_new
        sum_ref[...] += h                              # running time-sum (mean numerator)


def _lstm_call(kernel, x2d, wih, whh, bias, out_shape, out_spec_fn, tb, B):
    """x2d: (T*B, in_dim) time-major-flattened activations; wih: (2, in_dim, 4H);
    whh: (2, H, 4H); bias: (2, 4H) combined b_ih + b_hh per direction."""
    rows, IN = x2d.shape
    H, G = whh.shape[1], whh.shape[2]
    tb_rows = tb * B
    nc = rows // tb_rows

    def c_eff(d, c):                                   # chunk-level time reversal for bwd
        return d * (nc - 1 - c) + (1 - d) * c

    return pl.pallas_call(
        kernel,
        out_shape=out_shape,
        grid_spec=pltpu.PrefetchScalarGridSpec(
            num_scalar_prefetch=0,
            grid=(2, nc),
            in_specs=[
                pl.BlockSpec((tb_rows, IN), lambda d, c: (c_eff(d, c), 0)),
                pl.BlockSpec((1, IN, G), lambda d, c: (d, 0, 0)),    # Wih: VMEM-resident
                pl.BlockSpec((1, H, G), lambda d, c: (d, 0, 0)),     # Whh: VMEM-resident
                pl.BlockSpec((1, 1, G), lambda d, c: (d, 0, 0)),     # bias: VMEM-resident
            ],
            out_specs=out_spec_fn(c_eff),
            scratch_shapes=[
                pltpu.VMEM((tb_rows, G), jnp.float32),   # chunk gate-input projection
                pltpu.VMEM((B, H), jnp.float32),         # h state
                pltpu.VMEM((B, H), jnp.float32),         # c state
            ],
        ),
        compiler_params=pltpu.CompilerParams(
            dimension_semantics=("parallel", "arbitrary"),
            vmem_limit_bytes=32 * 1024 * 1024,
        ),
    )(x2d, wih, whh, bias.reshape(2, 1, G))


def lstm_layer_seq(x2d, wih, whh, bias, tb, B):
    """Full-sequence output (T*B, 2H) bf16 with fwd in [:, :H], bwd in [:, H:]."""
    H = whh.shape[1]
    rows = x2d.shape[0]

    def out_spec(c_eff):
        return pl.BlockSpec((tb * B, H), lambda d, c: (c_eff(d, c), d))

    return _lstm_call(lstm_seq_kernel, x2d, wih, whh, bias,
                      jax.ShapeDtypeStruct((rows, 2 * H), jnp.bfloat16), out_spec, tb, B)


def lstm_layer_pool(x2d, wih, whh, bias, tb, B):
    """Only the time-sum of h per direction: (B, 2H) f32."""
    H = whh.shape[1]

    def out_spec(c_eff):
        return pl.BlockSpec((B, H), lambda d, c: (0, d))   # revisited across time chunks

    return _lstm_call(lstm_pool_kernel, x2d, wih, whh, bias,
                      jax.ShapeDtypeStruct((B, 2 * H), jnp.float32), out_spec, tb, B)


# ----------------------------------------------------------------------------
# Head kernel: mean-pool finalize (divide running sum by T) + fc1/relu + fc2/relu + fc3.
# ----------------------------------------------------------------------------
def head_kernel(sum_ref, w1_ref, b1_ref, w2_ref, b2_ref, w3_ref, b3_ref, out_ref, *, inv_t):
    pooled = sum_ref[...] * inv_t                           # (B, 2H) mean over time
    h1 = jnp.maximum(
        jnp.dot(pooled, w1_ref[...], preferred_element_type=jnp.float32) + b1_ref[...], 0.0)
    # dropout(p=0.5) is identity at inference
    h2 = jnp.maximum(
        jnp.dot(h1, w2_ref[...], preferred_element_type=jnp.float32) + b2_ref[...], 0.0)
    logits = jnp.dot(h2, w3_ref[...], preferred_element_type=jnp.float32) + b3_ref[...]
    out_ref[...] = logits.astype(out_ref.dtype)


def head(h_sum, seq_len, w1, b1, w2, b2, w3, b3):
    B = h_sum.shape[0]
    vmem = pl.BlockSpec(memory_space=pltpu.MemorySpace.VMEM)
    return pl.pallas_call(
        functools.partial(head_kernel, inv_t=1.0 / seq_len),
        out_shape=jax.ShapeDtypeStruct((B, NUM_CLASSES), jnp.float32),
        in_specs=[vmem] * 7,
        out_specs=vmem,
    )(h_sum, w1, b1.reshape(1, -1), w2, b2.reshape(1, -1), w3, b3.reshape(1, -1))


# ----------------------------------------------------------------------------
# Parameters (deterministic, PyTorch-style init), stored transposed and stacked
# per direction for x @ W layouts.
# ----------------------------------------------------------------------------
def init_params(key, vocab_size):
    keys = iter(jax.random.split(key, 32))
    params = {}

    emb = jax.random.normal(next(keys), (vocab_size, EMBED_DIM), jnp.float32)
    emb = emb.at[0].set(0.0)                                # padding_idx=0
    params['embedding'] = emb

    k = 1.0 / math.sqrt(HIDDEN_DIM)
    lstm = []
    for layer in range(NUM_LAYERS):
        in_dim = EMBED_DIM if layer == 0 else 2 * HIDDEN_DIM
        wih_d, whh_d, b_d = [], [], []
        for _ in range(2):                                  # fwd, bwd
            wih = jax.random.uniform(next(keys), (4 * HIDDEN_DIM, in_dim), jnp.float32, -k, k)
            whh = jax.random.uniform(next(keys), (4 * HIDDEN_DIM, HIDDEN_DIM), jnp.float32, -k, k)
            bih = jax.random.uniform(next(keys), (4 * HIDDEN_DIM,), jnp.float32, -k, k)
            bhh = jax.random.uniform(next(keys), (4 * HIDDEN_DIM,), jnp.float32, -k, k)
            wih_d.append(wih.T)                             # (in_dim, 4H)
            whh_d.append(whh.T)                             # (H, 4H)
            b_d.append(bih + bhh)                           # (4H,)
        lstm.append((jnp.stack(wih_d), jnp.stack(whh_d), jnp.stack(b_d)))
    params['lstm'] = lstm

    def linear(key, fan_in, fan_out):
        k1, k2 = jax.random.split(key)
        kk = 1.0 / math.sqrt(fan_in)
        w = jax.random.uniform(k1, (fan_out, fan_in), jnp.float32, -kk, kk)
        b = jax.random.uniform(k2, (fan_out,), jnp.float32, -kk, kk)
        return w.T, b

    params['fc1'] = linear(next(keys), 2 * HIDDEN_DIM, 64)
    params['fc2'] = linear(next(keys), 64, 16)
    params['fc3'] = linear(next(keys), 16, NUM_CLASSES)
    return params


# ----------------------------------------------------------------------------
# Forward pass (Pallas) and pure-JAX reference.
# ----------------------------------------------------------------------------
@jax.jit
def forward(params, token_ids):
    B, T = token_ids.shape
    B_pad = ((B + 7) // 8) * 8                               # sublane-pad the batch
    ids = token_ids if B_pad == B else jnp.pad(token_ids, ((0, B_pad - B), (0, 0)))
    tb = _pick_time_block(T)

    # Embedding lookup: tiny gather kept in JAX glue, emitted time-major and flattened
    # to (T*B_pad, E) so every LSTM chunk block is a dense 2-D slab.
    x2d = jnp.take(params['embedding'], ids.T, axis=0).reshape(T * B_pad, EMBED_DIM)

    # Layer 0: full-sequence bidirectional LSTM (bf16 activations feed layer 1).
    wih0, whh0, b0 = params['lstm'][0]
    seq2d = lstm_layer_seq(x2d, wih0, whh0, b0, tb, B_pad)   # (T*B_pad, 2H) bf16

    # Layer 1 (last): only the running time-sum of h is materialized.
    wih1, whh1, b1 = params['lstm'][1]
    h_sum = lstm_layer_pool(seq2d, wih1, whh1, b1, tb, B_pad)  # (B_pad, 2H) f32

    w1, bb1 = params['fc1']; w2, bb2 = params['fc2']; w3, bb3 = params['fc3']
    logits = head(h_sum, T, w1, bb1, w2, bb2, w3, bb3)       # (B_pad, C)
    return logits[:B]


def _lstm_dir_ref(x_tbd, wih_t, whh_t, bias):
    T, B, _ = x_tbd.shape
    H = whh_t.shape[0]

    def step(carry, x_t):
        h, c = carry
        gates = x_t @ wih_t + h @ whh_t + bias
        i, f, g, o = jnp.split(gates, 4, axis=-1)
        c = jax.nn.sigmoid(f) * c + jax.nn.sigmoid(i) * jnp.tanh(g)
        h = jax.nn.sigmoid(o) * jnp.tanh(c)
        return (h, c), h

    init = (jnp.zeros((B, H), jnp.float32), jnp.zeros((B, H), jnp.float32))
    _, hs = jax.lax.scan(step, init, x_tbd)
    return hs


def forward_ref(params, token_ids):
    x = jnp.take(params['embedding'], token_ids.T, axis=0)
    for layer in range(NUM_LAYERS):
        wih, whh, bias = params['lstm'][layer]
        fwd = _lstm_dir_ref(x, wih[0], whh[0], bias[0])
        bwd = _lstm_dir_ref(x[::-1], wih[1], whh[1], bias[1])[::-1]
        x = jnp.concatenate([fwd, bwd], axis=-1)
    pooled = jnp.mean(x, axis=0)
    w1, b1 = params['fc1']; w2, b2 = params['fc2']; w3, b3 = params['fc3']
    h1 = jax.nn.relu(pooled @ w1 + b1)
    h2 = jax.nn.relu(h1 @ w2 + b2)
    return h2 @ w3 + b3


if __name__ == "__main__":
    key = jax.random.PRNGKey(0)
    k_param, k_tok = jax.random.split(key)

    vocab_size = 50
    batch, seq = 2, 8
    params = init_params(k_param, vocab_size)
    token_ids = jax.random.randint(k_tok, (batch, seq), 0, vocab_size, dtype=jnp.int32)

    logits = jax.block_until_ready(forward(params, token_ids))
    ref = jax.block_until_ready(forward_ref(params, token_ids))

    assert logits.shape == (batch, NUM_CLASSES)
    # Slightly looser tolerance than pure-f32 because the inter-layer sequence buffer
    # is stored in bfloat16 (gate math / state / accumulation remain f32).
    assert jnp.allclose(logits, ref, atol=2e-2, rtol=2e-2), (logits, ref)

    print("KERNEL_OK")
</pallas_src>

<mosaic_0001>
module attributes {stable_mosaic.version = 11 : i64} {
  func.func @head_kernel(%arg0: memref<8x256xf32, #tpu.memory_space<vmem>>, %arg1: memref<256x64xf32, #tpu.memory_space<vmem>>, %arg2: memref<1x64xf32, #tpu.memory_space<vmem>>, %arg3: memref<64x16xf32, #tpu.memory_space<vmem>>, %arg4: memref<1x16xf32, #tpu.memory_space<vmem>>, %arg5: memref<16x3xf32, #tpu.memory_space<vmem>>, %arg6: memref<1x3xf32, #tpu.memory_space<vmem>>, %arg7: memref<8x3xf32, #tpu.memory_space<vmem>>) attributes {dimension_semantics = [], scalar_prefetch = 0 : i64, scratch_operands = 0 : i64, tpu.core_type = #tpu.core_type<tc>} {
    %c0 = arith.constant 0 : index
    %c0_0 = arith.constant 0 : index
    %0 = vector.load %arg0[%c0, %c0_0] : memref<8x256xf32, #tpu.memory_space<vmem>>, vector<8x256xf32>
    %cst = arith.constant 1.250000e-01 : f32
    %1 = vector.broadcast %cst : f32 to vector<8x256xf32>
    %2 = arith.mulf %0, %1 : vector<8x256xf32>
    %c0_1 = arith.constant 0 : index
    %c0_2 = arith.constant 0 : index
    %3 = vector.load %arg1[%c0_1, %c0_2] : memref<256x64xf32, #tpu.memory_space<vmem>>, vector<256x64xf32>
    %cst_3 = arith.constant dense<0.000000e+00> : vector<8x64xf32>
    %4 = tpu.matmul %2, %3, %cst_3 {dimension_numbers = #tpu.dot_dimension_numbers<[1], [0], [0], [1], [0, 0, 1, 1], [], []>} : vector<8x256xf32>, vector<256x64xf32>, vector<8x64xf32> -> vector<8x64xf32>
    %c0_4 = arith.constant 0 : index
    %c0_5 = arith.constant 0 : index
    %5 = vector.load %arg2[%c0_4, %c0_5] : memref<1x64xf32, #tpu.memory_space<vmem>>, vector<1x64xf32>
    %6 = vector.broadcast %5 : vector<1x64xf32> to vector<8x64xf32>
    %7 = arith.addf %4, %6 : vector<8x64xf32>
    %cst_6 = arith.constant 0.000000e+00 : f32
    %8 = vector.broadcast %cst_6 : f32 to vector<8x64xf32>
    %9 = arith.maximumf %7, %8 : vector<8x64xf32>
    %c0_7 = arith.constant 0 : index
    %c0_8 = arith.constant 0 : index
    %10 = vector.load %arg3[%c0_7, %c0_8] : memref<64x16xf32, #tpu.memory_space<vmem>>, vector<64x16xf32>
    %cst_9 = arith.constant dense<0.000000e+00> : vector<8x16xf32>
    %11 = tpu.matmul %9, %10, %cst_9 {dimension_numbers = #tpu.dot_dimension_numbers<[1], [0], [0], [1], [0, 0, 1, 1], [], []>} : vector<8x64xf32>, vector<64x16xf32>, vector<8x16xf32> -> vector<8x16xf32>
    %c0_10 = arith.constant 0 : index
    %c0_11 = arith.constant 0 : index
    %12 = vector.load %arg4[%c0_10, %c0_11] : memref<1x16xf32, #tpu.memory_space<vmem>>, vector<1x16xf32>
    %13 = vector.broadcast %12 : vector<1x16xf32> to vector<8x16xf32>
    %14 = arith.addf %11, %13 : vector<8x16xf32>
    %cst_12 = arith.constant 0.000000e+00 : f32
    %15 = vector.broadcast %cst_12 : f32 to vector<8x16xf32>
    %16 = arith.maximumf %14, %15 : vector<8x16xf32>
    %c0_13 = arith.constant 0 : index
    %c0_14 = arith.constant 0 : index
    %17 = vector.load %arg5[%c0_13, %c0_14] : memref<16x3xf32, #tpu.memory_space<vmem>>, vector<16x3xf32>
    %cst_15 = arith.constant dense<0.000000e+00> : vector<8x3xf32>
    %18 = tpu.matmul %16, %17, %cst_15 {dimension_numbers = #tpu.dot_dimension_numbers<[1], [0], [0], [1], [0, 0, 1, 1], [], []>} : vector<8x16xf32>, vector<16x3xf32>, vector<8x3xf32> -> vector<8x3xf32>
    %c0_16 = arith.constant 0 : index
    %c0_17 = arith.constant 0 : index
    %19 = vector.load %arg6[%c0_16, %c0_17] : memref<1x3xf32, #tpu.memory_space<vmem>>, vector<1x3xf32>
    %20 = vector.broadcast %19 : vector<1x3xf32> to vector<8x3xf32>
    %21 = arith.addf %18, %20 : vector<8x3xf32>
    %c0_18 = arith.constant 0 : index
    %c0_19 = arith.constant 0 : index
    %22 = vector.load %arg7[%c0_18, %c0_19] : memref<8x3xf32, #tpu.memory_space<vmem>>, vector<8x3xf32>
    tpu.vector_store %arg7[%c0_18, %c0_19], %21 {strides = array<i32>} : memref<8x3xf32, #tpu.memory_space<vmem>>, vector<8x3xf32>,
    return
  }
}

module attributes {stable_mosaic.version = 11 : i64} {
  func.func @lstm_pool_kernel(%arg0: i32, %arg1: i32, %arg2: memref<64x256xbf16, #tpu.memory_space<vmem>>, %arg3: memref<1x256x512xf32, #tpu.memory_space<vmem>>, %arg4: memref<1x128x512xf32, #tpu.memory_space<vmem>>, %arg5: memref<1x1x512xf32, #tpu.memory_space<vmem>>, %arg6: memref<8x128xf32, #tpu.memory_space<vmem>>, %arg7: memref<64x512xf32, #tpu.memory_space<vmem>>, %arg8: memref<8x128xf32, #tpu.memory_space<vmem>>, %arg9: memref<8x128xf32, #tpu.memory_space<vmem>>) attributes {dimension_semantics = [#tpu.dimension_semantics<parallel>, #tpu.dimension_semantics<arbitrary>], iteration_bounds = array<i64: 2, 1>, scalar_prefetch = 0 : i64, scratch_operands = 3 : i64, tpu.core_type = #tpu.core_type<tc>, window_params = [{transform_indices = @transform_0, window_bounds = array<i64: 64, 256>}, {transform_indices = @transform_1, window_bounds = array<i64: 1, 256, 512>}, {transform_indices = @transform_2, window_bounds = array<i64: 1, 128, 512>}, {transform_indices = @transform_3, window_bounds = array<i64: 1, 1, 512>}, {transform_indices = @transform_4, window_bounds = array<i64: 8, 128>}]} {
    %c0_i32 = arith.constant 0 : i32
    %0 = arith.cmpi eq, %arg1, %c0_i32 : i32
    %1 = arith.extui %0 : i1 to i32
    %c0_i32_0 = arith.constant 0 : i32
    %2 = arith.cmpi ne, %1, %c0_i32_0 : i32
    scf.if %2 {
      %cst_211 = arith.constant 0.000000e+00 : f32
      %388 = vector.broadcast %cst_211 : f32 to vector<8x128xf32>
      %c0_212 = arith.constant 0 : index
      %c0_213 = arith.constant 0 : index
      %389 = vector.load %arg8[%c0_212, %c0_213] : memref<8x128xf32, #tpu.memory_space<vmem>>, vector<8x128xf32>
      tpu.vector_store %arg8[%c0_212, %c0_213], %388 {strides = array<i32>} : memref<8x128xf32, #tpu.memory_space<vmem>>, vector<8x128xf32>,
      %cst_214 = arith.constant 0.000000e+00 : f32
      %390 = vector.broadcast %cst_214 : f32 to vector<8x128xf32>
      %c0_215 = arith.constant 0 : index
      %c0_216 = arith.constant 0 : index
      %391 = vector.load %arg9[%c0_215, %c0_216] : memref<8x128xf32, #tpu.memory_space<vmem>>, vector<8x128xf32>
      tpu.vector_store %arg9[%c0_215, %c0_216], %390 {strides = array<i32>} : memref<8x128xf32, #tpu.memory_space<vmem>>, vector<8x128xf32>,
      %cst_217 = arith.constant 0.000000e+00 : f32
      %392 = vector.broadcast %cst_217 : f32 to vector<8x128xf32>
      %c0_218 = arith.constant 0 : index
      %c0_219 = arith.constant 0 : index
      %393 = vector.load %arg6[%c0_218, %c0_219] : memref<8x128xf32, #tpu.memory_space<vmem>>, vector<8x128xf32>
      tpu.vector_store %arg6[%c0_218, %c0_219], %392 {strides = array<i32>} : memref<8x128xf32, #tpu.memory_space<vmem>>, vector<8x128xf32>,
    } else {
    }
    %c0 = arith.constant 0 : index
    %c0_1 = arith.constant 0 : index
    %3 = vector.load %arg2[%c0, %c0_1] : memref<64x256xbf16, #tpu.memory_space<vmem>>, vector<64x256xbf16>
    %c0_2 = arith.constant 0 : index
    %c0_3 = arith.constant 0 : index
    %c0_4 = arith.constant 0 : index
    %4 = vector.load %arg3[%c0_2, %c0_3, %c0_4] : memref<1x256x512xf32, #tpu.memory_space<vmem>>, vector<1x256x512xf32>
    %5 = vector.shape_cast %4 : vector<1x256x512xf32> to vector<256x512xf32>
    %cst = arith.constant dense<0.000000e+00> : vector<64x512xf32>
    %6 = tpu.matmul %3, %5, %cst {dimension_numbers = #tpu.dot_dimension_numbers<[1], [0], [0], [1], [0, 0, 1, 1], [], []>} : vector<64x256xbf16>, vector<256x512xf32>, vector<64x512xf32> -> vector<64x512xf32>
    %c0_5 = arith.constant 0 : index
    %c0_6 = arith.constant 0 : index
    %c0_7 = arith.constant 0 : index
    %7 = vector.load %arg5[%c0_5, %c0_6, %c0_7] : memref<1x1x512xf32, #tpu.memory_space<vmem>>, vector<1x1x512xf32>
    %8 = vector.shape_cast %7 : vector<1x1x512xf32> to vector<1x512xf32>
    %9 = vector.broadcast %8 : vector<1x512xf32> to vector<64x512xf32>
    %10 = arith.addf %6, %9 : vector<64x512xf32>
    %c0_8 = arith.constant 0 : index
    %c0_9 = arith.constant 0 : index
    %11 = vector.load %arg7[%c0_8, %c0_9] : memref<64x512xf32, #tpu.memory_space<vmem>>, vector<64x512xf32>
    tpu.vector_store %arg7[%c0_8, %c0_9], %10 {strides = array<i32>} : memref<64x512xf32, #tpu.memory_space<vmem>>, vector<64x512xf32>,
    %c0_i32_10 = arith.constant 0 : i32
    %c1_i32 = arith.constant 1 : i32
    %12 = arith.muli %c0_i32_10, %c1_i32 : i32
    %c0_i32_11 = arith.constant 0 : i32
    %13 = arith.addi %c0_i32_11, %12 : i32
    %c7_i32 = arith.constant 7 : i32
    %14 = arith.subi %c7_i32, %13 : i32
    %15 = arith.muli %arg0, %14 : i32
    %c1_i32_12 = arith.constant 1 : i32
    %16 = arith.subi %c1_i32_12, %arg0 : i32
    %17 = arith.muli %16, %13 : i32
    %18 = arith.addi %15, %17 : i32
    %c8_i32 = arith.constant 8 : i32
    %19 = arith.muli %18, %c8_i32 : i32
    %20 = tpu.assume_multiple %19, 8 : i32
    %21 = arith.index_cast %20 : i32 to index
    %c0_13 = arith.constant 0 : index
    %22 = vector.load %arg7[%21, %c0_13] : memref<64x512xf32, #tpu.memory_space<vmem>>, vector<8x512xf32>
    %c0_14 = arith.constant 0 : index
    %c0_15 = arith.constant 0 : index
    %c0_16 = arith.constant 0 : index
    %23 = vector.load %arg4[%c0_14, %c0_15, %c0_16] : memref<1x128x512xf32, #tpu.memory_space<vmem>>, vector<1x128x512xf32>
    %24 = vector.shape_cast %23 : vector<1x128x512xf32> to vector<128x512xf32>
    %c0_17 = arith.constant 0 : index
    %c0_18 = arith.constant 0 : index
    %25 = vector.load %arg8[%c0_17, %c0_18] : memref<8x128xf32, #tpu.memory_space<vmem>>, vector<8x128xf32>
    %c0_19 = arith.constant 0 : index
    %c0_20 = arith.constant 0 : index
    %26 = vector.load %arg9[%c0_19, %c0_20] : memref<8x128xf32, #tpu.memory_space<vmem>>, vector<8x128xf32>
    %cst_21 = arith.constant dense<0.000000e+00> : vector<8x512xf32>
    %27 = tpu.matmul %25, %24, %cst_21 {dimension_numbers = #tpu.dot_dimension_numbers<[1], [0], [0], [1], [0, 0, 1, 1], [], []>} : vector<8x128xf32>, vector<128x512xf32>, vector<8x512xf32> -> vector<8x512xf32>
    %28 = arith.addf %22, %27 : vector<8x512xf32>
    %29 = vector.extract_strided_slice %28 {offsets = [0, 0], sizes = [8, 128], strides = [1, 1]} : vector<8x512xf32> to vector<8x128xf32>
    %30 = arith.negf %29 : vector<8x128xf32>
    %31 = math.exp %30 : vector<8x128xf32>
    %cst_22 = arith.constant 1.000000e+00 : f32
    %32 = vector.broadcast %cst_22 : f32 to vector<8x128xf32>
    %33 = arith.addf %32, %31 : vector<8x128xf32>
    %34 = arith.divf %32, %33 : vector<8x128xf32>
    %35 = vector.extract_strided_slice %28 {offsets = [0, 128], sizes = [8, 128], strides = [1, 1]} : vector<8x512xf32> to vector<8x128xf32>
    %36 = arith.negf %35 : vector<8x128xf32>
    %37 = math.exp %36 : vector<8x128xf32>
    %cst_23 = arith.constant 1.000000e+00 : f32
    %38 = vector.broadcast %cst_23 : f32 to vector<8x128xf32>
    %39 = arith.addf %38, %37 : vector<8x128xf32>
    %40 = arith.divf %38, %39 : vector<8x128xf32>
    %41 = vector.extract_strided_slice %28 {offsets = [0, 256], sizes = [8, 128], strides = [1, 1]} : vector<8x512xf32> to vector<8x128xf32>
    %42 = math.tanh %41 : vector<8x128xf32>
    %43 = vector.extract_strided_slice %28 {offsets = [0, 384], sizes = [8, 128], strides = [1, 1]} : vector<8x512xf32> to vector<8x128xf32>
    %44 = arith.negf %43 : vector<8x128xf32>
    %45 = math.exp %44 : vector<8x128xf32>
    %cst_24 = arith.constant 1.000000e+00 : f32
    %46 = vector.broadcast %cst_24 : f32 to vector<8x128xf32>
    %47 = arith.addf %46, %45 : vector<8x128xf32>
    %48 = arith.divf %46, %47 : vector<8x128xf32>
    %49 = arith.mulf %40, %26 : vector<8x128xf32>
    %50 = arith.mulf %34, %42 : vector<8x128xf32>
    %51 = arith.addf %49, %50 : vector<8x128xf32>
    %52 = math.tanh %51 : vector<8x128xf32>
    %53 = arith.mulf %48, %52 : vector<8x128xf32>
    %c0_25 = arith.constant 0 : index
    %c0_26 = arith.constant 0 : index
    %54 = vector.load %arg8[%c0_25, %c0_26] : memref<8x128xf32, #tpu.memory_space<vmem>>, vector<8x128xf32>
    tpu.vector_store %arg8[%c0_25, %c0_26], %53 {strides = array<i32>} : memref<8x128xf32, #tpu.memory_space<vmem>>, vector<8x128xf32>,
    %c0_27 = arith.constant 0 : index
    %c0_28 = arith.constant 0 : index
    %55 = vector.load %arg9[%c0_27, %c0_28] : memref<8x128xf32, #tpu.memory_space<vmem>>, vector<8x128xf32>
    tpu.vector_store %arg9[%c0_27, %c0_28], %51 {strides = array<i32>} : memref<8x128xf32, #tpu.memory_space<vmem>>, vector<8x128xf32>,
    %c0_29 = arith.constant 0 : index
    %c0_30 = arith.constant 0 : index
    %56 = vector.load %arg6[%c0_29, %c0_30] : memref<8x128xf32, #tpu.memory_space<vmem>>, vector<8x128xf32>
    %57 = arith.addf %56, %53 : vector<8x128xf32>
    %c0_31 = arith.constant 0 : index
    %c0_32 = arith.constant 0 : index
    %58 = vector.load %arg6[%c0_31, %c0_32] : memref<8x128xf32, #tpu.memory_space<vmem>>, vector<8x128xf32>
    tpu.vector_store %arg6[%c0_31, %c0_32], %57 {strides = array<i32>} : memref<8x128xf32, #tpu.memory_space<vmem>>, vector<8x128xf32>,
    %c1_i32_33 = arith.constant 1 : i32
    %c1_i32_34 = arith.constant 1 : i32
    %59 = arith.muli %c1_i32_33, %c1_i32_34 : i32
    %c0_i32_35 = arith.constant 0 : i32
    %60 = arith.addi %c0_i32_35, %59 : i32
    %c7_i32_36 = arith.constant 7 : i32
    %61 = arith.subi %c7_i32_36, %60 : i32
    %62 = arith.muli %arg0, %61 : i32
    %c1_i32_37 = arith.constant 1 : i32
    %63 = arith.subi %c1_i32_37, %arg0 : i32
    %64 = arith.muli %63, %60 : i32
    %65 = arith.addi %62, %64 : i32
    %c8_i32_38 = arith.constant 8 : i32
    %66 = arith.muli %65, %c8_i32_38 : i32
    %67 = tpu.assume_multiple %66, 8 : i32
    %68 = arith.index_cast %67 : i32 to index
    %c0_39 = arith.constant 0 : index
    %69 = vector.load %arg7[%68, %c0_39] : memref<64x512xf32, #tpu.memory_space<vmem>>, vector<8x512xf32>
    %c0_40 = arith.constant 0 : index
    %c0_41 = arith.constant 0 : index
    %c0_42 = arith.constant 0 : index
    %70 = vector.load %arg4[%c0_40, %c0_41, %c0_42] : memref<1x128x512xf32, #tpu.memory_space<vmem>>, vector<1x128x512xf32>
    %71 = vector.shape_cast %70 : vector<1x128x512xf32> to vector<128x512xf32>
    %c0_43 = arith.constant 0 : index
    %c0_44 = arith.constant 0 : index
    %72 = vector.load %arg8[%c0_43, %c0_44] : memref<8x128xf32, #tpu.memory_space<vmem>>, vector<8x128xf32>
    %c0_45 = arith.constant 0 : index
    %c0_46 = arith.constant 0 : index
    %73 = vector.load %arg9[%c0_45, %c0_46] : memref<8x128xf32, #tpu.memory_space<vmem>>, vector<8x128xf32>
    %cst_47 = arith.constant dense<0.000000e+00> : vector<8x512xf32>
    %74 = tpu.matmul %72, %71, %cst_47 {dimension_numbers = #tpu.dot_dimension_numbers<[1], [0], [0], [1], [0, 0, 1, 1], [], []>} : vector<8x128xf32>, vector<128x512xf32>, vector<8x512xf32> -> vector<8x512xf32>
    %75 = arith.addf %69, %74 : vector<8x512xf32>
    %76 = vector.extract_strided_slice %75 {offsets = [0, 0], sizes = [8, 128], strides = [1, 1]} : vector<8x512xf32> to vector<8x128xf32>
    %77 = arith.negf %76 : vector<8x128xf32>
    %78 = math.exp %77 : vector<8x128xf32>
    %cst_48 = arith.constant 1.000000e+00 : f32
    %79 = vector.broadcast %cst_48 : f32 to vector<8x128xf32>
    %80 = arith.addf %79, %78 : vector<8x128xf32>
    %81 = arith.divf %79, %80 : vector<8x128xf32>
    %82 = vector.extract_strided_slice %75 {offsets = [0, 128], sizes = [8, 128], strides = [1, 1]} : vector<8x512xf32> to vector<8x128xf32>
    %83 = arith.negf %82 : vector<8x128xf32>
    %84 = math.exp %83 : vector<8x128xf32>
    %cst_49 = arith.constant 1.000000e+00 : f32
    %85 = vector.broadcast %cst_49 : f32 to vector<8x128xf32>
    %86 = arith.addf %85, %84 : vector<8x128xf32>
    %87 = arith.divf %85, %86 : vector<8x128xf32>
    %88 = vector.extract_strided_slice %75 {offsets = [0, 256], sizes = [8, 128], strides = [1, 1]} : vector<8x512xf32> to vector<8x128xf32>
    %89 = math.tanh %88 : vector<8x128xf32>
    %90 = vector.extract_strided_slice %75 {offsets = [0, 384], sizes = [8, 128], strides = [1, 1]} : vector<8x512xf32> to vector<8x128xf32>
    %91 = arith.negf %90 : vector<8x128xf32>
    %92 = math.exp %91 : vector<8x128xf32>
    %cst_50 = arith.constant 1.000000e+00 : f32
    %93 = vector.broadcast %cst_50 : f32 to vector<8x128xf32>
    %94 = arith.addf %93, %92 : vector<8x128xf32>
    %95 = arith.divf %93, %94 : vector<8x128xf32>
    %96 = arith.mulf %87, %73 : vector<8x128xf32>
    %97 = arith.mulf %81, %89 : vector<8x128xf32>
    %98 = arith.addf %96, %97 : vector<8x128xf32>
    %99 = math.tanh %98 : vector<8x128xf32>
    %100 = arith.mulf %95, %99 : vector<8x128xf32>
    %c0_51 = arith.constant 0 : index
    %c0_52 = arith.constant 0 : index
    %101 = vector.load %arg8[%c0_51, %c0_52] : memref<8x128xf32, #tpu.memory_space<vmem>>, vector<8x128xf32>
    tpu.vector_store %arg8[%c0_51, %c0_52], %100 {strides = array<i32>} : memref<8x128xf32, #tpu.memory_space<vmem>>, vector<8x128xf32>,
    %c0_53 = arith.constant 0 : index
    %c0_54 = arith.constant 0 : index
    %102 = vector.load %arg9[%c0_53, %c0_54] : memref<8x128xf32, #tpu.memory_space<vmem>>, vector<8x128xf32>
    tpu.vector_store %arg9[%c0_53, %c0_54], %98 {strides = array<i32>} : memref<8x128xf32, #tpu.memory_space<vmem>>, vector<8x128xf32>,
    %c0_55 = arith.constant 0 : index
    %c0_56 = arith.constant 0 : index
    %103 = vector.load %arg6[%c0_55, %c0_56] : memref<8x128xf32, #tpu.memory_space<vmem>>, vector<8x128xf32>
    %104 = arith.addf %103, %100 : vector<8x128xf32>
    %c0_57 = arith.constant 0 : index
    %c0_58 = arith.constant 0 : index
    %105 = vector.load %arg6[%c0_57, %c0_58] : memref<8x128xf32, #tpu.memory_space<vmem>>, vector<8x128xf32>
    tpu.vector_store %arg6[%c0_57, %c0_58], %104 {strides = array<i32>} : memref<8x128xf32, #tpu.memory_space<vmem>>, vector<8x128xf32>,
    %c2_i32 = arith.constant 2 : i32
    %c1_i32_59 = arith.constant 1 : i32
    %106 = arith.muli %c2_i32, %c1_i32_59 : i32
    %c0_i32_60 = arith.constant 0 : i32
    %107 = arith.addi %c0_i32_60, %106 : i32
    %c7_i32_61 = arith.constant 7 : i32
    %108 = arith.subi %c7_i32_61, %107 : i32
    %109 = arith.muli %arg0, %108 : i32
    %c1_i32_62 = arith.constant 1 : i32
    %110 = arith.subi %c1_i32_62, %arg0 : i32
    %111 = arith.muli %110, %107 : i32
    %112 = arith.addi %109, %111 : i32
    %c8_i32_63 = arith.constant 8 : i32
    %113 = arith.muli %112, %c8_i32_63 : i32
    %114 = tpu.assume_multiple %113, 8 : i32
    %115 = arith.index_cast %114 : i32 to index
    %c0_64 = arith.constant 0 : index
    %116 = vector.load %arg7[%115, %c0_64] : memref<64x512xf32, #tpu.memory_space<vmem>>, vector<8x512xf32>
    %c0_65 = arith.constant 0 : index
    %c0_66 = arith.constant 0 : index
    %c0_67 = arith.constant 0 : index
    %117 = vector.load %arg4[%c0_65, %c0_66, %c0_67] : memref<1x128x512xf32, #tpu.memory_space<vmem>>, vector<1x128x512xf32>
    %118 = vector.shape_cast %117 : vector<1x128x512xf32> to vector<128x512xf32>
    %c0_68 = arith.constant 0 : index
    %c0_69 = arith.constant 0 : index
    %119 = vector.load %arg8[%c0_68, %c0_69] : memref<8x128xf32, #tpu.memory_space<vmem>>, vector<8x128xf32>
    %c0_70 = arith.constant 0 : index
    %c0_71 = arith.constant 0 : index
    %120 = vector.load %arg9[%c0_70, %c0_71] : memref<8x128xf32, #tpu.memory_space<vmem>>, vector<8x128xf32>
    %cst_72 = arith.constant dense<0.000000e+00> : vector<8x512xf32>
    %121 = tpu.matmul %119, %118, %cst_72 {dimension_numbers = #tpu.dot_dimension_numbers<[1], [0], [0], [1], [0, 0, 1, 1], [], []>} : vector<8x128xf32>, vector<128x512xf32>, vector<8x512xf32> -> vector<8x512xf32>
    %122 = arith.addf %116, %121 : vector<8x512xf32>
    %123 = vector.extract_strided_slice %122 {offsets = [0, 0], sizes = [8, 128], strides = [1, 1]} : vector<8x512xf32> to vector<8x128xf32>
    %124 = arith.negf %123 : vector<8x128xf32>
    %125 = math.exp %124 : vector<8x128xf32>
    %cst_73 = arith.constant 1.000000e+00 : f32
    %126 = vector.broadcast %cst_73 : f32 to vector<8x128xf32>
    %127 = arith.addf %126, %125 : vector<8x128xf32>
    %128 = arith.divf %126, %127 : vector<8x128xf32>
    %129 = vector.extract_strided_slice %122 {offsets = [0, 128], sizes = [8, 128], strides = [1, 1]} : vector<8x512xf32> to vector<8x128xf32>
    %130 = arith.negf %129 : vector<8x128xf32>
    %131 = math.exp %130 : vector<8x128xf32>
    %cst_74 = arith.constant 1.000000e+00 : f32
    %132 = vector.broadcast %cst_74 : f32 to vector<8x128xf32>
    %133 = arith.addf %132, %131 : vector<8x128xf32>
    %134 = arith.divf %132, %133 : vector<8x128xf32>
    %135 = vector.extract_strided_slice %122 {offsets = [0, 256], sizes = [8, 128], strides = [1, 1]} : vector<8x512xf32> to vector<8x128xf32>
    %136 = math.tanh %135 : vector<8x128xf32>
    %137 = vector.extract_strided_slice %122 {offsets = [0, 384], sizes = [8, 128], strides = [1, 1]} : vector<8x512xf32> to vector<8x128xf32>
    %138 = arith.negf %137 : vector<8x128xf32>
    %139 = math.exp %138 : vector<8x128xf32>
    %cst_75 = arith.constant 1.000000e+00 : f32
    %140 = vector.broadcast %cst_75 : f32 to vector<8x128xf32>
    %141 = arith.addf %140, %139 : vector<8x128xf32>
    %142 = arith.divf %140, %141 : vector<8x128xf32>
    %143 = arith.mulf %134, %120 : vector<8x128xf32>
    %144 = arith.mulf %128, %136 : vector<8x128xf32>
    %145 = arith.addf %143, %144 : vector<8x128xf32>
    %146 = math.tanh %145 : vector<8x128xf32>
    %147 = arith.mulf %142, %146 : vector<8x128xf32>
    %c0_76 = arith.constant 0 : index
    %c0_77 = arith.constant 0 : index
    %148 = vector.load %arg8[%c0_76, %c0_77] : memref<8x128xf32, #tpu.memory_space<vmem>>, vector<8x128xf32>
    tpu.vector_store %arg8[%c0_76, %c0_77], %147 {strides = array<i32>} : memref<8x128xf32, #tpu.memory_space<vmem>>, vector<8x128xf32>,
    %c0_78 = arith.constant 0 : index
    %c0_79 = arith.constant 0 : index
    %149 = vector.load %arg9[%c0_78, %c0_79] : memref<8x128xf32, #tpu.memory_space<vmem>>, vector<8x128xf32>
    tpu.vector_store %arg9[%c0_78, %c0_79], %145 {strides = array<i32>} : memref<8x128xf32, #tpu.memory_space<vmem>>, vector<8x128xf32>,
    %c0_80 = arith.constant 0 : index
    %c0_81 = arith.constant 0 : index
    %150 = vector.load %arg6[%c0_80, %c0_81] : memref<8x128xf32, #tpu.memory_space<vmem>>, vector<8x128xf32>
    %151 = arith.addf %150, %147 : vector<8x128xf32>
    %c0_82 = arith.constant 0 : index
    %c0_83 = arith.constant 0 : index
    %152 = vector.load %arg6[%c0_82, %c0_83] : memref<8x128xf32, #tpu.memory_space<vmem>>, vector<8x128xf32>
    tpu.vector_store %arg6[%c0_82, %c0_83], %151 {strides = array<i32>} : memref<8x128xf32, #tpu.memory_space<vmem>>, vector<8x128xf32>,
    %c3_i32 = arith.constant 3 : i32
    %c1_i32_84 = arith.constant 1 : i32
    %153 = arith.muli %c3_i32, %c1_i32_84 : i32
    %c0_i32_85 = arith.constant 0 : i32
    %154 = arith.addi %c0_i32_85, %153 : i32
    %c7_i32_86 = arith.constant 7 : i32
    %155 = arith.subi %c7_i32_86, %154 : i32
    %156 = arith.muli %arg0, %155 : i32
    %c1_i32_87 = arith.constant 1 : i32
    %157 = arith.subi %c1_i32_87, %arg0 : i32
    %158 = arith.muli %157, %154 : i32
    %159 = arith.addi %156, %158 : i32
    %c8_i32_88 = arith.constant 8 : i32
    %160 = arith.muli %159, %c8_i32_88 : i32
    %161 = tpu.assume_multiple %160, 8 : i32
    %162 = arith.index_cast %161 : i32 to index
    %c0_89 = arith.constant 0 : index
    %163 = vector.load %arg7[%162, %c0_89] : memref<64x512xf32, #tpu.memory_space<vmem>>, vector<8x512xf32>
    %c0_90 = arith.constant 0 : index
    %c0_91 = arith.constant 0 : index
    %c0_92 = arith.constant 0 : index
    %164 = vector.load %arg4[%c0_90, %c0_91, %c0_92] : memref<1x128x512xf32, #tpu.memory_space<vmem>>, vector<1x128x512xf32>
    %165 = vector.shape_cast %164 : vector<1x128x512xf32> to vector<128x512xf32>
    %c0_93 = arith.constant 0 : index
    %c0_94 = arith.constant 0 : index
    %166 = vector.load %arg8[%c0_93, %c0_94] : memref<8x128xf32, #tpu.memory_space<vmem>>, vector<8x128xf32>
    %c0_95 = arith.constant 0 : index
    %c0_96 = arith.constant 0 : index
    %167 = vector.load %arg9[%c0_95, %c0_96] : memref<8x128xf32, #tpu.memory_space<vmem>>, vector<8x128xf32>
    %cst_97 = arith.constant dense<0.000000e+00> : vector<8x512xf32>
    %168 = tpu.matmul %166, %165, %cst_97 {dimension_numbers = #tpu.dot_dimension_numbers<[1], [0], [0], [1], [0, 0, 1, 1], [], []>} : vector<8x128xf32>, vector<128x512xf32>, vector<8x512xf32> -> vector<8x512xf32>
    %169 = arith.addf %163, %168 : vector<8x512xf32>
    %170 = vector.extract_strided_slice %169 {offsets = [0, 0], sizes = [8, 128], strides = [1, 1]} : vector<8x512xf32> to vector<8x128xf32>
    %171 = arith.negf %170 : vector<8x128xf32>
    %172 = math.exp %171 : vector<8x128xf32>
    %cst_98 = arith.constant 1.000000e+00 : f32
    %173 = vector.broadcast %cst_98 : f32 to vector<8x128xf32>
    %174 = arith.addf %173, %172 : vector<8x128xf32>
    %175 = arith.divf %173, %174 : vector<8x128xf32>
    %176 = vector.extract_strided_slice %169 {offsets = [0, 128], sizes = [8, 128], strides = [1, 1]} : vector<8x512xf32> to vector<8x128xf32>
    %177 = arith.negf %176 : vector<8x128xf32>
    %178 = math.exp %177 : vector<8x128xf32>
    %cst_99 = arith.constant 1.000000e+00 : f32
    %179 = vector.broadcast %cst_99 : f32 to vector<8x128xf32>
    %180 = arith.addf %179, %178 : vector<8x128xf32>
    %181 = arith.divf %179, %180 : vector<8x128xf32>
    %182 = vector.extract_strided_slice %169 {offsets = [0, 256], sizes = [8, 128], strides = [1, 1]} : vector<8x512xf32> to vector<8x128xf32>
    %183 = math.tanh %182 : vector<8x128xf32>
    %184 = vector.extract_strided_slice %169 {offsets = [0, 384], sizes = [8, 128], strides = [1, 1]} : vector<8x512xf32> to vector<8x128xf32>
    %185 = arith.negf %184 : vector<8x128xf32>
    %186 = math.exp %185 : vector<8x128xf32>
    %cst_100 = arith.constant 1.000000e+00 : f32
    %187 = vector.broadcast %cst_100 : f32 to vector<8x128xf32>
    %188 = arith.addf %187, %186 : vector<8x128xf32>
    %189 = arith.divf %187, %188 : vector<8x128xf32>
    %190 = arith.mulf %181, %167 : vector<8x128xf32>
    %191 = arith.mulf %175, %183 : vector<8x128xf32>
    %192 = arith.addf %190, %191 : vector<8x128xf32>
    %193 = math.tanh %192 : vector<8x128xf32>
    %194 = arith.mulf %189, %193 : vector<8x128xf32>
    %c0_101 = arith.constant 0 : index
    %c0_102 = arith.constant 0 : index
    %195 = vector.load %arg8[%c0_101, %c0_102] : memref<8x128xf32, #tpu.memory_space<vmem>>, vector<8x128xf32>
    tpu.vector_store %arg8[%c0_101, %c0_102], %194 {strides = array<i32>} : memref<8x128xf32, #tpu.memory_space<vmem>>, vector<8x128xf32>,
    %c0_103 = arith.constant 0 : index
    %c0_104 = arith.constant 0 : index
    %196 = vector.load %arg9[%c0_103, %c0_104] : memref<8x128xf32, #tpu.memory_space<vmem>>, vector<8x128xf32>
    tpu.vector_store %arg9[%c0_103, %c0_104], %192 {strides = array<i32>} : memref<8x128xf32, #tpu.memory_space<vmem>>, vector<8x128xf32>,
    %c0_105 = arith.constant 0 : index
    %c0_106 = arith.constant 0 : index
    %197 = vector.load %arg6[%c0_105, %c0_106] : memref<8x128xf32, #tpu.memory_space<vmem>>, vector<8x128xf32>
    %198 = arith.addf %197, %194 : vector<8x128xf32>
    %c0_107 = arith.constant 0 : index
    %c0_108 = arith.constant 0 : index
    %199 = vector.load %arg6[%c0_107, %c0_108] : memref<8x128xf32, #tpu.memory_space<vmem>>, vector<8x128xf32>
    tpu.vector_store %arg6[%c0_107, %c0_108], %198 {strides = array<i32>} : memref<8x128xf32, #tpu.memory_space<vmem>>, vector<8x128xf32>,
    %c4_i32 = arith.constant 4 : i32
    %c1_i32_109 = arith.constant 1 : i32
    %200 = arith.muli %c4_i32, %c1_i32_109 : i32
    %c0_i32_110 = arith.constant 0 : i32
    %201 = arith.addi %c0_i32_110, %200 : i32
    %c7_i32_111 = arith.constant 7 : i32
    %202 = arith.subi %c7_i32_111, %201 : i32
    %203 = arith.muli %arg0, %202 : i32
    %c1_i32_112 = arith.constant 1 : i32
    %204 = arith.subi %c1_i32_112, %arg0 : i32
    %205 = arith.muli %204, %201 : i32
    %206 = arith.addi %203, %205 : i32
    %c8_i32_113 = arith.constant 8 : i32
    %207 = arith.muli %206, %c8_i32_113 : i32
    %208 = tpu.assume_multiple %207, 8 : i32
    %209 = arith.index_cast %208 : i32 to index
    %c0_114 = arith.constant 0 : index
    %210 = vector.load %arg7[%209, %c0_114] : memref<64x512xf32, #tpu.memory_space<vmem>>, vector<8x512xf32>
    %c0_115 = arith.constant 0 : index
    %c0_116 = arith.constant 0 : index
    %c0_117 = arith.constant 0 : index
    %211 = vector.load %arg4[%c0_115, %c0_116, %c0_117] : memref<1x128x512xf32, #tpu.memory_space<vmem>>, vector<1x128x512xf32>
    %212 = vector.shape_cast %211 : vector<1x128x512xf32> to vector<128x512xf32>
    %c0_118 = arith.constant 0 : index
    %c0_119 = arith.constant 0 : index
    %213 = vector.load %arg8[%c0_118, %c0_119] : memref<8x128xf32, #tpu.memory_space<vmem>>, vector<8x128xf32>
    %c0_120 = arith.constant 0 : index
    %c0_121 = arith.constant 0 : index
    %214 = vector.load %arg9[%c0_120, %c0_121] : memref<8x128xf32, #tpu.memory_space<vmem>>, vector<8x128xf32>
    %cst_122 = arith.constant dense<0.000000e+00> : vector<8x512xf32>
    %215 = tpu.matmul %213, %212, %cst_122 {dimension_numbers = #tpu.dot_dimension_numbers<[1], [0], [0], [1], [0, 0, 1, 1], [], []>} : vector<8x128xf32>, vector<128x512xf32>, vector<8x512xf32> -> vector<8x512xf32>
    %216 = arith.addf %210, %215 : vector<8x512xf32>
    %217 = vector.extract_strided_slice %216 {offsets = [0, 0], sizes = [8, 128], strides = [1, 1]} : vector<8x512xf32> to vector<8x128xf32>
    %218 = arith.negf %217 : vector<8x128xf32>
    %219 = math.exp %218 : vector<8x128xf32>
    %cst_123 = arith.constant 1.000000e+00 : f32
    %220 = vector.broadcast %cst_123 : f32 to vector<8x128xf32>
    %221 = arith.addf %220, %219 : vector<8x128xf32>
    %222 = arith.divf %220, %221 : vector<8x128xf32>
    %223 = vector.extract_strided_slice %216 {offsets = [0, 128], sizes = [8, 128], strides = [1, 1]} : vector<8x512xf32> to vector<8x128xf32>
    %224 = arith.negf %223 : vector<8x128xf32>
    %225 = math.exp %224 : vector<8x128xf32>
    %cst_124 = arith.constant 1.000000e+00 : f32
    %226 = vector.broadcast %cst_124 : f32 to vector<8x128xf32>
    %227 = arith.addf %226, %225 : vector<8x128xf32>
    %228 = arith.divf %226, %227 : vector<8x128xf32>
    %229 = vector.extract_strided_slice %216 {offsets = [0, 256], sizes = [8, 128], strides = [1, 1]} : vector<8x512xf32> to vector<8x128xf32>
    %230 = math.tanh %229 : vector<8x128xf32>
    %231 = vector.extract_strided_slice %216 {offsets = [0, 384], sizes = [8, 128], strides = [1, 1]} : vector<8x512xf32> to vector<8x128xf32>
    %232 = arith.negf %231 : vector<8x128xf32>
    %233 = math.exp %232 : vector<8x128xf32>
    %cst_125 = arith.constant 1.000000e+00 : f32
    %234 = vector.broadcast %cst_125 : f32 to vector<8x128xf32>
    %235 = arith.addf %234, %233 : vector<8x128xf32>
    %236 = arith.divf %234, %235 : vector<8x128xf32>
    %237 = arith.mulf %228, %214 : vector<8x128xf32>
    %238 = arith.mulf %222, %230 : vector<8x128xf32>
    %239 = arith.addf %237, %238 : vector<8x128xf32>
    %240 = math.tanh %239 : vector<8x128xf32>
    %241 = arith.mulf %236, %240 : vector<8x128xf32>
    %c0_126 = arith.constant 0 : index
    %c0_127 = arith.constant 0 : index
    %242 = vector.load %arg8[%c0_126, %c0_127] : memref<8x128xf32, #tpu.memory_space<vmem>>, vector<8x128xf32>
    tpu.vector_store %arg8[%c0_126, %c0_127], %241 {strides = array<i32>} : memref<8x128xf32, #tpu.memory_space<vmem>>, vector<8x128xf32>,
    %c0_128 = arith.constant 0 : index
    %c0_129 = arith.constant 0 : index
    %243 = vector.load %arg9[%c0_128, %c0_129] : memref<8x128xf32, #tpu.memory_space<vmem>>, vector<8x128xf32>
    tpu.vector_store %arg9[%c0_128, %c0_129], %239 {strides = array<i32>} : memref<8x128xf32, #tpu.memory_space<vmem>>, vector<8x128xf32>,
    %c0_130 = arith.constant 0 : index
    %c0_131 = arith.constant 0 : index
    %244 = vector.load %arg6[%c0_130, %c0_131] : memref<8x128xf32, #tpu.memory_space<vmem>>, vector<8x128xf32>
    %245 = arith.addf %244, %241 : vector<8x128xf32>
    %c0_132 = arith.constant 0 : index
    %c0_133 = arith.constant 0 : index
    %246 = vector.load %arg6[%c0_132, %c0_133] : memref<8x128xf32, #tpu.memory_space<vmem>>, vector<8x128xf32>
    tpu.vector_store %arg6[%c0_132, %c0_133], %245 {strides = array<i32>} : memref<8x128xf32, #tpu.memory_space<vmem>>, vector<8x128xf32>,
    %c5_i32 = arith.constant 5 : i32
    %c1_i32_134 = arith.constant 1 : i32
    %247 = arith.muli %c5_i32, %c1_i32_134 : i32
    %c0_i32_135 = arith.constant 0 : i32
    %248 = arith.addi %c0_i32_135, %247 : i32
    %c7_i32_136 = arith.constant 7 : i32
    %249 = arith.subi %c7_i32_136, %248 : i32
    %250 = arith.muli %arg0, %249 : i32
    %c1_i32_137 = arith.constant 1 : i32
    %251 = arith.subi %c1_i32_137, %arg0 : i32
    %252 = arith.muli %251, %248 : i32
    %253 = arith.addi %250, %252 : i32
    %c8_i32_138 = arith.constant 8 : i32
    %254 = arith.muli %253, %c8_i32_138 : i32
    %255 = tpu.assume_multiple %254, 8 : i32
    %256 = arith.index_cast %255 : i32 to index
    %c0_139 = arith.constant 0 : index
    %257 = vector.load %arg7[%256, %c0_139] : memref<64x512xf32, #tpu.memory_space<vmem>>, vector<8x512xf32>
    %c0_140 = arith.constant 0 : index
    %c0_141 = arith.constant 0 : index
    %c0_142 = arith.constant 0 : index
    %258 = vector.load %arg4[%c0_140, %c0_141, %c0_142] : memref<1x128x512xf32, #tpu.memory_space<vmem>>, vector<1x128x512xf32>
    %259 = vector.shape_cast %258 : vector<1x128x512xf32> to vector<128x512xf32>
    %c0_143 = arith.constant 0 : index
    %c0_144 = arith.constant 0 : index
    %260 = vector.load %arg8[%c0_143, %c0_144] : memref<8x128xf32, #tpu.memory_space<vmem>>, vector<8x128xf32>
    %c0_145 = arith.constant 0 : index
    %c0_146 = arith.constant 0 : index
    %261 = vector.load %arg9[%c0_145, %c0_146] : memref<8x128xf32, #tpu.memory_space<vmem>>, vector<8x128xf32>
    %cst_147 = arith.constant dense<0.000000e+00> : vector<8x512xf32>
    %262 = tpu.matmul %260, %259, %cst_147 {dimension_numbers = #tpu.dot_dimension_numbers<[1], [0], [0], [1], [0, 0, 1, 1], [], []>} : vector<8x128xf32>, vector<128x512xf32>, vector<8x512xf32> -> vector<8x512xf32>
    %263 = arith.addf %257, %262 : vector<8x512xf32>
    %264 = vector.extract_strided_slice %263 {offsets = [0, 0], sizes = [8, 128], strides = [1, 1]} : vector<8x512xf32> to vector<8x128xf32>
    %265 = arith.negf %264 : vector<8x128xf32>
    %266 = math.exp %265 : vector<8x128xf32>
    %cst_148 = arith.constant 1.000000e+00 : f32
    %267 = vector.broadcast %cst_148 : f32 to vector<8x128xf32>
    %268 = arith.addf %267, %266 : vector<8x128xf32>
    %269 = arith.divf %267, %268 : vector<8x128xf32>
    %270 = vector.extract_strided_slice %263 {offsets = [0, 128], sizes = [8, 128], strides = [1, 1]} : vector<8x512xf32> to vector<8x128xf32>
    %271 = arith.negf %270 : vector<8x128xf32>
    %272 = math.exp %271 : vector<8x128xf32>
    %cst_149 = arith.constant 1.000000e+00 : f32
    %273 = vector.broadcast %cst_149 : f32 to vector<8x128xf32>
    %274 = arith.addf %273, %272 : vector<8x128xf32>
    %275 = arith.divf %273, %274 : vector<8x128xf32>
    %276 = vector.extract_strided_slice %263 {offsets = [0, 256], sizes = [8, 128], strides = [1, 1]} : vector<8x512xf32> to vector<8x128xf32>
    %277 = math.tanh %276 : vector<8x128xf32>
    %278 = vector.extract_strided_slice %263 {offsets = [0, 384], sizes = [8, 128], strides = [1, 1]} : vector<8x512xf32> to vector<8x128xf32>
    %279 = arith.negf %278 : vector<8x128xf32>
    %280 = math.exp %279 : vector<8x128xf32>
    %cst_150 = arith.constant 1.000000e+00 : f32
    %281 = vector.broadcast %cst_150 : f32 to vector<8x128xf32>
    %282 = arith.addf %281, %280 : vector<8x128xf32>
    %283 = arith.divf %281, %282 : vector<8x128xf32>
    %284 = arith.mulf %275, %261 : vector<8x128xf32>
    %285 = arith.mulf %269, %277 : vector<8x128xf32>
    %286 = arith.addf %284, %285 : vector<8x128xf32>
    %287 = math.tanh %286 : vector<8x128xf32>
    %288 = arith.mulf %283, %287 : vector<8x128xf32>
    %c0_151 = arith.constant 0 : index
    %c0_152 = arith.constant 0 : index
    %289 = vector.load %arg8[%c0_151, %c0_152] : memref<8x128xf32, #tpu.memory_space<vmem>>, vector<8x128xf32>
    tpu.vector_store %arg8[%c0_151, %c0_152], %288 {strides = array<i32>} : memref<8x128xf32, #tpu.memory_space<vmem>>, vector<8x128xf32>,
    %c0_153 = arith.constant 0 : index
    %c0_154 = arith.constant 0 : index
    %290 = vector.load %arg9[%c0_153, %c0_154] : memref<8x128xf32, #tpu.memory_space<vmem>>, vector<8x128xf32>
    tpu.vector_store %arg9[%c0_153, %c0_154], %286 {strides = array<i32>} : memref<8x128xf32, #tpu.memory_space<vmem>>, vector<8x128xf32>,
    %c0_155 = arith.constant 0 : index
    %c0_156 = arith.constant 0 : index
    %291 = vector.load %arg6[%c0_155, %c0_156] : memref<8x128xf32, #tpu.memory_space<vmem>>, vector<8x128xf32>
    %292 = arith.addf %291, %288 : vector<8x128xf32>
    %c0_157 = arith.constant 0 : index
    %c0_158 = arith.constant 0 : index
    %293 = vector.load %arg6[%c0_157, %c0_158] : memref<8x128xf32, #tpu.memory_space<vmem>>, vector<8x128xf32>
    tpu.vector_store %arg6[%c0_157, %c0_158], %292 {strides = array<i32>} : memref<8x128xf32, #tpu.memory_space<vmem>>, vector<8x128xf32>,
    %c6_i32 = arith.constant 6 : i32
    %c1_i32_159 = arith.constant 1 : i32
    %294 = arith.muli %c6_i32, %c1_i32_159 : i32
    %c0_i32_160 = arith.constant 0 : i32
    %295 = arith.addi %c0_i32_160, %294 : i32
    %c7_i32_161 = arith.constant 7 : i32
    %296 = arith.subi %c7_i32_161, %295 : i32
    %297 = arith.muli %arg0, %296 : i32
    %c1_i32_162 = arith.constant 1 : i32
    %298 = arith.subi %c1_i32_162, %arg0 : i32
    %299 = arith.muli %298, %295 : i32
    %300 = arith.addi %297, %299 : i32
    %c8_i32_163 = arith.constant 8 : i32
    %301 = arith.muli %300, %c8_i32_163 : i32
    %302 = tpu.assume_multiple %301, 8 : i32
    %303 = arith.index_cast %302 : i32 to index
    %c0_164 = arith.constant 0 : index
    %304 = vector.load %arg7[%303, %c0_164] : memref<64x512xf32, #tpu.memory_space<vmem>>, vector<8x512xf32>
    %c0_165 = arith.constant 0 : index
    %c0_166 = arith.constant 0 : index
    %c0_167 = arith.constant 0 : index
    %305 = vector.load %arg4[%c0_165, %c0_166, %c0_167] : memref<1x128x512xf32, #tpu.memory_space<vmem>>, vector<1x128x512xf32>
    %306 = vector.shape_cast %305 : vector<1x128x512xf32> to vector<128x512xf32>
    %c0_168 = arith.constant 0 : index
    %c0_169 = arith.constant 0 : index
    %307 = vector.load %arg8[%c0_168, %c0_169] : memref<8x128xf32, #tpu.memory_space<vmem>>, vector<8x128xf32>
    %c0_170 = arith.constant 0 : index
    %c0_171 = arith.constant 0 : index
    %308 = vector.load %arg9[%c0_170, %c0_171] : memref<8x128xf32, #tpu.memory_space<vmem>>, vector<8x128xf32>
    %cst_172 = arith.constant dense<0.000000e+00> : vector<8x512xf32>
    %309 = tpu.matmul %307, %306, %cst_172 {dimension_numbers = #tpu.dot_dimension_numbers<[1], [0], [0], [1], [0, 0, 1, 1], [], []>} : vector<8x128xf32>, vector<128x512xf32>, vector<8x512xf32> -> vector<8x512xf32>
    %310 = arith.addf %304, %309 : vector<8x512xf32>
    %311 = vector.extract_strided_slice %310 {offsets = [0, 0], sizes = [8, 128], strides = [1, 1]} : vector<8x512xf32> to vector<8x128xf32>
    %312 = arith.negf %311 : vector<8x128xf32>
    %313 = math.exp %312 : vector<8x128xf32>
    %cst_173 = arith.constant 1.000000e+00 : f32
    %314 = vector.broadcast %cst_173 : f32 to vector<8x128xf32>
    %315 = arith.addf %314, %313 : vector<8x128xf32>
    %316 = arith.divf %314, %315 : vector<8x128xf32>
    %317 = vector.extract_strided_slice %310 {offsets = [0, 128], sizes = [8, 128], strides = [1, 1]} : vector<8x512xf32> to vector<8x128xf32>
    %318 = arith.negf %317 : vector<8x128xf32>
    %319 = math.exp %318 : vector<8x128xf32>
    %cst_174 = arith.constant 1.000000e+00 : f32
    %320 = vector.broadcast %cst_174 : f32 to vector<8x128xf32>
    %321 = arith.addf %320, %319 : vector<8x128xf32>
    %322 = arith.divf %320, %321 : vector<8x128xf32>
    %323 = vector.extract_strided_slice %310 {offsets = [0, 256], sizes = [8, 128], strides = [1, 1]} : vector<8x512xf32> to vector<8x128xf32>
    %324 = math.tanh %323 : vector<8x128xf32>
    %325 = vector.extract_strided_slice %310 {offsets = [0, 384], sizes = [8, 128], strides = [1, 1]} : vector<8x512xf32> to vector<8x128xf32>
    %326 = arith.negf %325 : vector<8x128xf32>
    %327 = math.exp %326 : vector<8x128xf32>
    %cst_175 = arith.constant 1.000000e+00 : f32
    %328 = vector.broadcast %cst_175 : f32 to vector<8x128xf32>
    %329 = arith.addf %328, %327 : vector<8x128xf32>
    %330 = arith.divf %328, %329 : vector<8x128xf32>
    %331 = arith.mulf %322, %308 : vector<8x128xf32>
    %332 = arith.mulf %316, %324 : vector<8x128xf32>
    %333 = arith.addf %331, %332 : vector<8x128xf32>
    %334 = math.tanh %333 : vector<8x128xf32>
    %335 = arith.mulf %330, %334 : vector<8x128xf32>
    %c0_176 = arith.constant 0 : index
    %c0_177 = arith.constant 0 : index
    %336 = vector.load %arg8[%c0_176, %c0_177] : memref<8x128xf32, #tpu.memory_space<vmem>>, vector<8x128xf32>
    tpu.vector_store %arg8[%c0_176, %c0_177], %335 {strides = array<i32>} : memref<8x128xf32, #tpu.memory_space<vmem>>, vector<8x128xf32>,
    %c0_178 = arith.constant 0 : index
    %c0_179 = arith.constant 0 : index
    %337 = vector.load %arg9[%c0_178, %c0_179] : memref<8x128xf32, #tpu.memory_space<vmem>>, vector<8x128xf32>
    tpu.vector_store %arg9[%c0_178, %c0_179], %333 {strides = array<i32>} : memref<8x128xf32, #tpu.memory_space<vmem>>, vector<8x128xf32>,
    %c0_180 = arith.constant 0 : index
    %c0_181 = arith.constant 0 : index
    %338 = vector.load %arg6[%c0_180, %c0_181] : memref<8x128xf32, #tpu.memory_space<vmem>>, vector<8x128xf32>
    %339 = arith.addf %338, %335 : vector<8x128xf32>
    %c0_182 = arith.constant 0 : index
    %c0_183 = arith.constant 0 : index
    %340 = vector.load %arg6[%c0_182, %c0_183] : memref<8x128xf32, #tpu.memory_space<vmem>>, vector<8x128xf32>
    tpu.vector_store %arg6[%c0_182, %c0_183], %339 {strides = array<i32>} : memref<8x128xf32, #tpu.memory_space<vmem>>, vector<8x128xf32>,
    %c7_i32_184 = arith.constant 7 : i32
    %c1_i32_185 = arith.constant 1 : i32
    %341 = arith.muli %c7_i32_184, %c1_i32_185 : i32
    %c0_i32_186 = arith.constant 0 : i32
    %342 = arith.addi %c0_i32_186, %341 : i32
    %c7_i32_187 = arith.constant 7 : i32
    %343 = arith.subi %c7_i32_187, %342 : i32
    %344 = arith.muli %arg0, %343 : i32
    %c1_i32_188 = arith.constant 1 : i32
    %345 = arith.subi %c1_i32_188, %arg0 : i32
    %346 = arith.muli %345, %342 : i32
    %347 = arith.addi %344, %346 : i32
    %c8_i32_189 = arith.constant 8 : i32
    %348 = arith.muli %347, %c8_i32_189 : i32
    %349 = tpu.assume_multiple %348, 8 : i32
    %350 = arith.index_cast %349 : i32 to index
    %c0_190 = arith.constant 0 : index
    %351 = vector.load %arg7[%350, %c0_190] : memref<64x512xf32, #tpu.memory_space<vmem>>, vector<8x512xf32>
    %c0_191 = arith.constant 0 : index
    %c0_192 = arith.constant 0 : index
    %c0_193 = arith.constant 0 : index
    %352 = vector.load %arg4[%c0_191, %c0_192, %c0_193] : memref<1x128x512xf32, #tpu.memory_space<vmem>>, vector<1x128x512xf32>
    %353 = vector.shape_cast %352 : vector<1x128x512xf32> to vector<128x512xf32>
    %c0_194 = arith.constant 0 : index
    %c0_195 = arith.constant 0 : index
    %354 = vector.load %arg8[%c0_194, %c0_195] : memref<8x128xf32, #tpu.memory_space<vmem>>, vector<8x128xf32>
    %c0_196 = arith.constant 0 : index
    %c0_197 = arith.constant 0 : index
    %355 = vector.load %arg9[%c0_196, %c0_197] : memref<8x128xf32, #tpu.memory_space<vmem>>, vector<8x128xf32>
    %cst_198 = arith.constant dense<0.000000e+00> : vector<8x512xf32>
    %356 = tpu.matmul %354, %353, %cst_198 {dimension_numbers = #tpu.dot_dimension_numbers<[1], [0], [0], [1], [0, 0, 1, 1], [], []>} : vector<8x128xf32>, vector<128x512xf32>, vector<8x512xf32> -> vector<8x512xf32>
    %357 = arith.addf %351, %356 : vector<8x512xf32>
    %358 = vector.extract_strided_slice %357 {offsets = [0, 0], sizes = [8, 128], strides = [1, 1]} : vector<8x512xf32> to vector<8x128xf32>
    %359 = arith.negf %358 : vector<8x128xf32>
    %360 = math.exp %359 : vector<8x128xf32>
    %cst_199 = arith.constant 1.000000e+00 : f32
    %361 = vector.broadcast %cst_199 : f32 to vector<8x128xf32>
    %362 = arith.addf %361, %360 : vector<8x128xf32>
    %363 = arith.divf %361, %362 : vector<8x128xf32>
    %364 = vector.extract_strided_slice %357 {offsets = [0, 128], sizes = [8, 128], strides = [1, 1]} : vector<8x512xf32> to vector<8x128xf32>
    %365 = arith.negf %364 : vector<8x128xf32>
    %366 = math.exp %365 : vector<8x128xf32>
    %cst_200 = arith.constant 1.000000e+00 : f32
    %367 = vector.broadcast %cst_200 : f32 to vector<8x128xf32>
    %368 = arith.addf %367, %366 : vector<8x128xf32>
    %369 = arith.divf %367, %368 : vector<8x128xf32>
    %370 = vector.extract_strided_slice %357 {offsets = [0, 256], sizes = [8, 128], strides = [1, 1]} : vector<8x512xf32> to vector<8x128xf32>
    %371 = math.tanh %370 : vector<8x128xf32>
    %372 = vector.extract_strided_slice %357 {offsets = [0, 384], sizes = [8, 128], strides = [1, 1]} : vector<8x512xf32> to vector<8x128xf32>
    %373 = arith.negf %372 : vector<8x128xf32>
    %374 = math.exp %373 : vector<8x128xf32>
    %cst_201 = arith.constant 1.000000e+00 : f32
    %375 = vector.broadcast %cst_201 : f32 to vector<8x128xf32>
    %376 = arith.addf %375, %374 : vector<8x128xf32>
    %377 = arith.divf %375, %376 : vector<8x128xf32>
    %378 = arith.mulf %369, %355 : vector<8x128xf32>
    %379 = arith.mulf %363, %371 : vector<8x128xf32>
    %380 = arith.addf %378, %379 : vector<8x128xf32>
    %381 = math.tanh %380 : vector<8x128xf32>
    %382 = arith.mulf %377, %381 : vector<8x128xf32>
    %c0_202 = arith.constant 0 : index
    %c0_203 = arith.constant 0 : index
    %383 = vector.load %arg8[%c0_202, %c0_203] : memref<8x128xf32, #tpu.memory_space<vmem>>, vector<8x128xf32>
    tpu.vector_store %arg8[%c0_202, %c0_203], %382 {strides = array<i32>} : memref<8x128xf32, #tpu.memory_space<vmem>>, vector<8x128xf32>,
    %c0_204 = arith.constant 0 : index
    %c0_205 = arith.constant 0 : index
    %384 = vector.load %arg9[%c0_204, %c0_205] : memref<8x128xf32, #tpu.memory_space<vmem>>, vector<8x128xf32>
    tpu.vector_store %arg9[%c0_204, %c0_205], %380 {strides = array<i32>} : memref<8x128xf32, #tpu.memory_space<vmem>>, vector<8x128xf32>,
    %c0_206 = arith.constant 0 : index
    %c0_207 = arith.constant 0 : index
    %385 = vector.load %arg6[%c0_206, %c0_207] : memref<8x128xf32, #tpu.memory_space<vmem>>, vector<8x128xf32>
    %386 = arith.addf %385, %382 : vector<8x128xf32>
    %c0_208 = arith.constant 0 : index
    %c0_209 = arith.constant 0 : index
    %387 = vector.load %arg6[%c0_208, %c0_209] : memref<8x128xf32, #tpu.memory_space<vmem>>, vector<8x128xf32>
    tpu.vector_store %arg6[%c0_208, %c0_209], %386 {strides = array<i32>} : memref<8x128xf32, #tpu.memory_space<vmem>>, vector<8x128xf32>,
    %c8_i32_210 = arith.constant 8 : i32
    return
  }
  func.func @transform_0(%arg0: i32, %arg1: i32) -> (i32, i32) {
    %c0_i32 = arith.constant 0 : i32
    %0 = arith.subi %c0_i32, %arg1 : i32
    %1 = arith.muli %arg0, %0 : i32
    %c1_i32 = arith.constant 1 : i32
    %2 = arith.subi %c1_i32, %arg0 : i32
    %3 = arith.muli %2, %arg1 : i32
    %4 = arith.addi %1, %3 : i32
    %c0_i32_0 = arith.constant 0 : i32
    %c0_i32_1 = arith.constant 0 : i32
    return %4, %c0_i32_0 : i32, i32
  }
  func.func @transform_1(%arg0: i32, %arg1: i32) -> (i32, i32, i32) {
    %c0_i32 = arith.constant 0 : i32
    %c0_i32_0 = arith.constant 0 : i32
    %c0_i32_1 = arith.constant 0 : i32
    return %arg0, %c0_i32, %c0_i32_0 : i32, i32, i32
  }
  func.func @transform_2(%arg0: i32, %arg1: i32) -> (i32, i32, i32) {
    %c0_i32 = arith.constant 0 : i32
    %c0_i32_0 = arith.constant 0 : i32
    %c0_i32_1 = arith.constant 0 : i32
    return %arg0, %c0_i32, %c0_i32_0 : i32, i32, i32
  }
  func.func @transform_3(%arg0: i32, %arg1: i32) -> (i32, i32, i32) {
    %c0_i32 = arith.constant 0 : i32
    %c0_i32_0 = arith.constant 0 : i32
    %c0_i32_1 = arith.constant 0 : i32
    return %arg0, %c0_i32, %c0_i32_0 : i32, i32, i32
  }
  func.func @transform_4(%arg0: i32, %arg1: i32) -> (i32, i32) {
    %c0_i32 = arith.constant 0 : i32
    %c0_i32_0 = arith.constant 0 : i32
    return %c0_i32, %arg0 : i32, i32
  }
}

module attributes {stable_mosaic.version = 11 : i64} {
  func.func @lstm_seq_kernel(%arg0: i32, %arg1: i32, %arg2: memref<64x128xf32, #tpu.memory_space<vmem>>, %arg3: memref<1x128x512xf32, #tpu.memory_space<vmem>>, %arg4: memref<1x128x512xf32, #tpu.memory_space<vmem>>, %arg5: memref<1x1x512xf32, #tpu.memory_space<vmem>>, %arg6: memref<64x128xbf16, #tpu.memory_space<vmem>>, %arg7: memref<64x512xf32, #tpu.memory_space<vmem>>, %arg8: memref<8x128xf32, #tpu.memory_space<vmem>>, %arg9: memref<8x128xf32, #tpu.memory_space<vmem>>) attributes {dimension_semantics = [#tpu.dimension_semantics<parallel>, #tpu.dimension_semantics<arbitrary>], iteration_bounds = array<i64: 2, 1>, scalar_prefetch = 0 : i64, scratch_operands = 3 : i64, tpu.core_type = #tpu.core_type<tc>, window_params = [{transform_indices = @transform_0, window_bounds = array<i64: 64, 128>}, {transform_indices = @transform_1, window_bounds = array<i64: 1, 128, 512>}, {transform_indices = @transform_2, window_bounds = array<i64: 1, 128, 512>}, {transform_indices = @transform_3, window_bounds = array<i64: 1, 1, 512>}, {transform_indices = @transform_4, window_bounds = array<i64: 64, 128>}]} {
    %c0_i32 = arith.constant 0 : i32
    %0 = arith.cmpi eq, %arg1, %c0_i32 : i32
    %1 = arith.extui %0 : i1 to i32
    %c0_i32_0 = arith.constant 0 : i32
    %2 = arith.cmpi ne, %1, %c0_i32_0 : i32
    scf.if %2 {
      %cst_187 = arith.constant 0.000000e+00 : f32
      %388 = vector.broadcast %cst_187 : f32 to vector<8x128xf32>
      %c0_188 = arith.constant 0 : index
      %c0_189 = arith.constant 0 : index
      %389 = vector.load %arg8[%c0_188, %c0_189] : memref<8x128xf32, #tpu.memory_space<vmem>>, vector<8x128xf32>
      tpu.vector_store %arg8[%c0_188, %c0_189], %388 {strides = array<i32>} : memref<8x128xf32, #tpu.memory_space<vmem>>, vector<8x128xf32>,
      %cst_190 = arith.constant 0.000000e+00 : f32
      %390 = vector.broadcast %cst_190 : f32 to vector<8x128xf32>
      %c0_191 = arith.constant 0 : index
      %c0_192 = arith.constant 0 : index
      %391 = vector.load %arg9[%c0_191, %c0_192] : memref<8x128xf32, #tpu.memory_space<vmem>>, vector<8x128xf32>
      tpu.vector_store %arg9[%c0_191, %c0_192], %390 {strides = array<i32>} : memref<8x128xf32, #tpu.memory_space<vmem>>, vector<8x128xf32>,
    } else {
    }
    %c0 = arith.constant 0 : index
    %c0_1 = arith.constant 0 : index
    %3 = vector.load %arg2[%c0, %c0_1] : memref<64x128xf32, #tpu.memory_space<vmem>>, vector<64x128xf32>
    %c0_2 = arith.constant 0 : index
    %c0_3 = arith.constant 0 : index
    %c0_4 = arith.constant 0 : index
    %4 = vector.load %arg3[%c0_2, %c0_3, %c0_4] : memref<1x128x512xf32, #tpu.memory_space<vmem>>, vector<1x128x512xf32>
    %5 = vector.shape_cast %4 : vector<1x128x512xf32> to vector<128x512xf32>
    %cst = arith.constant dense<0.000000e+00> : vector<64x512xf32>
    %6 = tpu.matmul %3, %5, %cst {dimension_numbers = #tpu.dot_dimension_numbers<[1], [0], [0], [1], [0, 0, 1, 1], [], []>} : vector<64x128xf32>, vector<128x512xf32>, vector<64x512xf32> -> vector<64x512xf32>
    %c0_5 = arith.constant 0 : index
    %c0_6 = arith.constant 0 : index
    %c0_7 = arith.constant 0 : index
    %7 = vector.load %arg5[%c0_5, %c0_6, %c0_7] : memref<1x1x512xf32, #tpu.memory_space<vmem>>, vector<1x1x512xf32>
    %8 = vector.shape_cast %7 : vector<1x1x512xf32> to vector<1x512xf32>
    %9 = vector.broadcast %8 : vector<1x512xf32> to vector<64x512xf32>
    %10 = arith.addf %6, %9 : vector<64x512xf32>
    %c0_8 = arith.constant 0 : index
    %c0_9 = arith.constant 0 : index
    %11 = vector.load %arg7[%c0_8, %c0_9] : memref<64x512xf32, #tpu.memory_space<vmem>>, vector<64x512xf32>
    tpu.vector_store %arg7[%c0_8, %c0_9], %10 {strides = array<i32>} : memref<64x512xf32, #tpu.memory_space<vmem>>, vector<64x512xf32>,
    %c0_i32_10 = arith.constant 0 : i32
    %c1_i32 = arith.constant 1 : i32
    %12 = arith.muli %c0_i32_10, %c1_i32 : i32
    %c0_i32_11 = arith.constant 0 : i32
    %13 = arith.addi %c0_i32_11, %12 : i32
    %c7_i32 = arith.constant 7 : i32
    %14 = arith.subi %c7_i32, %13 : i32
    %15 = arith.muli %arg0, %14 : i32
    %c1_i32_12 = arith.constant 1 : i32
    %16 = arith.subi %c1_i32_12, %arg0 : i32
    %17 = arith.muli %16, %13 : i32
    %18 = arith.addi %15, %17 : i32
    %c8_i32 = arith.constant 8 : i32
    %19 = arith.muli %18, %c8_i32 : i32
    %20 = tpu.assume_multiple %19, 8 : i32
    %21 = arith.index_cast %20 : i32 to index
    %c0_13 = arith.constant 0 : index
    %22 = vector.load %arg7[%21, %c0_13] : memref<64x512xf32, #tpu.memory_space<vmem>>, vector<8x512xf32>
    %c0_14 = arith.constant 0 : index
    %c0_15 = arith.constant 0 : index
    %c0_16 = arith.constant 0 : index
    %23 = vector.load %arg4[%c0_14, %c0_15, %c0_16] : memref<1x128x512xf32, #tpu.memory_space<vmem>>, vector<1x128x512xf32>
    %24 = vector.shape_cast %23 : vector<1x128x512xf32> to vector<128x512xf32>
    %c0_17 = arith.constant 0 : index
    %c0_18 = arith.constant 0 : index
    %25 = vector.load %arg8[%c0_17, %c0_18] : memref<8x128xf32, #tpu.memory_space<vmem>>, vector<8x128xf32>
    %c0_19 = arith.constant 0 : index
    %c0_20 = arith.constant 0 : index
    %26 = vector.load %arg9[%c0_19, %c0_20] : memref<8x128xf32, #tpu.memory_space<vmem>>, vector<8x128xf32>
    %cst_21 = arith.constant dense<0.000000e+00> : vector<8x512xf32>
    %27 = tpu.matmul %25, %24, %cst_21 {dimension_numbers = #tpu.dot_dimension_numbers<[1], [0], [0], [1], [0, 0, 1, 1], [], []>} : vector<8x128xf32>, vector<128x512xf32>, vector<8x512xf32> -> vector<8x512xf32>
    %28 = arith.addf %22, %27 : vector<8x512xf32>
    %29 = vector.extract_strided_slice %28 {offsets = [0, 0], sizes = [8, 128], strides = [1, 1]} : vector<8x512xf32> to vector<8x128xf32>
    %30 = arith.negf %29 : vector<8x128xf32>
    %31 = math.exp %30 : vector<8x128xf32>
    %cst_22 = arith.constant 1.000000e+00 : f32
    %32 = vector.broadcast %cst_22 : f32 to vector<8x128xf32>
    %33 = arith.addf %32, %31 : vector<8x128xf32>
    %34 = arith.divf %32, %33 : vector<8x128xf32>
    %35 = vector.extract_strided_slice %28 {offsets = [0, 128], sizes = [8, 128], strides = [1, 1]} : vector<8x512xf32> to vector<8x128xf32>
    %36 = arith.negf %35 : vector<8x128xf32>
    %37 = math.exp %36 : vector<8x128xf32>
    %cst_23 = arith.constant 1.000000e+00 : f32
    %38 = vector.broadcast %cst_23 : f32 to vector<8x128xf32>
    %39 = arith.addf %38, %37 : vector<8x128xf32>
    %40 = arith.divf %38, %39 : vector<8x128xf32>
    %41 = vector.extract_strided_slice %28 {offsets = [0, 256], sizes = [8, 128], strides = [1, 1]} : vector<8x512xf32> to vector<8x128xf32>
    %42 = math.tanh %41 : vector<8x128xf32>
    %43 = vector.extract_strided_slice %28 {offsets = [0, 384], sizes = [8, 128], strides = [1, 1]} : vector<8x512xf32> to vector<8x128xf32>
    %44 = arith.negf %43 : vector<8x128xf32>
    %45 = math.exp %44 : vector<8x128xf32>
    %cst_24 = arith.constant 1.000000e+00 : f32
    %46 = vector.broadcast %cst_24 : f32 to vector<8x128xf32>
    %47 = arith.addf %46, %45 : vector<8x128xf32>
    %48 = arith.divf %46, %47 : vector<8x128xf32>
    %49 = arith.mulf %40, %26 : vector<8x128xf32>
    %50 = arith.mulf %34, %42 : vector<8x128xf32>
    %51 = arith.addf %49, %50 : vector<8x128xf32>
    %52 = math.tanh %51 : vector<8x128xf32>
    %53 = arith.mulf %48, %52 : vector<8x128xf32>
    %c0_25 = arith.constant 0 : index
    %c0_26 = arith.constant 0 : index
    %54 = vector.load %arg8[%c0_25, %c0_26] : memref<8x128xf32, #tpu.memory_space<vmem>>, vector<8x128xf32>
    tpu.vector_store %arg8[%c0_25, %c0_26], %53 {strides = array<i32>} : memref<8x128xf32, #tpu.memory_space<vmem>>, vector<8x128xf32>,
    %c0_27 = arith.constant 0 : index
    %c0_28 = arith.constant 0 : index
    %55 = vector.load %arg9[%c0_27, %c0_28] : memref<8x128xf32, #tpu.memory_space<vmem>>, vector<8x128xf32>
    tpu.vector_store %arg9[%c0_27, %c0_28], %51 {strides = array<i32>} : memref<8x128xf32, #tpu.memory_space<vmem>>, vector<8x128xf32>,
    %56 = arith.truncf %53 : vector<8x128xf32> to vector<8x128xbf16>
    %57 = arith.index_cast %20 : i32 to index
    %c0_29 = arith.constant 0 : index
    %58 = vector.load %arg6[%57, %c0_29] : memref<64x128xbf16, #tpu.memory_space<vmem>>, vector<8x128xbf16>
    tpu.vector_store %arg6[%57, %c0_29], %56 {strides = array<i32>} : memref<64x128xbf16, #tpu.memory_space<vmem>>, vector<8x128xbf16>,
    %c1_i32_30 = arith.constant 1 : i32
    %c1_i32_31 = arith.constant 1 : i32
    %59 = arith.muli %c1_i32_30, %c1_i32_31 : i32
    %c0_i32_32 = arith.constant 0 : i32
    %60 = arith.addi %c0_i32_32, %59 : i32
    %c7_i32_33 = arith.constant 7 : i32
    %61 = arith.subi %c7_i32_33, %60 : i32
    %62 = arith.muli %arg0, %61 : i32
    %c1_i32_34 = arith.constant 1 : i32
    %63 = arith.subi %c1_i32_34, %arg0 : i32
    %64 = arith.muli %63, %60 : i32
    %65 = arith.addi %62, %64 : i32
    %c8_i32_35 = arith.constant 8 : i32
    %66 = arith.muli %65, %c8_i32_35 : i32
    %67 = tpu.assume_multiple %66, 8 : i32
    %68 = arith.index_cast %67 : i32 to index
    %c0_36 = arith.constant 0 : index
    %69 = vector.load %arg7[%68, %c0_36] : memref<64x512xf32, #tpu.memory_space<vmem>>, vector<8x512xf32>
    %c0_37 = arith.constant 0 : index
    %c0_38 = arith.constant 0 : index
    %c0_39 = arith.constant 0 : index
    %70 = vector.load %arg4[%c0_37, %c0_38, %c0_39] : memref<1x128x512xf32, #tpu.memory_space<vmem>>, vector<1x128x512xf32>
    %71 = vector.shape_cast %70 : vector<1x128x512xf32> to vector<128x512xf32>
    %c0_40 = arith.constant 0 : index
    %c0_41 = arith.constant 0 : index
    %72 = vector.load %arg8[%c0_40, %c0_41] : memref<8x128xf32, #tpu.memory_space<vmem>>, vector<8x128xf32>
    %c0_42 = arith.constant 0 : index
    %c0_43 = arith.constant 0 : index
    %73 = vector.load %arg9[%c0_42, %c0_43] : memref<8x128xf32, #tpu.memory_space<vmem>>, vector<8x128xf32>
    %cst_44 = arith.constant dense<0.000000e+00> : vector<8x512xf32>
    %74 = tpu.matmul %72, %71, %cst_44 {dimension_numbers = #tpu.dot_dimension_numbers<[1], [0], [0], [1], [0, 0, 1, 1], [], []>} : vector<8x128xf32>, vector<128x512xf32>, vector<8x512xf32> -> vector<8x512xf32>
    %75 = arith.addf %69, %74 : vector<8x512xf32>
    %76 = vector.extract_strided_slice %75 {offsets = [0, 0], sizes = [8, 128], strides = [1, 1]} : vector<8x512xf32> to vector<8x128xf32>
    %77 = arith.negf %76 : vector<8x128xf32>
    %78 = math.exp %77 : vector<8x128xf32>
    %cst_45 = arith.constant 1.000000e+00 : f32
    %79 = vector.broadcast %cst_45 : f32 to vector<8x128xf32>
    %80 = arith.addf %79, %78 : vector<8x128xf32>
    %81 = arith.divf %79, %80 : vector<8x128xf32>
    %82 = vector.extract_strided_slice %75 {offsets = [0, 128], sizes = [8, 128], strides = [1, 1]} : vector<8x512xf32> to vector<8x128xf32>
    %83 = arith.negf %82 : vector<8x128xf32>
    %84 = math.exp %83 : vector<8x128xf32>
    %cst_46 = arith.constant 1.000000e+00 : f32
    %85 = vector.broadcast %cst_46 : f32 to vector<8x128xf32>
    %86 = arith.addf %85, %84 : vector<8x128xf32>
    %87 = arith.divf %85, %86 : vector<8x128xf32>
    %88 = vector.extract_strided_slice %75 {offsets = [0, 256], sizes = [8, 128], strides = [1, 1]} : vector<8x512xf32> to vector<8x128xf32>
    %89 = math.tanh %88 : vector<8x128xf32>
    %90 = vector.extract_strided_slice %75 {offsets = [0, 384], sizes = [8, 128], strides = [1, 1]} : vector<8x512xf32> to vector<8x128xf32>
    %91 = arith.negf %90 : vector<8x128xf32>
    %92 = math.exp %91 : vector<8x128xf32>
    %cst_47 = arith.constant 1.000000e+00 : f32
    %93 = vector.broadcast %cst_47 : f32 to vector<8x128xf32>
    %94 = arith.addf %93, %92 : vector<8x128xf32>
    %95 = arith.divf %93, %94 : vector<8x128xf32>
    %96 = arith.mulf %87, %73 : vector<8x128xf32>
    %97 = arith.mulf %81, %89 : vector<8x128xf32>
    %98 = arith.addf %96, %97 : vector<8x128xf32>
    %99 = math.tanh %98 : vector<8x128xf32>
    %100 = arith.mulf %95, %99 : vector<8x128xf32>
    %c0_48 = arith.constant 0 : index
    %c0_49 = arith.constant 0 : index
    %101 = vector.load %arg8[%c0_48, %c0_49] : memref<8x128xf32, #tpu.memory_space<vmem>>, vector<8x128xf32>
    tpu.vector_store %arg8[%c0_48, %c0_49], %100 {strides = array<i32>} : memref<8x128xf32, #tpu.memory_space<vmem>>, vector<8x128xf32>,
    %c0_50 = arith.constant 0 : index
    %c0_51 = arith.constant 0 : index
    %102 = vector.load %arg9[%c0_50, %c0_51] : memref<8x128xf32, #tpu.memory_space<vmem>>, vector<8x128xf32>
    tpu.vector_store %arg9[%c0_50, %c0_51], %98 {strides = array<i32>} : memref<8x128xf32, #tpu.memory_space<vmem>>, vector<8x128xf32>,
    %103 = arith.truncf %100 : vector<8x128xf32> to vector<8x128xbf16>
    %104 = arith.index_cast %67 : i32 to index
    %c0_52 = arith.constant 0 : index
    %105 = vector.load %arg6[%104, %c0_52] : memref<64x128xbf16, #tpu.memory_space<vmem>>, vector<8x128xbf16>
    tpu.vector_store %arg6[%104, %c0_52], %103 {strides = array<i32>} : memref<64x128xbf16, #tpu.memory_space<vmem>>, vector<8x128xbf16>,
    %c2_i32 = arith.constant 2 : i32
    %c1_i32_53 = arith.constant 1 : i32
    %106 = arith.muli %c2_i32, %c1_i32_53 : i32
    %c0_i32_54 = arith.constant 0 : i32
    %107 = arith.addi %c0_i32_54, %106 : i32
    %c7_i32_55 = arith.constant 7 : i32
    %108 = arith.subi %c7_i32_55, %107 : i32
    %109 = arith.muli %arg0, %108 : i32
    %c1_i32_56 = arith.constant 1 : i32
    %110 = arith.subi %c1_i32_56, %arg0 : i32
    %111 = arith.muli %110, %107 : i32
    %112 = arith.addi %109, %111 : i32
    %c8_i32_57 = arith.constant 8 : i32
    %113 = arith.muli %112, %c8_i32_57 : i32
    %114 = tpu.assume_multiple %113, 8 : i32
    %115 = arith.index_cast %114 : i32 to index
    %c0_58 = arith.constant 0 : index
    %116 = vector.load %arg7[%115, %c0_58] : memref<64x512xf32, #tpu.memory_space<vmem>>, vector<8x512xf32>
    %c0_59 = arith.constant 0 : index
    %c0_60 = arith.constant 0 : index
    %c0_61 = arith.constant 0 : index
    %117 = vector.load %arg4[%c0_59, %c0_60, %c0_61] : memref<1x128x512xf32, #tpu.memory_space<vmem>>, vector<1x128x512xf32>
    %118 = vector.shape_cast %117 : vector<1x128x512xf32> to vector<128x512xf32>
    %c0_62 = arith.constant 0 : index
    %c0_63 = arith.constant 0 : index
    %119 = vector.load %arg8[%c0_62, %c0_63] : memref<8x128xf32, #tpu.memory_space<vmem>>, vector<8x128xf32>
    %c0_64 = arith.constant 0 : index
    %c0_65 = arith.constant 0 : index
    %120 = vector.load %arg9[%c0_64, %c0_65] : memref<8x128xf32, #tpu.memory_space<vmem>>, vector<8x128xf32>
    %cst_66 = arith.constant dense<0.000000e+00> : vector<8x512xf32>
    %121 = tpu.matmul %119, %118, %cst_66 {dimension_numbers = #tpu.dot_dimension_numbers<[1], [0], [0], [1], [0, 0, 1, 1], [], []>} : vector<8x128xf32>, vector<128x512xf32>, vector<8x512xf32> -> vector<8x512xf32>
    %122 = arith.addf %116, %121 : vector<8x512xf32>
    %123 = vector.extract_strided_slice %122 {offsets = [0, 0], sizes = [8, 128], strides = [1, 1]} : vector<8x512xf32> to vector<8x128xf32>
    %124 = arith.negf %123 : vector<8x128xf32>
    %125 = math.exp %124 : vector<8x128xf32>
    %cst_67 = arith.constant 1.000000e+00 : f32
    %126 = vector.broadcast %cst_67 : f32 to vector<8x128xf32>
    %127 = arith.addf %126, %125 : vector<8x128xf32>
    %128 = arith.divf %126, %127 : vector<8x128xf32>
    %129 = vector.extract_strided_slice %122 {offsets = [0, 128], sizes = [8, 128], strides = [1, 1]} : vector<8x512xf32> to vector<8x128xf32>
    %130 = arith.negf %129 : vector<8x128xf32>
    %131 = math.exp %130 : vector<8x128xf32>
    %cst_68 = arith.constant 1.000000e+00 : f32
    %132 = vector.broadcast %cst_68 : f32 to vector<8x128xf32>
    %133 = arith.addf %132, %131 : vector<8x128xf32>
    %134 = arith.divf %132, %133 : vector<8x128xf32>
    %135 = vector.extract_strided_slice %122 {offsets = [0, 256], sizes = [8, 128], strides = [1, 1]} : vector<8x512xf32> to vector<8x128xf32>
    %136 = math.tanh %135 : vector<8x128xf32>
    %137 = vector.extract_strided_slice %122 {offsets = [0, 384], sizes = [8, 128], strides = [1, 1]} : vector<8x512xf32> to vector<8x128xf32>
    %138 = arith.negf %137 : vector<8x128xf32>
    %139 = math.exp %138 : vector<8x128xf32>
    %cst_69 = arith.constant 1.000000e+00 : f32
    %140 = vector.broadcast %cst_69 : f32 to vector<8x128xf32>
    %141 = arith.addf %140, %139 : vector<8x128xf32>
    %142 = arith.divf %140, %141 : vector<8x128xf32>
    %143 = arith.mulf %134, %120 : vector<8x128xf32>
    %144 = arith.mulf %128, %136 : vector<8x128xf32>
    %145 = arith.addf %143, %144 : vector<8x128xf32>
    %146 = math.tanh %145 : vector<8x128xf32>
    %147 = arith.mulf %142, %146 : vector<8x128xf32>
    %c0_70 = arith.constant 0 : index
    %c0_71 = arith.constant 0 : index
    %148 = vector.load %arg8[%c0_70, %c0_71] : memref<8x128xf32, #tpu.memory_space<vmem>>, vector<8x128xf32>
    tpu.vector_store %arg8[%c0_70, %c0_71], %147 {strides = array<i32>} : memref<8x128xf32, #tpu.memory_space<vmem>>, vector<8x128xf32>,
    %c0_72 = arith.constant 0 : index
    %c0_73 = arith.constant 0 : index
    %149 = vector.load %arg9[%c0_72, %c0_73] : memref<8x128xf32, #tpu.memory_space<vmem>>, vector<8x128xf32>
    tpu.vector_store %arg9[%c0_72, %c0_73], %145 {strides = array<i32>} : memref<8x128xf32, #tpu.memory_space<vmem>>, vector<8x128xf32>,
    %150 = arith.truncf %147 : vector<8x128xf32> to vector<8x128xbf16>
    %151 = arith.index_cast %114 : i32 to index
    %c0_74 = arith.constant 0 : index
    %152 = vector.load %arg6[%151, %c0_74] : memref<64x128xbf16, #tpu.memory_space<vmem>>, vector<8x128xbf16>
    tpu.vector_store %arg6[%151, %c0_74], %150 {strides = array<i32>} : memref<64x128xbf16, #tpu.memory_space<vmem>>, vector<8x128xbf16>,
    %c3_i32 = arith.constant 3 : i32
    %c1_i32_75 = arith.constant 1 : i32
    %153 = arith.muli %c3_i32, %c1_i32_75 : i32
    %c0_i32_76 = arith.constant 0 : i32
    %154 = arith.addi %c0_i32_76, %153 : i32
    %c7_i32_77 = arith.constant 7 : i32
    %155 = arith.subi %c7_i32_77, %154 : i32
    %156 = arith.muli %arg0, %155 : i32
    %c1_i32_78 = arith.constant 1 : i32
    %157 = arith.subi %c1_i32_78, %arg0 : i32
    %158 = arith.muli %157, %154 : i32
    %159 = arith.addi %156, %158 : i32
    %c8_i32_79 = arith.constant 8 : i32
    %160 = arith.muli %159, %c8_i32_79 : i32
    %161 = tpu.assume_multiple %160, 8 : i32
    %162 = arith.index_cast %161 : i32 to index
    %c0_80 = arith.constant 0 : index
    %163 = vector.load %arg7[%162, %c0_80] : memref<64x512xf32, #tpu.memory_space<vmem>>, vector<8x512xf32>
    %c0_81 = arith.constant 0 : index
    %c0_82 = arith.constant 0 : index
    %c0_83 = arith.constant 0 : index
    %164 = vector.load %arg4[%c0_81, %c0_82, %c0_83] : memref<1x128x512xf32, #tpu.memory_space<vmem>>, vector<1x128x512xf32>
    %165 = vector.shape_cast %164 : vector<1x128x512xf32> to vector<128x512xf32>
    %c0_84 = arith.constant 0 : index
    %c0_85 = arith.constant 0 : index
    %166 = vector.load %arg8[%c0_84, %c0_85] : memref<8x128xf32, #tpu.memory_space<vmem>>, vector<8x128xf32>
    %c0_86 = arith.constant 0 : index
    %c0_87 = arith.constant 0 : index
    %167 = vector.load %arg9[%c0_86, %c0_87] : memref<8x128xf32, #tpu.memory_space<vmem>>, vector<8x128xf32>
    %cst_88 = arith.constant dense<0.000000e+00> : vector<8x512xf32>
    %168 = tpu.matmul %166, %165, %cst_88 {dimension_numbers = #tpu.dot_dimension_numbers<[1], [0], [0], [1], [0, 0, 1, 1], [], []>} : vector<8x128xf32>, vector<128x512xf32>, vector<8x512xf32> -> vector<8x512xf32>
    %169 = arith.addf %163, %168 : vector<8x512xf32>
    %170 = vector.extract_strided_slice %169 {offsets = [0, 0], sizes = [8, 128], strides = [1, 1]} : vector<8x512xf32> to vector<8x128xf32>
    %171 = arith.negf %170 : vector<8x128xf32>
    %172 = math.exp %171 : vector<8x128xf32>
    %cst_89 = arith.constant 1.000000e+00 : f32
    %173 = vector.broadcast %cst_89 : f32 to vector<8x128xf32>
    %174 = arith.addf %173, %172 : vector<8x128xf32>
    %175 = arith.divf %173, %174 : vector<8x128xf32>
    %176 = vector.extract_strided_slice %169 {offsets = [0, 128], sizes = [8, 128], strides = [1, 1]} : vector<8x512xf32> to vector<8x128xf32>
    %177 = arith.negf %176 : vector<8x128xf32>
    %178 = math.exp %177 : vector<8x128xf32>
    %cst_90 = arith.constant 1.000000e+00 : f32
    %179 = vector.broadcast %cst_90 : f32 to vector<8x128xf32>
    %180 = arith.addf %179, %178 : vector<8x128xf32>
    %181 = arith.divf %179, %180 : vector<8x128xf32>
    %182 = vector.extract_strided_slice %169 {offsets = [0, 256], sizes = [8, 128], strides = [1, 1]} : vector<8x512xf32> to vector<8x128xf32>
    %183 = math.tanh %182 : vector<8x128xf32>
    %184 = vector.extract_strided_slice %169 {offsets = [0, 384], sizes = [8, 128], strides = [1, 1]} : vector<8x512xf32> to vector<8x128xf32>
    %185 = arith.negf %184 : vector<8x128xf32>
    %186 = math.exp %185 : vector<8x128xf32>
    %cst_91 = arith.constant 1.000000e+00 : f32
    %187 = vector.broadcast %cst_91 : f32 to vector<8x128xf32>
    %188 = arith.addf %187, %186 : vector<8x128xf32>
    %189 = arith.divf %187, %188 : vector<8x128xf32>
    %190 = arith.mulf %181, %167 : vector<8x128xf32>
    %191 = arith.mulf %175, %183 : vector<8x128xf32>
    %192 = arith.addf %190, %191 : vector<8x128xf32>
    %193 = math.tanh %192 : vector<8x128xf32>
    %194 = arith.mulf %189, %193 : vector<8x128xf32>
    %c0_92 = arith.constant 0 : index
    %c0_93 = arith.constant 0 : index
    %195 = vector.load %arg8[%c0_92, %c0_93] : memref<8x128xf32, #tpu.memory_space<vmem>>, vector<8x128xf32>
    tpu.vector_store %arg8[%c0_92, %c0_93], %194 {strides = array<i32>} : memref<8x128xf32, #tpu.memory_space<vmem>>, vector<8x128xf32>,
    %c0_94 = arith.constant 0 : index
    %c0_95 = arith.constant 0 : index
    %196 = vector.load %arg9[%c0_94, %c0_95] : memref<8x128xf32, #tpu.memory_space<vmem>>, vector<8x128xf32>
    tpu.vector_store %arg9[%c0_94, %c0_95], %192 {strides = array<i32>} : memref<8x128xf32, #tpu.memory_space<vmem>>, vector<8x128xf32>,
    %197 = arith.truncf %194 : vector<8x128xf32> to vector<8x128xbf16>
    %198 = arith.index_cast %161 : i32 to index
    %c0_96 = arith.constant 0 : index
    %199 = vector.load %arg6[%198, %c0_96] : memref<64x128xbf16, #tpu.memory_space<vmem>>, vector<8x128xbf16>
    tpu.vector_store %arg6[%198, %c0_96], %197 {strides = array<i32>} : memref<64x128xbf16, #tpu.memory_space<vmem>>, vector<8x128xbf16>,
    %c4_i32 = arith.constant 4 : i32
    %c1_i32_97 = arith.constant 1 : i32
    %200 = arith.muli %c4_i32, %c1_i32_97 : i32
    %c0_i32_98 = arith.constant 0 : i32
    %201 = arith.addi %c0_i32_98, %200 : i32
    %c7_i32_99 = arith.constant 7 : i32
    %202 = arith.subi %c7_i32_99, %201 : i32
    %203 = arith.muli %arg0, %202 : i32
    %c1_i32_100 = arith.constant 1 : i32
    %204 = arith.subi %c1_i32_100, %arg0 : i32
    %205 = arith.muli %204, %201 : i32
    %206 = arith.addi %203, %205 : i32
    %c8_i32_101 = arith.constant 8 : i32
    %207 = arith.muli %206, %c8_i32_101 : i32
    %208 = tpu.assume_multiple %207, 8 : i32
    %209 = arith.index_cast %208 : i32 to index
    %c0_102 = arith.constant 0 : index
    %210 = vector.load %arg7[%209, %c0_102] : memref<64x512xf32, #tpu.memory_space<vmem>>, vector<8x512xf32>
    %c0_103 = arith.constant 0 : index
    %c0_104 = arith.constant 0 : index
    %c0_105 = arith.constant 0 : index
    %211 = vector.load %arg4[%c0_103, %c0_104, %c0_105] : memref<1x128x512xf32, #tpu.memory_space<vmem>>, vector<1x128x512xf32>
    %212 = vector.shape_cast %211 : vector<1x128x512xf32> to vector<128x512xf32>
    %c0_106 = arith.constant 0 : index
    %c0_107 = arith.constant 0 : index
    %213 = vector.load %arg8[%c0_106, %c0_107] : memref<8x128xf32, #tpu.memory_space<vmem>>, vector<8x128xf32>
    %c0_108 = arith.constant 0 : index
    %c0_109 = arith.constant 0 : index
    %214 = vector.load %arg9[%c0_108, %c0_109] : memref<8x128xf32, #tpu.memory_space<vmem>>, vector<8x128xf32>
    %cst_110 = arith.constant dense<0.000000e+00> : vector<8x512xf32>
    %215 = tpu.matmul %213, %212, %cst_110 {dimension_numbers = #tpu.dot_dimension_numbers<[1], [0], [0], [1], [0, 0, 1, 1], [], []>} : vector<8x128xf32>, vector<128x512xf32>, vector<8x512xf32> -> vector<8x512xf32>
    %216 = arith.addf %210, %215 : vector<8x512xf32>
    %217 = vector.extract_strided_slice %216 {offsets = [0, 0], sizes = [8, 128], strides = [1, 1]} : vector<8x512xf32> to vector<8x128xf32>
    %218 = arith.negf %217 : vector<8x128xf32>
    %219 = math.exp %218 : vector<8x128xf32>
    %cst_111 = arith.constant 1.000000e+00 : f32
    %220 = vector.broadcast %cst_111 : f32 to vector<8x128xf32>
    %221 = arith.addf %220, %219 : vector<8x128xf32>
    %222 = arith.divf %220, %221 : vector<8x128xf32>
    %223 = vector.extract_strided_slice %216 {offsets = [0, 128], sizes = [8, 128], strides = [1, 1]} : vector<8x512xf32> to vector<8x128xf32>
    %224 = arith.negf %223 : vector<8x128xf32>
    %225 = math.exp %224 : vector<8x128xf32>
    %cst_112 = arith.constant 1.000000e+00 : f32
    %226 = vector.broadcast %cst_112 : f32 to vector<8x128xf32>
    %227 = arith.addf %226, %225 : vector<8x128xf32>
    %228 = arith.divf %226, %227 : vector<8x128xf32>
    %229 = vector.extract_strided_slice %216 {offsets = [0, 256], sizes = [8, 128], strides = [1, 1]} : vector<8x512xf32> to vector<8x128xf32>
    %230 = math.tanh %229 : vector<8x128xf32>
    %231 = vector.extract_strided_slice %216 {offsets = [0, 384], sizes = [8, 128], strides = [1, 1]} : vector<8x512xf32> to vector<8x128xf32>
    %232 = arith.negf %231 : vector<8x128xf32>
    %233 = math.exp %232 : vector<8x128xf32>
    %cst_113 = arith.constant 1.000000e+00 : f32
    %234 = vector.broadcast %cst_113 : f32 to vector<8x128xf32>
    %235 = arith.addf %234, %233 : vector<8x128xf32>
    %236 = arith.divf %234, %235 : vector<8x128xf32>
    %237 = arith.mulf %228, %214 : vector<8x128xf32>
    %238 = arith.mulf %222, %230 : vector<8x128xf32>
    %239 = arith.addf %237, %238 : vector<8x128xf32>
    %240 = math.tanh %239 : vector<8x128xf32>
    %241 = arith.mulf %236, %240 : vector<8x128xf32>
    %c0_114 = arith.constant 0 : index
    %c0_115 = arith.constant 0 : index
    %242 = vector.load %arg8[%c0_114, %c0_115] : memref<8x128xf32, #tpu.memory_space<vmem>>, vector<8x128xf32>
    tpu.vector_store %arg8[%c0_114, %c0_115], %241 {strides = array<i32>} : memref<8x128xf32, #tpu.memory_space<vmem>>, vector<8x128xf32>,
    %c0_116 = arith.constant 0 : index
    %c0_117 = arith.constant 0 : index
    %243 = vector.load %arg9[%c0_116, %c0_117] : memref<8x128xf32, #tpu.memory_space<vmem>>, vector<8x128xf32>
    tpu.vector_store %arg9[%c0_116, %c0_117], %239 {strides = array<i32>} : memref<8x128xf32, #tpu.memory_space<vmem>>, vector<8x128xf32>,
    %244 = arith.truncf %241 : vector<8x128xf32> to vector<8x128xbf16>
    %245 = arith.index_cast %208 : i32 to index
    %c0_118 = arith.constant 0 : index
    %246 = vector.load %arg6[%245, %c0_118] : memref<64x128xbf16, #tpu.memory_space<vmem>>, vector<8x128xbf16>
    tpu.vector_store %arg6[%245, %c0_118], %244 {strides = array<i32>} : memref<64x128xbf16, #tpu.memory_space<vmem>>, vector<8x128xbf16>,
    %c5_i32 = arith.constant 5 : i32
    %c1_i32_119 = arith.constant 1 : i32
    %247 = arith.muli %c5_i32, %c1_i32_119 : i32
    %c0_i32_120 = arith.constant 0 : i32
    %248 = arith.addi %c0_i32_120, %247 : i32
    %c7_i32_121 = arith.constant 7 : i32
    %249 = arith.subi %c7_i32_121, %248 : i32
    %250 = arith.muli %arg0, %249 : i32
    %c1_i32_122 = arith.constant 1 : i32
    %251 = arith.subi %c1_i32_122, %arg0 : i32
    %252 = arith.muli %251, %248 : i32
    %253 = arith.addi %250, %252 : i32
    %c8_i32_123 = arith.constant 8 : i32
    %254 = arith.muli %253, %c8_i32_123 : i32
    %255 = tpu.assume_multiple %254, 8 : i32
    %256 = arith.index_cast %255 : i32 to index
    %c0_124 = arith.constant 0 : index
    %257 = vector.load %arg7[%256, %c0_124] : memref<64x512xf32, #tpu.memory_space<vmem>>, vector<8x512xf32>
    %c0_125 = arith.constant 0 : index
    %c0_126 = arith.constant 0 : index
    %c0_127 = arith.constant 0 : index
    %258 = vector.load %arg4[%c0_125, %c0_126, %c0_127] : memref<1x128x512xf32, #tpu.memory_space<vmem>>, vector<1x128x512xf32>
    %259 = vector.shape_cast %258 : vector<1x128x512xf32> to vector<128x512xf32>
    %c0_128 = arith.constant 0 : index
    %c0_129 = arith.constant 0 : index
    %260 = vector.load %arg8[%c0_128, %c0_129] : memref<8x128xf32, #tpu.memory_space<vmem>>, vector<8x128xf32>
    %c0_130 = arith.constant 0 : index
    %c0_131 = arith.constant 0 : index
    %261 = vector.load %arg9[%c0_130, %c0_131] : memref<8x128xf32, #tpu.memory_space<vmem>>, vector<8x128xf32>
    %cst_132 = arith.constant dense<0.000000e+00> : vector<8x512xf32>
    %262 = tpu.matmul %260, %259, %cst_132 {dimension_numbers = #tpu.dot_dimension_numbers<[1], [0], [0], [1], [0, 0, 1, 1], [], []>} : vector<8x128xf32>, vector<128x512xf32>, vector<8x512xf32> -> vector<8x512xf32>
    %263 = arith.addf %257, %262 : vector<8x512xf32>
    %264 = vector.extract_strided_slice %263 {offsets = [0, 0], sizes = [8, 128], strides = [1, 1]} : vector<8x512xf32> to vector<8x128xf32>
    %265 = arith.negf %264 : vector<8x128xf32>
    %266 = math.exp %265 : vector<8x128xf32>
    %cst_133 = arith.constant 1.000000e+00 : f32
    %267 = vector.broadcast %cst_133 : f32 to vector<8x128xf32>
    %268 = arith.addf %267, %266 : vector<8x128xf32>
    %269 = arith.divf %267, %268 : vector<8x128xf32>
    %270 = vector.extract_strided_slice %263 {offsets = [0, 128], sizes = [8, 128], strides = [1, 1]} : vector<8x512xf32> to vector<8x128xf32>
    %271 = arith.negf %270 : vector<8x128xf32>
    %272 = math.exp %271 : vector<8x128xf32>
    %cst_134 = arith.constant 1.000000e+00 : f32
    %273 = vector.broadcast %cst_134 : f32 to vector<8x128xf32>
    %274 = arith.addf %273, %272 : vector<8x128xf32>
    %275 = arith.divf %273, %274 : vector<8x128xf32>
    %276 = vector.extract_strided_slice %263 {offsets = [0, 256], sizes = [8, 128], strides = [1, 1]} : vector<8x512xf32> to vector<8x128xf32>
    %277 = math.tanh %276 : vector<8x128xf32>
    %278 = vector.extract_strided_slice %263 {offsets = [0, 384], sizes = [8, 128], strides = [1, 1]} : vector<8x512xf32> to vector<8x128xf32>
    %279 = arith.negf %278 : vector<8x128xf32>
    %280 = math.exp %279 : vector<8x128xf32>
    %cst_135 = arith.constant 1.000000e+00 : f32
    %281 = vector.broadcast %cst_135 : f32 to vector<8x128xf32>
    %282 = arith.addf %281, %280 : vector<8x128xf32>
    %283 = arith.divf %281, %282 : vector<8x128xf32>
    %284 = arith.mulf %275, %261 : vector<8x128xf32>
    %285 = arith.mulf %269, %277 : vector<8x128xf32>
    %286 = arith.addf %284, %285 : vector<8x128xf32>
    %287 = math.tanh %286 : vector<8x128xf32>
    %288 = arith.mulf %283, %287 : vector<8x128xf32>
    %c0_136 = arith.constant 0 : index
    %c0_137 = arith.constant 0 : index
    %289 = vector.load %arg8[%c0_136, %c0_137] : memref<8x128xf32, #tpu.memory_space<vmem>>, vector<8x128xf32>
    tpu.vector_store %arg8[%c0_136, %c0_137], %288 {strides = array<i32>} : memref<8x128xf32, #tpu.memory_space<vmem>>, vector<8x128xf32>,
    %c0_138 = arith.constant 0 : index
    %c0_139 = arith.constant 0 : index
    %290 = vector.load %arg9[%c0_138, %c0_139] : memref<8x128xf32, #tpu.memory_space<vmem>>, vector<8x128xf32>
    tpu.vector_store %arg9[%c0_138, %c0_139], %286 {strides = array<i32>} : memref<8x128xf32, #tpu.memory_space<vmem>>, vector<8x128xf32>,
    %291 = arith.truncf %288 : vector<8x128xf32> to vector<8x128xbf16>
    %292 = arith.index_cast %255 : i32 to index
    %c0_140 = arith.constant 0 : index
    %293 = vector.load %arg6[%292, %c0_140] : memref<64x128xbf16, #tpu.memory_space<vmem>>, vector<8x128xbf16>
    tpu.vector_store %arg6[%292, %c0_140], %291 {strides = array<i32>} : memref<64x128xbf16, #tpu.memory_space<vmem>>, vector<8x128xbf16>,
    %c6_i32 = arith.constant 6 : i32
    %c1_i32_141 = arith.constant 1 : i32
    %294 = arith.muli %c6_i32, %c1_i32_141 : i32
    %c0_i32_142 = arith.constant 0 : i32
    %295 = arith.addi %c0_i32_142, %294 : i32
    %c7_i32_143 = arith.constant 7 : i32
    %296 = arith.subi %c7_i32_143, %295 : i32
    %297 = arith.muli %arg0, %296 : i32
    %c1_i32_144 = arith.constant 1 : i32
    %298 = arith.subi %c1_i32_144, %arg0 : i32
    %299 = arith.muli %298, %295 : i32
    %300 = arith.addi %297, %299 : i32
    %c8_i32_145 = arith.constant 8 : i32
    %301 = arith.muli %300, %c8_i32_145 : i32
    %302 = tpu.assume_multiple %301, 8 : i32
    %303 = arith.index_cast %302 : i32 to index
    %c0_146 = arith.constant 0 : index
    %304 = vector.load %arg7[%303, %c0_146] : memref<64x512xf32, #tpu.memory_space<vmem>>, vector<8x512xf32>
    %c0_147 = arith.constant 0 : index
    %c0_148 = arith.constant 0 : index
    %c0_149 = arith.constant 0 : index
    %305 = vector.load %arg4[%c0_147, %c0_148, %c0_149] : memref<1x128x512xf32, #tpu.memory_space<vmem>>, vector<1x128x512xf32>
    %306 = vector.shape_cast %305 : vector<1x128x512xf32> to vector<128x512xf32>
    %c0_150 = arith.constant 0 : index
    %c0_151 = arith.constant 0 : index
    %307 = vector.load %arg8[%c0_150, %c0_151] : memref<8x128xf32, #tpu.memory_space<vmem>>, vector<8x128xf32>
    %c0_152 = arith.constant 0 : index
    %c0_153 = arith.constant 0 : index
    %308 = vector.load %arg9[%c0_152, %c0_153] : memref<8x128xf32, #tpu.memory_space<vmem>>, vector<8x128xf32>
    %cst_154 = arith.constant dense<0.000000e+00> : vector<8x512xf32>
    %309 = tpu.matmul %307, %306, %cst_154 {dimension_numbers = #tpu.dot_dimension_numbers<[1], [0], [0], [1], [0, 0, 1, 1], [], []>} : vector<8x128xf32>, vector<128x512xf32>, vector<8x512xf32> -> vector<8x512xf32>
    %310 = arith.addf %304, %309 : vector<8x512xf32>
    %311 = vector.extract_strided_slice %310 {offsets = [0, 0], sizes = [8, 128], strides = [1, 1]} : vector<8x512xf32> to vector<8x128xf32>
    %312 = arith.negf %311 : vector<8x128xf32>
    %313 = math.exp %312 : vector<8x128xf32>
    %cst_155 = arith.constant 1.000000e+00 : f32
    %314 = vector.broadcast %cst_155 : f32 to vector<8x128xf32>
    %315 = arith.addf %314, %313 : vector<8x128xf32>
    %316 = arith.divf %314, %315 : vector<8x128xf32>
    %317 = vector.extract_strided_slice %310 {offsets = [0, 128], sizes = [8, 128], strides = [1, 1]} : vector<8x512xf32> to vector<8x128xf32>
    %318 = arith.negf %317 : vector<8x128xf32>
    %319 = math.exp %318 : vector<8x128xf32>
    %cst_156 = arith.constant 1.000000e+00 : f32
    %320 = vector.broadcast %cst_156 : f32 to vector<8x128xf32>
    %321 = arith.addf %320, %319 : vector<8x128xf32>
    %322 = arith.divf %320, %321 : vector<8x128xf32>
    %323 = vector.extract_strided_slice %310 {offsets = [0, 256], sizes = [8, 128], strides = [1, 1]} : vector<8x512xf32> to vector<8x128xf32>
    %324 = math.tanh %323 : vector<8x128xf32>
    %325 = vector.extract_strided_slice %310 {offsets = [0, 384], sizes = [8, 128], strides = [1, 1]} : vector<8x512xf32> to vector<8x128xf32>
    %326 = arith.negf %325 : vector<8x128xf32>
    %327 = math.exp %326 : vector<8x128xf32>
    %cst_157 = arith.constant 1.000000e+00 : f32
    %328 = vector.broadcast %cst_157 : f32 to vector<8x128xf32>
    %329 = arith.addf %328, %327 : vector<8x128xf32>
    %330 = arith.divf %328, %329 : vector<8x128xf32>
    %331 = arith.mulf %322, %308 : vector<8x128xf32>
    %332 = arith.mulf %316, %324 : vector<8x128xf32>
    %333 = arith.addf %331, %332 : vector<8x128xf32>
    %334 = math.tanh %333 : vector<8x128xf32>
    %335 = arith.mulf %330, %334 : vector<8x128xf32>
    %c0_158 = arith.constant 0 : index
    %c0_159 = arith.constant 0 : index
    %336 = vector.load %arg8[%c0_158, %c0_159] : memref<8x128xf32, #tpu.memory_space<vmem>>, vector<8x128xf32>
    tpu.vector_store %arg8[%c0_158, %c0_159], %335 {strides = array<i32>} : memref<8x128xf32, #tpu.memory_space<vmem>>, vector<8x128xf32>,
    %c0_160 = arith.constant 0 : index
    %c0_161 = arith.constant 0 : index
    %337 = vector.load %arg9[%c0_160, %c0_161] : memref<8x128xf32, #tpu.memory_space<vmem>>, vector<8x128xf32>
    tpu.vector_store %arg9[%c0_160, %c0_161], %333 {strides = array<i32>} : memref<8x128xf32, #tpu.memory_space<vmem>>, vector<8x128xf32>,
    %338 = arith.truncf %335 : vector<8x128xf32> to vector<8x128xbf16>
    %339 = arith.index_cast %302 : i32 to index
    %c0_162 = arith.constant 0 : index
    %340 = vector.load %arg6[%339, %c0_162] : memref<64x128xbf16, #tpu.memory_space<vmem>>, vector<8x128xbf16>
    tpu.vector_store %arg6[%339, %c0_162], %338 {strides = array<i32>} : memref<64x128xbf16, #tpu.memory_space<vmem>>, vector<8x128xbf16>,
    %c7_i32_163 = arith.constant 7 : i32
    %c1_i32_164 = arith.constant 1 : i32
    %341 = arith.muli %c7_i32_163, %c1_i32_164 : i32
    %c0_i32_165 = arith.constant 0 : i32
    %342 = arith.addi %c0_i32_165, %341 : i32
    %c7_i32_166 = arith.constant 7 : i32
    %343 = arith.subi %c7_i32_166, %342 : i32
    %344 = arith.muli %arg0, %343 : i32
    %c1_i32_167 = arith.constant 1 : i32
    %345 = arith.subi %c1_i32_167, %arg0 : i32
    %346 = arith.muli %345, %342 : i32
    %347 = arith.addi %344, %346 : i32
    %c8_i32_168 = arith.constant 8 : i32
    %348 = arith.muli %347, %c8_i32_168 : i32
    %349 = tpu.assume_multiple %348, 8 : i32
    %350 = arith.index_cast %349 : i32 to index
    %c0_169 = arith.constant 0 : index
    %351 = vector.load %arg7[%350, %c0_169] : memref<64x512xf32, #tpu.memory_space<vmem>>, vector<8x512xf32>
    %c0_170 = arith.constant 0 : index
    %c0_171 = arith.constant 0 : index
    %c0_172 = arith.constant 0 : index
    %352 = vector.load %arg4[%c0_170, %c0_171, %c0_172] : memref<1x128x512xf32, #tpu.memory_space<vmem>>, vector<1x128x512xf32>
    %353 = vector.shape_cast %352 : vector<1x128x512xf32> to vector<128x512xf32>
    %c0_173 = arith.constant 0 : index
    %c0_174 = arith.constant 0 : index
    %354 = vector.load %arg8[%c0_173, %c0_174] : memref<8x128xf32, #tpu.memory_space<vmem>>, vector<8x128xf32>
    %c0_175 = arith.constant 0 : index
    %c0_176 = arith.constant 0 : index
    %355 = vector.load %arg9[%c0_175, %c0_176] : memref<8x128xf32, #tpu.memory_space<vmem>>, vector<8x128xf32>
    %cst_177 = arith.constant dense<0.000000e+00> : vector<8x512xf32>
    %356 = tpu.matmul %354, %353, %cst_177 {dimension_numbers = #tpu.dot_dimension_numbers<[1], [0], [0], [1], [0, 0, 1, 1], [], []>} : vector<8x128xf32>, vector<128x512xf32>, vector<8x512xf32> -> vector<8x512xf32>
    %357 = arith.addf %351, %356 : vector<8x512xf32>
    %358 = vector.extract_strided_slice %357 {offsets = [0, 0], sizes = [8, 128], strides = [1, 1]} : vector<8x512xf32> to vector<8x128xf32>
    %359 = arith.negf %358 : vector<8x128xf32>
    %360 = math.exp %359 : vector<8x128xf32>
    %cst_178 = arith.constant 1.000000e+00 : f32
    %361 = vector.broadcast %cst_178 : f32 to vector<8x128xf32>
    %362 = arith.addf %361, %360 : vector<8x128xf32>
    %363 = arith.divf %361, %362 : vector<8x128xf32>
    %364 = vector.extract_strided_slice %357 {offsets = [0, 128], sizes = [8, 128], strides = [1, 1]} : vector<8x512xf32> to vector<8x128xf32>
    %365 = arith.negf %364 : vector<8x128xf32>
    %366 = math.exp %365 : vector<8x128xf32>
    %cst_179 = arith.constant 1.000000e+00 : f32
    %367 = vector.broadcast %cst_179 : f32 to vector<8x128xf32>
    %368 = arith.addf %367, %366 : vector<8x128xf32>
    %369 = arith.divf %367, %368 : vector<8x128xf32>
    %370 = vector.extract_strided_slice %357 {offsets = [0, 256], sizes = [8, 128], strides = [1, 1]} : vector<8x512xf32> to vector<8x128xf32>
    %371 = math.tanh %370 : vector<8x128xf32>
    %372 = vector.extract_strided_slice %357 {offsets = [0, 384], sizes = [8, 128], strides = [1, 1]} : vector<8x512xf32> to vector<8x128xf32>
    %373 = arith.negf %372 : vector<8x128xf32>
    %374 = math.exp %373 : vector<8x128xf32>
    %cst_180 = arith.constant 1.000000e+00 : f32
    %375 = vector.broadcast %cst_180 : f32 to vector<8x128xf32>
    %376 = arith.addf %375, %374 : vector<8x128xf32>
    %377 = arith.divf %375, %376 : vector<8x128xf32>
    %378 = arith.mulf %369, %355 : vector<8x128xf32>
    %379 = arith.mulf %363, %371 : vector<8x128xf32>
    %380 = arith.addf %378, %379 : vector<8x128xf32>
    %381 = math.tanh %380 : vector<8x128xf32>
    %382 = arith.mulf %377, %381 : vector<8x128xf32>
    %c0_181 = arith.constant 0 : index
    %c0_182 = arith.constant 0 : index
    %383 = vector.load %arg8[%c0_181, %c0_182] : memref<8x128xf32, #tpu.memory_space<vmem>>, vector<8x128xf32>
    tpu.vector_store %arg8[%c0_181, %c0_182], %382 {strides = array<i32>} : memref<8x128xf32, #tpu.memory_space<vmem>>, vector<8x128xf32>,
    %c0_183 = arith.constant 0 : index
    %c0_184 = arith.constant 0 : index
    %384 = vector.load %arg9[%c0_183, %c0_184] : memref<8x128xf32, #tpu.memory_space<vmem>>, vector<8x128xf32>
    tpu.vector_store %arg9[%c0_183, %c0_184], %380 {strides = array<i32>} : memref<8x128xf32, #tpu.memory_space<vmem>>, vector<8x128xf32>,
    %385 = arith.truncf %382 : vector<8x128xf32> to vector<8x128xbf16>
    %386 = arith.index_cast %349 : i32 to index
    %c0_185 = arith.constant 0 : index
    %387 = vector.load %arg6[%386, %c0_185] : memref<64x128xbf16, #tpu.memory_space<vmem>>, vector<8x128xbf16>
    tpu.vector_store %arg6[%386, %c0_185], %385 {strides = array<i32>} : memref<64x128xbf16, #tpu.memory_space<vmem>>, vector<8x128xbf16>,
    %c8_i32_186 = arith.constant 8 : i32
    return
  }
  func.func @transform_0(%arg0: i32, %arg1: i32) -> (i32, i32) {
    %c0_i32 = arith.constant 0 : i32
    %0 = arith.subi %c0_i32, %arg1 : i32
    %1 = arith.muli %arg0, %0 : i32
    %c1_i32 = arith.constant 1 : i32
    %2 = arith.subi %c1_i32, %arg0 : i32
    %3 = arith.muli %2, %arg1 : i32
    %4 = arith.addi %1, %3 : i32
    %c0_i32_0 = arith.constant 0 : i32
    %c0_i32_1 = arith.constant 0 : i32
    return %4, %c0_i32_0 : i32, i32
  }
  func.func @transform_1(%arg0: i32, %arg1: i32) -> (i32, i32, i32) {
    %c0_i32 = arith.constant 0 : i32
    %c0_i32_0 = arith.constant 0 : i32
    %c0_i32_1 = arith.constant 0 : i32
    return %arg0, %c0_i32, %c0_i32_0 : i32, i32, i32
  }
  func.func @transform_2(%arg0: i32, %arg1: i32) -> (i32, i32, i32) {
    %c0_i32 = arith.constant 0 : i32
    %c0_i32_0 = arith.constant 0 : i32
    %c0_i32_1 = arith.constant 0 : i32
    return %arg0, %c0_i32, %c0_i32_0 : i32, i32, i32
  }
  func.func @transform_3(%arg0: i32, %arg1: i32) -> (i32, i32, i32) {
    %c0_i32 = arith.constant 0 : i32
    %c0_i32_0 = arith.constant 0 : i32
    %c0_i32_1 = arith.constant 0 : i32
    return %arg0, %c0_i32, %c0_i32_0 : i32, i32, i32
  }
  func.func @transform_4(%arg0: i32, %arg1: i32) -> (i32, i32) {
    %c0_i32 = arith.constant 0 : i32
    %0 = arith.subi %c0_i32, %arg1 : i32
    %1 = arith.muli %arg0, %0 : i32
    %c1_i32 = arith.constant 1 : i32
    %2 = arith.subi %c1_i32, %arg0 : i32
    %3 = arith.muli %2, %arg1 : i32
    %4 = arith.addi %1, %3 : i32
    %c0_i32_0 = arith.constant 0 : i32
    return %4, %arg0 : i32, i32
  }
}

</mosaic_0001>

<llo_original>
// kernel: forward.5
$region0: #{forward.5}
  #allocation0 [shape = 'u32[]', space=smem, size = 0x4, offset = 0x4, fixed_abs, tag = 'smem constant byte address 0x4 - core index']
  #allocation1 [shape = 'u32[144,128]{1,0:T(1,128)}', space=vmem, size = 0x12000, scoped, tag = 'internal scratch']
  %s0 = inlined_call_operand.vmem [shape: f32[8,256], index: 0, kind: input, shape index: {}]
  %s1 = inlined_call_operand.vmem [shape: f32[256,64], index: 1, kind: input, shape index: {}]
  %s2 = inlined_call_operand.vmem [shape: f32[1,64], index: 2, kind: input, shape index: {}]
  %s3 = inlined_call_operand.vmem [shape: f32[64,16], index: 3, kind: input, shape index: {}]
  %s4 = inlined_call_operand.vmem [shape: f32[1,16], index: 4, kind: input, shape index: {}]
  %s5 = inlined_call_operand.vmem [shape: f32[16,3], index: 5, kind: input, shape index: {}]
  %s6 = inlined_call_operand.vmem [shape: f32[1,3], index: 6, kind: input, shape index: {}]
  %s7 = inlined_call_operand.vmem [shape: f32[8,3], index: 7, kind: output, shape index: {}]
  %s8 = sld [smem:[#allocation0]]
  $region38: #{forward.5} parent=0
    _
  %s10 = ssub.s32 1, %s8
  %s11 = scalar_select 0, %s10, %s8
  // Predicated region
  $region2: #{forward.5} parent=0 // pred_check
    _
  $region3: #{forward.5} parent=0 // pred_check_branch
    %13 = sbr.rel (0) target = $region5
  $region4: #{forward.5} parent=0 // pred_region
    _
  $region5: #{forward.5} parent=0 // pred_fallthru
    _
  // Predicated region
  $region6: #{forward.5} parent=0 // pred_check
    _
  $region7: #{forward.5} parent=0 // pred_check_branch
    %15 = sbr.rel (0) target = $region9
  $region8: #{forward.5} parent=0 // pred_region
    _
  $region9: #{forward.5} parent=0 // pred_fallthru
    _
  // Predicated region
  $region10: #{forward.5} parent=0 // pred_check
    _
  $region11: #{forward.5} parent=0 // pred_check_branch
    %17 = sbr.rel (0) target = $region13
  $region12: #{forward.5} parent=0 // pred_region
    _
  $region13: #{forward.5} parent=0 // pred_fallthru
    _
  // Predicated region
  $region14: #{forward.5} parent=0 // pred_check
    _
  $region15: #{forward.5} parent=0 // pred_check_branch
    %19 = sbr.rel (0) target = $region17
  $region16: #{forward.5} parent=0 // pred_region
    _
  $region17: #{forward.5} parent=0 // pred_fallthru
    _
  // Predicated region
  $region18: #{forward.5} parent=0 // pred_check
    _
  $region19: #{forward.5} parent=0 // pred_check_branch
    %21 = sbr.rel (0) target = $region21
  $region20: #{forward.5} parent=0 // pred_region
    _
  $region21: #{forward.5} parent=0 // pred_fallthru
    _
  // Predicated region
  $region22: #{forward.5} parent=0 // pred_check
    _
  $region23: #{forward.5} parent=0 // pred_check_branch
    %23 = sbr.rel (0) target = $region25
  $region24: #{forward.5} parent=0 // pred_region
    _
  $region25: #{forward.5} parent=0 // pred_fallthru
    _
  // Predicated region
  $region26: #{forward.5} parent=0 // pred_check
    _
  $region27: #{forward.5} parent=0 // pred_check_branch
    %25 = sbr.rel (0) target = $region29
  $region28: #{forward.5} parent=0 // pred_region
    _
  $region29: #{forward.5} parent=0 // pred_fallthru
    _
  %v26 = vld [vmem:[%s0] sm:$0xff]
  %v27 = vld [vmem:[%s0 + $0x8] sm:$0xff]
  %v28 = vmul.f32 %v26, 0.125
  %v29 = vmul.f32 %v27, 0.125
  %v30 = vld [vmem:[%s1] sm:$0xff]
  %v31 = vld [vmem:[%s1 + $0x8] sm:$0xff]
  %v32 = vld [vmem:[%s1 + $0x10] sm:$0xff]
  %v33 = vld [vmem:[%s1 + $0x18] sm:$0xff]
  %v34 = vld [vmem:[%s1 + $0x20] sm:$0xff]
  %v35 = vld [vmem:[%s1 + $0x28] sm:$0xff]
  %v36 = vld [vmem:[%s1 + $0x30] sm:$0xff]
  %v37 = vld [vmem:[%s1 + $0x38] sm:$0xff]
  %v38 = vld [vmem:[%s1 + $0x40] sm:$0xff]
  %v39 = vld [vmem:[%s1 + $0x48] sm:$0xff]
  %v40 = vld [vmem:[%s1 + $0x50] sm:$0xff]
  %v41 = vld [vmem:[%s1 + $0x58] sm:$0xff]
  %v42 = vld [vmem:[%s1 + $0x60] sm:$0xff]
  %v43 = vld [vmem:[%s1 + $0x68] sm:$0xff]
  %v44 = vld [vmem:[%s1 + $0x70] sm:$0xff]
  %v45 = vld [vmem:[%s1 + $0x78] sm:$0xff]
  %v46 = vld [vmem:[%s1 + $0x80] sm:$0xff]
  %v47 = vld [vmem:[%s1 + $0x88] sm:$0xff]
  %v48 = vld [vmem:[%s1 + $0x90] sm:$0xff]
  %v49 = vld [vmem:[%s1 + $0x98] sm:$0xff]
  %v50 = vld [vmem:[%s1 + $0xa0] sm:$0xff]
  %v51 = vld [vmem:[%s1 + $0xa8] sm:$0xff]
  %v52 = vld [vmem:[%s1 + $0xb0] sm:$0xff]
  %v53 = vld [vmem:[%s1 + $0xb8] sm:$0xff]
  %v54 = vld [vmem:[%s1 + $0xc0] sm:$0xff]
  %v55 = vld [vmem:[%s1 + $0xc8] sm:$0xff]
  %v56 = vld [vmem:[%s1 + $0xd0] sm:$0xff]
  %v57 = vld [vmem:[%s1 + $0xd8] sm:$0xff]
  %v58 = vld [vmem:[%s1 + $0xe0] sm:$0xff]
  %v59 = vld [vmem:[%s1 + $0xe8] sm:$0xff]
  %v60 = vld [vmem:[%s1 + $0xf0] sm:$0xff]
  %v61 = vld [vmem:[%s1 + $0xf8] sm:$0xff]
  %v62 = vld [vmem:[%s2] sm:$0x1]
  %v64 = vlaneseq
  %v65 = vshrl.u32 %v64, 7
  %v66 = vsub.s32 0, %v65
  %v67 = vrot.slane %v62, %v66
  %69 = vmatprep.subr.mxu0 0.0
  %70 = vmatpush1.msra.mxu0 %v30
  %71 = vmatprep.subr.mxu0 0.0
  %72 = vmatpush1.msra.mxu0 %v31
  %73 = vmatprep.subr.mxu0 0.0
  %74 = vmatpush1.msra.mxu0 %v32
  %75 = vmatprep.subr.mxu0 0.0
  %76 = vmatpush1.msra.mxu0 %v33
  %77 = vmatprep.subr.mxu0 0.0
  %78 = vmatpush1.msra.mxu0 %v34
  %79 = vmatprep.subr.mxu0 0.0
  %80 = vmatpush1.msra.mxu0 %v35
  %81 = vmatprep.subr.mxu0 0.0
  %82 = vmatpush1.msra.mxu0 %v36
  %83 = vmatprep.subr.mxu0 0.0
  %84 = vmatpush1.msra.mxu0 %v37
  %85 = vmatprep.subr.mxu0 0.0
  %86 = vmatpush1.msra.mxu0 %v38
  %87 = vmatprep.subr.mxu0 0.0
  %88 = vmatpush1.msra.mxu0 %v39
  %89 = vmatprep.subr.mxu0 0.0
  %90 = vmatpush1.msra.mxu0 %v40
  %91 = vmatprep.subr.mxu0 0.0
  %92 = vmatpush1.msra.mxu0 %v41
  %93 = vmatprep.subr.mxu0 0.0
  %94 = vmatpush1.msra.mxu0 %v42
  %95 = vmatprep.subr.mxu0 0.0
  %96 = vmatpush1.msra.mxu0 %v43
  %97 = vmatprep.subr.mxu0 0.0
  %98 = vmatpush1.msra.mxu0 %v44
  %99 = vmatprep.subr.mxu0 0.0
  %100 = vmatpush1.msra.mxu0 %v45
  %101 = vmatprep.subr.mxu0 0.0
  %102 = vmatpush1.msra.mxu0 %v46
  %103 = vmatprep.subr.mxu0 0.0
  %104 = vmatpush1.msra.mxu0 %v47
  %105 = vmatprep.subr.mxu0 0.0
  %106 = vmatpush1.msra.mxu0 %v48
  %107 = vmatprep.subr.mxu0 0.0
  %108 = vmatpush1.msra.mxu0 %v49
  %109 = vmatprep.subr.mxu0 0.0
  %110 = vmatpush1.msra.mxu0 %v50
  %111 = vmatprep.subr.mxu0 0.0
  %112 = vmatpush1.msra.mxu0 %v51
  %113 = vmatprep.subr.mxu0 0.0
  %114 = vmatpush1.msra.mxu0 %v52
  %115 = vmatprep.subr.mxu0 0.0
  %116 = vmatpush1.msra.mxu0 %v53
  %117 = vmatprep.subr.mxu0 0.0
  %118 = vmatpush1.msra.mxu0 %v54
  %119 = vmatprep.subr.mxu0 0.0
  %120 = vmatpush1.msra.mxu0 %v55
  %121 = vmatprep.subr.mxu0 0.0
  %122 = vmatpush1.msra.mxu0 %v56
  %123 = vmatprep.subr.mxu0 0.0
  %124 = vmatpush1.msra.mxu0 %v57
  %125 = vmatprep.subr.mxu0 0.0
  %126 = vmatpush1.msra.mxu0 %v58
  %127 = vmatprep.subr.mxu0 0.0
  %128 = vmatpush1.msra.mxu0 %v59
  %129 = vmatprep.subr.mxu0 0.0
  %130 = vmatpush1.msra.mxu0 %v60
  %131 = vmatprep.subr.mxu0 0.0
  %132 = vmatpush1.msra.mxu0 %v61
  %133 = vmatprep.mubr.f32.mxu0 %v29
  %134 = vmatmul.mubr.f32.gmra.mrb[0].mxu0 %v28
  %v135 = vpop.f32.mrb[0].mxu0
  %v136 = vadd.f32 %v67, %v135
  %v137 = vpop.f32.mrb[0].mxu0
  %138 = vdwg.mxu0
  %v139 = vmax.f32 %v136, 0.0
  %v140 = vld [vmem:[%s3] sm:$0xff]
  %v141 = vld [vmem:[%s3 + $0x8] sm:$0xff]
  %v142 = vld [vmem:[%s3 + $0x10] sm:$0xff]
  %v143 = vld [vmem:[%s3 + $0x18] sm:$0xff]
  %v144 = vld [vmem:[%s3 + $0x20] sm:$0xff]
  %v145 = vld [vmem:[%s3 + $0x28] sm:$0xff]
  %v146 = vld [vmem:[%s3 + $0x30] sm:$0xff]
  %v147 = vld [vmem:[%s3 + $0x38] sm:$0xff]
  %v148 = vld [vmem:[%s4] sm:$0x1]
  %v150 = vlaneseq
  %v151 = vshrl.u32 %v150, 7
  %v152 = vsub.s32 0, %v151
  %v153 = vrot.slane %v148, %v152
  %vm155 = vcmask 523264
  %v157 = vsel %vm155, %v139, 0
  %159 = vmatprep.subr.mxu0 0.0
  %160 = vmatpush1.msra.mxu0 %v140
  %161 = vmatprep.subr.mxu0 0.0
  %162 = vmatpush1.msra.mxu0 %v141
  %163 = vmatprep.subr.mxu0 0.0
  %164 = vmatpush1.msra.mxu0 %v142
  %165 = vmatprep.subr.mxu0 0.0
  %166 = vmatpush1.msra.mxu0 %v143
  %167 = vmatprep.subr.mxu0 0.0
  %168 = vmatpush1.msra.mxu0 %v144
  %169 = vmatprep.subr.mxu0 0.0
  %170 = vmatpush1.msra.mxu0 %v145
  %171 = vmatprep.subr.mxu0 0.0
  %172 = vmatpush1.msra.mxu0 %v146
  %173 = vmatprep.subr.mxu0 0.0
  %174 = vmatpush1.msra.mxu0 %v147
  %175 = vmatprep.subr.mxu0 0.0
  %176 = vmatpush1.msra.mxu0 0.0
  %177 = vmatprep.subr.mxu0 0.0
  %178 = vmatpush1.msra.mxu0 0.0
  %179 = vmatprep.subr.mxu0 0.0
  %180 = vmatpush1.msra.mxu0 0.0
  %181 = vmatprep.subr.mxu0 0.0
  %182 = vmatpush1.msra.mxu0 0.0
  %183 = vmatprep.subr.mxu0 0.0
  %184 = vmatpush1.msra.mxu0 0.0
  %185 = vmatprep.subr.mxu0 0.0
  %186 = vmatpush1.msra.mxu0 0.0
  %187 = vmatprep.subr.mxu0 0.0
  %188 = vmatpush1.msra.mxu0 0.0
  %189 = vmatprep.subr.mxu0 0.0
  %190 = vmatpush1.msra.mxu0 0.0
  %191 = vmatprep.subr.mxu0 0.0
  %192 = vmatpush1.msra.mxu0 0.0
  %193 = vmatprep.subr.mxu0 0.0
  %194 = vmatpush1.msra.mxu0 0.0
  %195 = vmatprep.subr.mxu0 0.0
  %196 = vmatpush1.msra.mxu0 0.0
  %197 = vmatprep.subr.mxu0 0.0
  %198 = vmatpush1.msra.mxu0 0.0
  %199 = vmatprep.subr.mxu0 0.0
  %200 = vmatpush1.msra.mxu0 0.0
  %201 = vmatprep.subr.mxu0 0.0
  %202 = vmatpush1.msra.mxu0 0.0
  %203 = vmatprep.subr.mxu0 0.0
  %204 = vmatpush1.msra.mxu0 0.0
  %205 = vmatprep.subr.mxu0 0.0
  %206 = vmatpush1.msra.mxu0 0.0
  %207 = vmatprep.subr.mxu0 0.0
  %208 = vmatpush1.msra.mxu0 0.0
  %209 = vmatprep.subr.mxu0 0.0
  %210 = vmatpush1.msra.mxu0 0.0
  %211 = vmatprep.subr.mxu0 0.0
  %212 = vmatpush1.msra.mxu0 0.0
  %213 = vmatprep.subr.mxu0 0.0
  %214 = vmatpush1.msra.mxu0 0.0
  %215 = vmatprep.subr.mxu0 0.0
  %216 = vmatpush1.msra.mxu0 0.0
  %217 = vmatprep.subr.mxu0 0.0
  %218 = vmatpush1.msra.mxu0 0.0
  %219 = vmatprep.subr.mxu0 0.0
  %220 = vmatpush1.msra.mxu0 0.0
  %221 = vmatprep.subr.mxu0 0.0
  %222 = vmatpush1.msra.mxu0 0.0
  %223 = vmatprep.mubr.f32.mxu0 0.0
  %224 = vmatmul.mubr.f32.gmra.mrb[0].mxu0 %v157
  %v225 = vpop.f32.mrb[0].mxu0
  %v226 = vadd.f32 %v153, %v225
  %v227 = vpop.f32.mrb[0].mxu0
  %228 = vdwg.mxu0
  %v229 = vmax.f32 %v226, 0.0
  %v230 = vld [vmem:[%s5] sm:$0xff]
  %v231 = vld [vmem:[%s5 + $0x8] sm:$0xff]
  %v232 = vld [vmem:[%s6] sm:$0x1]
  %v234 = vlaneseq
  %v235 = vshrl.u32 %v234, 7
  %v236 = vsub.s32 0, %v235
  %v237 = vrot.slane %v232, %v236
  %vm239 = vcmask 130048
  %v241 = vsel %vm239, %v229, 0
  %243 = vmatprep.subr.mxu0 0.0
  %244 = vmatpush1.msra.mxu0 %v230
  %245 = vmatprep.subr.mxu0 0.0
  %246 = vmatpush1.msra.mxu0 %v231
  %247 = vmatprep.subr.mxu0 0.0
  %248 = vmatpush1.msra.mxu0 0.0
  %249 = vmatprep.subr.mxu0 0.0
  %250 = vmatpush1.msra.mxu0 0.0
  %251 = vmatprep.subr.mxu0 0.0
  %252 = vmatpush1.msra.mxu0 0.0
  %253 = vmatprep.subr.mxu0 0.0
  %254 = vmatpush1.msra.mxu0 0.0
  %255 = vmatprep.subr.mxu0 0.0
  %256 = vmatpush1.msra.mxu0 0.0
  %257 = vmatprep.subr.mxu0 0.0
  %258 = vmatpush1.msra.mxu0 0.0
  %259 = vmatprep.subr.mxu0 0.0
  %260 = vmatpush1.msra.mxu0 0.0
  %261 = vmatprep.subr.mxu0 0.0
  %262 = vmatpush1.msra.mxu0 0.0
  %263 = vmatprep.subr.mxu0 0.0
  %264 = vmatpush1.msra.mxu0 0.0
  %265 = vmatprep.subr.mxu0 0.0
  %266 = vmatpush1.msra.mxu0 0.0
  %267 = vmatprep.subr.mxu0 0.0
  %268 = vmatpush1.msra.mxu0 0.0
  %269 = vmatprep.subr.mxu0 0.0
  %270 = vmatpush1.msra.mxu0 0.0
  %271 = vmatprep.subr.mxu0 0.0
  %272 = vmatpush1.msra.mxu0 0.0
  %273 = vmatprep.subr.mxu0 0.0
  %274 = vmatpush1.msra.mxu0 0.0
  %275 = vmatprep.subr.mxu0 0.0
  %276 = vmatpush1.msra.mxu0 0.0
  %277 = vmatprep.subr.mxu0 0.0
  %278 = vmatpush1.msra.mxu0 0.0
  %279 = vmatprep.subr.mxu0 0.0
  %280 = vmatpush1.msra.mxu0 0.0
  %281 = vmatprep.subr.mxu0 0.0
  %282 = vmatpush1.msra.mxu0 0.0
  %283 = vmatprep.subr.mxu0 0.0
  %284 = vmatpush1.msra.mxu0 0.0
  %285 = vmatprep.subr.mxu0 0.0
  %286 = vmatpush1.msra.mxu0 0.0
  %287 = vmatprep.subr.mxu0 0.0
  %288 = vmatpush1.msra.mxu0 0.0
  %289 = vmatprep.subr.mxu0 0.0
  %290 = vmatpush1.msra.mxu0 0.0
  %291 = vmatprep.subr.mxu0 0.0
  %292 = vmatpush1.msra.mxu0 0.0
  %293 = vmatprep.subr.mxu0 0.0
  %294 = vmatpush1.msra.mxu0 0.0
  %295 = vmatprep.subr.mxu0 0.0
  %296 = vmatpush1.msra.mxu0 0.0
  %297 = vmatprep.subr.mxu0 0.0
  %298 = vmatpush1.msra.mxu0 0.0
  %299 = vmatprep.subr.mxu0 0.0
  %300 = vmatpush1.msra.mxu0 0.0
  %301 = vmatprep.subr.mxu0 0.0
  %302 = vmatpush1.msra.mxu0 0.0
  %303 = vmatprep.subr.mxu0 0.0
  %304 = vmatpush1.msra.mxu0 0.0
  %305 = vmatprep.subr.mxu0 0.0
  %306 = vmatpush1.msra.mxu0 0.0
  %307 = vmatprep.mubr.f32.mxu0 0.0
  %308 = vmatmul.mubr.f32.gmra.mrb[0].mxu0 %v241
  %v309 = vpop.f32.mrb[0].mxu0
  %v310 = vadd.f32 %v237, %v309
  %v311 = vpop.f32.mrb[0].mxu0
  %312 = vdwg.mxu0
  %vm313 = vcmask 23552
  %314 = vst.msk [vmem:[%s7] sm:$0xff] %vm313, %v310
  // Predicated region
  $region30: #{forward.5} parent=0 // pred_check
    _
  $region31: #{forward.5} parent=0 // pred_check_branch
    %316 = sbr.rel (0) target = $region33
  $region32: #{forward.5} parent=0 // pred_region
    _
  $region33: #{forward.5} parent=0 // pred_fallthru
    _
  // Predicated region
  $region34: #{forward.5} parent=0 // pred_check
    _
  $region35: #{forward.5} parent=0 // pred_check_branch
    %318 = sbr.rel (0) target = $region37
  $region36: #{forward.5} parent=0 // pred_region
    _
  $region37: #{forward.5} parent=0 // pred_fallthru
    _

// kernel: forward.3
$region0: #{forward.3}
  #allocation0 [shape = 'u32[]', space=smem, size = 0x4, offset = 0x4, fixed_abs, tag = 'smem constant byte address 0x4 - core index']
  #allocation1 [shape = 'u32[144,128]{1,0:T(1,128)}', space=vmem, size = 0x12000, scoped, tag = 'internal scratch']
  #allocation2 [shape = 'f32[64,512]{1,0:T(8,128)}', space=vmem, size = 0x20000, scoped, tag = 'scratch operand']
  #allocation3 [shape = 'f32[8,128]{1,0:T(8,128)}', space=vmem, size = 0x1000, scoped, tag = 'scratch operand']
  #allocation4 [shape = 'f32[8,128]{1,0:T(8,128)}', space=vmem, size = 0x1000, scoped, tag = 'scratch operand']
  %s0 = inlined_call_operand.vmem [shape: f32[64,128], index: 0, kind: input, shape index: {}]
  %s1 = inlined_call_operand.hbm [shape: f32[2,128,512], index: 1, kind: input, shape index: {}]
  %s2 = inlined_call_operand.hbm [shape: f32[2,128,512], index: 2, kind: input, shape index: {}]
  %s3 = inlined_call_operand.vmem [shape: f32[2,1,512], index: 3, kind: input, shape index: {}]
  %s4 = inlined_call_operand.vmem [shape: bf16[64,256], index: 4, kind: output, shape index: {}]
  %s5 = sld [smem:[#allocation0]]
  $region98: #{forward.3} parent=0
    _
  %s7 = ssub.s32 1, %s5
  %s8 = scalar_select 0, %s7, %s5
  $region1: #{forward.3} parent=0
    #allocation5 [shape = 'u8[524288]{0}', space=vmem, size = 0x80000, scoped, tag = 'input window, operand 1']
    #allocation6 [shape = 's32[2]{0}', space=sflag, size = 0x8, scoped, tag = 'scoped memory for forward.3']
    #allocation7 [shape = 'u8[524288]{0}', space=vmem, size = 0x80000, scoped, tag = 'input window, operand 2']
    #allocation8 [shape = 's32[2]{0}', space=sflag, size = 0x8, scoped, tag = 'scoped memory for forward.3']
    #allocation9 [shape = 'u8[32768]{0}', space=vmem, size = 0x8000, scoped, tag = 'output window, operand 0']
    %9 = vsyncpa [#allocation6], 0
    %s10 = scalar_lea.sflag [#allocation6], 1
    %11 = vsyncpa %s10, 0
    %12 = vsyncpa [#allocation8], 0
    %s13 = scalar_lea.sflag [#allocation8], 1
    %14 = vsyncpa %s13, 0
    loop: start=0, step=1, limit=4
    $region2: #{forward.3} parent=1 // loop_pre_header
      _
    $region3: #{forward.3} parent=1 // loop_header
      %s16 = sphi 0, %s20
      %p17 = scmp.ge.s32.totalorder %s16, 4
      %s23 = sphi 0, %s35
      %s24 = sphi 0, %s31
      %s25 = sphi 0, %s23
      %s26 = sphi 0, %s24
      %s27 = sphi 0, %s25
      %s28 = sphi 0, %s26
      %s48 = sphi 0, %s50
      %s51 = sphi 0, %s48
      %s52 = sphi 0, %s51
      %s68 = sphi 0, %s52
      %s74 = sphi 0, %s76
      %s77 = sphi 0, %s74
      %s78 = sphi 0, %s77
      %s94 = sphi 0, %s78
      %s100 = sphi 0, %s102
      %s103 = sphi 0, %s100
      %s104 = sphi 0, %s103
      %s120 = sphi 0, %s104
      %s126 = sphi 0, %s128
      %s129 = sphi 0, %s126
      %s130 = sphi 0, %s129
      %s146 = sphi 0, %s130
      %s164 = sphi 0, %s166
      %s167 = sphi 0, %s164
      %s168 = sphi 0, %s167
      %s184 = sphi 0, %s168
    $region4: #{forward.3} parent=1 // loop_header_branch
      %19 = sbr.rel (%p17) target = $region8
    $region5: #{forward.3} parent=1 // loop_body
      %s21 = ssub.s32 %s16, 1
      %s22 = ssub.s32 %s16, 2
      %s29 = sadd.s32 1, %s24
      %p30 = scmp.ge.s32.totalorder %s29, 1
      %s31 = scalar_select %p30, 0, %s29
      %s32 = sadd.s32 1, %s23
      %s33 = scalar_select %p30, %s32, %s23
      %p34 = scmp.ge.s32.totalorder %s33, 2
      %s35 = scalar_select %p34, 0, %s33
      %s36 = ssub.s32 0, %s24
      %s37 = smul.u32 %s23, %s36
      %s38 = ssub.s32 1, %s23
      %s39 = smul.u32 %s38, %s24
      %s40 = sadd.s32 %s37, %s39
      %s41 = ssub.s32 0, %s31
      %s42 = smul.u32 %s35, %s41
      %s43 = ssub.s32 1, %s35
      %s44 = smul.u32 %s43, %s31
      %s45 = sadd.s32 %s42, %s44
      %s46 = ssub.s32 %s40, %s45
      %p47 = scmp.eq.s32.totalorder %s46, 0
      %s49 = sadd.s32 %s48, 1
      %s50 = scalar_select %p47, %s48, %s49
      %p53 = pneg %p47
      %p54 = scmp.eq.s32.totalorder %s16, 1
      %p55 = por %p53, %p54
      %p56 = scmp.ne.s32.totalorder %s48, %s51
      %p57 = scmp.eq.s32.totalorder %s16, 0
      %p58 = por %p56, %p57
      %p59 = scmp.ne.s32.totalorder %s48, %s51
      %p60 = scmp.eq.s32.totalorder %s21, 1
      %p61 = por %p59, %p60
      %p62 = scmp.ne.s32.totalorder %s51, %s52
      %p63 = scmp.eq.s32.totalorder %s21, 0
      %p64 = por %p62, %p63
      %p65 = scmp.ne.s32.totalorder %s51, %s52
      %p66 = scmp.eq.s32.totalorder %s22, 1
      %p67 = por %p65, %p66
      %p69 = scmp.ne.s32.totalorder %s52, %s68
      %p70 = scmp.eq.s32.totalorder %s22, 0
      %p71 = por %p69, %p70
      %s72 = ssub.s32 %s23, %s35
      %p73 = scmp.eq.s32.totalorder %s72, 0
      %s75 = sadd.s32 %s74, 1
      %s76 = scalar_select %p73, %s74, %s75
      %p79 = pneg %p73
      %p80 = scmp.eq.s32.totalorder %s16, 1
      %p81 = por %p79, %p80
      %p82 = scmp.ne.s32.totalorder %s74, %s77
      %p83 = scmp.eq.s32.totalorder %s16, 0
      %p84 = por %p82, %p83
      %p85 = scmp.ne.s32.totalorder %s74, %s77
      %p86 = scmp.eq.s32.totalorder %s21, 1
      %p87 = por %p85, %p86
      %p88 = scmp.ne.s32.totalorder %s77, %s78
      %p89 = scmp.eq.s32.totalorder %s21, 0
      %p90 = por %p88, %p89
      %p91 = scmp.ne.s32.totalorder %s77, %s78
      %p92 = scmp.eq.s32.totalorder %s22, 1
      %p93 = por %p91, %p92
      %p95 = scmp.ne.s32.totalorder %s78, %s94
      %p96 = scmp.eq.s32.totalorder %s22, 0
      %p97 = por %p95, %p96
      %s98 = ssub.s32 %s23, %s35
      %p99 = scmp.eq.s32.totalorder %s98, 0
      %s101 = sadd.s32 %s100, 1
      %s102 = scalar_select %p99, %s100, %s101
      %p105 = pneg %p99
      %p106 = scmp.eq.s32.totalorder %s16, 1
      %p107 = por %p105, %p106
      %p108 = scmp.ne.s32.totalorder %s100, %s103
      %p109 = scmp.eq.s32.totalorder %s16, 0
      %p110 = por %p108, %p109
      %p111 = scmp.ne.s32.totalorder %s100, %s103
      %p112 = scmp.eq.s32.totalorder %s21, 1
      %p113 = por %p111, %p112
      %p114 = scmp.ne.s32.totalorder %s103, %s104
      %p115 = scmp.eq.s32.totalorder %s21, 0
      %p116 = por %p114, %p115
      %p117 = scmp.ne.s32.totalorder %s103, %s104
      %p118 = scmp.eq.s32.totalorder %s22, 1
      %p119 = por %p117, %p118
      %p121 = scmp.ne.s32.totalorder %s104, %s120
      %p122 = scmp.eq.s32.totalorder %s22, 0
      %p123 = por %p121, %p122
      %s124 = ssub.s32 %s23, %s35
      %p125 = scmp.eq.s32.totalorder %s124, 0
      %s127 = sadd.s32 %s126, 1
      %s128 = scalar_select %p125, %s126, %s127
      %p131 = pneg %p125
      %p132 = scmp.eq.s32.totalorder %s16, 1
      %p133 = por %p131, %p132
      %p134 = scmp.ne.s32.totalorder %s126, %s129
      %p135 = scmp.eq.s32.totalorder %s16, 0
      %p136 = por %p134, %p135
      %p137 = scmp.ne.s32.totalorder %s126, %s129
      %p138 = scmp.eq.s32.totalorder %s21, 1
      %p139 = por %p137, %p138
      %p140 = scmp.ne.s32.totalorder %s129, %s130
      %p141 = scmp.eq.s32.totalorder %s21, 0
      %p142 = por %p140, %p141
      %p143 = scmp.ne.s32.totalorder %s129, %s130
      %p144 = scmp.eq.s32.totalorder %s22, 1
      %p145 = por %p143, %p144
      %p147 = scmp.ne.s32.totalorder %s130, %s146
      %p148 = scmp.eq.s32.totalorder %s22, 0
      %p149 = por %p147, %p148
      %s150 = ssub.s32 0, %s24
      %s151 = smul.u32 %s23, %s150
      %s152 = ssub.s32 1, %s23
      %s153 = smul.u32 %s152, %s24
      %s154 = sadd.s32 %s151, %s153
      %s155 = ssub.s32 0, %s31
      %s156 = smul.u32 %s35, %s155
      %s157 = ssub.s32 1, %s35
      %s158 = smul.u32 %s157, %s31
      %s159 = sadd.s32 %s156, %s158
      %s160 = ssub.s32 %s154, %s159
      %s161 = ssub.s32 %s23, %s35
      %s162 = sor.u32 %s160, %s161
      %p163 = scmp.eq.s32.totalorder %s162, 0
      %s165 = sadd.s32 %s164, 1
      %s166 = scalar_select %p163, %s164, %s165
      %p169 = pneg %p163
      %p170 = scmp.eq.s32.totalorder %s16, 1
      %p171 = por %p169, %p170
      %p172 = scmp.ne.s32.totalorder %s164, %s167
      %p173 = scmp.eq.s32.totalorder %s16, 0
      %p174 = por %p172, %p173
      %p175 = scmp.ne.s32.totalorder %s164, %s167
      %p176 = scmp.eq.s32.totalorder %s21, 1
      %p177 = por %p175, %p176
      %p178 = scmp.ne.s32.totalorder %s167, %s168
      %p179 = scmp.eq.s32.totalorder %s21, 0
      %p180 = por %p178, %p179
      %p181 = scmp.ne.s32.totalorder %s167, %s168
      %p182 = scmp.eq.s32.totalorder %s22, 1
      %p183 = por %p181, %p182
      %p185 = scmp.ne.s32.totalorder %s168, %s184
      %p186 = scmp.eq.s32.totalorder %s22, 0
      %p187 = por %p185, %p186
      %p188 = scmp.le.s32.totalorder 1, %s16
      %p189 = scmp.lt.s32.totalorder %s16, 3
      %p190 = pnand %p188, %p189
      %p191 = pneg %p190
      // Predicated region
      $region9: #{forward.3} parent=5 // pred_check
        _
      $region10: #{forward.3} parent=5 // pred_check_branch
        %193 = sbr.rel (%p190) target = $region12
      $region11: #{forward.3} parent=5 // pred_region
        %s194 = ssub.s32 %s16, 1
      $region12: #{forward.3} parent=5 // pred_fallthru
        _
      %p195 = scmp.lt.s32.totalorder %s16, 2
      // Predicated region
      $region13: #{forward.3} parent=5 // pred_check
        %p196 = pneg %p195
      $region14: #{forward.3} parent=5 // pred_check_branch
        %198 = sbr.rel (%p196) target = $region16
      $region15: #{forward.3} parent=5 // pred_region
        // Predicated region
        $region17: #{forward.3} parent=15 // pred_check
          %p199 = pneg %p58
        $region18: #{forward.3} parent=15 // pred_check_branch
          %201 = sbr.rel (%p199) target = $region20
        $region19: #{forward.3} parent=15 // pred_region
          %s202 = ssub.s32 0, %s24
          %s203 = smul.u32 %s23, %s202
          %s204 = ssub.s32 1, %s23
          %s205 = smul.u32 %s204, %s24
          %s206 = sadd.s32 %s203, %s205
          %s207 = smul.u32 8, %s206
          %p208 = scmp.lt.s32.totalorder %s207, 7
          %s209 = scalar_select %p208, %s207, 7
          %s210 = smul.addr %s209, 8
          %s211 = scalar_lea.vmem %s0, %s210
          %s212 = ssub.s32 0, %s24
          %s213 = smul.u32 %s23, %s212
          %s214 = ssub.s32 1, %s23
          %s215 = smul.u32 %s214, %s24
          %s216 = sadd.s32 %s213, %s215
          %s217 = smul.u32 8, %s216
        $region20: #{forward.3} parent=15 // pred_fallthru
          _
        // Predicated region
        $region21: #{forward.3} parent=15 // pred_check
          %p218 = pneg %p84
        $region22: #{forward.3} parent=15 // pred_check_branch
          %220 = sbr.rel (%p218) target = $region24
        $region23: #{forward.3} parent=15 // pred_region
          %s221 = sand.u32 %s74, 1
          %s222 = scalar_lea.sflag [#allocation6], %s221
          %s223 = sand.u32 %s74, 1
          %s224 = smul.addr %s223, 512
          %s225 = scalar_lea.vmem [#allocation5], %s224
          %s227 = ssub.s32 8192, 8192
          %228 = vsyncadd %s222, %s227
          %s229 = smul.addr %s23, 64
          %s230 = smul.addr %s229, 128
          %s231 = scalar_lea.hbm %s1, %s230
          %s232 = sshll.u32 %s225, 4
          %s233 = int_to_ptr.vmem [resolvable:$true] %s232
          %238 = dma.hbm_to_vmem [thread:$0]  %s231, 8192, %s233, %s222, 512, 512, 32
        $region24: #{forward.3} parent=15 // pred_fallthru
          _
        // Predicated region
        $region25: #{forward.3} parent=15 // pred_check
          %p239 = pneg %p110
        $region26: #{forward.3} parent=15 // pred_check_branch
          %241 = sbr.rel (%p239) target = $region28
        $region27: #{forward.3} parent=15 // pred_region
          %s242 = sand.u32 %s100, 1
          %s243 = scalar_lea.sflag [#allocation8], %s242
          %s244 = sand.u32 %s100, 1
          %s245 = smul.addr %s244, 512
          %s246 = scalar_lea.vmem [#allocation7], %s245
          %s248 = ssub.s32 8192, 8192
          %249 = vsyncadd %s243, %s248
          %s250 = smul.addr %s23, 64
          %s251 = smul.addr %s250, 128
          %s252 = scalar_lea.hbm %s2, %s251
          %s253 = sshll.u32 %s246, 4
          %s254 = int_to_ptr.vmem [resolvable:$true] %s253
          %259 = dma.hbm_to_vmem [thread:$0]  %s252, 8192, %s254, %s243, 512, 512, 32
        $region28: #{forward.3} parent=15 // pred_fallthru
          _
        // Predicated region
        $region29: #{forward.3} parent=15 // pred_check
          %p260 = pneg %p136
        $region30: #{forward.3} parent=15 // pred_check_branch
          %262 = sbr.rel (%p260) target = $region32
        $region31: #{forward.3} parent=15 // pred_region
          %p263 = scmp.lt.s32.totalorder %s23, 1
          %s264 = scalar_select %p263, %s23, 1
          %s265 = smul.addr %s264, 4
          %s266 = scalar_lea.vmem %s3, %s265
        $region32: #{forward.3} parent=15 // pred_fallthru
          _
      $region16: #{forward.3} parent=5 // pred_fallthru
        _
      %p267 = scmp.le.s32.totalorder 1, %s16
      %p268 = scmp.lt.s32.totalorder %s16, 3
      %p269 = pnand %p267, %p268
      %p270 = pneg %p269
      // Predicated region
      $region33: #{forward.3} parent=5 // pred_check
        _
      $region34: #{forward.3} parent=5 // pred_check_branch
        %272 = sbr.rel (%p269) target = $region36
      $region35: #{forward.3} parent=5 // pred_region
        %s273 = ssub.s32 %s16, 1
        %s274 = sand.u32 %s77, 1
        %s275 = scalar_lea.sflag [#allocation6], %s274
        %s276 = sand.u32 %s77, 1
        %s277 = smul.addr %s276, 512
        %s278 = scalar_lea.vmem [#allocation5], %s277
        // Predicated region
        $region37: #{forward.3} parent=35 // pred_check
          %p279 = pneg %p90
        $region38: #{forward.3} parent=35 // pred_check_branch
          %281 = sbr.rel (%p279) target = $region40
        $region39: #{forward.3} parent=35 // pred_region
          %282 = dma.done %s275, 8192
        $region40: #{forward.3} parent=35 // pred_fallthru
          _
        %s283 = sand.u32 %s103, 1
        %s284 = scalar_lea.sflag [#allocation8], %s283
        %s285 = sand.u32 %s103, 1
        %s286 = smul.addr %s285, 512
        %s287 = scalar_lea.vmem [#allocation7], %s286
        // Predicated region
        $region41: #{forward.3} parent=35 // pred_check
          %p288 = pneg %p116
        $region42: #{forward.3} parent=35 // pred_check_branch
          %290 = sbr.rel (%p288) target = $region44
        $region43: #{forward.3} parent=35 // pred_region
          %291 = dma.done %s284, 8192
        $region44: #{forward.3} parent=35 // pred_fallthru
          _
        %s292 = ssub.s32 0, %s26
        %s293 = smul.u32 %s25, %s292
        %s294 = ssub.s32 1, %s25
        %s295 = smul.u32 %s294, %s26
        %s296 = sadd.s32 %s293, %s295
        %s297 = smul.u32 8, %s296
        %p298 = scmp.lt.s32.totalorder %s297, 7
        %s299 = scalar_select %p298, %s297, 7
        %s300 = smul.addr %s299, 8
        %s301 = scalar_lea.vmem %s0, %s300
        %p302 = pneg %p64
        %p303 = pneg %p61
        %s304 = sand.u32 %s77, 1
        %s305 = scalar_lea.sflag [#allocation6], %s304
        %s306 = sand.u32 %s77, 1
        %s307 = smul.addr %s306, 512
        %s308 = scalar_lea.vmem [#allocation5], %s307
        %p309 = pneg %p90
        %p310 = pneg %p87
        %s311 = sand.u32 %s103, 1
        %s312 = scalar_lea.sflag [#allocation8], %s311
        %s313 = sand.u32 %s103, 1
        %s314 = smul.addr %s313, 512
        %s315 = scalar_lea.vmem [#allocation7], %s314
        %p316 = pneg %p116
        %p317 = pneg %p113
        %p318 = scmp.lt.s32.totalorder %s25, 1
        %s319 = scalar_select %p318, %s25, 1
        %s320 = smul.addr %s319, 4
        %s321 = scalar_lea.vmem %s3, %s320
        %p322 = pneg %p142
        %p323 = pneg %p139
        %p324 = pneg %p180
        %p325 = pneg %p177
        %s326 = sand.u32 %s167, 1
        %s327 = sand.u32 %s167, 1
        %s328 = smul.addr %s327, 32
        %s329 = scalar_lea.vmem [#allocation9], %s328
        %s330 = ssub.s32 0, %s26
        %s331 = smul.u32 %s25, %s330
        %s332 = ssub.s32 1, %s25
        %s333 = smul.u32 %s332, %s26
        %s334 = sadd.s32 %s331, %s333
        %s335 = smul.u32 8, %s334
        %p336 = scmp.lt.s32.totalorder %s335, 7
        %s337 = scalar_select %p336, %s335, 7
        %s338 = smul.addr %s337, 8
        %s339 = scalar_lea.vmem %s0, %s338
        %s340 = ssub.s32 0, %s26
        %s341 = smul.u32 %s25, %s340
        %s342 = ssub.s32 1, %s25
        %s343 = smul.u32 %s342, %s26
        %s344 = sadd.s32 %s341, %s343
        %s345 = smul.u32 8, %s344
        %p346 = scmp.lt.s32.totalorder %s25, 1
        %s347 = scalar_select %p346, %s25, 1
        %s348 = smul.addr %s347, 4
        %s349 = scalar_lea.vmem %s3, %s348
        %s350 = ssub.s32 0, %s26
        %s351 = smul.u32 %s25, %s350
        %s352 = ssub.s32 1, %s25
        %s353 = smul.u32 %s352, %s26
        %s354 = sadd.s32 %s351, %s353
        %s355 = smul.u32 8, %s354
        %p356 = scmp.eq.s32.totalorder %s26, 0
        // Predicated region
        $region45: #{forward.3} parent=35 // pred_check
          %p357 = pneg %p356
        $region46: #{forward.3} parent=35 // pred_check_branch
          %359 = sbr.rel (%p357) target = $region48
        $region47: #{forward.3} parent=35 // pred_region
          %360 = vst [vmem:[#allocation3] sm:$0xff] 0.0
          %361 = vst [vmem:[#allocation4] sm:$0xff] 0.0
        $region48: #{forward.3} parent=35 // pred_fallthru
          _
        %v362 = vld [vmem:[%s339] sm:$0xff]
        %v363 = vld [vmem:[%s339 + $0x8] sm:$0xff]
        %v364 = vld [vmem:[%s339 + $0x10] sm:$0xff]
        %v365 = vld [vmem:[%s339 + $0x18] sm:$0xff]
        %v366 = vld [vmem:[%s339 + $0x20] sm:$0xff]
        %v367 = vld [vmem:[%s339 + $0x28] sm:$0xff]
        %v368 = vld [vmem:[%s339 + $0x30] sm:$0xff]
        %v369 = vld [vmem:[%s339 + $0x38] sm:$0xff]
        %v370 = vld [vmem:[%s278] sm:$0xff]
        %v371 = vld [vmem:[%s278 + $0x8] sm:$0xff]
        %v372 = vld [vmem:[%s278 + $0x10] sm:$0xff]
        %v373 = vld [vmem:[%s278 + $0x18] sm:$0xff]
        %v374 = vld [vmem:[%s278 + $0x20] sm:$0xff]
        %v375 = vld [vmem:[%s278 + $0x28] sm:$0xff]
        %v376 = vld [vmem:[%s278 + $0x30] sm:$0xff]
        %v377 = vld [vmem:[%s278 + $0x38] sm:$0xff]
        %v378 = vld [vmem:[%s278 + $0x40] sm:$0xff]
        %v379 = vld [vmem:[%s278 + $0x48] sm:$0xff]
        %v380 = vld [vmem:[%s278 + $0x50] sm:$0xff]
        %v381 = vld [vmem:[%s278 + $0x58] sm:$0xff]
        %v382 = vld [vmem:[%s278 + $0x60] sm:$0xff]
        %v383 = vld [vmem:[%s278 + $0x68] sm:$0xff]
        %v384 = vld [vmem:[%s278 + $0x70] sm:$0xff]
        %v385 = vld [vmem:[%s278 + $0x78] sm:$0xff]
        %v386 = vld [vmem:[%s278 + $0x80] sm:$0xff]
        %v387 = vld [vmem:[%s278 + $0x88] sm:$0xff]
        %v388 = vld [vmem:[%s278 + $0x90] sm:$0xff]
        %v389 = vld [vmem:[%s278 + $0x98] sm:$0xff]
        %v390 = vld [vmem:[%s278 + $0xa0] sm:$0xff]
        %v391 = vld [vmem:[%s278 + $0xa8] sm:$0xff]
        %v392 = vld [vmem:[%s278 + $0xb0] sm:$0xff]
        %v393 = vld [vmem:[%s278 + $0xb8] sm:$0xff]
        %v394 = vld [vmem:[%s278 + $0xc0] sm:$0xff]
        %v395 = vld [vmem:[%s278 + $0xc8] sm:$0xff]
        %v396 = vld [vmem:[%s278 + $0xd0] sm:$0xff]
        %v397 = vld [vmem:[%s278 + $0xd8] sm:$0xff]
        %v398 = vld [vmem:[%s278 + $0xe0] sm:$0xff]
        %v399 = vld [vmem:[%s278 + $0xe8] sm:$0xff]
        %v400 = vld [vmem:[%s278 + $0xf0] sm:$0xff]
        %v401 = vld [vmem:[%s278 + $0xf8] sm:$0xff]
        %v402 = vld [vmem:[%s278 + $0x100] sm:$0xff]
        %v403 = vld [vmem:[%s278 + $0x108] sm:$0xff]
        %v404 = vld [vmem:[%s278 + $0x110] sm:$0xff]
        %v405 = vld [vmem:[%s278 + $0x118] sm:$0xff]
        %v406 = vld [vmem:[%s278 + $0x120] sm:$0xff]
        %v407 = vld [vmem:[%s278 + $0x128] sm:$0xff]
        %v408 = vld [vmem:[%s278 + $0x130] sm:$0xff]
        %v409 = vld [vmem:[%s278 + $0x138] sm:$0xff]
        %v410 = vld [vmem:[%s278 + $0x140] sm:$0xff]
        %v411 = vld [vmem:[%s278 + $0x148] sm:$0xff]
        %v412 = vld [vmem:[%s278 + $0x150] sm:$0xff]
        %v413 = vld [vmem:[%s278 + $0x158] sm:$0xff]
        %v414 = vld [vmem:[%s278 + $0x160] sm:$0xff]
        %v415 = vld [vmem:[%s278 + $0x168] sm:$0xff]
        %v416 = vld [vmem:[%s278 + $0x170] sm:$0xff]
        %v417 = vld [vmem:[%s278 + $0x178] sm:$0xff]
        %v418 = vld [vmem:[%s278 + $0x180] sm:$0xff]
        %v419 = vld [vmem:[%s278 + $0x188] sm:$0xff]
        %v420 = vld [vmem:[%s278 + $0x190] sm:$0xff]
        %v421 = vld [vmem:[%s278 + $0x198] sm:$0xff]
        %v422 = vld [vmem:[%s278 + $0x1a0] sm:$0xff]
        %v423 = vld [vmem:[%s278 + $0x1a8] sm:$0xff]
        %v424 = vld [vmem:[%s278 + $0x1b0] sm:$0xff]
        %v425 = vld [vmem:[%s278 + $0x1b8] sm:$0xff]
        %v426 = vld [vmem:[%s278 + $0x1c0] sm:$0xff]
        %v427 = vld [vmem:[%s278 + $0x1c8] sm:$0xff]
        %v428 = vld [vmem:[%s278 + $0x1d0] sm:$0xff]
        %v429 = vld [vmem:[%s278 + $0x1d8] sm:$0xff]
        %v430 = vld [vmem:[%s278 + $0x1e0] sm:$0xff]
        %v431 = vld [vmem:[%s278 + $0x1e8] sm:$0xff]
        %v432 = vld [vmem:[%s278 + $0x1f0] sm:$0xff]
        %v433 = vld [vmem:[%s278 + $0x1f8] sm:$0xff]
        %v434 = vld [vmem:[%s349] sm:$0xf]
        %v436 = vlaneseq
        %v437 = vshrl.u32 %v436, 7
        %v438 = vsub.s32 0, %v437
        %v439 = vrot.slane %v434, %v438
        %v440 = vlaneseq
        %v441 = vshrl.u32 %v440, 7
        %v442 = vsub.s32 1, %v441
        %v443 = vrot.slane %v434, %v442
        %v444 = vlaneseq
        %v445 = vshrl.u32 %v444, 7
        %v446 = vsub.s32 2, %v445
        %v447 = vrot.slane %v434, %v446
        %v448 = vlaneseq
        %v449 = vshrl.u32 %v448, 7
        %v450 = vsub.s32 3, %v449
        %v451 = vrot.slane %v434, %v450
        %456 = vmatprep.subr.mxu0 %v371
        %457 = vmatpush1.msra.mxu0 %v370
        %458 = vmatprep.subr.mxu0 %v375
        %459 = vmatpush1.msra.mxu0 %v374
        %460 = vmatprep.subr.mxu0 %v379
        %461 = vmatpush1.msra.mxu0 %v378
        %462 = vmatprep.subr.mxu0 %v383
        %463 = vmatpush1.msra.mxu0 %v382
        %464 = vmatprep.subr.mxu0 %v387
        %465 = vmatpush1.msra.mxu0 %v386
        %466 = vmatprep.subr.mxu0 %v391
        %467 = vmatpush1.msra.mxu0 %v390
        %468 = vmatprep.subr.mxu0 %v395
        %469 = vmatpush1.msra.mxu0 %v394
        %470 = vmatprep.subr.mxu0 %v399
        %471 = vmatpush1.msra.mxu0 %v398
        %472 = vmatprep.subr.mxu0 %v403
        %473 = vmatpush1.msra.mxu0 %v402
        %474 = vmatprep.subr.mxu0 %v407
        %475 = vmatpush1.msra.mxu0 %v406
        %476 = vmatprep.subr.mxu0 %v411
        %477 = vmatpush1.msra.mxu0 %v410
        %478 = vmatprep.subr.mxu0 %v415
        %479 = vmatpush1.msra.mxu0 %v414
        %480 = vmatprep.subr.mxu0 %v419
        %481 = vmatpush1.msra.mxu0 %v418
        %482 = vmatprep.subr.mxu0 %v423
        %483 = vmatpush1.msra.mxu0 %v422
        %484 = vmatprep.subr.mxu0 %v427
        %485 = vmatpush1.msra.mxu0 %v426
        %486 = vmatprep.subr.mxu0 %v431
        %487 = vmatpush1.msra.mxu0 %v430
        %488 = vmatprep.subr.mxu0 0.0
        %489 = vmatpush1.msra.mxu0 0.0
        %490 = vmatprep.subr.mxu0 0.0
        %491 = vmatpush1.msra.mxu0 0.0
        %492 = vmatprep.subr.mxu0 0.0
        %493 = vmatpush1.msra.mxu0 0.0
        %494 = vmatprep.subr.mxu0 0.0
        %495 = vmatpush1.msra.mxu0 0.0
        %496 = vmatprep.subr.mxu0 0.0
        %497 = vmatpush1.msra.mxu0 0.0
        %498 = vmatprep.subr.mxu0 0.0
        %499 = vmatpush1.msra.mxu0 0.0
        %500 = vmatprep.subr.mxu0 0.0
        %501 = vmatpush1.msra.mxu0 0.0
        %502 = vmatprep.subr.mxu0 0.0
        %503 = vmatpush1.msra.mxu0 0.0
        %504 = vmatprep.subr.mxu0 0.0
        %505 = vmatpush1.msra.mxu0 0.0
        %506 = vmatprep.subr.mxu0 0.0
        %507 = vmatpush1.msra.mxu0 0.0
        %508 = vmatprep.subr.mxu0 0.0
        %509 = vmatpush1.msra.mxu0 0.0
        %510 = vmatprep.subr.mxu0 0.0
        %511 = vmatpush1.msra.mxu0 0.0
        %512 = vmatprep.subr.mxu0 0.0
        %513 = vmatpush1.msra.mxu0 0.0
        %514 = vmatprep.subr.mxu0 0.0
        %515 = vmatpush1.msra.mxu0 0.0
        %516 = vmatprep.subr.mxu0 0.0
        %517 = vmatpush1.msra.mxu0 0.0
        %518 = vmatprep.subr.mxu0 0.0
        %519 = vmatpush1.msra.mxu0 0.0
        %520 = vmatprep.mubr.f32.mxu0 0.0
        %521 = vmatmul.mubr.f32.gmra.mrb[0].mxu0 %v362
        %v522 = vpop.f32.mrb[0].mxu0
        %v523 = vadd.f32 %v439, %v522
        %v524 = vpop.f32.mrb[0].mxu0
        %v525 = vadd.f32 %v443, %v524
        %526 = vmatprep.mubr.f32.mxu0 0.0
        %527 = vmatmul.mubr.f32.gmra.mrb[0].mxu0 %v363
        %v528 = vpop.f32.mrb[0].mxu0
        %v529 = vadd.f32 %v439, %v528
        %v530 = vpop.f32.mrb[0].mxu0
        %v531 = vadd.f32 %v443, %v530
        %532 = vmatprep.mubr.f32.mxu0 0.0
        %533 = vmatmul.mubr.f32.gmra.mrb[0].mxu0 %v364
        %v534 = vpop.f32.mrb[0].mxu0
        %v535 = vadd.f32 %v439, %v534
        %v536 = vpop.f32.mrb[0].mxu0
        %v537 = vadd.f32 %v443, %v536
        %538 = vmatprep.mubr.f32.mxu0 0.0
        %539 = vmatmul.mubr.f32.gmra.mrb[0].mxu0 %v365
        %v540 = vpop.f32.mrb[0].mxu0
        %v541 = vadd.f32 %v439, %v540
        %v542 = vpop.f32.mrb[0].mxu0
        %v543 = vadd.f32 %v443, %v542
        %544 = vmatprep.mubr.f32.mxu0 0.0
        %545 = vmatmul.mubr.f32.gmra.mrb[0].mxu0 %v366
        %v546 = vpop.f32.mrb[0].mxu0
        %v547 = vadd.f32 %v439, %v546
        %v548 = vpop.f32.mrb[0].mxu0
        %v549 = vadd.f32 %v443, %v548
        %550 = vmatprep.mubr.f32.mxu0 0.0
        %551 = vmatmul.mubr.f32.gmra.mrb[0].mxu0 %v367
        %v552 = vpop.f32.mrb[0].mxu0
        %v553 = vadd.f32 %v439, %v552
        %v554 = vpop.f32.mrb[0].mxu0
        %v555 = vadd.f32 %v443, %v554
        %556 = vmatprep.mubr.f32.mxu0 0.0
        %557 = vmatmul.mubr.f32.gmra.mrb[0].mxu0 %v368
        %v558 = vpop.f32.mrb[0].mxu0
        %v559 = vadd.f32 %v439, %v558
        %v560 = vpop.f32.mrb[0].mxu0
        %v561 = vadd.f32 %v443, %v560
        %562 = vmatprep.mubr.f32.mxu0 0.0
        %563 = vmatmul.mubr.f32.gmra.mrb[0].mxu0 %v369
        %v564 = vpop.f32.mrb[0].mxu0
        %v565 = vadd.f32 %v439, %v564
        %v566 = vpop.f32.mrb[0].mxu0
        %v567 = vadd.f32 %v443, %v566
        %568 = vdwg.mxu0
        %569 = vmatprep.subr.mxu0 %v373
        %570 = vmatpush1.msra.mxu0 %v372
        %571 = vmatprep.subr.mxu0 %v377
        %572 = vmatpush1.msra.mxu0 %v376
        %573 = vmatprep.subr.mxu0 %v381
        %574 = vmatpush1.msra.mxu0 %v380
        %575 = vmatprep.subr.mxu0 %v385
        %576 = vmatpush1.msra.mxu0 %v384
        %577 = vmatprep.subr.mxu0 %v389
        %578 = vmatpush1.msra.mxu0 %v388
        %579 = vmatprep.subr.mxu0 %v393
        %580 = vmatpush1.msra.mxu0 %v392
        %581 = vmatprep.subr.mxu0 %v397
        %582 = vmatpush1.msra.mxu0 %v396
        %583 = vmatprep.subr.mxu0 %v401
        %584 = vmatpush1.msra.mxu0 %v400
        %585 = vmatprep.subr.mxu0 %v405
        %586 = vmatpush1.msra.mxu0 %v404
        %587 = vmatprep.subr.mxu0 %v409
        %588 = vmatpush1.msra.mxu0 %v408
        %589 = vmatprep.subr.mxu0 %v413
        %590 = vmatpush1.msra.mxu0 %v412
        %591 = vmatprep.subr.mxu0 %v417
        %592 = vmatpush1.msra.mxu0 %v416
        %593 = vmatprep.subr.mxu0 %v421
        %594 = vmatpush1.msra.mxu0 %v420
        %595 = vmatprep.subr.mxu0 %v425
        %596 = vmatpush1.msra.mxu0 %v424
        %597 = vmatprep.subr.mxu0 %v429
        %598 = vmatpush1.msra.mxu0 %v428
        %599 = vmatprep.subr.mxu0 %v433
        %600 = vmatpush1.msra.mxu0 %v432
        %601 = vmatprep.subr.mxu0 0.0
        %602 = vmatpush1.msra.mxu0 0.0
        %603 = vmatprep.subr.mxu0 0.0
        %604 = vmatpush1.msra.mxu0 0.0
        %605 = vmatprep.subr.mxu0 0.0
        %606 = vmatpush1.msra.mxu0 0.0
        %607 = vmatprep.subr.mxu0 0.0
        %608 = vmatpush1.msra.mxu0 0.0
        %609 = vmatprep.subr.mxu0 0.0
        %610 = vmatpush1.msra.mxu0 0.0
        %611 = vmatprep.subr.mxu0 0.0
        %612 = vmatpush1.msra.mxu0 0.0
        %613 = vmatprep.subr.mxu0 0.0
        %614 = vmatpush1.msra.mxu0 0.0
        %615 = vmatprep.subr.mxu0 0.0
        %616 = vmatpush1.msra.mxu0 0.0
        %617 = vmatprep.subr.mxu0 0.0
        %618 = vmatpush1.msra.mxu0 0.0
        %619 = vmatprep.subr.mxu0 0.0
        %620 = vmatpush1.msra.mxu0 0.0
        %621 = vmatprep.subr.mxu0 0.0
        %622 = vmatpush1.msra.mxu0 0.0
        %623 = vmatprep.subr.mxu0 0.0
        %624 = vmatpush1.msra.mxu0 0.0
        %625 = vmatprep.subr.mxu0 0.0
        %626 = vmatpush1.msra.mxu0 0.0
        %627 = vmatprep.subr.mxu0 0.0
        %628 = vmatpush1.msra.mxu0 0.0
        %629 = vmatprep.subr.mxu0 0.0
        %630 = vmatpush1.msra.mxu0 0.0
        %631 = vmatprep.subr.mxu0 0.0
        %632 = vmatpush1.msra.mxu0 0.0
        %633 = vmatprep.mubr.f32.mxu0 0.0
        %634 = vmatmul.mubr.f32.gmra.mrb[0].mxu0 %v362
        %v635 = vpop.f32.mrb[0].mxu0
        %v636 = vadd.f32 %v447, %v635
        %v637 = vpop.f32.mrb[0].mxu0
        %v638 = vadd.f32 %v451, %v637
        %639 = vmatprep.mubr.f32.mxu0 0.0
        %640 = vmatmul.mubr.f32.gmra.mrb[0].mxu0 %v363
        %v641 = vpop.f32.mrb[0].mxu0
        %v642 = vadd.f32 %v447, %v641
        %v643 = vpop.f32.mrb[0].mxu0
        %v644 = vadd.f32 %v451, %v643
        %645 = vmatprep.mubr.f32.mxu0 0.0
        %646 = vmatmul.mubr.f32.gmra.mrb[0].mxu0 %v364
        %v647 = vpop.f32.mrb[0].mxu0
        %v648 = vadd.f32 %v447, %v647
        %v649 = vpop.f32.mrb[0].mxu0
        %v650 = vadd.f32 %v451, %v649
        %651 = vmatprep.mubr.f32.mxu0 0.0
        %652 = vmatmul.mubr.f32.gmra.mrb[0].mxu0 %v365
        %v653 = vpop.f32.mrb[0].mxu0
        %v654 = vadd.f32 %v447, %v653
        %v655 = vpop.f32.mrb[0].mxu0
        %v656 = vadd.f32 %v451, %v655
        %657 = vmatprep.mubr.f32.mxu0 0.0
        %658 = vmatmul.mubr.f32.gmra.mrb[0].mxu0 %v366
        %v659 = vpop.f32.mrb[0].mxu0
        %v660 = vadd.f32 %v447, %v659
        %v661 = vpop.f32.mrb[0].mxu0
        %v662 = vadd.f32 %v451, %v661
        %663 = vmatprep.mubr.f32.mxu0 0.0
        %664 = vmatmul.mubr.f32.gmra.mrb[0].mxu0 %v367
        %v665 = vpop.f32.mrb[0].mxu0
        %v666 = vadd.f32 %v447, %v665
        %v667 = vpop.f32.mrb[0].mxu0
        %v668 = vadd.f32 %v451, %v667
        %669 = vmatprep.mubr.f32.mxu0 0.0
        %670 = vmatmul.mubr.f32.gmra.mrb[0].mxu0 %v368
        %v671 = vpop.f32.mrb[0].mxu0
        %v672 = vadd.f32 %v447, %v671
        %v673 = vpop.f32.mrb[0].mxu0
        %v674 = vadd.f32 %v451, %v673
        %675 = vmatprep.mubr.f32.mxu0 0.0
        %676 = vmatmul.mubr.f32.gmra.mrb[0].mxu0 %v369
        %v677 = vpop.f32.mrb[0].mxu0
        %v678 = vadd.f32 %v447, %v677
        %v679 = vpop.f32.mrb[0].mxu0
        %v680 = vadd.f32 %v451, %v679
        %681 = vdwg.mxu0
        %682 = vst [vmem:[#allocation2] sm:$0xff] %v523
        %683 = vst [vmem:[#allocation2 + $0x8] sm:$0xff] %v525
        %684 = vst [vmem:[#allocation2 + $0x10] sm:$0xff] %v636
        %685 = vst [vmem:[#allocation2 + $0x18] sm:$0xff] %v638
        %686 = vst [vmem:[#allocation2 + $0x20] sm:$0xff] %v529
        %687 = vst [vmem:[#allocation2 + $0x28] sm:$0xff] %v531
        %688 = vst [vmem:[#allocation2 + $0x30] sm:$0xff] %v642
        %689 = vst [vmem:[#allocation2 + $0x38] sm:$0xff] %v644
        %690 = vst [vmem:[#allocation2 + $0x40] sm:$0xff] %v535
        %691 = vst [vmem:[#allocation2 + $0x48] sm:$0xff] %v537
        %692 = vst [vmem:[#allocation2 + $0x50] sm:$0xff] %v648
        %693 = vst [vmem:[#allocation2 + $0x58] sm:$0xff] %v650
        %694 = vst [vmem:[#allocation2 + $0x60] sm:$0xff] %v541
        %695 = vst [vmem:[#allocation2 + $0x68] sm:$0xff] %v543
        %696 = vst [vmem:[#allocation2 + $0x70] sm:$0xff] %v654
        %697 = vst [vmem:[#allocation2 + $0x78] sm:$0xff] %v656
        %698 = vst [vmem:[#allocation2 + $0x80] sm:$0xff] %v547
        %699 = vst [vmem:[#allocation2 + $0x88] sm:$0xff] %v549
        %700 = vst [vmem:[#allocation2 + $0x90] sm:$0xff] %v660
        %701 = vst [vmem:[#allocation2 + $0x98] sm:$0xff] %v662
        %702 = vst [vmem:[#allocation2 + $0xa0] sm:$0xff] %v553
        %703 = vst [vmem:[#allocation2 + $0xa8] sm:$0xff] %v555
        %704 = vst [vmem:[#allocation2 + $0xb0] sm:$0xff] %v666
        %705 = vst [vmem:[#allocation2 + $0xb8] sm:$0xff] %v668
        %706 = vst [vmem:[#allocation2 + $0xc0] sm:$0xff] %v559
        %707 = vst [vmem:[#allocation2 + $0xc8] sm:$0xff] %v561
        %708 = vst [vmem:[#allocation2 + $0xd0] sm:$0xff] %v672
        %709 = vst [vmem:[#allocation2 + $0xd8] sm:$0xff] %v674
        %710 = vst [vmem:[#allocation2 + $0xe0] sm:$0xff] %v565
        %711 = vst [vmem:[#allocation2 + $0xe8] sm:$0xff] %v567
        %712 = vst [vmem:[#allocation2 + $0xf0] sm:$0xff] %v678
        %713 = vst [vmem:[#allocation2 + $0xf8] sm:$0xff] %v680
        %s714 = smul.u32 %s25, 56
        %s715 = sshra.s32 %s714, 3
        %s716 = sand.u32 %s714, 7
        %s717 = smul.u32 %s715, 4
        %s718 = smul.addr %s717, 8
        %s719 = scalar_lea.vmem [#allocation2], %s718
        %v720 = vld [vmem:[%s719] sm:$0xff]
        %v721 = vld [vmem:[%s719 + $0x8] sm:$0xff]
        %v722 = vld [vmem:[%s719 + $0x10] sm:$0xff]
        %v723 = vld [vmem:[%s719 + $0x18] sm:$0xff]
        %v724 = vld [vmem:[%s287] sm:$0xff]
        %v725 = vld [vmem:[%s287 + $0x8] sm:$0xff]
        %v726 = vld [vmem:[%s287 + $0x10] sm:$0xff]
        %v727 = vld [vmem:[%s287 + $0x18] sm:$0xff]
        %v728 = vld [vmem:[%s287 + $0x20] sm:$0xff]
        %v729 = vld [vmem:[%s287 + $0x28] sm:$0xff]
        %v730 = vld [vmem:[%s287 + $0x30] sm:$0xff]
        %v731 = vld [vmem:[%s287 + $0x38] sm:$0xff]
        %v732 = vld [vmem:[%s287 + $0x40] sm:$0xff]
        %v733 = vld [vmem:[%s287 + $0x48] sm:$0xff]
        %v734 = vld [vmem:[%s287 + $0x50] sm:$0xff]
        %v735 = vld [vmem:[%s287 + $0x58] sm:$0xff]
        %v736 = vld [vmem:[%s287 + $0x60] sm:$0xff]
        %v737 = vld [vmem:[%s287 + $0x68] sm:$0xff]
        %v738 = vld [vmem:[%s287 + $0x70] sm:$0xff]
        %v739 = vld [vmem:[%s287 + $0x78] sm:$0xff]
        %v740 = vld [vmem:[%s287 + $0x80] sm:$0xff]
        %v741 = vld [vmem:[%s287 + $0x88] sm:$0xff]
        %v742 = vld [vmem:[%s287 + $0x90] sm:$0xff]
        %v743 = vld [vmem:[%s287 + $0x98] sm:$0xff]
        %v744 = vld [vmem:[%s287 + $0xa0] sm:$0xff]
        %v745 = vld [vmem:[%s287 + $0xa8] sm:$0xff]
        %v746 = vld [vmem:[%s287 + $0xb0] sm:$0xff]
        %v747 = vld [vmem:[%s287 + $0xb8] sm:$0xff]
        %v748 = vld [vmem:[%s287 + $0xc0] sm:$0xff]
        %v749 = vld [vmem:[%s287 + $0xc8] sm:$0xff]
        %v750 = vld [vmem:[%s287 + $0xd0] sm:$0xff]
        %v751 = vld [vmem:[%s287 + $0xd8] sm:$0xff]
        %v752 = vld [vmem:[%s287 + $0xe0] sm:$0xff]
        %v753 = vld [vmem:[%s287 + $0xe8] sm:$0xff]
        %v754 = vld [vmem:[%s287 + $0xf0] sm:$0xff]
        %v755 = vld [vmem:[%s287 + $0xf8] sm:$0xff]
        %v756 = vld [vmem:[%s287 + $0x100] sm:$0xff]
        %v757 = vld [vmem:[%s287 + $0x108] sm:$0xff]
        %v758 = vld [vmem:[%s287 + $0x110] sm:$0xff]
        %v759 = vld [vmem:[%s287 + $0x118] sm:$0xff]
        %v760 = vld [vmem:[%s287 + $0x120] sm:$0xff]
        %v761 = vld [vmem:[%s287 + $0x128] sm:$0xff]
        %v762 = vld [vmem:[%s287 + $0x130] sm:$0xff]
        %v763 = vld [vmem:[%s287 + $0x138] sm:$0xff]
        %v764 = vld [vmem:[%s287 + $0x140] sm:$0xff]
        %v765 = vld [vmem:[%s287 + $0x148] sm:$0xff]
        %v766 = vld [vmem:[%s287 + $0x150] sm:$0xff]
        %v767 = vld [vmem:[%s287 + $0x158] sm:$0xff]
        %v768 = vld [vmem:[%s287 + $0x160] sm:$0xff]
        %v769 = vld [vmem:[%s287 + $0x168] sm:$0xff]
        %v770 = vld [vmem:[%s287 + $0x170] sm:$0xff]
        %v771 = vld [vmem:[%s287 + $0x178] sm:$0xff]
        %v772 = vld [vmem:[%s287 + $0x180] sm:$0xff]
        %v773 = vld [vmem:[%s287 + $0x188] sm:$0xff]
        %v774 = vld [vmem:[%s287 + $0x190] sm:$0xff]
        %v775 = vld [vmem:[%s287 + $0x198] sm:$0xff]
        %v776 = vld [vmem:[%s287 + $0x1a0] sm:$0xff]
        %v777 = vld [vmem:[%s287 + $0x1a8] sm:$0xff]
        %v778 = vld [vmem:[%s287 + $0x1b0] sm:$0xff]
        %v779 = vld [vmem:[%s287 + $0x1b8] sm:$0xff]
        %v780 = vld [vmem:[%s287 + $0x1c0] sm:$0xff]
        %v781 = vld [vmem:[%s287 + $0x1c8] sm:$0xff]
        %v782 = vld [vmem:[%s287 + $0x1d0] sm:$0xff]
        %v783 = vld [vmem:[%s287 + $0x1d8] sm:$0xff]
        %v784 = vld [vmem:[%s287 + $0x1e0] sm:$0xff]
        %v785 = vld [vmem:[%s287 + $0x1e8] sm:$0xff]
        %v786 = vld [vmem:[%s287 + $0x1f0] sm:$0xff]
        %v787 = vld [vmem:[%s287 + $0x1f8] sm:$0xff]
        %v788 = vld [vmem:[#allocation3] sm:$0xff]
        %v789 = vld [vmem:[#allocation4] sm:$0xff]
        %790 = vmatprep.subr.mxu0 %v725
        %791 = vmatpush1.msra.mxu0 %v724
        %792 = vmatprep.subr.mxu0 %v729
        %793 = vmatpush1.msra.mxu0 %v728
        %794 = vmatprep.subr.mxu0 %v733
        %795 = vmatpush1.msra.mxu0 %v732
        %796 = vmatprep.subr.mxu0 %v737
        %797 = vmatpush1.msra.mxu0 %v736
        %798 = vmatprep.subr.mxu0 %v741
        %799 = vmatpush1.msra.mxu0 %v740
        %800 = vmatprep.subr.mxu0 %v745
        %801 = vmatpush1.msra.mxu0 %v744
        %802 = vmatprep.subr.mxu0 %v749
        %803 = vmatpush1.msra.mxu0 %v748
        %804 = vmatprep.subr.mxu0 %v753
        %805 = vmatpush1.msra.mxu0 %v752
        %806 = vmatprep.subr.mxu0 %v757
        %807 = vmatpush1.msra.mxu0 %v756
        %808 = vmatprep.subr.mxu0 %v761
        %809 = vmatpush1.msra.mxu0 %v760
        %810 = vmatprep.subr.mxu0 %v765
        %811 = vmatpush1.msra.mxu0 %v764
        %812 = vmatprep.subr.mxu0 %v769
        %813 = vmatpush1.msra.mxu0 %v768
        %814 = vmatprep.subr.mxu0 %v773
        %815 = vmatpush1.msra.mxu0 %v772
        %816 = vmatprep.subr.mxu0 %v777
        %817 = vmatpush1.msra.mxu0 %v776
        %818 = vmatprep.subr.mxu0 %v781
        %819 = vmatpush1.msra.mxu0 %v780
        %820 = vmatprep.subr.mxu0 %v785
        %821 = vmatpush1.msra.mxu0 %v784
        %822 = vmatprep.subr.mxu0 0.0
        %823 = vmatpush1.msra.mxu0 0.0
        %824 = vmatprep.subr.mxu0 0.0
        %825 = vmatpush1.msra.mxu0 0.0
        %826 = vmatprep.subr.mxu0 0.0
        %827 = vmatpush1.msra.mxu0 0.0
        %828 = vmatprep.subr.mxu0 0.0
        %829 = vmatpush1.msra.mxu0 0.0
        %830 = vmatprep.subr.mxu0 0.0
        %831 = vmatpush1.msra.mxu0 0.0
        %832 = vmatprep.subr.mxu0 0.0
        %833 = vmatpush1.msra.mxu0 0.0
        %834 = vmatprep.subr.mxu0 0.0
        %835 = vmatpush1.msra.mxu0 0.0
        %836 = vmatprep.subr.mxu0 0.0
        %837 = vmatpush1.msra.mxu0 0.0
        %838 = vmatprep.subr.mxu0 0.0
        %839 = vmatpush1.msra.mxu0 0.0
        %840 = vmatprep.subr.mxu0 0.0
        %841 = vmatpush1.msra.mxu0 0.0
        %842 = vmatprep.subr.mxu0 0.0
        %843 = vmatpush1.msra.mxu0 0.0
        %844 = vmatprep.subr.mxu0 0.0
        %845 = vmatpush1.msra.mxu0 0.0
        %846 = vmatprep.subr.mxu0 0.0
        %847 = vmatpush1.msra.mxu0 0.0
        %848 = vmatprep.subr.mxu0 0.0
        %849 = vmatpush1.msra.mxu0 0.0
        %850 = vmatprep.subr.mxu0 0.0
        %851 = vmatpush1.msra.mxu0 0.0
        %852 = vmatprep.subr.mxu0 0.0
        %853 = vmatpush1.msra.mxu0 0.0
        %854 = vmatprep.mubr.f32.mxu0 0.0
        %855 = vmatmul.mubr.f32.gmra.mrb[0].mxu0 %v788
        %v856 = vpop.f32.mrb[0].mxu0
        %v857 = vadd.f32 0.0, %v856
        %v858 = vpop.f32.mrb[0].mxu0
        %v859 = vadd.f32 0.0, %v858
        %860 = vdwg.mxu0
        %861 = vmatprep.subr.mxu0 %v727
        %862 = vmatpush1.msra.mxu0 %v726
        %863 = vmatprep.subr.mxu0 %v731
        %864 = vmatpush1.msra.mxu0 %v730
        %865 = vmatprep.subr.mxu0 %v735
        %866 = vmatpush1.msra.mxu0 %v734
        %867 = vmatprep.subr.mxu0 %v739
        %868 = vmatpush1.msra.mxu0 %v738
        %869 = vmatprep.subr.mxu0 %v743
        %870 = vmatpush1.msra.mxu0 %v742
        %871 = vmatprep.subr.mxu0 %v747
        %872 = vmatpush1.msra.mxu0 %v746
        %873 = vmatprep.subr.mxu0 %v751
        %874 = vmatpush1.msra.mxu0 %v750
        %875 = vmatprep.subr.mxu0 %v755
        %876 = vmatpush1.msra.mxu0 %v754
        %877 = vmatprep.subr.mxu0 %v759
        %878 = vmatpush1.msra.mxu0 %v758
        %879 = vmatprep.subr.mxu0 %v763
        %880 = vmatpush1.msra.mxu0 %v762
        %881 = vmatprep.subr.mxu0 %v767
        %882 = vmatpush1.msra.mxu0 %v766
        %883 = vmatprep.subr.mxu0 %v771
        %884 = vmatpush1.msra.mxu0 %v770
        %885 = vmatprep.subr.mxu0 %v775
        %886 = vmatpush1.msra.mxu0 %v774
        %887 = vmatprep.subr.mxu0 %v779
        %888 = vmatpush1.msra.mxu0 %v778
        %889 = vmatprep.subr.mxu0 %v783
        %890 = vmatpush1.msra.mxu0 %v782
        %891 = vmatprep.subr.mxu0 %v787
        %892 = vmatpush1.msra.mxu0 %v786
        %893 = vmatprep.subr.mxu0 0.0
        %894 = vmatpush1.msra.mxu0 0.0
        %895 = vmatprep.subr.mxu0 0.0
        %896 = vmatpush1.msra.mxu0 0.0
        %897 = vmatprep.subr.mxu0 0.0
        %898 = vmatpush1.msra.mxu0 0.0
        %899 = vmatprep.subr.mxu0 0.0
        %900 = vmatpush1.msra.mxu0 0.0
        %901 = vmatprep.subr.mxu0 0.0
        %902 = vmatpush1.msra.mxu0 0.0
        %903 = vmatprep.subr.mxu0 0.0
        %904 = vmatpush1.msra.mxu0 0.0
        %905 = vmatprep.subr.mxu0 0.0
        %906 = vmatpush1.msra.mxu0 0.0
        %907 = vmatprep.subr.mxu0 0.0
        %908 = vmatpush1.msra.mxu0 0.0
        %909 = vmatprep.subr.mxu0 0.0
        %910 = vmatpush1.msra.mxu0 0.0
        %911 = vmatprep.subr.mxu0 0.0
        %912 = vmatpush1.msra.mxu0 0.0
        %913 = vmatprep.subr.mxu0 0.0
        %914 = vmatpush1.msra.mxu0 0.0
        %915 = vmatprep.subr.mxu0 0.0
        %916 = vmatpush1.msra.mxu0 0.0
        %917 = vmatprep.subr.mxu0 0.0
        %918 = vmatpush1.msra.mxu0 0.0
        %919 = vmatprep.subr.mxu0 0.0
        %920 = vmatpush1.msra.mxu0 0.0
        %921 = vmatprep.subr.mxu0 0.0
        %922 = vmatpush1.msra.mxu0 0.0
        %923 = vmatprep.subr.mxu0 0.0
        %924 = vmatpush1.msra.mxu0 0.0
        %925 = vmatprep.mubr.f32.mxu0 0.0
        %926 = vmatmul.mubr.f32.gmra.mrb[0].mxu0 %v788
        %v927 = vpop.f32.mrb[0].mxu0
        %v928 = vadd.f32 0.0, %v927
        %v929 = vpop.f32.mrb[0].mxu0
        %v930 = vadd.f32 0.0, %v929
        %931 = vdwg.mxu0
        %v932 = vadd.f32 %v720, %v857
        %v933 = vadd.f32 %v721, %v859
        %v934 = vadd.f32 %v722, %v928
        %v935 = vadd.f32 %v723, %v930
        %v936 = vxor.u32 %v932, 2147483648
        %v937 = vmul.f32 %v936, 1.442695
        %v938 = vpow.pop %v937
        %v939 = vadd.f32 %v938, 1.0
        %v940 = vrcp.pop %v939
        %v941 = vmul.f32 1.0, %v940
        %v942 = vxor.u32 %v933, 2147483648
        %v943 = vmul.f32 %v942, 1.442695
        %v944 = vpow.pop %v943
        %v945 = vadd.f32 %v944, 1.0
        %v946 = vrcp.pop %v945
        %v947 = vmul.f32 1.0, %v946
        %v948 = vtanh.pop %v934
        %v949 = vxor.u32 %v935, 2147483648
        %v950 = vmul.f32 %v949, 1.442695
        %v951 = vpow.pop %v950
        %v952 = vadd.f32 %v951, 1.0
        %v953 = vrcp.pop %v952
        %v954 = vmul.f32 1.0, %v953
        %v955 = vmul.f32 %v947, %v789
        %v956 = vmul.f32 %v941, %v948
        %v957 = vadd.f32 %v955, %v956
        %v958 = vtanh.pop %v957
        %v959 = vmul.f32 %v954, %v958
        %960 = vst [vmem:[#allocation3] sm:$0xff] %v959
        %961 = vst [vmem:[#allocation4] sm:$0xff] %v957
        %v962 = vpack.c.bf16 %v959, %v959
        %s963 = smul.addr %s715, 4
        %s964 = scalar_lea.vmem %s329, %s963 [#allocation9]
        %965 = vst [vmem:[%s964] sm:$0xf] %v962
        %s966 = smul.u32 %s25, 6
        %s967 = ssub.s32 1, %s25
        %s968 = sadd.s32 %s966, %s967
        %s969 = smul.u32 %s968, 8
        %s970 = sshra.s32 %s969, 3
        %s971 = sand.u32 %s969, 7
        %s972 = smul.u32 %s970, 4
        %s973 = smul.addr %s972, 8
        %s974 = scalar_lea.vmem [#allocation2], %s973
        %v975 = vld [vmem:[%s974] sm:$0xff]
        %v976 = vld [vmem:[%s974 + $0x8] sm:$0xff]
        %v977 = vld [vmem:[%s974 + $0x10] sm:$0xff]
        %v978 = vld [vmem:[%s974 + $0x18] sm:$0xff]
        %v979 = vld [vmem:[%s287] sm:$0xff]
        %v980 = vld [vmem:[%s287 + $0x8] sm:$0xff]
        %v981 = vld [vmem:[%s287 + $0x10] sm:$0xff]
        %v982 = vld [vmem:[%s287 + $0x18] sm:$0xff]
        %v983 = vld [vmem:[%s287 + $0x20] sm:$0xff]
        %v984 = vld [vmem:[%s287 + $0x28] sm:$0xff]
        %v985 = vld [vmem:[%s287 + $0x30] sm:$0xff]
        %v986 = vld [vmem:[%s287 + $0x38] sm:$0xff]
        %v987 = vld [vmem:[%s287 + $0x40] sm:$0xff]
        %v988 = vld [vmem:[%s287 + $0x48] sm:$0xff]
        %v989 = vld [vmem:[%s287 + $0x50] sm:$0xff]
        %v990 = vld [vmem:[%s287 + $0x58] sm:$0xff]
        %v991 = vld [vmem:[%s287 + $0x60] sm:$0xff]
        %v992 = vld [vmem:[%s287 + $0x68] sm:$0xff]
        %v993 = vld [vmem:[%s287 + $0x70] sm:$0xff]
        %v994 = vld [vmem:[%s287 + $0x78] sm:$0xff]
        %v995 = vld [vmem:[%s287 + $0x80] sm:$0xff]
        %v996 = vld [vmem:[%s287 + $0x88] sm:$0xff]
        %v997 = vld [vmem:[%s287 + $0x90] sm:$0xff]
        %v998 = vld [vmem:[%s287 + $0x98] sm:$0xff]
        %v999 = vld [vmem:[%s287 + $0xa0] sm:$0xff]
        %v1000 = vld [vmem:[%s287 + $0xa8] sm:$0xff]
        %v1001 = vld [vmem:[%s287 + $0xb0] sm:$0xff]
        %v1002 = vld [vmem:[%s287 + $0xb8] sm:$0xff]
        %v1003 = vld [vmem:[%s287 + $0xc0] sm:$0xff]
        %v1004 = vld [vmem:[%s287 + $0xc8] sm:$0xff]
        %v1005 = vld [vmem:[%s287 + $0xd0] sm:$0xff]
        %v1006 = vld [vmem:[%s287 + $0xd8] sm:$0xff]
        %v1007 = vld [vmem:[%s287 + $0xe0] sm:$0xff]
        %v1008 = vld [vmem:[%s287 + $0xe8] sm:$0xff]
        %v1009 = vld [vmem:[%s287 + $0xf0] sm:$0xff]
        %v1010 = vld [vmem:[%s287 + $0xf8] sm:$0xff]
        %v1011 = vld [vmem:[%s287 + $0x100] sm:$0xff]
        %v1012 = vld [vmem:[%s287 + $0x108] sm:$0xff]
        %v1013 = vld [vmem:[%s287 + $0x110] sm:$0xff]
        %v1014 = vld [vmem:[%s287 + $0x118] sm:$0xff]
        %v1015 = vld [vmem:[%s287 + $0x120] sm:$0xff]
        %v1016 = vld [vmem:[%s287 + $0x128] sm:$0xff]
        %v1017 = vld [vmem:[%s287 + $0x130] sm:$0xff]
        %v1018 = vld [vmem:[%s287 + $0x138] sm:$0xff]
        %v1019 = vld [vmem:[%s287 + $0x140] sm:$0xff]
        %v1020 = vld [vmem:[%s287 + $0x148] sm:$0xff]
        %v1021 = vld [vmem:[%s287 + $0x150] sm:$0xff]
        %v1022 = vld [vmem:[%s287 + $0x158] sm:$0xff]
        %v1023 = vld [vmem:[%s287 + $0x160] sm:$0xff]
        %v1024 = vld [vmem:[%s287 + $0x168] sm:$0xff]
        %v1025 = vld [vmem:[%s287 + $0x170] sm:$0xff]
        %v1026 = vld [vmem:[%s287 + $0x178] sm:$0xff]
        %v1027 = vld [vmem:[%s287 + $0x180] sm:$0xff]
        %v1028 = vld [vmem:[%s287 + $0x188] sm:$0xff]
        %v1029 = vld [vmem:[%s287 + $0x190] sm:$0xff]
        %v1030 = vld [vmem:[%s287 + $0x198] sm:$0xff]
        %v1031 = vld [vmem:[%s287 + $0x1a0] sm:$0xff]
        %v1032 = vld [vmem:[%s287 + $0x1a8] sm:$0xff]
        %v1033 = vld [vmem:[%s287 + $0x1b0] sm:$0xff]
        %v1034 = vld [vmem:[%s287 + $0x1b8] sm:$0xff]
        %v1035 = vld [vmem:[%s287 + $0x1c0] sm:$0xff]
        %v1036 = vld [vmem:[%s287 + $0x1c8] sm:$0xff]
        %v1037 = vld [vmem:[%s287 + $0x1d0] sm:$0xff]
        %v1038 = vld [vmem:[%s287 + $0x1d8] sm:$0xff]
        %v1039 = vld [vmem:[%s287 + $0x1e0] sm:$0xff]
        %v1040 = vld [vmem:[%s287 + $0x1e8] sm:$0xff]
        %v1041 = vld [vmem:[%s287 + $0x1f0] sm:$0xff]
        %v1042 = vld [vmem:[%s287 + $0x1f8] sm:$0xff]
        %v1043 = vld [vmem:[#allocation3] sm:$0xff]
        %v1044 = vld [vmem:[#allocation4] sm:$0xff]
        %1045 = vmatprep.subr.mxu0 %v980
        %1046 = vmatpush1.msra.mxu0 %v979
        %1047 = vmatprep.subr.mxu0 %v984
        %1048 = vmatpush1.msra.mxu0 %v983
        %1049 = vmatprep.subr.mxu0 %v988
        %1050 = vmatpush1.msra.mxu0 %v987
        %1051 = vmatprep.subr.mxu0 %v992
        %1052 = vmatpush1.msra.mxu0 %v991
        %1053 = vmatprep.subr.mxu0 %v996
        %1054 = vmatpush1.msra.mxu0 %v995
        %1055 = vmatprep.subr.mxu0 %v1000
        %1056 = vmatpush1.msra.mxu0 %v999
        %1057 = vmatprep.subr.mxu0 %v1004
        %1058 = vmatpush1.msra.mxu0 %v1003
        %1059 = vmatprep.subr.mxu0 %v1008
        %1060 = vmatpush1.msra.mxu0 %v1007
        %1061 = vmatprep.subr.mxu0 %v1012
        %1062 = vmatpush1.msra.mxu0 %v1011
        %1063 = vmatprep.subr.mxu0 %v1016
        %1064 = vmatpush1.msra.mxu0 %v1015
        %1065 = vmatprep.subr.mxu0 %v1020
        %1066 = vmatpush1.msra.mxu0 %v1019
        %1067 = vmatprep.subr.mxu0 %v1024
        %1068 = vmatpush1.msra.mxu0 %v1023
        %1069 = vmatprep.subr.mxu0 %v1028
        %1070 = vmatpush1.msra.mxu0 %v1027
        %1071 = vmatprep.subr.mxu0 %v1032
        %1072 = vmatpush1.msra.mxu0 %v1031
        %1073 = vmatprep.subr.mxu0 %v1036
        %1074 = vmatpush1.msra.mxu0 %v1035
        %1075 = vmatprep.subr.mxu0 %v1040
        %1076 = vmatpush1.msra.mxu0 %v1039
        %1077 = vmatprep.subr.mxu0 0.0
        %1078 = vmatpush1.msra.mxu0 0.0
        %1079 = vmatprep.subr.mxu0 0.0
        %1080 = vmatpush1.msra.mxu0 0.0
        %1081 = vmatprep.subr.mxu0 0.0
        %1082 = vmatpush1.msra.mxu0 0.0
        %1083 = vmatprep.subr.mxu0 0.0
        %1084 = vmatpush1.msra.mxu0 0.0
        %1085 = vmatprep.subr.mxu0 0.0
        %1086 = vmatpush1.msra.mxu0 0.0
        %1087 = vmatprep.subr.mxu0 0.0
        %1088 = vmatpush1.msra.mxu0 0.0
        %1089 = vmatprep.subr.mxu0 0.0
        %1090 = vmatpush1.msra.mxu0 0.0
        %1091 = vmatprep.subr.mxu0 0.0
        %1092 = vmatpush1.msra.mxu0 0.0
        %1093 = vmatprep.subr.mxu0 0.0
        %1094 = vmatpush1.msra.mxu0 0.0
        %1095 = vmatprep.subr.mxu0 0.0
        %1096 = vmatpush1.msra.mxu0 0.0
        %1097 = vmatprep.subr.mxu0 0.0
        %1098 = vmatpush1.msra.mxu0 0.0
        %1099 = vmatprep.subr.mxu0 0.0
        %1100 = vmatpush1.msra.mxu0 0.0
        %1101 = vmatprep.subr.mxu0 0.0
        %1102 = vmatpush1.msra.mxu0 0.0
        %1103 = vmatprep.subr.mxu0 0.0
        %1104 = vmatpush1.msra.mxu0 0.0
        %1105 = vmatprep.subr.mxu0 0.0
        %1106 = vmatpush1.msra.mxu0 0.0
        %1107 = vmatprep.subr.mxu0 0.0
        %1108 = vmatpush1.msra.mxu0 0.0
        %1109 = vmatprep.mubr.f32.mxu0 0.0
        %1110 = vmatmul.mubr.f32.gmra.mrb[0].mxu0 %v1043
        %v1111 = vpop.f32.mrb[0].mxu0
        %v1112 = vadd.f32 0.0, %v1111
        %v1113 = vpop.f32.mrb[0].mxu0
        %v1114 = vadd.f32 0.0, %v1113
        %1115 = vdwg.mxu0
        %1116 = vmatprep.subr.mxu0 %v982
        %1117 = vmatpush1.msra.mxu0 %v981
        %1118 = vmatprep.subr.mxu0 %v986
        %1119 = vmatpush1.msra.mxu0 %v985
        %1120 = vmatprep.subr.mxu0 %v990
        %1121 = vmatpush1.msra.mxu0 %v989
        %1122 = vmatprep.subr.mxu0 %v994
        %1123 = vmatpush1.msra.mxu0 %v993
        %1124 = vmatprep.subr.mxu0 %v998
        %1125 = vmatpush1.msra.mxu0 %v997
        %1126 = vmatprep.subr.mxu0 %v1002
        %1127 = vmatpush1.msra.mxu0 %v1001
        %1128 = vmatprep.subr.mxu0 %v1006
        %1129 = vmatpush1.msra.mxu0 %v1005
        %1130 = vmatprep.subr.mxu0 %v1010
        %1131 = vmatpush1.msra.mxu0 %v1009
        %1132 = vmatprep.subr.mxu0 %v1014
        %1133 = vmatpush1.msra.mxu0 %v1013
        %1134 = vmatprep.subr.mxu0 %v1018
        %1135 = vmatpush1.msra.mxu0 %v1017
        %1136 = vmatprep.subr.mxu0 %v1022
        %1137 = vmatpush1.msra.mxu0 %v1021
        %1138 = vmatprep.subr.mxu0 %v1026
        %1139 = vmatpush1.msra.mxu0 %v1025
        %1140 = vmatprep.subr.mxu0 %v1030
        %1141 = vmatpush1.msra.mxu0 %v1029
        %1142 = vmatprep.subr.mxu0 %v1034
        %1143 = vmatpush1.msra.mxu0 %v1033
        %1144 = vmatprep.subr.mxu0 %v1038
        %1145 = vmatpush1.msra.mxu0 %v1037
        %1146 = vmatprep.subr.mxu0 %v1042
        %1147 = vmatpush1.msra.mxu0 %v1041
        %1148 = vmatprep.subr.mxu0 0.0
        %1149 = vmatpush1.msra.mxu0 0.0
        %1150 = vmatprep.subr.mxu0 0.0
        %1151 = vmatpush1.msra.mxu0 0.0
        %1152 = vmatprep.subr.mxu0 0.0
        %1153 = vmatpush1.msra.mxu0 0.0
        %1154 = vmatprep.subr.mxu0 0.0
        %1155 = vmatpush1.msra.mxu0 0.0
        %1156 = vmatprep.subr.mxu0 0.0
        %1157 = vmatpush1.msra.mxu0 0.0
        %1158 = vmatprep.subr.mxu0 0.0
        %1159 = vmatpush1.msra.mxu0 0.0
        %1160 = vmatprep.subr.mxu0 0.0
        %1161 = vmatpush1.msra.mxu0 0.0
        %1162 = vmatprep.subr.mxu0 0.0
        %1163 = vmatpush1.msra.mxu0 0.0
        %1164 = vmatprep.subr.mxu0 0.0
        %1165 = vmatpush1.msra.mxu0 0.0
        %1166 = vmatprep.subr.mxu0 0.0
        %1167 = vmatpush1.msra.mxu0 0.0
        %1168 = vmatprep.subr.mxu0 0.0
        %1169 = vmatpush1.msra.mxu0 0.0
        %1170 = vmatprep.subr.mxu0 0.0
        %1171 = vmatpush1.msra.mxu0 0.0
        %1172 = vmatprep.subr.mxu0 0.0
        %1173 = vmatpush1.msra.mxu0 0.0
        %1174 = vmatprep.subr.mxu0 0.0
        %1175 = vmatpush1.msra.mxu0 0.0
        %1176 = vmatprep.subr.mxu0 0.0
        %1177 = vmatpush1.msra.mxu0 0.0
        %1178 = vmatprep.subr.mxu0 0.0
        %1179 = vmatpush1.msra.mxu0 0.0
        %1180 = vmatprep.mubr.f32.mxu0 0.0
        %1181 = vmatmul.mubr.f32.gmra.mrb[0].mxu0 %v1043
        %v1182 = vpop.f32.mrb[0].mxu0
        %v1183 = vadd.f32 0.0, %v1182
        %v1184 = vpop.f32.mrb[0].mxu0
        %v1185 = vadd.f32 0.0, %v1184
        %1186 = vdwg.mxu0
        %v1187 = vadd.f32 %v975, %v1112
        %v1188 = vadd.f32 %v976, %v1114
        %v1189 = vadd.f32 %v977, %v1183
        %v1190 = vadd.f32 %v978, %v1185
        %v1191 = vxor.u32 %v1187, 2147483648
        %v1192 = vmul.f32 %v1191, 1.442695
        %v1193 = vpow.pop %v1192
        %v1194 = vadd.f32 %v1193, 1.0
        %v1195 = vrcp.pop %v1194
        %v1196 = vmul.f32 1.0, %v1195
        %v1197 = vxor.u32 %v1188, 2147483648
        %v1198 = vmul.f32 %v1197, 1.442695
        %v1199 = vpow.pop %v1198
        %v1200 = vadd.f32 %v1199, 1.0
        %v1201 = vrcp.pop %v1200
        %v1202 = vmul.f32 1.0, %v1201
        %v1203 = vtanh.pop %v1189
        %v1204 = vxor.u32 %v1190, 2147483648
        %v1205 = vmul.f32 %v1204, 1.442695
        %v1206 = vpow.pop %v1205
        %v1207 = vadd.f32 %v1206, 1.0
        %v1208 = vrcp.pop %v1207
        %v1209 = vmul.f32 1.0, %v1208
        %v1210 = vmul.f32 %v1202, %v1044
        %v1211 = vmul.f32 %v1196, %v1203
        %v1212 = vadd.f32 %v1210, %v1211
        %v1213 = vtanh.pop %v1212
        %v1214 = vmul.f32 %v1209, %v1213
        %1215 = vst [vmem:[#allocation3] sm:$0xff] %v1214
        %1216 = vst [vmem:[#allocation4] sm:$0xff] %v1212
        %v1217 = vpack.c.bf16 %v1214, %v1214
        %s1218 = smul.addr %s970, 4
        %s1219 = scalar_lea.vmem %s329, %s1218 [#allocation9]
        %1220 = vst [vmem:[%s1219] sm:$0xf] %v1217
        %s1221 = smul.u32 %s25, 5
        %s1222 = smul.u32 %s967, 2
        %s1223 = sadd.s32 %s1221, %s1222
        %s1224 = smul.u32 %s1223, 8
        %s1225 = sshra.s32 %s1224, 3
        %s1226 = sand.u32 %s1224, 7
        %s1227 = smul.u32 %s1225, 4
        %s1228 = smul.addr %s1227, 8
        %s1229 = scalar_lea.vmem [#allocation2], %s1228
        %v1230 = vld [vmem:[%s1229] sm:$0xff]
        %v1231 = vld [vmem:[%s1229 + $0x8] sm:$0xff]
        %v1232 = vld [vmem:[%s1229 + $0x10] sm:$0xff]
        %v1233 = vld [vmem:[%s1229 + $0x18] sm:$0xff]
        %v1234 = vld [vmem:[%s287] sm:$0xff]
        %v1235 = vld [vmem:[%s287 + $0x8] sm:$0xff]
        %v1236 = vld [vmem:[%s287 + $0x10] sm:$0xff]
        %v1237 = vld [vmem:[%s287 + $0x18] sm:$0xff]
        %v1238 = vld [vmem:[%s287 + $0x20] sm:$0xff]
        %v1239 = vld [vmem:[%s287 + $0x28] sm:$0xff]
        %v1240 = vld [vmem:[%s287 + $0x30] sm:$0xff]
        %v1241 = vld [vmem:[%s287 + $0x38] sm:$0xff]
        %v1242 = vld [vmem:[%s287 + $0x40] sm:$0xff]
        %v1243 = vld [vmem:[%s287 + $0x48] sm:$0xff]
        %v1244 = vld [vmem:[%s287 + $0x50] sm:$0xff]
        %v1245 = vld [vmem:[%s287 + $0x58] sm:$0xff]
        %v1246 = vld [vmem:[%s287 + $0x60] sm:$0xff]
        %v1247 = vld [vmem:[%s287 + $0x68] sm:$0xff]
        %v1248 = vld [vmem:[%s287 + $0x70] sm:$0xff]
        %v1249 = vld [vmem:[%s287 + $0x78] sm:$0xff]
        %v1250 = vld [vmem:[%s287 + $0x80] sm:$0xff]
        %v1251 = vld [vmem:[%s287 + $0x88] sm:$0xff]
        %v1252 = vld [vmem:[%s287 + $0x90] sm:$0xff]
        %v1253 = vld [vmem:[%s287 + $0x98] sm:$0xff]
        %v1254 = vld [vmem:[%s287 + $0xa0] sm:$0xff]
        %v1255 = vld [vmem:[%s287 + $0xa8] sm:$0xff]
        %v1256 = vld [vmem:[%s287 + $0xb0] sm:$0xff]
        %v1257 = vld [vmem:[%s287 + $0xb8] sm:$0xff]
        %v1258 = vld [vmem:[%s287 + $0xc0] sm:$0xff]
        %v1259 = vld [vmem:[%s287 + $0xc8] sm:$0xff]
        %v1260 = vld [vmem:[%s287 + $0xd0] sm:$0xff]
        %v1261 = vld [vmem:[%s287 + $0xd8] sm:$0xff]
        %v1262 = vld [vmem:[%s287 + $0xe0] sm:$0xff]
        %v1263 = vld [vmem:[%s287 + $0xe8] sm:$0xff]
        %v1264 = vld [vmem:[%s287 + $0xf0] sm:$0xff]
        %v1265 = vld [vmem:[%s287 + $0xf8] sm:$0xff]
        %v1266 = vld [vmem:[%s287 + $0x100] sm:$0xff]
        %v1267 = vld [vmem:[%s287 + $0x108] sm:$0xff]
        %v1268 = vld [vmem:[%s287 + $0x110] sm:$0xff]
        %v1269 = vld [vmem:[%s287 + $0x118] sm:$0xff]
        %v1270 = vld [vmem:[%s287 + $0x120] sm:$0xff]
        %v1271 = vld [vmem:[%s287 + $0x128] sm:$0xff]
        %v1272 = vld [vmem:[%s287 + $0x130] sm:$0xff]
        %v1273 = vld [vmem:[%s287 + $0x138] sm:$0xff]
        %v1274 = vld [vmem:[%s287 + $0x140] sm:$0xff]
        %v1275 = vld [vmem:[%s287 + $0x148] sm:$0xff]
        %v1276 = vld [vmem:[%s287 + $0x150] sm:$0xff]
        %v1277 = vld [vmem:[%s287 + $0x158] sm:$0xff]
        %v1278 = vld [vmem:[%s287 + $0x160] sm:$0xff]
        %v1279 = vld [vmem:[%s287 + $0x168] sm:$0xff]
        %v1280 = vld [vmem:[%s287 + $0x170] sm:$0xff]
        %v1281 = vld [vmem:[%s287 + $0x178] sm:$0xff]
        %v1282 = vld [vmem:[%s287 + $0x180] sm:$0xff]
        %v1283 = vld [vmem:[%s287 + $0x188] sm:$0xff]
        %v1284 = vld [vmem:[%s287 + $0x190] sm:$0xff]
        %v1285 = vld [vmem:[%s287 + $0x198] sm:$0xff]
        %v1286 = vld [vmem:[%s287 + $0x1a0] sm:$0xff]
        %v1287 = vld [vmem:[%s287 + $0x1a8] sm:$0xff]
        %v1288 = vld [vmem:[%s287 + $0x1b0] sm:$0xff]
        %v1289 = vld [vmem:[%s287 + $0x1b8] sm:$0xff]
        %v1290 = vld [vmem:[%s287 + $0x1c0] sm:$0xff]
        %v1291 = vld [vmem:[%s287 + $0x1c8] sm:$0xff]
        %v1292 = vld [vmem:[%s287 + $0x1d0] sm:$0xff]
        %v1293 = vld [vmem:[%s287 + $0x1d8] sm:$0xff]
        %v1294 = vld [vmem:[%s287 + $0x1e0] sm:$0xff]
        %v1295 = vld [vmem:[%s287 + $0x1e8] sm:$0xff]
        %v1296 = vld [vmem:[%s287 + $0x1f0] sm:$0xff]
        %v1297 = vld [vmem:[%s287 + $0x1f8] sm:$0xff]
        %v1298 = vld [vmem:[#allocation3] sm:$0xff]
        %v1299 = vld [vmem:[#allocation4] sm:$0xff]
        %1300 = vmatprep.subr.mxu0 %v1235
        %1301 = vmatpush1.msra.mxu0 %v1234
        %1302 = vmatprep.subr.mxu0 %v1239
        %1303 = vmatpush1.msra.mxu0 %v1238
        %1304 = vmatprep.subr.mxu0 %v1243
        %1305 = vmatpush1.msra.mxu0 %v1242
        %1306 = vmatprep.subr.mxu0 %v1247
        %1307 = vmatpush1.msra.mxu0 %v1246
        %1308 = vmatprep.subr.mxu0 %v1251
        %1309 = vmatpush1.msra.mxu0 %v1250
        %1310 = vmatprep.subr.mxu0 %v1255
        %1311 = vmatpush1.msra.mxu0 %v1254
        %1312 = vmatprep.subr.mxu0 %v1259
        %1313 = vmatpush1.msra.mxu0 %v1258
        %1314 = vmatprep.subr.mxu0 %v1263
        %1315 = vmatpush1.msra.mxu0 %v1262
        %1316 = vmatprep.subr.mxu0 %v1267
        %1317 = vmatpush1.msra.mxu0 %v1266
        %1318 = vmatprep.subr.mxu0 %v1271
        %1319 = vmatpush1.msra.mxu0 %v1270
        %1320 = vmatprep.subr.mxu0 %v1275
        %1321 = vmatpush1.msra.mxu0 %v1274
        %1322 = vmatprep.subr.mxu0 %v1279
        %1323 = vmatpush1.msra.mxu0 %v1278
        %1324 = vmatprep.subr.mxu0 %v1283
        %1325 = vmatpush1.msra.mxu0 %v1282
        %1326 = vmatprep.subr.mxu0 %v1287
        %1327 = vmatpush1.msra.mxu0 %v1286
        %1328 = vmatprep.subr.mxu0 %v1291
        %1329 = vmatpush1.msra.mxu0 %v1290
        %1330 = vmatprep.subr.mxu0 %v1295
        %1331 = vmatpush1.msra.mxu0 %v1294
        %1332 = vmatprep.subr.mxu0 0.0
        %1333 = vmatpush1.msra.mxu0 0.0
        %1334 = vmatprep.subr.mxu0 0.0
        %1335 = vmatpush1.msra.mxu0 0.0
        %1336 = vmatprep.subr.mxu0 0.0
        %1337 = vmatpush1.msra.mxu0 0.0
        %1338 = vmatprep.subr.mxu0 0.0
        %1339 = vmatpush1.msra.mxu0 0.0
        %1340 = vmatprep.subr.mxu0 0.0
        %1341 = vmatpush1.msra.mxu0 0.0
        %1342 = vmatprep.subr.mxu0 0.0
        %1343 = vmatpush1.msra.mxu0 0.0
        %1344 = vmatprep.subr.mxu0 0.0
        %1345 = vmatpush1.msra.mxu0 0.0
        %1346 = vmatprep.subr.mxu0 0.0
        %1347 = vmatpush1.msra.mxu0 0.0
        %1348 = vmatprep.subr.mxu0 0.0
        %1349 = vmatpush1.msra.mxu0 0.0
        %1350 = vmatprep.subr.mxu0 0.0
        %1351 = vmatpush1.msra.mxu0 0.0
        %1352 = vmatprep.subr.mxu0 0.0
        %1353 = vmatpush1.msra.mxu0 0.0
        %1354 = vmatprep.subr.mxu0 0.0
        %1355 = vmatpush1.msra.mxu0 0.0
        %1356 = vmatprep.subr.mxu0 0.0
        %1357 = vmatpush1.msra.mxu0 0.0
        %1358 = vmatprep.subr.mxu0 0.0
        %1359 = vmatpush1.msra.mxu0 0.0
        %1360 = vmatprep.subr.mxu0 0.0
        %1361 = vmatpush1.msra.mxu0 0.0
        %1362 = vmatprep.subr.mxu0 0.0
        %1363 = vmatpush1.msra.mxu0 0.0
        %1364 = vmatprep.mubr.f32.mxu0 0.0
        %1365 = vmatmul.mubr.f32.gmra.mrb[0].mxu0 %v1298
        %v1366 = vpop.f32.mrb[0].mxu0
        %v1367 = vadd.f32 0.0, %v1366
        %v1368 = vpop.f32.mrb[0].mxu0
        %v1369 = vadd.f32 0.0, %v1368
        %1370 = vdwg.mxu0
        %1371 = vmatprep.subr.mxu0 %v1237
        %1372 = vmatpush1.msra.mxu0 %v1236
        %1373 = vmatprep.subr.mxu0 %v1241
        %1374 = vmatpush1.msra.mxu0 %v1240
        %1375 = vmatprep.subr.mxu0 %v1245
        %1376 = vmatpush1.msra.mxu0 %v1244
        %1377 = vmatprep.subr.mxu0 %v1249
        %1378 = vmatpush1.msra.mxu0 %v1248
        %1379 = vmatprep.subr.mxu0 %v1253
        %1380 = vmatpush1.msra.mxu0 %v1252
        %1381 = vmatprep.subr.mxu0 %v1257
        %1382 = vmatpush1.msra.mxu0 %v1256
        %1383 = vmatprep.subr.mxu0 %v1261
        %1384 = vmatpush1.msra.mxu0 %v1260
        %1385 = vmatprep.subr.mxu0 %v1265
        %1386 = vmatpush1.msra.mxu0 %v1264
        %1387 = vmatprep.subr.mxu0 %v1269
        %1388 = vmatpush1.msra.mxu0 %v1268
        %1389 = vmatprep.subr.mxu0 %v1273
        %1390 = vmatpush1.msra.mxu0 %v1272
        %1391 = vmatprep.subr.mxu0 %v1277
        %1392 = vmatpush1.msra.mxu0 %v1276
        %1393 = vmatprep.subr.mxu0 %v1281
        %1394 = vmatpush1.msra.mxu0 %v1280
        %1395 = vmatprep.subr.mxu0 %v1285
        %1396 = vmatpush1.msra.mxu0 %v1284
        %1397 = vmatprep.subr.mxu0 %v1289
        %1398 = vmatpush1.msra.mxu0 %v1288
        %1399 = vmatprep.subr.mxu0 %v1293
        %1400 = vmatpush1.msra.mxu0 %v1292
        %1401 = vmatprep.subr.mxu0 %v1297
        %1402 = vmatpush1.msra.mxu0 %v1296
        %1403 = vmatprep.subr.mxu0 0.0
        %1404 = vmatpush1.msra.mxu0 0.0
        %1405 = vmatprep.subr.mxu0 0.0
        %1406 = vmatpush1.msra.mxu0 0.0
        %1407 = vmatprep.subr.mxu0 0.0
        %1408 = vmatpush1.msra.mxu0 0.0
        %1409 = vmatprep.subr.mxu0 0.0
        %1410 = vmatpush1.msra.mxu0 0.0
        %1411 = vmatprep.subr.mxu0 0.0
        %1412 = vmatpush1.msra.mxu0 0.0
        %1413 = vmatprep.subr.mxu0 0.0
        %1414 = vmatpush1.msra.mxu0 0.0
        %1415 = vmatprep.subr.mxu0 0.0
        %1416 = vmatpush1.msra.mxu0 0.0
        %1417 = vmatprep.subr.mxu0 0.0
        %1418 = vmatpush1.msra.mxu0 0.0
        %1419 = vmatprep.subr.mxu0 0.0
        %1420 = vmatpush1.msra.mxu0 0.0
        %1421 = vmatprep.subr.mxu0 0.0
        %1422 = vmatpush1.msra.mxu0 0.0
        %1423 = vmatprep.subr.mxu0 0.0
        %1424 = vmatpush1.msra.mxu0 0.0
        %1425 = vmatprep.subr.mxu0 0.0
        %1426 = vmatpush1.msra.mxu0 0.0
        %1427 = vmatprep.subr.mxu0 0.0
        %1428 = vmatpush1.msra.mxu0 0.0
        %1429 = vmatprep.subr.mxu0 0.0
        %1430 = vmatpush1.msra.mxu0 0.0
        %1431 = vmatprep.subr.mxu0 0.0
        %1432 = vmatpush1.msra.mxu0 0.0
        %1433 = vmatprep.subr.mxu0 0.0
        %1434 = vmatpush1.msra.mxu0 0.0
        %1435 = vmatprep.mubr.f32.mxu0 0.0
        %1436 = vmatmul.mubr.f32.gmra.mrb[0].mxu0 %v1298
        %v1437 = vpop.f32.mrb[0].mxu0
        %v1438 = vadd.f32 0.0, %v1437
        %v1439 = vpop.f32.mrb[0].mxu0
        %v1440 = vadd.f32 0.0, %v1439
        %1441 = vdwg.mxu0
        %v1442 = vadd.f32 %v1230, %v1367
        %v1443 = vadd.f32 %v1231, %v1369
        %v1444 = vadd.f32 %v1232, %v1438
        %v1445 = vadd.f32 %v1233, %v1440
        %v1446 = vxor.u32 %v1442, 2147483648
        %v1447 = vmul.f32 %v1446, 1.442695
        %v1448 = vpow.pop %v1447
        %v1449 = vadd.f32 %v1448, 1.0
        %v1450 = vrcp.pop %v1449
        %v1451 = vmul.f32 1.0, %v1450
        %v1452 = vxor.u32 %v1443, 2147483648
        %v1453 = vmul.f32 %v1452, 1.442695
        %v1454 = vpow.pop %v1453
        %v1455 = vadd.f32 %v1454, 1.0
        %v1456 = vrcp.pop %v1455
        %v1457 = vmul.f32 1.0, %v1456
        %v1458 = vtanh.pop %v1444
        %v1459 = vxor.u32 %v1445, 2147483648
        %v1460 = vmul.f32 %v1459, 1.442695
        %v1461 = vpow.pop %v1460
        %v1462 = vadd.f32 %v1461, 1.0
        %v1463 = vrcp.pop %v1462
        %v1464 = vmul.f32 1.0, %v1463
        %v1465 = vmul.f32 %v1457, %v1299
        %v1466 = vmul.f32 %v1451, %v1458
        %v1467 = vadd.f32 %v1465, %v1466
        %v1468 = vtanh.pop %v1467
        %v1469 = vmul.f32 %v1464, %v1468
        %1470 = vst [vmem:[#allocation3] sm:$0xff] %v1469
        %1471 = vst [vmem:[#allocation4] sm:$0xff] %v1467
        %v1472 = vpack.c.bf16 %v1469, %v1469
        %s1473 = smul.addr %s1225, 4
        %s1474 = scalar_lea.vmem %s329, %s1473 [#allocation9]
        %1475 = vst [vmem:[%s1474] sm:$0xf] %v1472
        %s1476 = smul.u32 %s25, 4
        %s1477 = smul.u32 %s967, 3
        %s1478 = sadd.s32 %s1476, %s1477
        %s1479 = smul.u32 %s1478, 8
        %s1480 = sshra.s32 %s1479, 3
        %s1481 = sand.u32 %s1479, 7
        %s1482 = smul.u32 %s1480, 4
        %s1483 = smul.addr %s1482, 8
        %s1484 = scalar_lea.vmem [#allocation2], %s1483
        %v1485 = vld [vmem:[%s1484] sm:$0xff]
        %v1486 = vld [vmem:[%s1484 + $0x8] sm:$0xff]
        %v1487 = vld [vmem:[%s1484 + $0x10] sm:$0xff]
        %v1488 = vld [vmem:[%s1484 + $0x18] sm:$0xff]
        %v1489 = vld [vmem:[%s287] sm:$0xff]
        %v1490 = vld [vmem:[%s287 + $0x8] sm:$0xff]
        %v1491 = vld [vmem:[%s287 + $0x10] sm:$0xff]
        %v1492 = vld [vmem:[%s287 + $0x18] sm:$0xff]
        %v1493 = vld [vmem:[%s287 + $0x20] sm:$0xff]
        %v1494 = vld [vmem:[%s287 + $0x28] sm:$0xff]
        %v1495 = vld [vmem:[%s287 + $0x30] sm:$0xff]
        %v1496 = vld [vmem:[%s287 + $0x38] sm:$0xff]
        %v1497 = vld [vmem:[%s287 + $0x40] sm:$0xff]
        %v1498 = vld [vmem:[%s287 + $0x48] sm:$0xff]
        %v1499 = vld [vmem:[%s287 + $0x50] sm:$0xff]
        %v1500 = vld [vmem:[%s287 + $0x58] sm:$0xff]
        %v1501 = vld [vmem:[%s287 + $0x60] sm:$0xff]
        %v1502 = vld [vmem:[%s287 + $0x68] sm:$0xff]
        %v1503 = vld [vmem:[%s287 + $0x70] sm:$0xff]
        %v1504 = vld [vmem:[%s287 + $0x78] sm:$0xff]
        %v1505 = vld [vmem:[%s287 + $0x80] sm:$0xff]
        %v1506 = vld [vmem:[%s287 + $0x88] sm:$0xff]
        %v1507 = vld [vmem:[%s287 + $0x90] sm:$0xff]
        %v1508 = vld [vmem:[%s287 + $0x98] sm:$0xff]
        %v1509 = vld [vmem:[%s287 + $0xa0] sm:$0xff]
        %v1510 = vld [vmem:[%s287 + $0xa8] sm:$0xff]
        %v1511 = vld [vmem:[%s287 + $0xb0] sm:$0xff]
        %v1512 = vld [vmem:[%s287 + $0xb8] sm:$0xff]
        %v1513 = vld [vmem:[%s287 + $0xc0] sm:$0xff]
        %v1514 = vld [vmem:[%s287 + $0xc8] sm:$0xff]
        %v1515 = vld [vmem:[%s287 + $0xd0] sm:$0xff]
        %v1516 = vld [vmem:[%s287 + $0xd8] sm:$0xff]
        %v1517 = vld [vmem:[%s287 + $0xe0] sm:$0xff]
        %v1518 = vld [vmem:[%s287 + $0xe8] sm:$0xff]
        %v1519 = vld [vmem:[%s287 + $0xf0] sm:$0xff]
        %v1520 = vld [vmem:[%s287 + $0xf8] sm:$0xff]
        %v1521 = vld [vmem:[%s287 + $0x100] sm:$0xff]
        %v1522 = vld [vmem:[%s287 + $0x108] sm:$0xff]
        %v1523 = vld [vmem:[%s287 + $0x110] sm:$0xff]
        %v1524 = vld [vmem:[%s287 + $0x118] sm:$0xff]
        %v1525 = vld [vmem:[%s287 + $0x120] sm:$0xff]
        %v1526 = vld [vmem:[%s287 + $0x128] sm:$0xff]
        %v1527 = vld [vmem:[%s287 + $0x130] sm:$0xff]
        %v1528 = vld [vmem:[%s287 + $0x138] sm:$0xff]
        %v1529 = vld [vmem:[%s287 + $0x140] sm:$0xff]
        %v1530 = vld [vmem:[%s287 + $0x148] sm:$0xff]
        %v1531 = vld [vmem:[%s287 + $0x150] sm:$0xff]
        %v1532 = vld [vmem:[%s287 + $0x158] sm:$0xff]
        %v1533 = vld [vmem:[%s287 + $0x160] sm:$0xff]
        %v1534 = vld [vmem:[%s287 + $0x168] sm:$0xff]
        %v1535 = vld [vmem:[%s287 + $0x170] sm:$0xff]
        %v1536 = vld [vmem:[%s287 + $0x178] sm:$0xff]
        %v1537 = vld [vmem:[%s287 + $0x180] sm:$0xff]
        %v1538 = vld [vmem:[%s287 + $0x188] sm:$0xff]
        %v1539 = vld [vmem:[%s287 + $0x190] sm:$0xff]
        %v1540 = vld [vmem:[%s287 + $0x198] sm:$0xff]
        %v1541 = vld [vmem:[%s287 + $0x1a0] sm:$0xff]
        %v1542 = vld [vmem:[%s287 + $0x1a8] sm:$0xff]
        %v1543 = vld [vmem:[%s287 + $0x1b0] sm:$0xff]
        %v1544 = vld [vmem:[%s287 + $0x1b8] sm:$0xff]
        %v1545 = vld [vmem:[%s287 + $0x1c0] sm:$0xff]
        %v1546 = vld [vmem:[%s287 + $0x1c8] sm:$0xff]
        %v1547 = vld [vmem:[%s287 + $0x1d0] sm:$0xff]
        %v1548 = vld [vmem:[%s287 + $0x1d8] sm:$0xff]
        %v1549 = vld [vmem:[%s287 + $0x1e0] sm:$0xff]
        %v1550 = vld [vmem:[%s287 + $0x1e8] sm:$0xff]
        %v1551 = vld [vmem:[%s287 + $0x1f0] sm:$0xff]
        %v1552 = vld [vmem:[%s287 + $0x1f8] sm:$0xff]
        %v1553 = vld [vmem:[#allocation3] sm:$0xff]
        %v1554 = vld [vmem:[#allocation4] sm:$0xff]
        %1555 = vmatprep.subr.mxu0 %v1490
        %1556 = vmatpush1.msra.mxu0 %v1489
        %1557 = vmatprep.subr.mxu0 %v1494
        %1558 = vmatpush1.msra.mxu0 %v1493
        %1559 = vmatprep.subr.mxu0 %v1498
        %1560 = vmatpush1.msra.mxu0 %v1497
        %1561 = vmatprep.subr.mxu0 %v1502
        %1562 = vmatpush1.msra.mxu0 %v1501
        %1563 = vmatprep.subr.mxu0 %v1506
        %1564 = vmatpush1.msra.mxu0 %v1505
        %1565 = vmatprep.subr.mxu0 %v1510
        %1566 = vmatpush1.msra.mxu0 %v1509
        %1567 = vmatprep.subr.mxu0 %v1514
        %1568 = vmatpush1.msra.mxu0 %v1513
        %1569 = vmatprep.subr.mxu0 %v1518
        %1570 = vmatpush1.msra.mxu0 %v1517
        %1571 = vmatprep.subr.mxu0 %v1522
        %1572 = vmatpush1.msra.mxu0 %v1521
        %1573 = vmatprep.subr.mxu0 %v1526
        %1574 = vmatpush1.msra.mxu0 %v1525
        %1575 = vmatprep.subr.mxu0 %v1530
        %1576 = vmatpush1.msra.mxu0 %v1529
        %1577 = vmatprep.subr.mxu0 %v1534
        %1578 = vmatpush1.msra.mxu0 %v1533
        %1579 = vmatprep.subr.mxu0 %v1538
        %1580 = vmatpush1.msra.mxu0 %v1537
        %1581 = vmatprep.subr.mxu0 %v1542
        %1582 = vmatpush1.msra.mxu0 %v1541
        %1583 = vmatprep.subr.mxu0 %v1546
        %1584 = vmatpush1.msra.mxu0 %v1545
        %1585 = vmatprep.subr.mxu0 %v1550
        %1586 = vmatpush1.msra.mxu0 %v1549
        %1587 = vmatprep.subr.mxu0 0.0
        %1588 = vmatpush1.msra.mxu0 0.0
        %1589 = vmatprep.subr.mxu0 0.0
        %1590 = vmatpush1.msra.mxu0 0.0
        %1591 = vmatprep.subr.mxu0 0.0
        %1592 = vmatpush1.msra.mxu0 0.0
        %1593 = vmatprep.subr.mxu0 0.0
        %1594 = vmatpush1.msra.mxu0 0.0
        %1595 = vmatprep.subr.mxu0 0.0
        %1596 = vmatpush1.msra.mxu0 0.0
        %1597 = vmatprep.subr.mxu0 0.0
        %1598 = vmatpush1.msra.mxu0 0.0
        %1599 = vmatprep.subr.mxu0 0.0
        %1600 = vmatpush1.msra.mxu0 0.0
        %1601 = vmatprep.subr.mxu0 0.0
        %1602 = vmatpush1.msra.mxu0 0.0
        %1603 = vmatprep.subr.mxu0 0.0
        %1604 = vmatpush1.msra.mxu0 0.0
        %1605 = vmatprep.subr.mxu0 0.0
        %1606 = vmatpush1.msra.mxu0 0.0
        %1607 = vmatprep.subr.mxu0 0.0
        %1608 = vmatpush1.msra.mxu0 0.0
        %1609 = vmatprep.subr.mxu0 0.0
        %1610 = vmatpush1.msra.mxu0 0.0
        %1611 = vmatprep.subr.mxu0 0.0
        %1612 = vmatpush1.msra.mxu0 0.0
        %1613 = vmatprep.subr.mxu0 0.0
        %1614 = vmatpush1.msra.mxu0 0.0
        %1615 = vmatprep.subr.mxu0 0.0
        %1616 = vmatpush1.msra.mxu0 0.0
        %1617 = vmatprep.subr.mxu0 0.0
        %1618 = vmatpush1.msra.mxu0 0.0
        %1619 = vmatprep.mubr.f32.mxu0 0.0
        %1620 = vmatmul.mubr.f32.gmra.mrb[0].mxu0 %v1553
        %v1621 = vpop.f32.mrb[0].mxu0
        %v1622 = vadd.f32 0.0, %v1621
        %v1623 = vpop.f32.mrb[0].mxu0
        %v1624 = vadd.f32 0.0, %v1623
        %1625 = vdwg.mxu0
        %1626 = vmatprep.subr.mxu0 %v1492
        %1627 = vmatpush1.msra.mxu0 %v1491
        %1628 = vmatprep.subr.mxu0 %v1496
        %1629 = vmatpush1.msra.mxu0 %v1495
        %1630 = vmatprep.subr.mxu0 %v1500
        %1631 = vmatpush1.msra.mxu0 %v1499
        %1632 = vmatprep.subr.mxu0 %v1504
        %1633 = vmatpush1.msra.mxu0 %v1503
        %1634 = vmatprep.subr.mxu0 %v1508
        %1635 = vmatpush1.msra.mxu0 %v1507
        %1636 = vmatprep.subr.mxu0 %v1512
        %1637 = vmatpush1.msra.mxu0 %v1511
        %1638 = vmatprep.subr.mxu0 %v1516
        %1639 = vmatpush1.msra.mxu0 %v1515
        %1640 = vmatprep.subr.mxu0 %v1520
        %1641 = vmatpush1.msra.mxu0 %v1519
        %1642 = vmatprep.subr.mxu0 %v1524
        %1643 = vmatpush1.msra.mxu0 %v1523
        %1644 = vmatprep.subr.mxu0 %v1528
        %1645 = vmatpush1.msra.mxu0 %v1527
        %1646 = vmatprep.subr.mxu0 %v1532
        %1647 = vmatpush1.msra.mxu0 %v1531
        %1648 = vmatprep.subr.mxu0 %v1536
        %1649 = vmatpush1.msra.mxu0 %v1535
        %1650 = vmatprep.subr.mxu0 %v1540
        %1651 = vmatpush1.msra.mxu0 %v1539
        %1652 = vmatprep.subr.mxu0 %v1544
        %1653 = vmatpush1.msra.mxu0 %v1543
        %1654 = vmatprep.subr.mxu0 %v1548
        %1655 = vmatpush1.msra.mxu0 %v1547
        %1656 = vmatprep.subr.mxu0 %v1552
        %1657 = vmatpush1.msra.mxu0 %v1551
        %1658 = vmatprep.subr.mxu0 0.0
        %1659 = vmatpush1.msra.mxu0 0.0
        %1660 = vmatprep.subr.mxu0 0.0
        %1661 = vmatpush1.msra.mxu0 0.0
        %1662 = vmatprep.subr.mxu0 0.0
        %1663 = vmatpush1.msra.mxu0 0.0
        %1664 = vmatprep.subr.mxu0 0.0
        %1665 = vmatpush1.msra.mxu0 0.0
        %1666 = vmatprep.subr.mxu0 0.0
        %1667 = vmatpush1.msra.mxu0 0.0
        %1668 = vmatprep.subr.mxu0 0.0
        %1669 = vmatpush1.msra.mxu0 0.0
        %1670 = vmatprep.subr.mxu0 0.0
        %1671 = vmatpush1.msra.mxu0 0.0
        %1672 = vmatprep.subr.mxu0 0.0
        %1673 = vmatpush1.msra.mxu0 0.0
        %1674 = vmatprep.subr.mxu0 0.0
        %1675 = vmatpush1.msra.mxu0 0.0
        %1676 = vmatprep.subr.mxu0 0.0
        %1677 = vmatpush1.msra.mxu0 0.0
        %1678 = vmatprep.subr.mxu0 0.0
        %1679 = vmatpush1.msra.mxu0 0.0
        %1680 = vmatprep.subr.mxu0 0.0
        %1681 = vmatpush1.msra.mxu0 0.0
        %1682 = vmatprep.subr.mxu0 0.0
        %1683 = vmatpush1.msra.mxu0 0.0
        %1684 = vmatprep.subr.mxu0 0.0
        %1685 = vmatpush1.msra.mxu0 0.0
        %1686 = vmatprep.subr.mxu0 0.0
        %1687 = vmatpush1.msra.mxu0 0.0
        %1688 = vmatprep.subr.mxu0 0.0
        %1689 = vmatpush1.msra.mxu0 0.0
        %1690 = vmatprep.mubr.f32.mxu0 0.0
        %1691 = vmatmul.mubr.f32.gmra.mrb[0].mxu0 %v1553
        %v1692 = vpop.f32.mrb[0].mxu0
        %v1693 = vadd.f32 0.0, %v1692
        %v1694 = vpop.f32.mrb[0].mxu0
        %v1695 = vadd.f32 0.0, %v1694
        %1696 = vdwg.mxu0
        %v1697 = vadd.f32 %v1485, %v1622
        %v1698 = vadd.f32 %v1486, %v1624
        %v1699 = vadd.f32 %v1487, %v1693
        %v1700 = vadd.f32 %v1488, %v1695
        %v1701 = vxor.u32 %v1697, 2147483648
        %v1702 = vmul.f32 %v1701, 1.442695
        %v1703 = vpow.pop %v1702
        %v1704 = vadd.f32 %v1703, 1.0
        %v1705 = vrcp.pop %v1704
        %v1706 = vmul.f32 1.0, %v1705
        %v1707 = vxor.u32 %v1698, 2147483648
        %v1708 = vmul.f32 %v1707, 1.442695
        %v1709 = vpow.pop %v1708
        %v1710 = vadd.f32 %v1709, 1.0
        %v1711 = vrcp.pop %v1710
        %v1712 = vmul.f32 1.0, %v1711
        %v1713 = vtanh.pop %v1699
        %v1714 = vxor.u32 %v1700, 2147483648
        %v1715 = vmul.f32 %v1714, 1.442695
        %v1716 = vpow.pop %v1715
        %v1717 = vadd.f32 %v1716, 1.0
        %v1718 = vrcp.pop %v1717
        %v1719 = vmul.f32 1.0, %v1718
        %v1720 = vmul.f32 %v1712, %v1554
        %v1721 = vmul.f32 %v1706, %v1713
        %v1722 = vadd.f32 %v1720, %v1721
        %v1723 = vtanh.pop %v1722
        %v1724 = vmul.f32 %v1719, %v1723
        %1725 = vst [vmem:[#allocation3] sm:$0xff] %v1724
        %1726 = vst [vmem:[#allocation4] sm:$0xff] %v1722
        %v1727 = vpack.c.bf16 %v1724, %v1724
        %s1728 = smul.addr %s1480, 4
        %s1729 = scalar_lea.vmem %s329, %s1728 [#allocation9]
        %1730 = vst [vmem:[%s1729] sm:$0xf] %v1727
        %s1731 = smul.u32 %s25, 3
        %s1732 = smul.u32 %s967, 4
        %s1733 = sadd.s32 %s1731, %s1732
        %s1734 = smul.u32 %s1733, 8
        %s1735 = sshra.s32 %s1734, 3
        %s1736 = sand.u32 %s1734, 7
        %s1737 = smul.u32 %s1735, 4
        %s1738 = smul.addr %s1737, 8
        %s1739 = scalar_lea.vmem [#allocation2], %s1738
        %v1740 = vld [vmem:[%s1739] sm:$0xff]
        %v1741 = vld [vmem:[%s1739 + $0x8] sm:$0xff]
        %v1742 = vld [vmem:[%s1739 + $0x10] sm:$0xff]
        %v1743 = vld [vmem:[%s1739 + $0x18] sm:$0xff]
        %v1744 = vld [vmem:[%s287] sm:$0xff]
        %v1745 = vld [vmem:[%s287 + $0x8] sm:$0xff]
        %v1746 = vld [vmem:[%s287 + $0x10] sm:$0xff]
        %v1747 = vld [vmem:[%s287 + $0x18] sm:$0xff]
        %v1748 = vld [vmem:[%s287 + $0x20] sm:$0xff]
        %v1749 = vld [vmem:[%s287 + $0x28] sm:$0xff]
        %v1750 = vld [vmem:[%s287 + $0x30] sm:$0xff]
        %v1751 = vld [vmem:[%s287 + $0x38] sm:$0xff]
        %v1752 = vld [vmem:[%s287 + $0x40] sm:$0xff]
        %v1753 = vld [vmem:[%s287 + $0x48] sm:$0xff]
        %v1754 = vld [vmem:[%s287 + $0x50] sm:$0xff]
        %v1755 = vld [vmem:[%s287 + $0x58] sm:$0xff]
        %v1756 = vld [vmem:[%s287 + $0x60] sm:$0xff]
        %v1757 = vld [vmem:[%s287 + $0x68] sm:$0xff]
        %v1758 = vld [vmem:[%s287 + $0x70] sm:$0xff]
        %v1759 = vld [vmem:[%s287 + $0x78] sm:$0xff]
        %v1760 = vld [vmem:[%s287 + $0x80] sm:$0xff]
        %v1761 = vld [vmem:[%s287 + $0x88] sm:$0xff]
        %v1762 = vld [vmem:[%s287 + $0x90] sm:$0xff]
        %v1763 = vld [vmem:[%s287 + $0x98] sm:$0xff]
        %v1764 = vld [vmem:[%s287 + $0xa0] sm:$0xff]
        %v1765 = vld [vmem:[%s287 + $0xa8] sm:$0xff]
        %v1766 = vld [vmem:[%s287 + $0xb0] sm:$0xff]
        %v1767 = vld [vmem:[%s287 + $0xb8] sm:$0xff]
        %v1768 = vld [vmem:[%s287 + $0xc0] sm:$0xff]
        %v1769 = vld [vmem:[%s287 + $0xc8] sm:$0xff]
        %v1770 = vld [vmem:[%s287 + $0xd0] sm:$0xff]
        %v1771 = vld [vmem:[%s287 + $0xd8] sm:$0xff]
        %v1772 = vld [vmem:[%s287 + $0xe0] sm:$0xff]
        %v1773 = vld [vmem:[%s287 + $0xe8] sm:$0xff]
        %v1774 = vld [vmem:[%s287 + $0xf0] sm:$0xff]
        %v1775 = vld [vmem:[%s287 + $0xf8] sm:$0xff]
        %v1776 = vld [vmem:[%s287 + $0x100] sm:$0xff]
        %v1777 = vld [vmem:[%s287 + $0x108] sm:$0xff]
        %v1778 = vld [vmem:[%s287 + $0x110] sm:$0xff]
        %v1779 = vld [vmem:[%s287 + $0x118] sm:$0xff]
        %v1780 = vld [vmem:[%s287 + $0x120] sm:$0xff]
        %v1781 = vld [vmem:[%s287 + $0x128] sm:$0xff]
        %v1782 = vld [vmem:[%s287 + $0x130] sm:$0xff]
        %v1783 = vld [vmem:[%s287 + $0x138] sm:$0xff]
        %v1784 = vld [vmem:[%s287 + $0x140] sm:$0xff]
        %v1785 = vld [vmem:[%s287 + $0x148] sm:$0xff]
        %v1786 = vld [vmem:[%s287 + $0x150] sm:$0xff]
        %v1787 = vld [vmem:[%s287 + $0x158] sm:$0xff]
        %v1788 = vld [vmem:[%s287 + $0x160] sm:$0xff]
        %v1789 = vld [vmem:[%s287 + $0x168] sm:$0xff]
        %v1790 = vld [vmem:[%s287 + $0x170] sm:$0xff]
        %v1791 = vld [vmem:[%s287 + $0x178] sm:$0xff]
        %v1792 = vld [vmem:[%s287 + $0x180] sm:$0xff]
        %v1793 = vld [vmem:[%s287 + $0x188] sm:$0xff]
        %v1794 = vld [vmem:[%s287 + $0x190] sm:$0xff]
        %v1795 = vld [vmem:[%s287 + $0x198] sm:$0xff]
        %v1796 = vld [vmem:[%s287 + $0x1a0] sm:$0xff]
        %v1797 = vld [vmem:[%s287 + $0x1a8] sm:$0xff]
        %v1798 = vld [vmem:[%s287 + $0x1b0] sm:$0xff]
        %v1799 = vld [vmem:[%s287 + $0x1b8] sm:$0xff]
        %v1800 = vld [vmem:[%s287 + $0x1c0] sm:$0xff]
        %v1801 = vld [vmem:[%s287 + $0x1c8] sm:$0xff]
        %v1802 = vld [vmem:[%s287 + $0x1d0] sm:$0xff]
        %v1803 = vld [vmem:[%s287 + $0x1d8] sm:$0xff]
        %v1804 = vld [vmem:[%s287 + $0x1e0] sm:$0xff]
        %v1805 = vld [vmem:[%s287 + $0x1e8] sm:$0xff]
        %v1806 = vld [vmem:[%s287 + $0x1f0] sm:$0xff]
        %v1807 = vld [vmem:[%s287 + $0x1f8] sm:$0xff]
        %v1808 = vld [vmem:[#allocation3] sm:$0xff]
        %v1809 = vld [vmem:[#allocation4] sm:$0xff]
        %1810 = vmatprep.subr.mxu0 %v1745
        %1811 = vmatpush1.msra.mxu0 %v1744
        %1812 = vmatprep.subr.mxu0 %v1749
        %1813 = vmatpush1.msra.mxu0 %v1748
        %1814 = vmatprep.subr.mxu0 %v1753
        %1815 = vmatpush1.msra.mxu0 %v1752
        %1816 = vmatprep.subr.mxu0 %v1757
        %1817 = vmatpush1.msra.mxu0 %v1756
        %1818 = vmatprep.subr.mxu0 %v1761
        %1819 = vmatpush1.msra.mxu0 %v1760
        %1820 = vmatprep.subr.mxu0 %v1765
        %1821 = vmatpush1.msra.mxu0 %v1764
        %1822 = vmatprep.subr.mxu0 %v1769
        %1823 = vmatpush1.msra.mxu0 %v1768
        %1824 = vmatprep.subr.mxu0 %v1773
        %1825 = vmatpush1.msra.mxu0 %v1772
        %1826 = vmatprep.subr.mxu0 %v1777
        %1827 = vmatpush1.msra.mxu0 %v1776
        %1828 = vmatprep.subr.mxu0 %v1781
        %1829 = vmatpush1.msra.mxu0 %v1780
        %1830 = vmatprep.subr.mxu0 %v1785
        %1831 = vmatpush1.msra.mxu0 %v1784
        %1832 = vmatprep.subr.mxu0 %v1789
        %1833 = vmatpush1.msra.mxu0 %v1788
        %1834 = vmatprep.subr.mxu0 %v1793
        %1835 = vmatpush1.msra.mxu0 %v1792
        %1836 = vmatprep.subr.mxu0 %v1797
        %1837 = vmatpush1.msra.mxu0 %v1796
        %1838 = vmatprep.subr.mxu0 %v1801
        %1839 = vmatpush1.msra.mxu0 %v1800
        %1840 = vmatprep.subr.mxu0 %v1805
        %1841 = vmatpush1.msra.mxu0 %v1804
        %1842 = vmatprep.subr.mxu0 0.0
        %1843 = vmatpush1.msra.mxu0 0.0
        %1844 = vmatprep.subr.mxu0 0.0
        %1845 = vmatpush1.msra.mxu0 0.0
        %1846 = vmatprep.subr.mxu0 0.0
        %1847 = vmatpush1.msra.mxu0 0.0
        %1848 = vmatprep.subr.mxu0 0.0
        %1849 = vmatpush1.msra.mxu0 0.0
        %1850 = vmatprep.subr.mxu0 0.0
        %1851 = vmatpush1.msra.mxu0 0.0
        %1852 = vmatprep.subr.mxu0 0.0
        %1853 = vmatpush1.msra.mxu0 0.0
        %1854 = vmatprep.subr.mxu0 0.0
        %1855 = vmatpush1.msra.mxu0 0.0
        %1856 = vmatprep.subr.mxu0 0.0
        %1857 = vmatpush1.msra.mxu0 0.0
        %1858 = vmatprep.subr.mxu0 0.0
        %1859 = vmatpush1.msra.mxu0 0.0
        %1860 = vmatprep.subr.mxu0 0.0
        %1861 = vmatpush1.msra.mxu0 0.0
        %1862 = vmatprep.subr.mxu0 0.0
        %1863 = vmatpush1.msra.mxu0 0.0
        %1864 = vmatprep.subr.mxu0 0.0
        %1865 = vmatpush1.msra.mxu0 0.0
        %1866 = vmatprep.subr.mxu0 0.0
        %1867 = vmatpush1.msra.mxu0 0.0
        %1868 = vmatprep.subr.mxu0 0.0
        %1869 = vmatpush1.msra.mxu0 0.0
        %1870 = vmatprep.subr.mxu0 0.0
        %1871 = vmatpush1.msra.mxu0 0.0
        %1872 = vmatprep.subr.mxu0 0.0
        %1873 = vmatpush1.msra.mxu0 0.0
        %1874 = vmatprep.mubr.f32.mxu0 0.0
        %1875 = vmatmul.mubr.f32.gmra.mrb[0].mxu0 %v1808
        %v1876 = vpop.f32.mrb[0].mxu0
        %v1877 = vadd.f32 0.0, %v1876
        %v1878 = vpop.f32.mrb[0].mxu0
        %v1879 = vadd.f32 0.0, %v1878
        %1880 = vdwg.mxu0
        %1881 = vmatprep.subr.mxu0 %v1747
        %1882 = vmatpush1.msra.mxu0 %v1746
        %1883 = vmatprep.subr.mxu0 %v1751
        %1884 = vmatpush1.msra.mxu0 %v1750
        %1885 = vmatprep.subr.mxu0 %v1755
        %1886 = vmatpush1.msra.mxu0 %v1754
        %1887 = vmatprep.subr.mxu0 %v1759
        %1888 = vmatpush1.msra.mxu0 %v1758
        %1889 = vmatprep.subr.mxu0 %v1763
        %1890 = vmatpush1.msra.mxu0 %v1762
        %1891 = vmatprep.subr.mxu0 %v1767
        %1892 = vmatpush1.msra.mxu0 %v1766
        %1893 = vmatprep.subr.mxu0 %v1771
        %1894 = vmatpush1.msra.mxu0 %v1770
        %1895 = vmatprep.subr.mxu0 %v1775
        %1896 = vmatpush1.msra.mxu0 %v1774
        %1897 = vmatprep.subr.mxu0 %v1779
        %1898 = vmatpush1.msra.mxu0 %v1778
        %1899 = vmatprep.subr.mxu0 %v1783
        %1900 = vmatpush1.msra.mxu0 %v1782
        %1901 = vmatprep.subr.mxu0 %v1787
        %1902 = vmatpush1.msra.mxu0 %v1786
        %1903 = vmatprep.subr.mxu0 %v1791
        %1904 = vmatpush1.msra.mxu0 %v1790
        %1905 = vmatprep.subr.mxu0 %v1795
        %1906 = vmatpush1.msra.mxu0 %v1794
        %1907 = vmatprep.subr.mxu0 %v1799
        %1908 = vmatpush1.msra.mxu0 %v1798
        %1909 = vmatprep.subr.mxu0 %v1803
        %1910 = vmatpush1.msra.mxu0 %v1802
        %1911 = vmatprep.subr.mxu0 %v1807
        %1912 = vmatpush1.msra.mxu0 %v1806
        %1913 = vmatprep.subr.mxu0 0.0
        %1914 = vmatpush1.msra.mxu0 0.0
        %1915 = vmatprep.subr.mxu0 0.0
        %1916 = vmatpush1.msra.mxu0 0.0
        %1917 = vmatprep.subr.mxu0 0.0
        %1918 = vmatpush1.msra.mxu0 0.0
        %1919 = vmatprep.subr.mxu0 0.0
        %1920 = vmatpush1.msra.mxu0 0.0
        %1921 = vmatprep.subr.mxu0 0.0
        %1922 = vmatpush1.msra.mxu0 0.0
        %1923 = vmatprep.subr.mxu0 0.0
        %1924 = vmatpush1.msra.mxu0 0.0
        %1925 = vmatprep.subr.mxu0 0.0
        %1926 = vmatpush1.msra.mxu0 0.0
        %1927 = vmatprep.subr.mxu0 0.0
        %1928 = vmatpush1.msra.mxu0 0.0
        %1929 = vmatprep.subr.mxu0 0.0
        %1930 = vmatpush1.msra.mxu0 0.0
        %1931 = vmatprep.subr.mxu0 0.0
        %1932 = vmatpush1.msra.mxu0 0.0
        %1933 = vmatprep.subr.mxu0 0.0
        %1934 = vmatpush1.msra.mxu0 0.0
        %1935 = vmatprep.subr.mxu0 0.0
        %1936 = vmatpush1.msra.mxu0 0.0
        %1937 = vmatprep.subr.mxu0 0.0
        %1938 = vmatpush1.msra.mxu0 0.0
        %1939 = vmatprep.subr.mxu0 0.0
        %1940 = vmatpush1.msra.mxu0 0.0
        %1941 = vmatprep.subr.mxu0 0.0
        %1942 = vmatpush1.msra.mxu0 0.0
        %1943 = vmatprep.subr.mxu0 0.0
        %1944 = vmatpush1.msra.mxu0 0.0
        %1945 = vmatprep.mubr.f32.mxu0 0.0
        %1946 = vmatmul.mubr.f32.gmra.mrb[0].mxu0 %v1808
        %v1947 = vpop.f32.mrb[0].mxu0
        %v1948 = vadd.f32 0.0, %v1947
        %v1949 = vpop.f32.mrb[0].mxu0
        %v1950 = vadd.f32 0.0, %v1949
        %1951 = vdwg.mxu0
        %v1952 = vadd.f32 %v1740, %v1877
        %v1953 = vadd.f32 %v1741, %v1879
        %v1954 = vadd.f32 %v1742, %v1948
        %v1955 = vadd.f32 %v1743, %v1950
        %v1956 = vxor.u32 %v1952, 2147483648
        %v1957 = vmul.f32 %v1956, 1.442695
        %v1958 = vpow.pop %v1957
        %v1959 = vadd.f32 %v1958, 1.0
        %v1960 = vrcp.pop %v1959
        %v1961 = vmul.f32 1.0, %v1960
        %v1962 = vxor.u32 %v1953, 2147483648
        %v1963 = vmul.f32 %v1962, 1.442695
        %v1964 = vpow.pop %v1963
        %v1965 = vadd.f32 %v1964, 1.0
        %v1966 = vrcp.pop %v1965
        %v1967 = vmul.f32 1.0, %v1966
        %v1968 = vtanh.pop %v1954
        %v1969 = vxor.u32 %v1955, 2147483648
        %v1970 = vmul.f32 %v1969, 1.442695
        %v1971 = vpow.pop %v1970
        %v1972 = vadd.f32 %v1971, 1.0
        %v1973 = vrcp.pop %v1972
        %v1974 = vmul.f32 1.0, %v1973
        %v1975 = vmul.f32 %v1967, %v1809
        %v1976 = vmul.f32 %v1961, %v1968
        %v1977 = vadd.f32 %v1975, %v1976
        %v1978 = vtanh.pop %v1977
        %v1979 = vmul.f32 %v1974, %v1978
        %1980 = vst [vmem:[#allocation3] sm:$0xff] %v1979
        %1981 = vst [vmem:[#allocation4] sm:$0xff] %v1977
        %v1982 = vpack.c.bf16 %v1979, %v1979
        %s1983 = smul.addr %s1735, 4
        %s1984 = scalar_lea.vmem %s329, %s1983 [#allocation9]
        %1985 = vst [vmem:[%s1984] sm:$0xf] %v1982
        %s1986 = smul.u32 %s25, 2
        %s1987 = smul.u32 %s967, 5
        %s1988 = sadd.s32 %s1986, %s1987
        %s1989 = smul.u32 %s1988, 8
        %s1990 = sshra.s32 %s1989, 3
        %s1991 = sand.u32 %s1989, 7
        %s1992 = smul.u32 %s1990, 4
        %s1993 = smul.addr %s1992, 8
        %s1994 = scalar_lea.vmem [#allocation2], %s1993
        %v1995 = vld [vmem:[%s1994] sm:$0xff]
        %v1996 = vld [vmem:[%s1994 + $0x8] sm:$0xff]
        %v1997 = vld [vmem:[%s1994 + $0x10] sm:$0xff]
        %v1998 = vld [vmem:[%s1994 + $0x18] sm:$0xff]
        %v1999 = vld [vmem:[%s287] sm:$0xff]
        %v2000 = vld [vmem:[%s287 + $0x8] sm:$0xff]
        %v2001 = vld [vmem:[%s287 + $0x10] sm:$0xff]
        %v2002 = vld [vmem:[%s287 + $0x18] sm:$0xff]
        %v2003 = vld [vmem:[%s287 + $0x20] sm:$0xff]
        %v2004 = vld [vmem:[%s287 + $0x28] sm:$0xff]
        %v2005 = vld [vmem:[%s287 + $0x30] sm:$0xff]
        %v2006 = vld [vmem:[%s287 + $0x38] sm:$0xff]
        %v2007 = vld [vmem:[%s287 + $0x40] sm:$0xff]
        %v2008 = vld [vmem:[%s287 + $0x48] sm:$0xff]
        %v2009 = vld [vmem:[%s287 + $0x50] sm:$0xff]
        %v2010 = vld [vmem:[%s287 + $0x58] sm:$0xff]
        %v2011 = vld [vmem:[%s287 + $0x60] sm:$0xff]
        %v2012 = vld [vmem:[%s287 + $0x68] sm:$0xff]
        %v2013 = vld [vmem:[%s287 + $0x70] sm:$0xff]
        %v2014 = vld [vmem:[%s287 + $0x78] sm:$0xff]
        %v2015 = vld [vmem:[%s287 + $0x80] sm:$0xff]
        %v2016 = vld [vmem:[%s287 + $0x88] sm:$0xff]
        %v2017 = vld [vmem:[%s287 + $0x90] sm:$0xff]
        %v2018 = vld [vmem:[%s287 + $0x98] sm:$0xff]
        %v2019 = vld [vmem:[%s287 + $0xa0] sm:$0xff]
        %v2020 = vld [vmem:[%s287 + $0xa8] sm:$0xff]
        %v2021 = vld [vmem:[%s287 + $0xb0] sm:$0xff]
        %v2022 = vld [vmem:[%s287 + $0xb8] sm:$0xff]
        %v2023 = vld [vmem:[%s287 + $0xc0] sm:$0xff]
        %v2024 = vld [vmem:[%s287 + $0xc8] sm:$0xff]
        %v2025 = vld [vmem:[%s287 + $0xd0] sm:$0xff]
        %v2026 = vld [vmem:[%s287 + $0xd8] sm:$0xff]
        %v2027 = vld [vmem:[%s287 + $0xe0] sm:$0xff]
        %v2028 = vld [vmem:[%s287 + $0xe8] sm:$0xff]
        %v2029 = vld [vmem:[%s287 + $0xf0] sm:$0xff]
        %v2030 = vld [vmem:[%s287 + $0xf8] sm:$0xff]
        %v2031 = vld [vmem:[%s287 + $0x100] sm:$0xff]
        %v2032 = vld [vmem:[%s287 + $0x108] sm:$0xff]
        %v2033 = vld [vmem:[%s287 + $0x110] sm:$0xff]
        %v2034 = vld [vmem:[%s287 + $0x118] sm:$0xff]
        %v2035 = vld [vmem:[%s287 + $0x120] sm:$0xff]
        %v2036 = vld [vmem:[%s287 + $0x128] sm:$0xff]
        %v2037 = vld [vmem:[%s287 + $0x130] sm:$0xff]
        %v2038 = vld [vmem:[%s287 + $0x138] sm:$0xff]
        %v2039 = vld [vmem:[%s287 + $0x140] sm:$0xff]
        %v2040 = vld [vmem:[%s287 + $0x148] sm:$0xff]
        %v2041 = vld [vmem:[%s287 + $0x150] sm:$0xff]
        %v2042 = vld [vmem:[%s287 + $0x158] sm:$0xff]
        %v2043 = vld [vmem:[%s287 + $0x160] sm:$0xff]
        %v2044 = vld [vmem:[%s287 + $0x168] sm:$0xff]
        %v2045 = vld [vmem:[%s287 + $0x170] sm:$0xff]
        %v2046 = vld [vmem:[%s287 + $0x178] sm:$0xff]
        %v2047 = vld [vmem:[%s287 + $0x180] sm:$0xff]
        %v2048 = vld [vmem:[%s287 + $0x188] sm:$0xff]
        %v2049 = vld [vmem:[%s287 + $0x190] sm:$0xff]
        %v2050 = vld [vmem:[%s287 + $0x198] sm:$0xff]
        %v2051 = vld [vmem:[%s287 + $0x1a0] sm:$0xff]
        %v2052 = vld [vmem:[%s287 + $0x1a8] sm:$0xff]
        %v2053 = vld [vmem:[%s287 + $0x1b0] sm:$0xff]
        %v2054 = vld [vmem:[%s287 + $0x1b8] sm:$0xff]
        %v2055 = vld [vmem:[%s287 + $0x1c0] sm:$0xff]
        %v2056 = vld [vmem:[%s287 + $0x1c8] sm:$0xff]
        %v2057 = vld [vmem:[%s287 + $0x1d0] sm:$0xff]
        %v2058 = vld [vmem:[%s287 + $0x1d8] sm:$0xff]
        %v2059 = vld [vmem:[%s287 + $0x1e0] sm:$0xff]
        %v2060 = vld [vmem:[%s287 + $0x1e8] sm:$0xff]
        %v2061 = vld [vmem:[%s287 + $0x1f0] sm:$0xff]
        %v2062 = vld [vmem:[%s287 + $0x1f8] sm:$0xff]
        %v2063 = vld [vmem:[#allocation3] sm:$0xff]
        %v2064 = vld [vmem:[#allocation4] sm:$0xff]
        %2065 = vmatprep.subr.mxu0 %v2000
        %2066 = vmatpush1.msra.mxu0 %v1999
        %2067 = vmatprep.subr.mxu0 %v2004
        %2068 = vmatpush1.msra.mxu0 %v2003
        %2069 = vmatprep.subr.mxu0 %v2008
        %2070 = vmatpush1.msra.mxu0 %v2007
        %2071 = vmatprep.subr.mxu0 %v2012
        %2072 = vmatpush1.msra.mxu0 %v2011
        %2073 = vmatprep.subr.mxu0 %v2016
        %2074 = vmatpush1.msra.mxu0 %v2015
        %2075 = vmatprep.subr.mxu0 %v2020
        %2076 = vmatpush1.msra.mxu0 %v2019
        %2077 = vmatprep.subr.mxu0 %v2024
        %2078 = vmatpush1.msra.mxu0 %v2023
        %2079 = vmatprep.subr.mxu0 %v2028
        %2080 = vmatpush1.msra.mxu0 %v2027
        %2081 = vmatprep.subr.mxu0 %v2032
        %2082 = vmatpush1.msra.mxu0 %v2031
        %2083 = vmatprep.subr.mxu0 %v2036
        %2084 = vmatpush1.msra.mxu0 %v2035
        %2085 = vmatprep.subr.mxu0 %v2040
        %2086 = vmatpush1.msra.mxu0 %v2039
        %2087 = vmatprep.subr.mxu0 %v2044
        %2088 = vmatpush1.msra.mxu0 %v2043
        %2089 = vmatprep.subr.mxu0 %v2048
        %2090 = vmatpush1.msra.mxu0 %v2047
        %2091 = vmatprep.subr.mxu0 %v2052
        %2092 = vmatpush1.msra.mxu0 %v2051
        %2093 = vmatprep.subr.mxu0 %v2056
        %2094 = vmatpush1.msra.mxu0 %v2055
        %2095 = vmatprep.subr.mxu0 %v2060
        %2096 = vmatpush1.msra.mxu0 %v2059
        %2097 = vmatprep.subr.mxu0 0.0
        %2098 = vmatpush1.msra.mxu0 0.0
        %2099 = vmatprep.subr.mxu0 0.0
        %2100 = vmatpush1.msra.mxu0 0.0
        %2101 = vmatprep.subr.mxu0 0.0
        %2102 = vmatpush1.msra.mxu0 0.0
        %2103 = vmatprep.subr.mxu0 0.0
        %2104 = vmatpush1.msra.mxu0 0.0
        %2105 = vmatprep.subr.mxu0 0.0
        %2106 = vmatpush1.msra.mxu0 0.0
        %2107 = vmatprep.subr.mxu0 0.0
        %2108 = vmatpush1.msra.mxu0 0.0
        %2109 = vmatprep.subr.mxu0 0.0
        %2110 = vmatpush1.msra.mxu0 0.0
        %2111 = vmatprep.subr.mxu0 0.0
        %2112 = vmatpush1.msra.mxu0 0.0
        %2113 = vmatprep.subr.mxu0 0.0
        %2114 = vmatpush1.msra.mxu0 0.0
        %2115 = vmatprep.subr.mxu0 0.0
        %2116 = vmatpush1.msra.mxu0 0.0
        %2117 = vmatprep.subr.mxu0 0.0
        %2118 = vmatpush1.msra.mxu0 0.0
        %2119 = vmatprep.subr.mxu0 0.0
        %2120 = vmatpush1.msra.mxu0 0.0
        %2121 = vmatprep.subr.mxu0 0.0
        %2122 = vmatpush1.msra.mxu0 0.0
        %2123 = vmatprep.subr.mxu0 0.0
        %2124 = vmatpush1.msra.mxu0 0.0
        %2125 = vmatprep.subr.mxu0 0.0
        %2126 = vmatpush1.msra.mxu0 0.0
        %2127 = vmatprep.subr.mxu0 0.0
        %2128 = vmatpush1.msra.mxu0 0.0
        %2129 = vmatprep.mubr.f32.mxu0 0.0
        %2130 = vmatmul.mubr.f32.gmra.mrb[0].mxu0 %v2063
        %v2131 = vpop.f32.mrb[0].mxu0
        %v2132 = vadd.f32 0.0, %v2131
        %v2133 = vpop.f32.mrb[0].mxu0
        %v2134 = vadd.f32 0.0, %v2133
        %2135 = vdwg.mxu0
        %2136 = vmatprep.subr.mxu0 %v2002
        %2137 = vmatpush1.msra.mxu0 %v2001
        %2138 = vmatprep.subr.mxu0 %v2006
        %2139 = vmatpush1.msra.mxu0 %v2005
        %2140 = vmatprep.subr.mxu0 %v2010
        %2141 = vmatpush1.msra.mxu0 %v2009
        %2142 = vmatprep.subr.mxu0 %v2014
        %2143 = vmatpush1.msra.mxu0 %v2013
        %2144 = vmatprep.subr.mxu0 %v2018
        %2145 = vmatpush1.msra.mxu0 %v2017
        %2146 = vmatprep.subr.mxu0 %v2022
        %2147 = vmatpush1.msra.mxu0 %v2021
        %2148 = vmatprep.subr.mxu0 %v2026
        %2149 = vmatpush1.msra.mxu0 %v2025
        %2150 = vmatprep.subr.mxu0 %v2030
        %2151 = vmatpush1.msra.mxu0 %v2029
        %2152 = vmatprep.subr.mxu0 %v2034
        %2153 = vmatpush1.msra.mxu0 %v2033
        %2154 = vmatprep.subr.mxu0 %v2038
        %2155 = vmatpush1.msra.mxu0 %v2037
        %2156 = vmatprep.subr.mxu0 %v2042
        %2157 = vmatpush1.msra.mxu0 %v2041
        %2158 = vmatprep.subr.mxu0 %v2046
        %2159 = vmatpush1.msra.mxu0 %v2045
        %2160 = vmatprep.subr.mxu0 %v2050
        %2161 = vmatpush1.msra.mxu0 %v2049
        %2162 = vmatprep.subr.mxu0 %v2054
        %2163 = vmatpush1.msra.mxu0 %v2053
        %2164 = vmatprep.subr.mxu0 %v2058
        %2165 = vmatpush1.msra.mxu0 %v2057
        %2166 = vmatprep.subr.mxu0 %v2062
        %2167 = vmatpush1.msra.mxu0 %v2061
        %2168 = vmatprep.subr.mxu0 0.0
        %2169 = vmatpush1.msra.mxu0 0.0
        %2170 = vmatprep.subr.mxu0 0.0
        %2171 = vmatpush1.msra.mxu0 0.0
        %2172 = vmatprep.subr.mxu0 0.0
        %2173 = vmatpush1.msra.mxu0 0.0
        %2174 = vmatprep.subr.mxu0 0.0
        %2175 = vmatpush1.msra.mxu0 0.0
        %2176 = vmatprep.subr.mxu0 0.0
        %2177 = vmatpush1.msra.mxu0 0.0
        %2178 = vmatprep.subr.mxu0 0.0
        %2179 = vmatpush1.msra.mxu0 0.0
        %2180 = vmatprep.subr.mxu0 0.0
        %2181 = vmatpush1.msra.mxu0 0.0
        %2182 = vmatprep.subr.mxu0 0.0
        %2183 = vmatpush1.msra.mxu0 0.0
        %2184 = vmatprep.subr.mxu0 0.0
        %2185 = vmatpush1.msra.mxu0 0.0
        %2186 = vmatprep.subr.mxu0 0.0
        %2187 = vmatpush1.msra.mxu0 0.0
        %2188 = vmatprep.subr.mxu0 0.0
        %2189 = vmatpush1.msra.mxu0 0.0
        %2190 = vmatprep.subr.mxu0 0.0
        %2191 = vmatpush1.msra.mxu0 0.0
        %2192 = vmatprep.subr.mxu0 0.0
        %2193 = vmatpush1.msra.mxu0 0.0
        %2194 = vmatprep.subr.mxu0 0.0
        %2195 = vmatpush1.msra.mxu0 0.0
        %2196 = vmatprep.subr.mxu0 0.0
        %2197 = vmatpush1.msra.mxu0 0.0
        %2198 = vmatprep.subr.mxu0 0.0
        %2199 = vmatpush1.msra.mxu0 0.0
        %2200 = vmatprep.mubr.f32.mxu0 0.0
        %2201 = vmatmul.mubr.f32.gmra.mrb[0].mxu0 %v2063
        %v2202 = vpop.f32.mrb[0].mxu0
        %v2203 = vadd.f32 0.0, %v2202
        %v2204 = vpop.f32.mrb[0].mxu0
        %v2205 = vadd.f32 0.0, %v2204
        %2206 = vdwg.mxu0
        %v2207 = vadd.f32 %v1995, %v2132
        %v2208 = vadd.f32 %v1996, %v2134
        %v2209 = vadd.f32 %v1997, %v2203
        %v2210 = vadd.f32 %v1998, %v2205
        %v2211 = vxor.u32 %v2207, 2147483648
        %v2212 = vmul.f32 %v2211, 1.442695
        %v2213 = vpow.pop %v2212
        %v2214 = vadd.f32 %v2213, 1.0
        %v2215 = vrcp.pop %v2214
        %v2216 = vmul.f32 1.0, %v2215
        %v2217 = vxor.u32 %v2208, 2147483648
        %v2218 = vmul.f32 %v2217, 1.442695
        %v2219 = vpow.pop %v2218
        %v2220 = vadd.f32 %v2219, 1.0
        %v2221 = vrcp.pop %v2220
        %v2222 = vmul.f32 1.0, %v2221
        %v2223 = vtanh.pop %v2209
        %v2224 = vxor.u32 %v2210, 2147483648
        %v2225 = vmul.f32 %v2224, 1.442695
        %v2226 = vpow.pop %v2225
        %v2227 = vadd.f32 %v2226, 1.0
        %v2228 = vrcp.pop %v2227
        %v2229 = vmul.f32 1.0, %v2228
        %v2230 = vmul.f32 %v2222, %v2064
        %v2231 = vmul.f32 %v2216, %v2223
        %v2232 = vadd.f32 %v2230, %v2231
        %v2233 = vtanh.pop %v2232
        %v2234 = vmul.f32 %v2229, %v2233
        %2235 = vst [vmem:[#allocation3] sm:$0xff] %v2234
        %2236 = vst [vmem:[#allocation4] sm:$0xff] %v2232
        %v2237 = vpack.c.bf16 %v2234, %v2234
        %s2238 = smul.addr %s1990, 4
        %s2239 = scalar_lea.vmem %s329, %s2238 [#allocation9]
        %2240 = vst [vmem:[%s2239] sm:$0xf] %v2237
        %s2241 = smul.u32 %s967, 6
        %s2242 = sadd.s32 %s25, %s2241
        %s2243 = smul.u32 %s2242, 8
        %s2244 = sshra.s32 %s2243, 3
        %s2245 = sand.u32 %s2243, 7
        %s2246 = smul.u32 %s2244, 4
        %s2247 = smul.addr %s2246, 8
        %s2248 = scalar_lea.vmem [#allocation2], %s2247
        %v2249 = vld [vmem:[%s2248] sm:$0xff]
        %v2250 = vld [vmem:[%s2248 + $0x8] sm:$0xff]
        %v2251 = vld [vmem:[%s2248 + $0x10] sm:$0xff]
        %v2252 = vld [vmem:[%s2248 + $0x18] sm:$0xff]
        %v2253 = vld [vmem:[%s287] sm:$0xff]
        %v2254 = vld [vmem:[%s287 + $0x8] sm:$0xff]
        %v2255 = vld [vmem:[%s287 + $0x10] sm:$0xff]
        %v2256 = vld [vmem:[%s287 + $0x18] sm:$0xff]
        %v2257 = vld [vmem:[%s287 + $0x20] sm:$0xff]
        %v2258 = vld [vmem:[%s287 + $0x28] sm:$0xff]
        %v2259 = vld [vmem:[%s287 + $0x30] sm:$0xff]
        %v2260 = vld [vmem:[%s287 + $0x38] sm:$0xff]
        %v2261 = vld [vmem:[%s287 + $0x40] sm:$0xff]
        %v2262 = vld [vmem:[%s287 + $0x48] sm:$0xff]
        %v2263 = vld [vmem:[%s287 + $0x50] sm:$0xff]
        %v2264 = vld [vmem:[%s287 + $0x58] sm:$0xff]
        %v2265 = vld [vmem:[%s287 + $0x60] sm:$0xff]
        %v2266 = vld [vmem:[%s287 + $0x68] sm:$0xff]
        %v2267 = vld [vmem:[%s287 + $0x70] sm:$0xff]
        %v2268 = vld [vmem:[%s287 + $0x78] sm:$0xff]
        %v2269 = vld [vmem:[%s287 + $0x80] sm:$0xff]
        %v2270 = vld [vmem:[%s287 + $0x88] sm:$0xff]
        %v2271 = vld [vmem:[%s287 + $0x90] sm:$0xff]
        %v2272 = vld [vmem:[%s287 + $0x98] sm:$0xff]
        %v2273 = vld [vmem:[%s287 + $0xa0] sm:$0xff]
        %v2274 = vld [vmem:[%s287 + $0xa8] sm:$0xff]
        %v2275 = vld [vmem:[%s287 + $0xb0] sm:$0xff]
        %v2276 = vld [vmem:[%s287 + $0xb8] sm:$0xff]
        %v2277 = vld [vmem:[%s287 + $0xc0] sm:$0xff]
        %v2278 = vld [vmem:[%s287 + $0xc8] sm:$0xff]
        %v2279 = vld [vmem:[%s287 + $0xd0] sm:$0xff]
        %v2280 = vld [vmem:[%s287 + $0xd8] sm:$0xff]
        %v2281 = vld [vmem:[%s287 + $0xe0] sm:$0xff]
        %v2282 = vld [vmem:[%s287 + $0xe8] sm:$0xff]
        %v2283 = vld [vmem:[%s287 + $0xf0] sm:$0xff]
        %v2284 = vld [vmem:[%s287 + $0xf8] sm:$0xff]
        %v2285 = vld [vmem:[%s287 + $0x100] sm:$0xff]
        %v2286 = vld [vmem:[%s287 + $0x108] sm:$0xff]
        %v2287 = vld [vmem:[%s287 + $0x110] sm:$0xff]
        %v2288 = vld [vmem:[%s287 + $0x118] sm:$0xff]
        %v2289 = vld [vmem:[%s287 + $0x120] sm:$0xff]
        %v2290 = vld [vmem:[%s287 + $0x128] sm:$0xff]
        %v2291 = vld [vmem:[%s287 + $0x130] sm:$0xff]
        %v2292 = vld [vmem:[%s287 + $0x138] sm:$0xff]
        %v2293 = vld [vmem:[%s287 + $0x140] sm:$0xff]
        %v2294 = vld [vmem:[%s287 + $0x148] sm:$0xff]
        %v2295 = vld [vmem:[%s287 + $0x150] sm:$0xff]
        %v2296 = vld [vmem:[%s287 + $0x158] sm:$0xff]
        %v2297 = vld [vmem:[%s287 + $0x160] sm:$0xff]
        %v2298 = vld [vmem:[%s287 + $0x168] sm:$0xff]
        %v2299 = vld [vmem:[%s287 + $0x170] sm:$0xff]
        %v2300 = vld [vmem:[%s287 + $0x178] sm:$0xff]
        %v2301 = vld [vmem:[%s287 + $0x180] sm:$0xff]
        %v2302 = vld [vmem:[%s287 + $0x188] sm:$0xff]
        %v2303 = vld [vmem:[%s287 + $0x190] sm:$0xff]
        %v2304 = vld [vmem:[%s287 + $0x198] sm:$0xff]
        %v2305 = vld [vmem:[%s287 + $0x1a0] sm:$0xff]
        %v2306 = vld [vmem:[%s287 + $0x1a8] sm:$0xff]
        %v2307 = vld [vmem:[%s287 + $0x1b0] sm:$0xff]
        %v2308 = vld [vmem:[%s287 + $0x1b8] sm:$0xff]
        %v2309 = vld [vmem:[%s287 + $0x1c0] sm:$0xff]
        %v2310 = vld [vmem:[%s287 + $0x1c8] sm:$0xff]
        %v2311 = vld [vmem:[%s287 + $0x1d0] sm:$0xff]
        %v2312 = vld [vmem:[%s287 + $0x1d8] sm:$0xff]
        %v2313 = vld [vmem:[%s287 + $0x1e0] sm:$0xff]
        %v2314 = vld [vmem:[%s287 + $0x1e8] sm:$0xff]
        %v2315 = vld [vmem:[%s287 + $0x1f0] sm:$0xff]
        %v2316 = vld [vmem:[%s287 + $0x1f8] sm:$0xff]
        %v2317 = vld [vmem:[#allocation3] sm:$0xff]
        %v2318 = vld [vmem:[#allocation4] sm:$0xff]
        %2319 = vmatprep.subr.mxu0 %v2254
        %2320 = vmatpush1.msra.mxu0 %v2253
        %2321 = vmatprep.subr.mxu0 %v2258
        %2322 = vmatpush1.msra.mxu0 %v2257
        %2323 = vmatprep.subr.mxu0 %v2262
        %2324 = vmatpush1.msra.mxu0 %v2261
        %2325 = vmatprep.subr.mxu0 %v2266
        %2326 = vmatpush1.msra.mxu0 %v2265
        %2327 = vmatprep.subr.mxu0 %v2270
        %2328 = vmatpush1.msra.mxu0 %v2269
        %2329 = vmatprep.subr.mxu0 %v2274
        %2330 = vmatpush1.msra.mxu0 %v2273
        %2331 = vmatprep.subr.mxu0 %v2278
        %2332 = vmatpush1.msra.mxu0 %v2277
        %2333 = vmatprep.subr.mxu0 %v2282
        %2334 = vmatpush1.msra.mxu0 %v2281
        %2335 = vmatprep.subr.mxu0 %v2286
        %2336 = vmatpush1.msra.mxu0 %v2285
        %2337 = vmatprep.subr.mxu0 %v2290
        %2338 = vmatpush1.msra.mxu0 %v2289
        %2339 = vmatprep.subr.mxu0 %v2294
        %2340 = vmatpush1.msra.mxu0 %v2293
        %2341 = vmatprep.subr.mxu0 %v2298
        %2342 = vmatpush1.msra.mxu0 %v2297
        %2343 = vmatprep.subr.mxu0 %v2302
        %2344 = vmatpush1.msra.mxu0 %v2301
        %2345 = vmatprep.subr.mxu0 %v2306
        %2346 = vmatpush1.msra.mxu0 %v2305
        %2347 = vmatprep.subr.mxu0 %v2310
        %2348 = vmatpush1.msra.mxu0 %v2309
        %2349 = vmatprep.subr.mxu0 %v2314
        %2350 = vmatpush1.msra.mxu0 %v2313
        %2351 = vmatprep.subr.mxu0 0.0
        %2352 = vmatpush1.msra.mxu0 0.0
        %2353 = vmatprep.subr.mxu0 0.0
        %2354 = vmatpush1.msra.mxu0 0.0
        %2355 = vmatprep.subr.mxu0 0.0
        %2356 = vmatpush1.msra.mxu0 0.0
        %2357 = vmatprep.subr.mxu0 0.0
        %2358 = vmatpush1.msra.mxu0 0.0
        %2359 = vmatprep.subr.mxu0 0.0
        %2360 = vmatpush1.msra.mxu0 0.0
        %2361 = vmatprep.subr.mxu0 0.0
        %2362 = vmatpush1.msra.mxu0 0.0
        %2363 = vmatprep.subr.mxu0 0.0
        %2364 = vmatpush1.msra.mxu0 0.0
        %2365 = vmatprep.subr.mxu0 0.0
        %2366 = vmatpush1.msra.mxu0 0.0
        %2367 = vmatprep.subr.mxu0 0.0
        %2368 = vmatpush1.msra.mxu0 0.0
        %2369 = vmatprep.subr.mxu0 0.0
        %2370 = vmatpush1.msra.mxu0 0.0
        %2371 = vmatprep.subr.mxu0 0.0
        %2372 = vmatpush1.msra.mxu0 0.0
        %2373 = vmatprep.subr.mxu0 0.0
        %2374 = vmatpush1.msra.mxu0 0.0
        %2375 = vmatprep.subr.mxu0 0.0
        %2376 = vmatpush1.msra.mxu0 0.0
        %2377 = vmatprep.subr.mxu0 0.0
        %2378 = vmatpush1.msra.mxu0 0.0
        %2379 = vmatprep.subr.mxu0 0.0
        %2380 = vmatpush1.msra.mxu0 0.0
        %2381 = vmatprep.subr.mxu0 0.0
        %2382 = vmatpush1.msra.mxu0 0.0
        %2383 = vmatprep.mubr.f32.mxu0 0.0
        %2384 = vmatmul.mubr.f32.gmra.mrb[0].mxu0 %v2317
        %v2385 = vpop.f32.mrb[0].mxu0
        %v2386 = vadd.f32 0.0, %v2385
        %v2387 = vpop.f32.mrb[0].mxu0
        %v2388 = vadd.f32 0.0, %v2387
        %2389 = vdwg.mxu0
        %2390 = vmatprep.subr.mxu0 %v2256
        %2391 = vmatpush1.msra.mxu0 %v2255
        %2392 = vmatprep.subr.mxu0 %v2260
        %2393 = vmatpush1.msra.mxu0 %v2259
        %2394 = vmatprep.subr.mxu0 %v2264
        %2395 = vmatpush1.msra.mxu0 %v2263
        %2396 = vmatprep.subr.mxu0 %v2268
        %2397 = vmatpush1.msra.mxu0 %v2267
        %2398 = vmatprep.subr.mxu0 %v2272
        %2399 = vmatpush1.msra.mxu0 %v2271
        %2400 = vmatprep.subr.mxu0 %v2276
        %2401 = vmatpush1.msra.mxu0 %v2275
        %2402 = vmatprep.subr.mxu0 %v2280
        %2403 = vmatpush1.msra.mxu0 %v2279
        %2404 = vmatprep.subr.mxu0 %v2284
        %2405 = vmatpush1.msra.mxu0 %v2283
        %2406 = vmatprep.subr.mxu0 %v2288
        %2407 = vmatpush1.msra.mxu0 %v2287
        %2408 = vmatprep.subr.mxu0 %v2292
        %2409 = vmatpush1.msra.mxu0 %v2291
        %2410 = vmatprep.subr.mxu0 %v2296
        %2411 = vmatpush1.msra.mxu0 %v2295
        %2412 = vmatprep.subr.mxu0 %v2300
        %2413 = vmatpush1.msra.mxu0 %v2299
        %2414 = vmatprep.subr.mxu0 %v2304
        %2415 = vmatpush1.msra.mxu0 %v2303
        %2416 = vmatprep.subr.mxu0 %v2308
        %2417 = vmatpush1.msra.mxu0 %v2307
        %2418 = vmatprep.subr.mxu0 %v2312
        %2419 = vmatpush1.msra.mxu0 %v2311
        %2420 = vmatprep.subr.mxu0 %v2316
        %2421 = vmatpush1.msra.mxu0 %v2315
        %2422 = vmatprep.subr.mxu0 0.0
        %2423 = vmatpush1.msra.mxu0 0.0
        %2424 = vmatprep.subr.mxu0 0.0
        %2425 = vmatpush1.msra.mxu0 0.0
        %2426 = vmatprep.subr.mxu0 0.0
        %2427 = vmatpush1.msra.mxu0 0.0
        %2428 = vmatprep.subr.mxu0 0.0
        %2429 = vmatpush1.msra.mxu0 0.0
        %2430 = vmatprep.subr.mxu0 0.0
        %2431 = vmatpush1.msra.mxu0 0.0
        %2432 = vmatprep.subr.mxu0 0.0
        %2433 = vmatpush1.msra.mxu0 0.0
        %2434 = vmatprep.subr.mxu0 0.0
        %2435 = vmatpush1.msra.mxu0 0.0
        %2436 = vmatprep.subr.mxu0 0.0
        %2437 = vmatpush1.msra.mxu0 0.0
        %2438 = vmatprep.subr.mxu0 0.0
        %2439 = vmatpush1.msra.mxu0 0.0
        %2440 = vmatprep.subr.mxu0 0.0
        %2441 = vmatpush1.msra.mxu0 0.0
        %2442 = vmatprep.subr.mxu0 0.0
        %2443 = vmatpush1.msra.mxu0 0.0
        %2444 = vmatprep.subr.mxu0 0.0
        %2445 = vmatpush1.msra.mxu0 0.0
        %2446 = vmatprep.subr.mxu0 0.0
        %2447 = vmatpush1.msra.mxu0 0.0
        %2448 = vmatprep.subr.mxu0 0.0
        %2449 = vmatpush1.msra.mxu0 0.0
        %2450 = vmatprep.subr.mxu0 0.0
        %2451 = vmatpush1.msra.mxu0 0.0
        %2452 = vmatprep.subr.mxu0 0.0
        %2453 = vmatpush1.msra.mxu0 0.0
        %2454 = vmatprep.mubr.f32.mxu0 0.0
        %2455 = vmatmul.mubr.f32.gmra.mrb[0].mxu0 %v2317
        %v2456 = vpop.f32.mrb[0].mxu0
        %v2457 = vadd.f32 0.0, %v2456
        %v2458 = vpop.f32.mrb[0].mxu0
        %v2459 = vadd.f32 0.0, %v2458
        %2460 = vdwg.mxu0
        %v2461 = vadd.f32 %v2249, %v2386
        %v2462 = vadd.f32 %v2250, %v2388
        %v2463 = vadd.f32 %v2251, %v2457
        %v2464 = vadd.f32 %v2252, %v2459
        %v2465 = vxor.u32 %v2461, 2147483648
        %v2466 = vmul.f32 %v2465, 1.442695
        %v2467 = vpow.pop %v2466
        %v2468 = vadd.f32 %v2467, 1.0
        %v2469 = vrcp.pop %v2468
        %v2470 = vmul.f32 1.0, %v2469
        %v2471 = vxor.u32 %v2462, 2147483648
        %v2472 = vmul.f32 %v2471, 1.442695
        %v2473 = vpow.pop %v2472
        %v2474 = vadd.f32 %v2473, 1.0
        %v2475 = vrcp.pop %v2474
        %v2476 = vmul.f32 1.0, %v2475
        %v2477 = vtanh.pop %v2463
        %v2478 = vxor.u32 %v2464, 2147483648
        %v2479 = vmul.f32 %v2478, 1.442695
        %v2480 = vpow.pop %v2479
        %v2481 = vadd.f32 %v2480, 1.0
        %v2482 = vrcp.pop %v2481
        %v2483 = vmul.f32 1.0, %v2482
        %v2484 = vmul.f32 %v2476, %v2318
        %v2485 = vmul.f32 %v2470, %v2477
        %v2486 = vadd.f32 %v2484, %v2485
        %v2487 = vtanh.pop %v2486
        %v2488 = vmul.f32 %v2483, %v2487
        %2489 = vst [vmem:[#allocation3] sm:$0xff] %v2488
        %2490 = vst [vmem:[#allocation4] sm:$0xff] %v2486
        %v2491 = vpack.c.bf16 %v2488, %v2488
        %s2492 = smul.addr %s2244, 4
        %s2493 = scalar_lea.vmem %s329, %s2492 [#allocation9]
        %2494 = vst [vmem:[%s2493] sm:$0xf] %v2491
        %s2495 = smul.u32 %s967, 56
        %s2496 = sshra.s32 %s2495, 3
        %s2497 = sand.u32 %s2495, 7
        %s2498 = smul.u32 %s2496, 4
        %s2499 = smul.addr %s2498, 8
        %s2500 = scalar_lea.vmem [#allocation2], %s2499
        %v2501 = vld [vmem:[%s2500] sm:$0xff]
        %v2502 = vld [vmem:[%s2500 + $0x8] sm:$0xff]
        %v2503 = vld [vmem:[%s2500 + $0x10] sm:$0xff]
        %v2504 = vld [vmem:[%s2500 + $0x18] sm:$0xff]
        %v2505 = vld [vmem:[%s287] sm:$0xff]
        %v2506 = vld [vmem:[%s287 + $0x8] sm:$0xff]
        %v2507 = vld [vmem:[%s287 + $0x10] sm:$0xff]
        %v2508 = vld [vmem:[%s287 + $0x18] sm:$0xff]
        %v2509 = vld [vmem:[%s287 + $0x20] sm:$0xff]
        %v2510 = vld [vmem:[%s287 + $0x28] sm:$0xff]
        %v2511 = vld [vmem:[%s287 + $0x30] sm:$0xff]
        %v2512 = vld [vmem:[%s287 + $0x38] sm:$0xff]
        %v2513 = vld [vmem:[%s287 + $0x40] sm:$0xff]
        %v2514 = vld [vmem:[%s287 + $0x48] sm:$0xff]
        %v2515 = vld [vmem:[%s287 + $0x50] sm:$0xff]
        %v2516 = vld [vmem:[%s287 + $0x58] sm:$0xff]
        %v2517 = vld [vmem:[%s287 + $0x60] sm:$0xff]
        %v2518 = vld [vmem:[%s287 + $0x68] sm:$0xff]
        %v2519 = vld [vmem:[%s287 + $0x70] sm:$0xff]
        %v2520 = vld [vmem:[%s287 + $0x78] sm:$0xff]
        %v2521 = vld [vmem:[%s287 + $0x80] sm:$0xff]
        %v2522 = vld [vmem:[%s287 + $0x88] sm:$0xff]
        %v2523 = vld [vmem:[%s287 + $0x90] sm:$0xff]
        %v2524 = vld [vmem:[%s287 + $0x98] sm:$0xff]
        %v2525 = vld [vmem:[%s287 + $0xa0] sm:$0xff]
        %v2526 = vld [vmem:[%s287 + $0xa8] sm:$0xff]
        %v2527 = vld [vmem:[%s287 + $0xb0] sm:$0xff]
        %v2528 = vld [vmem:[%s287 + $0xb8] sm:$0xff]
        %v2529 = vld [vmem:[%s287 + $0xc0] sm:$0xff]
        %v2530 = vld [vmem:[%s287 + $0xc8] sm:$0xff]
        %v2531 = vld [vmem:[%s287 + $0xd0] sm:$0xff]
        %v2532 = vld [vmem:[%s287 + $0xd8] sm:$0xff]
        %v2533 = vld [vmem:[%s287 + $0xe0] sm:$0xff]
        %v2534 = vld [vmem:[%s287 + $0xe8] sm:$0xff]
        %v2535 = vld [vmem:[%s287 + $0xf0] sm:$0xff]
        %v2536 = vld [vmem:[%s287 + $0xf8] sm:$0xff]
        %v2537 = vld [vmem:[%s287 + $0x100] sm:$0xff]
        %v2538 = vld [vmem:[%s287 + $0x108] sm:$0xff]
        %v2539 = vld [vmem:[%s287 + $0x110] sm:$0xff]
        %v2540 = vld [vmem:[%s287 + $0x118] sm:$0xff]
        %v2541 = vld [vmem:[%s287 + $0x120] sm:$0xff]
        %v2542 = vld [vmem:[%s287 + $0x128] sm:$0xff]
        %v2543 = vld [vmem:[%s287 + $0x130] sm:$0xff]
        %v2544 = vld [vmem:[%s287 + $0x138] sm:$0xff]
        %v2545 = vld [vmem:[%s287 + $0x140] sm:$0xff]
        %v2546 = vld [vmem:[%s287 + $0x148] sm:$0xff]
        %v2547 = vld [vmem:[%s287 + $0x150] sm:$0xff]
        %v2548 = vld [vmem:[%s287 + $0x158] sm:$0xff]
        %v2549 = vld [vmem:[%s287 + $0x160] sm:$0xff]
        %v2550 = vld [vmem:[%s287 + $0x168] sm:$0xff]
        %v2551 = vld [vmem:[%s287 + $0x170] sm:$0xff]
        %v2552 = vld [vmem:[%s287 + $0x178] sm:$0xff]
        %v2553 = vld [vmem:[%s287 + $0x180] sm:$0xff]
        %v2554 = vld [vmem:[%s287 + $0x188] sm:$0xff]
        %v2555 = vld [vmem:[%s287 + $0x190] sm:$0xff]
        %v2556 = vld [vmem:[%s287 + $0x198] sm:$0xff]
        %v2557 = vld [vmem:[%s287 + $0x1a0] sm:$0xff]
        %v2558 = vld [vmem:[%s287 + $0x1a8] sm:$0xff]
        %v2559 = vld [vmem:[%s287 + $0x1b0] sm:$0xff]
        %v2560 = vld [vmem:[%s287 + $0x1b8] sm:$0xff]
        %v2561 = vld [vmem:[%s287 + $0x1c0] sm:$0xff]
        %v2562 = vld [vmem:[%s287 + $0x1c8] sm:$0xff]
        %v2563 = vld [vmem:[%s287 + $0x1d0] sm:$0xff]
        %v2564 = vld [vmem:[%s287 + $0x1d8] sm:$0xff]
        %v2565 = vld [vmem:[%s287 + $0x1e0] sm:$0xff]
        %v2566 = vld [vmem:[%s287 + $0x1e8] sm:$0xff]
        %v2567 = vld [vmem:[%s287 + $0x1f0] sm:$0xff]
        %v2568 = vld [vmem:[%s287 + $0x1f8] sm:$0xff]
        %v2569 = vld [vmem:[#allocation3] sm:$0xff]
        %v2570 = vld [vmem:[#allocation4] sm:$0xff]
        %2571 = vmatprep.subr.mxu0 %v2506
        %2572 = vmatpush1.msra.mxu0 %v2505
        %2573 = vmatprep.subr.mxu0 %v2510
        %2574 = vmatpush1.msra.mxu0 %v2509
        %2575 = vmatprep.subr.mxu0 %v2514
        %2576 = vmatpush1.msra.mxu0 %v2513
        %2577 = vmatprep.subr.mxu0 %v2518
        %2578 = vmatpush1.msra.mxu0 %v2517
        %2579 = vmatprep.subr.mxu0 %v2522
        %2580 = vmatpush1.msra.mxu0 %v2521
        %2581 = vmatprep.subr.mxu0 %v2526
        %2582 = vmatpush1.msra.mxu0 %v2525
        %2583 = vmatprep.subr.mxu0 %v2530
        %2584 = vmatpush1.msra.mxu0 %v2529
        %2585 = vmatprep.subr.mxu0 %v2534
        %2586 = vmatpush1.msra.mxu0 %v2533
        %2587 = vmatprep.subr.mxu0 %v2538
        %2588 = vmatpush1.msra.mxu0 %v2537
        %2589 = vmatprep.subr.mxu0 %v2542
        %2590 = vmatpush1.msra.mxu0 %v2541
        %2591 = vmatprep.subr.mxu0 %v2546
        %2592 = vmatpush1.msra.mxu0 %v2545
        %2593 = vmatprep.subr.mxu0 %v2550
        %2594 = vmatpush1.msra.mxu0 %v2549
        %2595 = vmatprep.subr.mxu0 %v2554
        %2596 = vmatpush1.msra.mxu0 %v2553
        %2597 = vmatprep.subr.mxu0 %v2558
        %2598 = vmatpush1.msra.mxu0 %v2557
        %2599 = vmatprep.subr.mxu0 %v2562
        %2600 = vmatpush1.msra.mxu0 %v2561
        %2601 = vmatprep.subr.mxu0 %v2566
        %2602 = vmatpush1.msra.mxu0 %v2565
        %2603 = vmatprep.subr.mxu0 0.0
        %2604 = vmatpush1.msra.mxu0 0.0
        %2605 = vmatprep.subr.mxu0 0.0
        %2606 = vmatpush1.msra.mxu0 0.0
        %2607 = vmatprep.subr.mxu0 0.0
        %2608 = vmatpush1.msra.mxu0 0.0
        %2609 = vmatprep.subr.mxu0 0.0
        %2610 = vmatpush1.msra.mxu0 0.0
        %2611 = vmatprep.subr.mxu0 0.0
        %2612 = vmatpush1.msra.mxu0 0.0
        %2613 = vmatprep.subr.mxu0 0.0
        %2614 = vmatpush1.msra.mxu0 0.0
        %2615 = vmatprep.subr.mxu0 0.0
        %2616 = vmatpush1.msra.mxu0 0.0
        %2617 = vmatprep.subr.mxu0 0.0
        %2618 = vmatpush1.msra.mxu0 0.0
        %2619 = vmatprep.subr.mxu0 0.0
        %2620 = vmatpush1.msra.mxu0 0.0
        %2621 = vmatprep.subr.mxu0 0.0
        %2622 = vmatpush1.msra.mxu0 0.0
        %2623 = vmatprep.subr.mxu0 0.0
        %2624 = vmatpush1.msra.mxu0 0.0
        %2625 = vmatprep.subr.mxu0 0.0
        %2626 = vmatpush1.msra.mxu0 0.0
        %2627 = vmatprep.subr.mxu0 0.0
        %2628 = vmatpush1.msra.mxu0 0.0
        %2629 = vmatprep.subr.mxu0 0.0
        %2630 = vmatpush1.msra.mxu0 0.0
        %2631 = vmatprep.subr.mxu0 0.0
        %2632 = vmatpush1.msra.mxu0 0.0
        %2633 = vmatprep.subr.mxu0 0.0
        %2634 = vmatpush1.msra.mxu0 0.0
        %2635 = vmatprep.mubr.f32.mxu0 0.0
        %2636 = vmatmul.mubr.f32.gmra.mrb[0].mxu0 %v2569
        %v2637 = vpop.f32.mrb[0].mxu0
        %v2638 = vadd.f32 0.0, %v2637
        %v2639 = vpop.f32.mrb[0].mxu0
        %v2640 = vadd.f32 0.0, %v2639
        %2641 = vdwg.mxu0
        %2642 = vmatprep.subr.mxu0 %v2508
        %2643 = vmatpush1.msra.mxu0 %v2507
        %2644 = vmatprep.subr.mxu0 %v2512
        %2645 = vmatpush1.msra.mxu0 %v2511
        %2646 = vmatprep.subr.mxu0 %v2516
        %2647 = vmatpush1.msra.mxu0 %v2515
        %2648 = vmatprep.subr.mxu0 %v2520
        %2649 = vmatpush1.msra.mxu0 %v2519
        %2650 = vmatprep.subr.mxu0 %v2524
        %2651 = vmatpush1.msra.mxu0 %v2523
        %2652 = vmatprep.subr.mxu0 %v2528
        %2653 = vmatpush1.msra.mxu0 %v2527
        %2654 = vmatprep.subr.mxu0 %v2532
        %2655 = vmatpush1.msra.mxu0 %v2531
        %2656 = vmatprep.subr.mxu0 %v2536
        %2657 = vmatpush1.msra.mxu0 %v2535
        %2658 = vmatprep.subr.mxu0 %v2540
        %2659 = vmatpush1.msra.mxu0 %v2539
        %2660 = vmatprep.subr.mxu0 %v2544
        %2661 = vmatpush1.msra.mxu0 %v2543
        %2662 = vmatprep.subr.mxu0 %v2548
        %2663 = vmatpush1.msra.mxu0 %v2547
        %2664 = vmatprep.subr.mxu0 %v2552
        %2665 = vmatpush1.msra.mxu0 %v2551
        %2666 = vmatprep.subr.mxu0 %v2556
        %2667 = vmatpush1.msra.mxu0 %v2555
        %2668 = vmatprep.subr.mxu0 %v2560
        %2669 = vmatpush1.msra.mxu0 %v2559
        %2670 = vmatprep.subr.mxu0 %v2564
        %2671 = vmatpush1.msra.mxu0 %v2563
        %2672 = vmatprep.subr.mxu0 %v2568
        %2673 = vmatpush1.msra.mxu0 %v2567
        %2674 = vmatprep.subr.mxu0 0.0
        %2675 = vmatpush1.msra.mxu0 0.0
        %2676 = vmatprep.subr.mxu0 0.0
        %2677 = vmatpush1.msra.mxu0 0.0
        %2678 = vmatprep.subr.mxu0 0.0
        %2679 = vmatpush1.msra.mxu0 0.0
        %2680 = vmatprep.subr.mxu0 0.0
        %2681 = vmatpush1.msra.mxu0 0.0
        %2682 = vmatprep.subr.mxu0 0.0
        %2683 = vmatpush1.msra.mxu0 0.0
        %2684 = vmatprep.subr.mxu0 0.0
        %2685 = vmatpush1.msra.mxu0 0.0
        %2686 = vmatprep.subr.mxu0 0.0
        %2687 = vmatpush1.msra.mxu0 0.0
        %2688 = vmatprep.subr.mxu0 0.0
        %2689 = vmatpush1.msra.mxu0 0.0
        %2690 = vmatprep.subr.mxu0 0.0
        %2691 = vmatpush1.msra.mxu0 0.0
        %2692 = vmatprep.subr.mxu0 0.0
        %2693 = vmatpush1.msra.mxu0 0.0
        %2694 = vmatprep.subr.mxu0 0.0
        %2695 = vmatpush1.msra.mxu0 0.0
        %2696 = vmatprep.subr.mxu0 0.0
        %2697 = vmatpush1.msra.mxu0 0.0
        %2698 = vmatprep.subr.mxu0 0.0
        %2699 = vmatpush1.msra.mxu0 0.0
        %2700 = vmatprep.subr.mxu0 0.0
        %2701 = vmatpush1.msra.mxu0 0.0
        %2702 = vmatprep.subr.mxu0 0.0
        %2703 = vmatpush1.msra.mxu0 0.0
        %2704 = vmatprep.subr.mxu0 0.0
        %2705 = vmatpush1.msra.mxu0 0.0
        %2706 = vmatprep.mubr.f32.mxu0 0.0
        %2707 = vmatmul.mubr.f32.gmra.mrb[0].mxu0 %v2569
        %v2708 = vpop.f32.mrb[0].mxu0
        %v2709 = vadd.f32 0.0, %v2708
        %v2710 = vpop.f32.mrb[0].mxu0
        %v2711 = vadd.f32 0.0, %v2710
        %2712 = vdwg.mxu0
        %v2713 = vadd.f32 %v2501, %v2638
        %v2714 = vadd.f32 %v2502, %v2640
        %v2715 = vadd.f32 %v2503, %v2709
        %v2716 = vadd.f32 %v2504, %v2711
        %v2717 = vxor.u32 %v2713, 2147483648
        %v2718 = vmul.f32 %v2717, 1.442695
        %v2719 = vpow.pop %v2718
        %v2720 = vadd.f32 %v2719, 1.0
        %v2721 = vrcp.pop %v2720
        %v2722 = vmul.f32 1.0, %v2721
        %v2723 = vxor.u32 %v2714, 2147483648
        %v2724 = vmul.f32 %v2723, 1.442695
        %v2725 = vpow.pop %v2724
        %v2726 = vadd.f32 %v2725, 1.0
        %v2727 = vrcp.pop %v2726
        %v2728 = vmul.f32 1.0, %v2727
        %v2729 = vtanh.pop %v2715
        %v2730 = vxor.u32 %v2716, 2147483648
        %v2731 = vmul.f32 %v2730, 1.442695
        %v2732 = vpow.pop %v2731
        %v2733 = vadd.f32 %v2732, 1.0
        %v2734 = vrcp.pop %v2733
        %v2735 = vmul.f32 1.0, %v2734
        %v2736 = vmul.f32 %v2728, %v2570
        %v2737 = vmul.f32 %v2722, %v2729
        %v2738 = vadd.f32 %v2736, %v2737
        %v2739 = vtanh.pop %v2738
        %v2740 = vmul.f32 %v2735, %v2739
        %2741 = vst [vmem:[#allocation3] sm:$0xff] %v2740
        %2742 = vst [vmem:[#allocation4] sm:$0xff] %v2738
        %v2743 = vpack.c.bf16 %v2740, %v2740
        %s2744 = smul.addr %s2496, 4
        %s2745 = scalar_lea.vmem %s329, %s2744 [#allocation9]
        %2746 = vst [vmem:[%s2745] sm:$0xf] %v2743
        %s2747 = sand.u32 %s167, 1
        %s2748 = sand.u32 %s167, 1
        %s2749 = smul.addr %s2748, 32
        %s2750 = scalar_lea.vmem [#allocation9], %s2749
        // Predicated region
        $region49: #{forward.3} parent=35 // pred_check
          %p2751 = pneg %p177
        $region50: #{forward.3} parent=35 // pred_check_branch
          %2753 = sbr.rel (%p2751) target = $region52
        $region51: #{forward.3} parent=35 // pred_region
          %s2754 = ssub.s32 0, %s26
          %s2755 = smul.u32 %s25, %s2754
          %s2756 = ssub.s32 1, %s25
          %s2757 = smul.u32 %s2756, %s26
          %s2758 = sadd.s32 %s2755, %s2757
          %s2759 = smul.u32 8, %s2758
          %s2760 = smul.addr %s2759, 2
          %s2761 = sadd.s32 %s25, %s2760
          %s2762 = smul.addr %s2761, 4
          %s2763 = scalar_lea.vmem %s4, %s2762
          // Predicated region
          $region53: #{forward.3} parent=51 // pred_check
            _
          $region54: #{forward.3} parent=51 // pred_check_branch
            %2765 = sbr.rel (0) target = $region56
          $region55: #{forward.3} parent=51 // pred_region
            // Predicated region
            $region57: #{forward.3} parent=55 // pred_check
              _
            $region58: #{forward.3} parent=55 // pred_check_branch
              %2767 = sbr.rel target = $region60
            $region59: #{forward.3} parent=55 // pred_region
              // Predicated region
              $region72: #{forward.3} parent=59 // pred_check
                _
              $region73: #{forward.3} parent=59 // pred_check_branch
                %2796 = sbr.rel (0) target = $region75
              $region74: #{forward.3} parent=59 // pred_region
                loop: start=0, step=1, limit=1
                $region76: #{forward.3} parent=74 // loop_pre_header
                  _
                $region77: #{forward.3} parent=74 // loop_header
                  %s2798 = sphi 0, %s2802
                  %p2799 = scmp.ge.s32.totalorder %s2798, 1
                  %s2803 = sphi %s2750, %s2750
                  %s2804 = sphi %s2763, %s2763
                $region78: #{forward.3} parent=74 // loop_header_branch
                  %2801 = sbr.rel (%p2799) target = $region82
                $region79: #{forward.3} parent=74 // loop_body
                  _
                $region80: #{forward.3} parent=74 // loop_footer
                  %s2802 = sadd.s32 1, %s2798
                $region81: #{forward.3} parent=74 // loop_footer_branch
                  %2797 = sbr.rel target = $region77
                $region82: #{forward.3} parent=74 // loop_exit
                  _
                loop: start=0, step=1, limit=1
                $region83: #{forward.3} parent=74 // loop_pre_header
                  _
                $region84: #{forward.3} parent=74 // loop_header
                  %s2807 = sphi 0, %s2811
                  %p2808 = scmp.ge.s32.totalorder %s2807, 1
                  %s2812 = sphi %s2750, %s2750
                  %s2813 = sphi %s2763, %s2763
                $region85: #{forward.3} parent=74 // loop_header_branch
                  %2810 = sbr.rel (%p2808) target = $region89
                $region86: #{forward.3} parent=74 // loop_body
                  %v2814 = vld [vmem:[%s2812] sm:$0xf]
                  %2815 = vst [vmem:[%s2813] sm:$0xf] %v2814
                  %v2816 = vld [vmem:[%s2812 + $0x4] sm:$0xf]
                  %2817 = vst [vmem:[%s2813 + $0x8] sm:$0xf] %v2816
                  %v2818 = vld [vmem:[%s2812 + $0x8] sm:$0xf]
                  %2819 = vst [vmem:[%s2813 + $0x10] sm:$0xf] %v2818
                  %v2820 = vld [vmem:[%s2812 + $0xc] sm:$0xf]
                  %2821 = vst [vmem:[%s2813 + $0x18] sm:$0xf] %v2820
                  %v2822 = vld [vmem:[%s2812 + $0x10] sm:$0xf]
                  %2823 = vst [vmem:[%s2813 + $0x20] sm:$0xf] %v2822
                  %v2824 = vld [vmem:[%s2812 + $0x14] sm:$0xf]
                  %2825 = vst [vmem:[%s2813 + $0x28] sm:$0xf] %v2824
                  %v2826 = vld [vmem:[%s2812 + $0x18] sm:$0xf]
                  %2827 = vst [vmem:[%s2813 + $0x30] sm:$0xf] %v2826
                  %v2828 = vld [vmem:[%s2812 + $0x1c] sm:$0xf]
                  %2829 = vst [vmem:[%s2813 + $0x38] sm:$0xf] %v2828
                $region87: #{forward.3} parent=74 // loop_footer
                  %s2811 = sadd.s32 1, %s2807
                $region88: #{forward.3} parent=74 // loop_footer_branch
                  %2806 = sbr.rel target = $region84
                $region89: #{forward.3} parent=74 // loop_exit
                  _
              $region75: #{forward.3} parent=59 // pred_fallthru
                _
            $region60: #{forward.3} parent=55 // pred_fallthru
              _
            // Predicated region
            $region61: #{forward.3} parent=55 // pred_check
              _
            $region62: #{forward.3} parent=55 // pred_check_branch
              %2769 = sbr.rel (0) target = $region64
            $region63: #{forward.3} parent=55 // pred_region
              loop: start=0, step=1, limit=1
              $region65: #{forward.3} parent=63 // loop_pre_header
                _
              $region66: #{forward.3} parent=63 // loop_header
                %s2772 = sphi 0, %s2776
                %p2773 = scmp.ge.s32.totalorder %s2772, 1
                %s2777 = sphi %s2750, %s2750
                %s2778 = sphi %s2763, %s2763
              $region67: #{forward.3} parent=63 // loop_header_branch
                %2775 = sbr.rel (%p2773) target = $region71
              $region68: #{forward.3} parent=63 // loop_body
                %v2779 = vld [vmem:[%s2777] sm:$0xf]
                %2780 = vst [vmem:[%s2778] sm:$0xf] %v2779
                %v2781 = vld [vmem:[%s2777 + $0x4] sm:$0xf]
                %2782 = vst [vmem:[%s2778 + $0x8] sm:$0xf] %v2781
                %v2783 = vld [vmem:[%s2777 + $0x8] sm:$0xf]
                %2784 = vst [vmem:[%s2778 + $0x10] sm:$0xf] %v2783
                %v2785 = vld [vmem:[%s2777 + $0xc] sm:$0xf]
                %2786 = vst [vmem:[%s2778 + $0x18] sm:$0xf] %v2785
                %v2787 = vld [vmem:[%s2777 + $0x10] sm:$0xf]
                %2788 = vst [vmem:[%s2778 + $0x20] sm:$0xf] %v2787
                %v2789 = vld [vmem:[%s2777 + $0x14] sm:$0xf]
                %2790 = vst [vmem:[%s2778 + $0x28] sm:$0xf] %v2789
                %v2791 = vld [vmem:[%s2777 + $0x18] sm:$0xf]
                %2792 = vst [vmem:[%s2778 + $0x30] sm:$0xf] %v2791
                %v2793 = vld [vmem:[%s2777 + $0x1c] sm:$0xf]
                %2794 = vst [vmem:[%s2778 + $0x38] sm:$0xf] %v2793
              $region69: #{forward.3} parent=63 // loop_footer
                %s2776 = sadd.s32 1, %s2772
              $region70: #{forward.3} parent=63 // loop_footer_branch
                %2771 = sbr.rel target = $region66
              $region71: #{forward.3} parent=63 // loop_exit
                _
            $region64: #{forward.3} parent=55 // pred_fallthru
              _
          $region56: #{forward.3} parent=51 // pred_fallthru
            _
          %2830 = vnop
        $region52: #{forward.3} parent=35 // pred_fallthru
          _
      $region36: #{forward.3} parent=5 // pred_fallthru
        _
      %p2831 = scmp.le.s32.totalorder 2, %s16
      // Predicated region
      $region90: #{forward.3} parent=5 // pred_check
        %p2832 = pneg %p2831
      $region91: #{forward.3} parent=5 // pred_check_branch
        %2834 = sbr.rel (%p2832) target = $region93
      $region92: #{forward.3} parent=5 // pred_region
        %s2835 = ssub.s32 %s16, 2
        // Predicated region
        $region94: #{forward.3} parent=92 // pred_check
          %p2836 = pneg %p183
        $region95: #{forward.3} parent=92 // pred_check_branch
          %2838 = sbr.rel (%p2836) target = $region97
        $region96: #{forward.3} parent=92 // pred_region
          %s2839 = sand.u32 %s168, 1
          %s2840 = sand.u32 %s168, 1
          %s2841 = smul.addr %s2840, 32
          %s2842 = scalar_lea.vmem [#allocation9], %s2841
        $region97: #{forward.3} parent=92 // pred_fallthru
          _
      $region93: #{forward.3} parent=5 // pred_fallthru
        _
    $region6: #{forward.3} parent=1 // loop_footer
      %s20 = sadd.s32 1, %s16
    $region7: #{forward.3} parent=1 // loop_footer_branch
      %15 = sbr.rel target = $region3
    $region8: #{forward.3} parent=1 // loop_exit
      _
    %2843 = vsyncpa [#allocation6], 1
    %s2844 = scalar_lea.sflag [#allocation6], 1
    %2845 = vsyncpa %s2844, 1
    %2846 = vsyncpa [#allocation8], 1
    %s2847 = scalar_lea.sflag [#allocation8], 1
    %2848 = vsyncpa %s2847, 1

// kernel: forward.4
$region0: #{forward.4}
  #allocation0 [shape = 'u32[]', space=smem, size = 0x4, offset = 0x4, fixed_abs, tag = 'smem constant byte address 0x4 - core index']
  #allocation1 [shape = 'u32[144,128]{1,0:T(1,128)}', space=vmem, size = 0x12000, scoped, tag = 'internal scratch']
  #allocation2 [shape = 'f32[64,512]{1,0:T(8,128)}', space=vmem, size = 0x20000, scoped, tag = 'scratch operand']
  #allocation3 [shape = 'f32[8,128]{1,0:T(8,128)}', space=vmem, size = 0x1000, scoped, tag = 'scratch operand']
  #allocation4 [shape = 'f32[8,128]{1,0:T(8,128)}', space=vmem, size = 0x1000, scoped, tag = 'scratch operand']
  %s0 = inlined_call_operand.vmem [shape: bf16[64,256], index: 0, kind: input, shape index: {}]
  %s1 = inlined_call_operand.vmem [shape: f32[2,256,512], index: 1, kind: input, shape index: {}]
  %s2 = inlined_call_operand.hbm [shape: f32[2,128,512], index: 2, kind: input, shape index: {}]
  %s3 = inlined_call_operand.vmem [shape: f32[2,1,512], index: 3, kind: input, shape index: {}]
  %s4 = inlined_call_operand.vmem [shape: f32[8,256], index: 4, kind: output, shape index: {}]
  %s5 = sld [smem:[#allocation0]]
  $region57: #{forward.4} parent=0
    _
  %s7 = ssub.s32 1, %s5
  %s8 = scalar_select 0, %s7, %s5
  $region1: #{forward.4} parent=0
    #allocation5 [shape = 'u8[524288]{0}', space=vmem, size = 0x80000, scoped, tag = 'input window, operand 2']
    #allocation6 [shape = 's32[2]{0}', space=sflag, size = 0x8, scoped, tag = 'scoped memory for forward.4']
    %9 = vsyncpa [#allocation6], 0
    %s10 = scalar_lea.sflag [#allocation6], 1
    %11 = vsyncpa %s10, 0
    loop: start=0, step=1, limit=4
    $region2: #{forward.4} parent=1 // loop_pre_header
      _
    $region3: #{forward.4} parent=1 // loop_header
      %s13 = sphi 0, %s17
      %p14 = scmp.ge.s32.totalorder %s13, 4
      %s20 = sphi 0, %s32
      %s21 = sphi 0, %s28
      %s22 = sphi 0, %s20
      %s23 = sphi 0, %s21
      %s24 = sphi 0, %s22
      %s25 = sphi 0, %s23
      %s45 = sphi 0, %s47
      %s48 = sphi 0, %s45
      %s49 = sphi 0, %s48
      %s65 = sphi 0, %s49
      %s71 = sphi 0, %s73
      %s74 = sphi 0, %s71
      %s75 = sphi 0, %s74
      %s91 = sphi 0, %s75
      %s97 = sphi 0, %s99
      %s100 = sphi 0, %s97
      %s101 = sphi 0, %s100
      %s117 = sphi 0, %s101
      %s123 = sphi 0, %s125
      %s126 = sphi 0, %s123
      %s127 = sphi 0, %s126
      %s143 = sphi 0, %s127
      %s149 = sphi 0, %s151
      %s152 = sphi 0, %s149
      %s153 = sphi 0, %s152
      %s169 = sphi 0, %s153
    $region4: #{forward.4} parent=1 // loop_header_branch
      %16 = sbr.rel (%p14) target = $region8
    $region5: #{forward.4} parent=1 // loop_body
      %s18 = ssub.s32 %s13, 1
      %s19 = ssub.s32 %s13, 2
      %s26 = sadd.s32 1, %s21
      %p27 = scmp.ge.s32.totalorder %s26, 1
      %s28 = scalar_select %p27, 0, %s26
      %s29 = sadd.s32 1, %s20
      %s30 = scalar_select %p27, %s29, %s20
      %p31 = scmp.ge.s32.totalorder %s30, 2
      %s32 = scalar_select %p31, 0, %s30
      %s33 = ssub.s32 0, %s21
      %s34 = smul.u32 %s20, %s33
      %s35 = ssub.s32 1, %s20
      %s36 = smul.u32 %s35, %s21
      %s37 = sadd.s32 %s34, %s36
      %s38 = ssub.s32 0, %s28
      %s39 = smul.u32 %s32, %s38
      %s40 = ssub.s32 1, %s32
      %s41 = smul.u32 %s40, %s28
      %s42 = sadd.s32 %s39, %s41
      %s43 = ssub.s32 %s37, %s42
      %p44 = scmp.eq.s32.totalorder %s43, 0
      %s46 = sadd.s32 %s45, 1
      %s47 = scalar_select %p44, %s45, %s46
      %p50 = pneg %p44
      %p51 = scmp.eq.s32.totalorder %s13, 1
      %p52 = por %p50, %p51
      %p53 = scmp.ne.s32.totalorder %s45, %s48
      %p54 = scmp.eq.s32.totalorder %s13, 0
      %p55 = por %p53, %p54
      %p56 = scmp.ne.s32.totalorder %s45, %s48
      %p57 = scmp.eq.s32.totalorder %s18, 1
      %p58 = por %p56, %p57
      %p59 = scmp.ne.s32.totalorder %s48, %s49
      %p60 = scmp.eq.s32.totalorder %s18, 0
      %p61 = por %p59, %p60
      %p62 = scmp.ne.s32.totalorder %s48, %s49
      %p63 = scmp.eq.s32.totalorder %s19, 1
      %p64 = por %p62, %p63
      %p66 = scmp.ne.s32.totalorder %s49, %s65
      %p67 = scmp.eq.s32.totalorder %s19, 0
      %p68 = por %p66, %p67
      %s69 = ssub.s32 %s20, %s32
      %p70 = scmp.eq.s32.totalorder %s69, 0
      %s72 = sadd.s32 %s71, 1
      %s73 = scalar_select %p70, %s71, %s72
      %p76 = pneg %p70
      %p77 = scmp.eq.s32.totalorder %s13, 1
      %p78 = por %p76, %p77
      %p79 = scmp.ne.s32.totalorder %s71, %s74
      %p80 = scmp.eq.s32.totalorder %s13, 0
      %p81 = por %p79, %p80
      %p82 = scmp.ne.s32.totalorder %s71, %s74
      %p83 = scmp.eq.s32.totalorder %s18, 1
      %p84 = por %p82, %p83
      %p85 = scmp.ne.s32.totalorder %s74, %s75
      %p86 = scmp.eq.s32.totalorder %s18, 0
      %p87 = por %p85, %p86
      %p88 = scmp.ne.s32.totalorder %s74, %s75
      %p89 = scmp.eq.s32.totalorder %s19, 1
      %p90 = por %p88, %p89
      %p92 = scmp.ne.s32.totalorder %s75, %s91
      %p93 = scmp.eq.s32.totalorder %s19, 0
      %p94 = por %p92, %p93
      %s95 = ssub.s32 %s20, %s32
      %p96 = scmp.eq.s32.totalorder %s95, 0
      %s98 = sadd.s32 %s97, 1
      %s99 = scalar_select %p96, %s97, %s98
      %p102 = pneg %p96
      %p103 = scmp.eq.s32.totalorder %s13, 1
      %p104 = por %p102, %p103
      %p105 = scmp.ne.s32.totalorder %s97, %s100
      %p106 = scmp.eq.s32.totalorder %s13, 0
      %p107 = por %p105, %p106
      %p108 = scmp.ne.s32.totalorder %s97, %s100
      %p109 = scmp.eq.s32.totalorder %s18, 1
      %p110 = por %p108, %p109
      %p111 = scmp.ne.s32.totalorder %s100, %s101
      %p112 = scmp.eq.s32.totalorder %s18, 0
      %p113 = por %p111, %p112
      %p114 = scmp.ne.s32.totalorder %s100, %s101
      %p115 = scmp.eq.s32.totalorder %s19, 1
      %p116 = por %p114, %p115
      %p118 = scmp.ne.s32.totalorder %s101, %s117
      %p119 = scmp.eq.s32.totalorder %s19, 0
      %p120 = por %p118, %p119
      %s121 = ssub.s32 %s20, %s32
      %p122 = scmp.eq.s32.totalorder %s121, 0
      %s124 = sadd.s32 %s123, 1
      %s125 = scalar_select %p122, %s123, %s124
      %p128 = pneg %p122
      %p129 = scmp.eq.s32.totalorder %s13, 1
      %p130 = por %p128, %p129
      %p131 = scmp.ne.s32.totalorder %s123, %s126
      %p132 = scmp.eq.s32.totalorder %s13, 0
      %p133 = por %p131, %p132
      %p134 = scmp.ne.s32.totalorder %s123, %s126
      %p135 = scmp.eq.s32.totalorder %s18, 1
      %p136 = por %p134, %p135
      %p137 = scmp.ne.s32.totalorder %s126, %s127
      %p138 = scmp.eq.s32.totalorder %s18, 0
      %p139 = por %p137, %p138
      %p140 = scmp.ne.s32.totalorder %s126, %s127
      %p141 = scmp.eq.s32.totalorder %s19, 1
      %p142 = por %p140, %p141
      %p144 = scmp.ne.s32.totalorder %s127, %s143
      %p145 = scmp.eq.s32.totalorder %s19, 0
      %p146 = por %p144, %p145
      %s147 = ssub.s32 %s20, %s32
      %p148 = scmp.eq.s32.totalorder %s147, 0
      %s150 = sadd.s32 %s149, 1
      %s151 = scalar_select %p148, %s149, %s150
      %p154 = pneg %p148
      %p155 = scmp.eq.s32.totalorder %s13, 1
      %p156 = por %p154, %p155
      %p157 = scmp.ne.s32.totalorder %s149, %s152
      %p158 = scmp.eq.s32.totalorder %s13, 0
      %p159 = por %p157, %p158
      %p160 = scmp.ne.s32.totalorder %s149, %s152
      %p161 = scmp.eq.s32.totalorder %s18, 1
      %p162 = por %p160, %p161
      %p163 = scmp.ne.s32.totalorder %s152, %s153
      %p164 = scmp.eq.s32.totalorder %s18, 0
      %p165 = por %p163, %p164
      %p166 = scmp.ne.s32.totalorder %s152, %s153
      %p167 = scmp.eq.s32.totalorder %s19, 1
      %p168 = por %p166, %p167
      %p170 = scmp.ne.s32.totalorder %s153, %s169
      %p171 = scmp.eq.s32.totalorder %s19, 0
      %p172 = por %p170, %p171
      %p173 = scmp.le.s32.totalorder 1, %s13
      %p174 = scmp.lt.s32.totalorder %s13, 3
      %p175 = pnand %p173, %p174
      %p176 = pneg %p175
      // Predicated region
      $region9: #{forward.4} parent=5 // pred_check
        _
      $region10: #{forward.4} parent=5 // pred_check_branch
        %178 = sbr.rel (%p175) target = $region12
      $region11: #{forward.4} parent=5 // pred_region
        %s179 = ssub.s32 %s13, 1
      $region12: #{forward.4} parent=5 // pred_fallthru
        _
      %p180 = scmp.lt.s32.totalorder %s13, 2
      // Predicated region
      $region13: #{forward.4} parent=5 // pred_check
        %p181 = pneg %p180
      $region14: #{forward.4} parent=5 // pred_check_branch
        %183 = sbr.rel (%p181) target = $region16
      $region15: #{forward.4} parent=5 // pred_region
        // Predicated region
        $region17: #{forward.4} parent=15 // pred_check
          %p184 = pneg %p55
        $region18: #{forward.4} parent=15 // pred_check_branch
          %186 = sbr.rel (%p184) target = $region20
        $region19: #{forward.4} parent=15 // pred_region
          %s187 = ssub.s32 0, %s21
          %s188 = smul.u32 %s20, %s187
          %s189 = ssub.s32 1, %s20
          %s190 = smul.u32 %s189, %s21
          %s191 = sadd.s32 %s188, %s190
          %s192 = smul.u32 8, %s191
          %p193 = scmp.lt.s32.totalorder %s192, 7
          %s194 = scalar_select %p193, %s192, 7
          %s195 = smul.addr %s194, 2
          %s196 = smul.addr %s195, 4
          %s197 = scalar_lea.vmem %s0, %s196
          %s198 = ssub.s32 0, %s21
          %s199 = smul.u32 %s20, %s198
          %s200 = ssub.s32 1, %s20
          %s201 = smul.u32 %s200, %s21
          %s202 = sadd.s32 %s199, %s201
          %s203 = smul.u32 8, %s202
        $region20: #{forward.4} parent=15 // pred_fallthru
          _
        // Predicated region
        $region21: #{forward.4} parent=15 // pred_check
          %p204 = pneg %p81
        $region22: #{forward.4} parent=15 // pred_check_branch
          %206 = sbr.rel (%p204) target = $region24
        $region23: #{forward.4} parent=15 // pred_region
          %p207 = scmp.lt.s32.totalorder %s20, 1
          %s208 = scalar_select %p207, %s20, 1
          %s209 = smul.addr %s208, 128
          %s210 = smul.addr %s209, 8
          %s211 = scalar_lea.vmem %s1, %s210
        $region24: #{forward.4} parent=15 // pred_fallthru
          _
        // Predicated region
        $region25: #{forward.4} parent=15 // pred_check
          %p212 = pneg %p107
        $region26: #{forward.4} parent=15 // pred_check_branch
          %214 = sbr.rel (%p212) target = $region28
        $region27: #{forward.4} parent=15 // pred_region
          %s215 = sand.u32 %s97, 1
          %s216 = scalar_lea.sflag [#allocation6], %s215
          %s217 = sand.u32 %s97, 1
          %s218 = smul.addr %s217, 512
          %s219 = scalar_lea.vmem [#allocation5], %s218
          %s221 = ssub.s32 8192, 8192
          %222 = vsyncadd %s216, %s221
          %s223 = smul.addr %s20, 64
          %s224 = smul.addr %s223, 128
          %s225 = scalar_lea.hbm %s2, %s224
          %s226 = sshll.u32 %s219, 4
          %s227 = int_to_ptr.vmem [resolvable:$true] %s226
          %232 = dma.hbm_to_vmem [thread:$0]  %s225, 8192, %s227, %s216, 512, 512, 32
        $region28: #{forward.4} parent=15 // pred_fallthru
          _
        // Predicated region
        $region29: #{forward.4} parent=15 // pred_check
          %p233 = pneg %p133
        $region30: #{forward.4} parent=15 // pred_check_branch
          %235 = sbr.rel (%p233) target = $region32
        $region31: #{forward.4} parent=15 // pred_region
          %p236 = scmp.lt.s32.totalorder %s20, 1
          %s237 = scalar_select %p236, %s20, 1
          %s238 = smul.addr %s237, 4
          %s239 = scalar_lea.vmem %s3, %s238
        $region32: #{forward.4} parent=15 // pred_fallthru
          _
      $region16: #{forward.4} parent=5 // pred_fallthru
        _
      %p240 = scmp.le.s32.totalorder 1, %s13
      %p241 = scmp.lt.s32.totalorder %s13, 3
      %p242 = pnand %p240, %p241
      %p243 = pneg %p242
      // Predicated region
      $region33: #{forward.4} parent=5 // pred_check
        _
      $region34: #{forward.4} parent=5 // pred_check_branch
        %245 = sbr.rel (%p242) target = $region36
      $region35: #{forward.4} parent=5 // pred_region
        %s246 = ssub.s32 %s13, 1
        %s247 = sand.u32 %s100, 1
        %s248 = scalar_lea.sflag [#allocation6], %s247
        %s249 = sand.u32 %s100, 1
        %s250 = smul.addr %s249, 512
        %s251 = scalar_lea.vmem [#allocation5], %s250
        // Predicated region
        $region37: #{forward.4} parent=35 // pred_check
          %p252 = pneg %p113
        $region38: #{forward.4} parent=35 // pred_check_branch
          %254 = sbr.rel (%p252) target = $region40
        $region39: #{forward.4} parent=35 // pred_region
          %255 = dma.done %s248, 8192
        $region40: #{forward.4} parent=35 // pred_fallthru
          _
        %s256 = ssub.s32 0, %s23
        %s257 = smul.u32 %s22, %s256
        %s258 = ssub.s32 1, %s22
        %s259 = smul.u32 %s258, %s23
        %s260 = sadd.s32 %s257, %s259
        %s261 = smul.u32 8, %s260
        %p262 = scmp.lt.s32.totalorder %s261, 7
        %s263 = scalar_select %p262, %s261, 7
        %s264 = smul.addr %s263, 2
        %s265 = smul.addr %s264, 4
        %s266 = scalar_lea.vmem %s0, %s265
        %p267 = pneg %p61
        %p268 = pneg %p58
        %p269 = scmp.lt.s32.totalorder %s22, 1
        %s270 = scalar_select %p269, %s22, 1
        %s271 = smul.addr %s270, 128
        %s272 = smul.addr %s271, 8
        %s273 = scalar_lea.vmem %s1, %s272
        %p274 = pneg %p87
        %p275 = pneg %p84
        %s276 = sand.u32 %s100, 1
        %s277 = scalar_lea.sflag [#allocation6], %s276
        %s278 = sand.u32 %s100, 1
        %s279 = smul.addr %s278, 512
        %s280 = scalar_lea.vmem [#allocation5], %s279
        %p281 = pneg %p113
        %p282 = pneg %p110
        %p283 = scmp.lt.s32.totalorder %s22, 1
        %s284 = scalar_select %p283, %s22, 1
        %s285 = smul.addr %s284, 4
        %s286 = scalar_lea.vmem %s3, %s285
        %p287 = pneg %p139
        %p288 = pneg %p136
        %p289 = pneg %p165
        %p290 = pneg %p162
        %p291 = scmp.lt.s32.totalorder %s22, 1
        %s292 = scalar_select %p291, %s22, 1
        %s293 = smul.addr %s292, 8
        %s294 = scalar_lea.vmem %s4, %s293
        %s295 = ssub.s32 0, %s23
        %s296 = smul.u32 %s22, %s295
        %s297 = ssub.s32 1, %s22
        %s298 = smul.u32 %s297, %s23
        %s299 = sadd.s32 %s296, %s298
        %s300 = smul.u32 8, %s299
        %p301 = scmp.lt.s32.totalorder %s300, 7
        %s302 = scalar_select %p301, %s300, 7
        %s303 = smul.addr %s302, 2
        %s304 = smul.addr %s303, 4
        %s305 = scalar_lea.vmem %s0, %s304
        %s306 = ssub.s32 0, %s23
        %s307 = smul.u32 %s22, %s306
        %s308 = ssub.s32 1, %s22
        %s309 = smul.u32 %s308, %s23
        %s310 = sadd.s32 %s307, %s309
        %s311 = smul.u32 8, %s310
        %p312 = scmp.lt.s32.totalorder %s22, 1
        %s313 = scalar_select %p312, %s22, 1
        %s314 = smul.addr %s313, 128
        %s315 = smul.addr %s314, 8
        %s316 = scalar_lea.vmem %s1, %s315
        %p317 = scmp.lt.s32.totalorder %s22, 1
        %s318 = scalar_select %p317, %s22, 1
        %s319 = smul.addr %s318, 4
        %s320 = scalar_lea.vmem %s3, %s319
        %p321 = scmp.lt.s32.totalorder %s22, 1
        %s322 = scalar_select %p321, %s22, 1
        %s323 = smul.addr %s322, 8
        %s324 = scalar_lea.vmem %s4, %s323
        %p325 = scmp.eq.s32.totalorder %s23, 0
        // Predicated region
        $region41: #{forward.4} parent=35 // pred_check
          %p326 = pneg %p325
        $region42: #{forward.4} parent=35 // pred_check_branch
          %328 = sbr.rel (%p326) target = $region44
        $region43: #{forward.4} parent=35 // pred_region
          %329 = vst [vmem:[#allocation3] sm:$0xff] 0.0
          %330 = vst [vmem:[#allocation4] sm:$0xff] 0.0
          %331 = vst [vmem:[%s324] sm:$0xff] 0.0
        $region44: #{forward.4} parent=35 // pred_fallthru
          _
        %v332 = vld [vmem:[%s305] sm:$0xff]
        %v333 = vld [vmem:[%s305 + $0x8] sm:$0xff]
        %v334 = vld [vmem:[%s305 + $0x10] sm:$0xff]
        %v335 = vld [vmem:[%s305 + $0x18] sm:$0xff]
        %v336 = vld [vmem:[%s305 + $0x20] sm:$0xff]
        %v337 = vld [vmem:[%s305 + $0x28] sm:$0xff]
        %v338 = vld [vmem:[%s305 + $0x30] sm:$0xff]
        %v339 = vld [vmem:[%s305 + $0x38] sm:$0xff]
        %v340 = vld [vmem:[%s316] sm:$0xff]
        %v341 = vld [vmem:[%s316 + $0x8] sm:$0xff]
        %v342 = vld [vmem:[%s316 + $0x10] sm:$0xff]
        %v343 = vld [vmem:[%s316 + $0x18] sm:$0xff]
        %v344 = vld [vmem:[%s316 + $0x20] sm:$0xff]
        %v345 = vld [vmem:[%s316 + $0x28] sm:$0xff]
        %v346 = vld [vmem:[%s316 + $0x30] sm:$0xff]
        %v347 = vld [vmem:[%s316 + $0x38] sm:$0xff]
        %v348 = vld [vmem:[%s316 + $0x40] sm:$0xff]
        %v349 = vld [vmem:[%s316 + $0x48] sm:$0xff]
        %v350 = vld [vmem:[%s316 + $0x50] sm:$0xff]
        %v351 = vld [vmem:[%s316 + $0x58] sm:$0xff]
        %v352 = vld [vmem:[%s316 + $0x60] sm:$0xff]
        %v353 = vld [vmem:[%s316 + $0x68] sm:$0xff]
        %v354 = vld [vmem:[%s316 + $0x70] sm:$0xff]
        %v355 = vld [vmem:[%s316 + $0x78] sm:$0xff]
        %v356 = vld [vmem:[%s316 + $0x80] sm:$0xff]
        %v357 = vld [vmem:[%s316 + $0x88] sm:$0xff]
        %v358 = vld [vmem:[%s316 + $0x90] sm:$0xff]
        %v359 = vld [vmem:[%s316 + $0x98] sm:$0xff]
        %v360 = vld [vmem:[%s316 + $0xa0] sm:$0xff]
        %v361 = vld [vmem:[%s316 + $0xa8] sm:$0xff]
        %v362 = vld [vmem:[%s316 + $0xb0] sm:$0xff]
        %v363 = vld [vmem:[%s316 + $0xb8] sm:$0xff]
        %v364 = vld [vmem:[%s316 + $0xc0] sm:$0xff]
        %v365 = vld [vmem:[%s316 + $0xc8] sm:$0xff]
        %v366 = vld [vmem:[%s316 + $0xd0] sm:$0xff]
        %v367 = vld [vmem:[%s316 + $0xd8] sm:$0xff]
        %v368 = vld [vmem:[%s316 + $0xe0] sm:$0xff]
        %v369 = vld [vmem:[%s316 + $0xe8] sm:$0xff]
        %v370 = vld [vmem:[%s316 + $0xf0] sm:$0xff]
        %v371 = vld [vmem:[%s316 + $0xf8] sm:$0xff]
        %v372 = vld [vmem:[%s316 + $0x100] sm:$0xff]
        %v373 = vld [vmem:[%s316 + $0x108] sm:$0xff]
        %v374 = vld [vmem:[%s316 + $0x110] sm:$0xff]
        %v375 = vld [vmem:[%s316 + $0x118] sm:$0xff]
        %v376 = vld [vmem:[%s316 + $0x120] sm:$0xff]
        %v377 = vld [vmem:[%s316 + $0x128] sm:$0xff]
        %v378 = vld [vmem:[%s316 + $0x130] sm:$0xff]
        %v379 = vld [vmem:[%s316 + $0x138] sm:$0xff]
        %v380 = vld [vmem:[%s316 + $0x140] sm:$0xff]
        %v381 = vld [vmem:[%s316 + $0x148] sm:$0xff]
        %v382 = vld [vmem:[%s316 + $0x150] sm:$0xff]
        %v383 = vld [vmem:[%s316 + $0x158] sm:$0xff]
        %v384 = vld [vmem:[%s316 + $0x160] sm:$0xff]
        %v385 = vld [vmem:[%s316 + $0x168] sm:$0xff]
        %v386 = vld [vmem:[%s316 + $0x170] sm:$0xff]
        %v387 = vld [vmem:[%s316 + $0x178] sm:$0xff]
        %v388 = vld [vmem:[%s316 + $0x180] sm:$0xff]
        %v389 = vld [vmem:[%s316 + $0x188] sm:$0xff]
        %v390 = vld [vmem:[%s316 + $0x190] sm:$0xff]
        %v391 = vld [vmem:[%s316 + $0x198] sm:$0xff]
        %v392 = vld [vmem:[%s316 + $0x1a0] sm:$0xff]
        %v393 = vld [vmem:[%s316 + $0x1a8] sm:$0xff]
        %v394 = vld [vmem:[%s316 + $0x1b0] sm:$0xff]
        %v395 = vld [vmem:[%s316 + $0x1b8] sm:$0xff]
        %v396 = vld [vmem:[%s316 + $0x1c0] sm:$0xff]
        %v397 = vld [vmem:[%s316 + $0x1c8] sm:$0xff]
        %v398 = vld [vmem:[%s316 + $0x1d0] sm:$0xff]
        %v399 = vld [vmem:[%s316 + $0x1d8] sm:$0xff]
        %v400 = vld [vmem:[%s316 + $0x1e0] sm:$0xff]
        %v401 = vld [vmem:[%s316 + $0x1e8] sm:$0xff]
        %v402 = vld [vmem:[%s316 + $0x1f0] sm:$0xff]
        %v403 = vld [vmem:[%s316 + $0x1f8] sm:$0xff]
        %v404 = vld [vmem:[%s316 + $0x200] sm:$0xff]
        %v405 = vld [vmem:[%s316 + $0x208] sm:$0xff]
        %v406 = vld [vmem:[%s316 + $0x210] sm:$0xff]
        %v407 = vld [vmem:[%s316 + $0x218] sm:$0xff]
        %v408 = vld [vmem:[%s316 + $0x220] sm:$0xff]
        %v409 = vld [vmem:[%s316 + $0x228] sm:$0xff]
        %v410 = vld [vmem:[%s316 + $0x230] sm:$0xff]
        %v411 = vld [vmem:[%s316 + $0x238] sm:$0xff]
        %v412 = vld [vmem:[%s316 + $0x240] sm:$0xff]
        %v413 = vld [vmem:[%s316 + $0x248] sm:$0xff]
        %v414 = vld [vmem:[%s316 + $0x250] sm:$0xff]
        %v415 = vld [vmem:[%s316 + $0x258] sm:$0xff]
        %v416 = vld [vmem:[%s316 + $0x260] sm:$0xff]
        %v417 = vld [vmem:[%s316 + $0x268] sm:$0xff]
        %v418 = vld [vmem:[%s316 + $0x270] sm:$0xff]
        %v419 = vld [vmem:[%s316 + $0x278] sm:$0xff]
        %v420 = vld [vmem:[%s316 + $0x280] sm:$0xff]
        %v421 = vld [vmem:[%s316 + $0x288] sm:$0xff]
        %v422 = vld [vmem:[%s316 + $0x290] sm:$0xff]
        %v423 = vld [vmem:[%s316 + $0x298] sm:$0xff]
        %v424 = vld [vmem:[%s316 + $0x2a0] sm:$0xff]
        %v425 = vld [vmem:[%s316 + $0x2a8] sm:$0xff]
        %v426 = vld [vmem:[%s316 + $0x2b0] sm:$0xff]
        %v427 = vld [vmem:[%s316 + $0x2b8] sm:$0xff]
        %v428 = vld [vmem:[%s316 + $0x2c0] sm:$0xff]
        %v429 = vld [vmem:[%s316 + $0x2c8] sm:$0xff]
        %v430 = vld [vmem:[%s316 + $0x2d0] sm:$0xff]
        %v431 = vld [vmem:[%s316 + $0x2d8] sm:$0xff]
        %v432 = vld [vmem:[%s316 + $0x2e0] sm:$0xff]
        %v433 = vld [vmem:[%s316 + $0x2e8] sm:$0xff]
        %v434 = vld [vmem:[%s316 + $0x2f0] sm:$0xff]
        %v435 = vld [vmem:[%s316 + $0x2f8] sm:$0xff]
        %v436 = vld [vmem:[%s316 + $0x300] sm:$0xff]
        %v437 = vld [vmem:[%s316 + $0x308] sm:$0xff]
        %v438 = vld [vmem:[%s316 + $0x310] sm:$0xff]
        %v439 = vld [vmem:[%s316 + $0x318] sm:$0xff]
        %v440 = vld [vmem:[%s316 + $0x320] sm:$0xff]
        %v441 = vld [vmem:[%s316 + $0x328] sm:$0xff]
        %v442 = vld [vmem:[%s316 + $0x330] sm:$0xff]
        %v443 = vld [vmem:[%s316 + $0x338] sm:$0xff]
        %v444 = vld [vmem:[%s316 + $0x340] sm:$0xff]
        %v445 = vld [vmem:[%s316 + $0x348] sm:$0xff]
        %v446 = vld [vmem:[%s316 + $0x350] sm:$0xff]
        %v447 = vld [vmem:[%s316 + $0x358] sm:$0xff]
        %v448 = vld [vmem:[%s316 + $0x360] sm:$0xff]
        %v449 = vld [vmem:[%s316 + $0x368] sm:$0xff]
        %v450 = vld [vmem:[%s316 + $0x370] sm:$0xff]
        %v451 = vld [vmem:[%s316 + $0x378] sm:$0xff]
        %v452 = vld [vmem:[%s316 + $0x380] sm:$0xff]
        %v453 = vld [vmem:[%s316 + $0x388] sm:$0xff]
        %v454 = vld [vmem:[%s316 + $0x390] sm:$0xff]
        %v455 = vld [vmem:[%s316 + $0x398] sm:$0xff]
        %v456 = vld [vmem:[%s316 + $0x3a0] sm:$0xff]
        %v457 = vld [vmem:[%s316 + $0x3a8] sm:$0xff]
        %v458 = vld [vmem:[%s316 + $0x3b0] sm:$0xff]
        %v459 = vld [vmem:[%s316 + $0x3b8] sm:$0xff]
        %v460 = vld [vmem:[%s316 + $0x3c0] sm:$0xff]
        %v461 = vld [vmem:[%s316 + $0x3c8] sm:$0xff]
        %v462 = vld [vmem:[%s316 + $0x3d0] sm:$0xff]
        %v463 = vld [vmem:[%s316 + $0x3d8] sm:$0xff]
        %v464 = vld [vmem:[%s316 + $0x3e0] sm:$0xff]
        %v465 = vld [vmem:[%s316 + $0x3e8] sm:$0xff]
        %v466 = vld [vmem:[%s316 + $0x3f0] sm:$0xff]
        %v467 = vld [vmem:[%s316 + $0x3f8] sm:$0xff]
        %v468 = vld [vmem:[%s320] sm:$0xf]
        %v470 = vlaneseq
        %v471 = vshrl.u32 %v470, 7
        %v472 = vsub.s32 0, %v471
        %v473 = vrot.slane %v468, %v472
        %v474 = vlaneseq
        %v475 = vshrl.u32 %v474, 7
        %v476 = vsub.s32 1, %v475
        %v477 = vrot.slane %v468, %v476
        %v478 = vlaneseq
        %v479 = vshrl.u32 %v478, 7
        %v480 = vsub.s32 2, %v479
        %v481 = vrot.slane %v468, %v480
        %v482 = vlaneseq
        %v483 = vshrl.u32 %v482, 7
        %v484 = vsub.s32 3, %v483
        %v485 = vrot.slane %v468, %v484
        %v498 = vunpack.c.l.b16 %v332
        %v499 = vunpack.c.h.b16 %v332
        %v500 = vunpack.c.l.b16 %v333
        %v501 = vunpack.c.h.b16 %v333
        %v502 = vunpack.c.l.b16 %v334
        %v503 = vunpack.c.h.b16 %v334
        %v504 = vunpack.c.l.b16 %v335
        %v505 = vunpack.c.h.b16 %v335
        %v506 = vunpack.c.l.b16 %v336
        %v507 = vunpack.c.h.b16 %v336
        %v508 = vunpack.c.l.b16 %v337
        %v509 = vunpack.c.h.b16 %v337
        %v510 = vunpack.c.l.b16 %v338
        %v511 = vunpack.c.h.b16 %v338
        %v512 = vunpack.c.l.b16 %v339
        %v513 = vunpack.c.h.b16 %v339
        %v514 = vpack.c.b16 %v500, %v498
        %v515 = vpack.c.b16 %v501, %v499
        %v516 = vpack.c.b16 %v504, %v502
        %v517 = vpack.c.b16 %v505, %v503
        %v518 = vpack.c.b16 %v508, %v506
        %v519 = vpack.c.b16 %v509, %v507
        %v520 = vpack.c.b16 %v512, %v510
        %v521 = vpack.c.b16 %v513, %v511
        %530 = vmatprep.subr.mxu0 %v341
        %531 = vmatpush1.msra.mxu0 %v340
        %532 = vmatprep.subr.mxu0 %v345
        %533 = vmatpush1.msra.mxu0 %v344
        %534 = vmatprep.subr.mxu0 %v349
        %535 = vmatpush1.msra.mxu0 %v348
        %536 = vmatprep.subr.mxu0 %v353
        %537 = vmatpush1.msra.mxu0 %v352
        %538 = vmatprep.subr.mxu0 %v357
        %539 = vmatpush1.msra.mxu0 %v356
        %540 = vmatprep.subr.mxu0 %v361
        %541 = vmatpush1.msra.mxu0 %v360
        %542 = vmatprep.subr.mxu0 %v365
        %543 = vmatpush1.msra.mxu0 %v364
        %544 = vmatprep.subr.mxu0 %v369
        %545 = vmatpush1.msra.mxu0 %v368
        %546 = vmatprep.subr.mxu0 %v373
        %547 = vmatpush1.msra.mxu0 %v372
        %548 = vmatprep.subr.mxu0 %v377
        %549 = vmatpush1.msra.mxu0 %v376
        %550 = vmatprep.subr.mxu0 %v381
        %551 = vmatpush1.msra.mxu0 %v380
        %552 = vmatprep.subr.mxu0 %v385
        %553 = vmatpush1.msra.mxu0 %v384
        %554 = vmatprep.subr.mxu0 %v389
        %555 = vmatpush1.msra.mxu0 %v388
        %556 = vmatprep.subr.mxu0 %v393
        %557 = vmatpush1.msra.mxu0 %v392
        %558 = vmatprep.subr.mxu0 %v397
        %559 = vmatpush1.msra.mxu0 %v396
        %560 = vmatprep.subr.mxu0 %v401
        %561 = vmatpush1.msra.mxu0 %v400
        %562 = vmatprep.subr.mxu0 %v405
        %563 = vmatpush1.msra.mxu0 %v404
        %564 = vmatprep.subr.mxu0 %v409
        %565 = vmatpush1.msra.mxu0 %v408
        %566 = vmatprep.subr.mxu0 %v413
        %567 = vmatpush1.msra.mxu0 %v412
        %568 = vmatprep.subr.mxu0 %v417
        %569 = vmatpush1.msra.mxu0 %v416
        %570 = vmatprep.subr.mxu0 %v421
        %571 = vmatpush1.msra.mxu0 %v420
        %572 = vmatprep.subr.mxu0 %v425
        %573 = vmatpush1.msra.mxu0 %v424
        %574 = vmatprep.subr.mxu0 %v429
        %575 = vmatpush1.msra.mxu0 %v428
        %576 = vmatprep.subr.mxu0 %v433
        %577 = vmatpush1.msra.mxu0 %v432
        %578 = vmatprep.subr.mxu0 %v437
        %579 = vmatpush1.msra.mxu0 %v436
        %580 = vmatprep.subr.mxu0 %v441
        %581 = vmatpush1.msra.mxu0 %v440
        %582 = vmatprep.subr.mxu0 %v445
        %583 = vmatpush1.msra.mxu0 %v444
        %584 = vmatprep.subr.mxu0 %v449
        %585 = vmatpush1.msra.mxu0 %v448
        %586 = vmatprep.subr.mxu0 %v453
        %587 = vmatpush1.msra.mxu0 %v452
        %588 = vmatprep.subr.mxu0 %v457
        %589 = vmatpush1.msra.mxu0 %v456
        %590 = vmatprep.subr.mxu0 %v461
        %591 = vmatpush1.msra.mxu0 %v460
        %592 = vmatprep.subr.mxu0 %v465
        %593 = vmatpush1.msra.mxu0 %v464
        %594 = vmatprep.mubr.bf16.mxu0 %v515
        %595 = vmatmul.mubr.bf16.gmra.mrb[0].mxu0 %v514
        %v596 = vpop.f32.mrb[0].mxu0
        %v597 = vadd.f32 %v473, %v596
        %v598 = vpop.f32.mrb[0].mxu0
        %v599 = vadd.f32 %v477, %v598
        %v600 = vpop.f32.mrb[0].mxu0
        %v601 = vadd.f32 %v473, %v600
        %v602 = vpop.f32.mrb[0].mxu0
        %v603 = vadd.f32 %v477, %v602
        %604 = vmatprep.mubr.bf16.mxu0 %v517
        %605 = vmatmul.mubr.bf16.gmra.mrb[0].mxu0 %v516
        %v606 = vpop.f32.mrb[0].mxu0
        %v607 = vadd.f32 %v473, %v606
        %v608 = vpop.f32.mrb[0].mxu0
        %v609 = vadd.f32 %v477, %v608
        %v610 = vpop.f32.mrb[0].mxu0
        %v611 = vadd.f32 %v473, %v610
        %v612 = vpop.f32.mrb[0].mxu0
        %v613 = vadd.f32 %v477, %v612
        %614 = vmatprep.mubr.bf16.mxu0 %v519
        %615 = vmatmul.mubr.bf16.gmra.mrb[0].mxu0 %v518
        %v616 = vpop.f32.mrb[0].mxu0
        %v617 = vadd.f32 %v473, %v616
        %v618 = vpop.f32.mrb[0].mxu0
        %v619 = vadd.f32 %v477, %v618
        %v620 = vpop.f32.mrb[0].mxu0
        %v621 = vadd.f32 %v473, %v620
        %v622 = vpop.f32.mrb[0].mxu0
        %v623 = vadd.f32 %v477, %v622
        %624 = vmatprep.mubr.bf16.mxu0 %v521
        %625 = vmatmul.mubr.bf16.gmra.mrb[0].mxu0 %v520
        %v626 = vpop.f32.mrb[0].mxu0
        %v627 = vadd.f32 %v473, %v626
        %v628 = vpop.f32.mrb[0].mxu0
        %v629 = vadd.f32 %v477, %v628
        %v630 = vpop.f32.mrb[0].mxu0
        %v631 = vadd.f32 %v473, %v630
        %v632 = vpop.f32.mrb[0].mxu0
        %v633 = vadd.f32 %v477, %v632
        %634 = vdwg.mxu0
        %635 = vmatprep.subr.mxu0 %v343
        %636 = vmatpush1.msra.mxu0 %v342
        %637 = vmatprep.subr.mxu0 %v347
        %638 = vmatpush1.msra.mxu0 %v346
        %639 = vmatprep.subr.mxu0 %v351
        %640 = vmatpush1.msra.mxu0 %v350
        %641 = vmatprep.subr.mxu0 %v355
        %642 = vmatpush1.msra.mxu0 %v354
        %643 = vmatprep.subr.mxu0 %v359
        %644 = vmatpush1.msra.mxu0 %v358
        %645 = vmatprep.subr.mxu0 %v363
        %646 = vmatpush1.msra.mxu0 %v362
        %647 = vmatprep.subr.mxu0 %v367
        %648 = vmatpush1.msra.mxu0 %v366
        %649 = vmatprep.subr.mxu0 %v371
        %650 = vmatpush1.msra.mxu0 %v370
        %651 = vmatprep.subr.mxu0 %v375
        %652 = vmatpush1.msra.mxu0 %v374
        %653 = vmatprep.subr.mxu0 %v379
        %654 = vmatpush1.msra.mxu0 %v378
        %655 = vmatprep.subr.mxu0 %v383
        %656 = vmatpush1.msra.mxu0 %v382
        %657 = vmatprep.subr.mxu0 %v387
        %658 = vmatpush1.msra.mxu0 %v386
        %659 = vmatprep.subr.mxu0 %v391
        %660 = vmatpush1.msra.mxu0 %v390
        %661 = vmatprep.subr.mxu0 %v395
        %662 = vmatpush1.msra.mxu0 %v394
        %663 = vmatprep.subr.mxu0 %v399
        %664 = vmatpush1.msra.mxu0 %v398
        %665 = vmatprep.subr.mxu0 %v403
        %666 = vmatpush1.msra.mxu0 %v402
        %667 = vmatprep.subr.mxu0 %v407
        %668 = vmatpush1.msra.mxu0 %v406
        %669 = vmatprep.subr.mxu0 %v411
        %670 = vmatpush1.msra.mxu0 %v410
        %671 = vmatprep.subr.mxu0 %v415
        %672 = vmatpush1.msra.mxu0 %v414
        %673 = vmatprep.subr.mxu0 %v419
        %674 = vmatpush1.msra.mxu0 %v418
        %675 = vmatprep.subr.mxu0 %v423
        %676 = vmatpush1.msra.mxu0 %v422
        %677 = vmatprep.subr.mxu0 %v427
        %678 = vmatpush1.msra.mxu0 %v426
        %679 = vmatprep.subr.mxu0 %v431
        %680 = vmatpush1.msra.mxu0 %v430
        %681 = vmatprep.subr.mxu0 %v435
        %682 = vmatpush1.msra.mxu0 %v434
        %683 = vmatprep.subr.mxu0 %v439
        %684 = vmatpush1.msra.mxu0 %v438
        %685 = vmatprep.subr.mxu0 %v443
        %686 = vmatpush1.msra.mxu0 %v442
        %687 = vmatprep.subr.mxu0 %v447
        %688 = vmatpush1.msra.mxu0 %v446
        %689 = vmatprep.subr.mxu0 %v451
        %690 = vmatpush1.msra.mxu0 %v450
        %691 = vmatprep.subr.mxu0 %v455
        %692 = vmatpush1.msra.mxu0 %v454
        %693 = vmatprep.subr.mxu0 %v459
        %694 = vmatpush1.msra.mxu0 %v458
        %695 = vmatprep.subr.mxu0 %v463
        %696 = vmatpush1.msra.mxu0 %v462
        %697 = vmatprep.subr.mxu0 %v467
        %698 = vmatpush1.msra.mxu0 %v466
        %699 = vmatprep.mubr.bf16.mxu0 %v515
        %700 = vmatmul.mubr.bf16.gmra.mrb[0].mxu0 %v514
        %v701 = vpop.f32.mrb[0].mxu0
        %v702 = vadd.f32 %v481, %v701
        %v703 = vpop.f32.mrb[0].mxu0
        %v704 = vadd.f32 %v485, %v703
        %v705 = vpop.f32.mrb[0].mxu0
        %v706 = vadd.f32 %v481, %v705
        %v707 = vpop.f32.mrb[0].mxu0
        %v708 = vadd.f32 %v485, %v707
        %709 = vmatprep.mubr.bf16.mxu0 %v517
        %710 = vmatmul.mubr.bf16.gmra.mrb[0].mxu0 %v516
        %v711 = vpop.f32.mrb[0].mxu0
        %v712 = vadd.f32 %v481, %v711
        %v713 = vpop.f32.mrb[0].mxu0
        %v714 = vadd.f32 %v485, %v713
        %v715 = vpop.f32.mrb[0].mxu0
        %v716 = vadd.f32 %v481, %v715
        %v717 = vpop.f32.mrb[0].mxu0
        %v718 = vadd.f32 %v485, %v717
        %719 = vmatprep.mubr.bf16.mxu0 %v519
        %720 = vmatmul.mubr.bf16.gmra.mrb[0].mxu0 %v518
        %v721 = vpop.f32.mrb[0].mxu0
        %v722 = vadd.f32 %v481, %v721
        %v723 = vpop.f32.mrb[0].mxu0
        %v724 = vadd.f32 %v485, %v723
        %v725 = vpop.f32.mrb[0].mxu0
        %v726 = vadd.f32 %v481, %v725
        %v727 = vpop.f32.mrb[0].mxu0
        %v728 = vadd.f32 %v485, %v727
        %729 = vmatprep.mubr.bf16.mxu0 %v521
        %730 = vmatmul.mubr.bf16.gmra.mrb[0].mxu0 %v520
        %v731 = vpop.f32.mrb[0].mxu0
        %v732 = vadd.f32 %v481, %v731
        %v733 = vpop.f32.mrb[0].mxu0
        %v734 = vadd.f32 %v485, %v733
        %v735 = vpop.f32.mrb[0].mxu0
        %v736 = vadd.f32 %v481, %v735
        %v737 = vpop.f32.mrb[0].mxu0
        %v738 = vadd.f32 %v485, %v737
        %739 = vdwg.mxu0
        %740 = vst [vmem:[#allocation2] sm:$0xff] %v597
        %741 = vst [vmem:[#allocation2 + $0x8] sm:$0xff] %v599
        %742 = vst [vmem:[#allocation2 + $0x10] sm:$0xff] %v702
        %743 = vst [vmem:[#allocation2 + $0x18] sm:$0xff] %v704
        %744 = vst [vmem:[#allocation2 + $0x20] sm:$0xff] %v601
        %745 = vst [vmem:[#allocation2 + $0x28] sm:$0xff] %v603
        %746 = vst [vmem:[#allocation2 + $0x30] sm:$0xff] %v706
        %747 = vst [vmem:[#allocation2 + $0x38] sm:$0xff] %v708
        %748 = vst [vmem:[#allocation2 + $0x40] sm:$0xff] %v607
        %749 = vst [vmem:[#allocation2 + $0x48] sm:$0xff] %v609
        %750 = vst [vmem:[#allocation2 + $0x50] sm:$0xff] %v712
        %751 = vst [vmem:[#allocation2 + $0x58] sm:$0xff] %v714
        %752 = vst [vmem:[#allocation2 + $0x60] sm:$0xff] %v611
        %753 = vst [vmem:[#allocation2 + $0x68] sm:$0xff] %v613
        %754 = vst [vmem:[#allocation2 + $0x70] sm:$0xff] %v716
        %755 = vst [vmem:[#allocation2 + $0x78] sm:$0xff] %v718
        %756 = vst [vmem:[#allocation2 + $0x80] sm:$0xff] %v617
        %757 = vst [vmem:[#allocation2 + $0x88] sm:$0xff] %v619
        %758 = vst [vmem:[#allocation2 + $0x90] sm:$0xff] %v722
        %759 = vst [vmem:[#allocation2 + $0x98] sm:$0xff] %v724
        %760 = vst [vmem:[#allocation2 + $0xa0] sm:$0xff] %v621
        %761 = vst [vmem:[#allocation2 + $0xa8] sm:$0xff] %v623
        %762 = vst [vmem:[#allocation2 + $0xb0] sm:$0xff] %v726
        %763 = vst [vmem:[#allocation2 + $0xb8] sm:$0xff] %v728
        %764 = vst [vmem:[#allocation2 + $0xc0] sm:$0xff] %v627
        %765 = vst [vmem:[#allocation2 + $0xc8] sm:$0xff] %v629
        %766 = vst [vmem:[#allocation2 + $0xd0] sm:$0xff] %v732
        %767 = vst [vmem:[#allocation2 + $0xd8] sm:$0xff] %v734
        %768 = vst [vmem:[#allocation2 + $0xe0] sm:$0xff] %v631
        %769 = vst [vmem:[#allocation2 + $0xe8] sm:$0xff] %v633
        %770 = vst [vmem:[#allocation2 + $0xf0] sm:$0xff] %v736
        %771 = vst [vmem:[#allocation2 + $0xf8] sm:$0xff] %v738
        %s772 = smul.u32 %s22, 56
        %s773 = sshra.s32 %s772, 3
        %s774 = sand.u32 %s772, 7
        %s775 = smul.u32 %s773, 4
        %s776 = smul.addr %s775, 8
        %s777 = scalar_lea.vmem [#allocation2], %s776
        %v778 = vld [vmem:[%s777] sm:$0xff]
        %v779 = vld [vmem:[%s777 + $0x8] sm:$0xff]
        %v780 = vld [vmem:[%s777 + $0x10] sm:$0xff]
        %v781 = vld [vmem:[%s777 + $0x18] sm:$0xff]
        %v782 = vld [vmem:[%s251] sm:$0xff]
        %v783 = vld [vmem:[%s251 + $0x8] sm:$0xff]
        %v784 = vld [vmem:[%s251 + $0x10] sm:$0xff]
        %v785 = vld [vmem:[%s251 + $0x18] sm:$0xff]
        %v786 = vld [vmem:[%s251 + $0x20] sm:$0xff]
        %v787 = vld [vmem:[%s251 + $0x28] sm:$0xff]
        %v788 = vld [vmem:[%s251 + $0x30] sm:$0xff]
        %v789 = vld [vmem:[%s251 + $0x38] sm:$0xff]
        %v790 = vld [vmem:[%s251 + $0x40] sm:$0xff]
        %v791 = vld [vmem:[%s251 + $0x48] sm:$0xff]
        %v792 = vld [vmem:[%s251 + $0x50] sm:$0xff]
        %v793 = vld [vmem:[%s251 + $0x58] sm:$0xff]
        %v794 = vld [vmem:[%s251 + $0x60] sm:$0xff]
        %v795 = vld [vmem:[%s251 + $0x68] sm:$0xff]
        %v796 = vld [vmem:[%s251 + $0x70] sm:$0xff]
        %v797 = vld [vmem:[%s251 + $0x78] sm:$0xff]
        %v798 = vld [vmem:[%s251 + $0x80] sm:$0xff]
        %v799 = vld [vmem:[%s251 + $0x88] sm:$0xff]
        %v800 = vld [vmem:[%s251 + $0x90] sm:$0xff]
        %v801 = vld [vmem:[%s251 + $0x98] sm:$0xff]
        %v802 = vld [vmem:[%s251 + $0xa0] sm:$0xff]
        %v803 = vld [vmem:[%s251 + $0xa8] sm:$0xff]
        %v804 = vld [vmem:[%s251 + $0xb0] sm:$0xff]
        %v805 = vld [vmem:[%s251 + $0xb8] sm:$0xff]
        %v806 = vld [vmem:[%s251 + $0xc0] sm:$0xff]
        %v807 = vld [vmem:[%s251 + $0xc8] sm:$0xff]
        %v808 = vld [vmem:[%s251 + $0xd0] sm:$0xff]
        %v809 = vld [vmem:[%s251 + $0xd8] sm:$0xff]
        %v810 = vld [vmem:[%s251 + $0xe0] sm:$0xff]
        %v811 = vld [vmem:[%s251 + $0xe8] sm:$0xff]
        %v812 = vld [vmem:[%s251 + $0xf0] sm:$0xff]
        %v813 = vld [vmem:[%s251 + $0xf8] sm:$0xff]
        %v814 = vld [vmem:[%s251 + $0x100] sm:$0xff]
        %v815 = vld [vmem:[%s251 + $0x108] sm:$0xff]
        %v816 = vld [vmem:[%s251 + $0x110] sm:$0xff]
        %v817 = vld [vmem:[%s251 + $0x118] sm:$0xff]
        %v818 = vld [vmem:[%s251 + $0x120] sm:$0xff]
        %v819 = vld [vmem:[%s251 + $0x128] sm:$0xff]
        %v820 = vld [vmem:[%s251 + $0x130] sm:$0xff]
        %v821 = vld [vmem:[%s251 + $0x138] sm:$0xff]
        %v822 = vld [vmem:[%s251 + $0x140] sm:$0xff]
        %v823 = vld [vmem:[%s251 + $0x148] sm:$0xff]
        %v824 = vld [vmem:[%s251 + $0x150] sm:$0xff]
        %v825 = vld [vmem:[%s251 + $0x158] sm:$0xff]
        %v826 = vld [vmem:[%s251 + $0x160] sm:$0xff]
        %v827 = vld [vmem:[%s251 + $0x168] sm:$0xff]
        %v828 = vld [vmem:[%s251 + $0x170] sm:$0xff]
        %v829 = vld [vmem:[%s251 + $0x178] sm:$0xff]
        %v830 = vld [vmem:[%s251 + $0x180] sm:$0xff]
        %v831 = vld [vmem:[%s251 + $0x188] sm:$0xff]
        %v832 = vld [vmem:[%s251 + $0x190] sm:$0xff]
        %v833 = vld [vmem:[%s251 + $0x198] sm:$0xff]
        %v834 = vld [vmem:[%s251 + $0x1a0] sm:$0xff]
        %v835 = vld [vmem:[%s251 + $0x1a8] sm:$0xff]
        %v836 = vld [vmem:[%s251 + $0x1b0] sm:$0xff]
        %v837 = vld [vmem:[%s251 + $0x1b8] sm:$0xff]
        %v838 = vld [vmem:[%s251 + $0x1c0] sm:$0xff]
        %v839 = vld [vmem:[%s251 + $0x1c8] sm:$0xff]
        %v840 = vld [vmem:[%s251 + $0x1d0] sm:$0xff]
        %v841 = vld [vmem:[%s251 + $0x1d8] sm:$0xff]
        %v842 = vld [vmem:[%s251 + $0x1e0] sm:$0xff]
        %v843 = vld [vmem:[%s251 + $0x1e8] sm:$0xff]
        %v844 = vld [vmem:[%s251 + $0x1f0] sm:$0xff]
        %v845 = vld [vmem:[%s251 + $0x1f8] sm:$0xff]
        %v846 = vld [vmem:[#allocation3] sm:$0xff]
        %v847 = vld [vmem:[#allocation4] sm:$0xff]
        %848 = vmatprep.subr.mxu0 %v783
        %849 = vmatpush1.msra.mxu0 %v782
        %850 = vmatprep.subr.mxu0 %v787
        %851 = vmatpush1.msra.mxu0 %v786
        %852 = vmatprep.subr.mxu0 %v791
        %853 = vmatpush1.msra.mxu0 %v790
        %854 = vmatprep.subr.mxu0 %v795
        %855 = vmatpush1.msra.mxu0 %v794
        %856 = vmatprep.subr.mxu0 %v799
        %857 = vmatpush1.msra.mxu0 %v798
        %858 = vmatprep.subr.mxu0 %v803
        %859 = vmatpush1.msra.mxu0 %v802
        %860 = vmatprep.subr.mxu0 %v807
        %861 = vmatpush1.msra.mxu0 %v806
        %862 = vmatprep.subr.mxu0 %v811
        %863 = vmatpush1.msra.mxu0 %v810
        %864 = vmatprep.subr.mxu0 %v815
        %865 = vmatpush1.msra.mxu0 %v814
        %866 = vmatprep.subr.mxu0 %v819
        %867 = vmatpush1.msra.mxu0 %v818
        %868 = vmatprep.subr.mxu0 %v823
        %869 = vmatpush1.msra.mxu0 %v822
        %870 = vmatprep.subr.mxu0 %v827
        %871 = vmatpush1.msra.mxu0 %v826
        %872 = vmatprep.subr.mxu0 %v831
        %873 = vmatpush1.msra.mxu0 %v830
        %874 = vmatprep.subr.mxu0 %v835
        %875 = vmatpush1.msra.mxu0 %v834
        %876 = vmatprep.subr.mxu0 %v839
        %877 = vmatpush1.msra.mxu0 %v838
        %878 = vmatprep.subr.mxu0 %v843
        %879 = vmatpush1.msra.mxu0 %v842
        %880 = vmatprep.subr.mxu0 0.0
        %881 = vmatpush1.msra.mxu0 0.0
        %882 = vmatprep.subr.mxu0 0.0
        %883 = vmatpush1.msra.mxu0 0.0
        %884 = vmatprep.subr.mxu0 0.0
        %885 = vmatpush1.msra.mxu0 0.0
        %886 = vmatprep.subr.mxu0 0.0
        %887 = vmatpush1.msra.mxu0 0.0
        %888 = vmatprep.subr.mxu0 0.0
        %889 = vmatpush1.msra.mxu0 0.0
        %890 = vmatprep.subr.mxu0 0.0
        %891 = vmatpush1.msra.mxu0 0.0
        %892 = vmatprep.subr.mxu0 0.0
        %893 = vmatpush1.msra.mxu0 0.0
        %894 = vmatprep.subr.mxu0 0.0
        %895 = vmatpush1.msra.mxu0 0.0
        %896 = vmatprep.subr.mxu0 0.0
        %897 = vmatpush1.msra.mxu0 0.0
        %898 = vmatprep.subr.mxu0 0.0
        %899 = vmatpush1.msra.mxu0 0.0
        %900 = vmatprep.subr.mxu0 0.0
        %901 = vmatpush1.msra.mxu0 0.0
        %902 = vmatprep.subr.mxu0 0.0
        %903 = vmatpush1.msra.mxu0 0.0
        %904 = vmatprep.subr.mxu0 0.0
        %905 = vmatpush1.msra.mxu0 0.0
        %906 = vmatprep.subr.mxu0 0.0
        %907 = vmatpush1.msra.mxu0 0.0
        %908 = vmatprep.subr.mxu0 0.0
        %909 = vmatpush1.msra.mxu0 0.0
        %910 = vmatprep.subr.mxu0 0.0
        %911 = vmatpush1.msra.mxu0 0.0
        %912 = vmatprep.mubr.f32.mxu0 0.0
        %913 = vmatmul.mubr.f32.gmra.mrb[0].mxu0 %v846
        %v914 = vpop.f32.mrb[0].mxu0
        %v915 = vadd.f32 0.0, %v914
        %v916 = vpop.f32.mrb[0].mxu0
        %v917 = vadd.f32 0.0, %v916
        %918 = vdwg.mxu0
        %919 = vmatprep.subr.mxu0 %v785
        %920 = vmatpush1.msra.mxu0 %v784
        %921 = vmatprep.subr.mxu0 %v789
        %922 = vmatpush1.msra.mxu0 %v788
        %923 = vmatprep.subr.mxu0 %v793
        %924 = vmatpush1.msra.mxu0 %v792
        %925 = vmatprep.subr.mxu0 %v797
        %926 = vmatpush1.msra.mxu0 %v796
        %927 = vmatprep.subr.mxu0 %v801
        %928 = vmatpush1.msra.mxu0 %v800
        %929 = vmatprep.subr.mxu0 %v805
        %930 = vmatpush1.msra.mxu0 %v804
        %931 = vmatprep.subr.mxu0 %v809
        %932 = vmatpush1.msra.mxu0 %v808
        %933 = vmatprep.subr.mxu0 %v813
        %934 = vmatpush1.msra.mxu0 %v812
        %935 = vmatprep.subr.mxu0 %v817
        %936 = vmatpush1.msra.mxu0 %v816
        %937 = vmatprep.subr.mxu0 %v821
        %938 = vmatpush1.msra.mxu0 %v820
        %939 = vmatprep.subr.mxu0 %v825
        %940 = vmatpush1.msra.mxu0 %v824
        %941 = vmatprep.subr.mxu0 %v829
        %942 = vmatpush1.msra.mxu0 %v828
        %943 = vmatprep.subr.mxu0 %v833
        %944 = vmatpush1.msra.mxu0 %v832
        %945 = vmatprep.subr.mxu0 %v837
        %946 = vmatpush1.msra.mxu0 %v836
        %947 = vmatprep.subr.mxu0 %v841
        %948 = vmatpush1.msra.mxu0 %v840
        %949 = vmatprep.subr.mxu0 %v845
        %950 = vmatpush1.msra.mxu0 %v844
        %951 = vmatprep.subr.mxu0 0.0
        %952 = vmatpush1.msra.mxu0 0.0
        %953 = vmatprep.subr.mxu0 0.0
        %954 = vmatpush1.msra.mxu0 0.0
        %955 = vmatprep.subr.mxu0 0.0
        %956 = vmatpush1.msra.mxu0 0.0
        %957 = vmatprep.subr.mxu0 0.0
        %958 = vmatpush1.msra.mxu0 0.0
        %959 = vmatprep.subr.mxu0 0.0
        %960 = vmatpush1.msra.mxu0 0.0
        %961 = vmatprep.subr.mxu0 0.0
        %962 = vmatpush1.msra.mxu0 0.0
        %963 = vmatprep.subr.mxu0 0.0
        %964 = vmatpush1.msra.mxu0 0.0
        %965 = vmatprep.subr.mxu0 0.0
        %966 = vmatpush1.msra.mxu0 0.0
        %967 = vmatprep.subr.mxu0 0.0
        %968 = vmatpush1.msra.mxu0 0.0
        %969 = vmatprep.subr.mxu0 0.0
        %970 = vmatpush1.msra.mxu0 0.0
        %971 = vmatprep.subr.mxu0 0.0
        %972 = vmatpush1.msra.mxu0 0.0
        %973 = vmatprep.subr.mxu0 0.0
        %974 = vmatpush1.msra.mxu0 0.0
        %975 = vmatprep.subr.mxu0 0.0
        %976 = vmatpush1.msra.mxu0 0.0
        %977 = vmatprep.subr.mxu0 0.0
        %978 = vmatpush1.msra.mxu0 0.0
        %979 = vmatprep.subr.mxu0 0.0
        %980 = vmatpush1.msra.mxu0 0.0
        %981 = vmatprep.subr.mxu0 0.0
        %982 = vmatpush1.msra.mxu0 0.0
        %983 = vmatprep.mubr.f32.mxu0 0.0
        %984 = vmatmul.mubr.f32.gmra.mrb[0].mxu0 %v846
        %v985 = vpop.f32.mrb[0].mxu0
        %v986 = vadd.f32 0.0, %v985
        %v987 = vpop.f32.mrb[0].mxu0
        %v988 = vadd.f32 0.0, %v987
        %989 = vdwg.mxu0
        %v990 = vadd.f32 %v778, %v915
        %v991 = vadd.f32 %v779, %v917
        %v992 = vadd.f32 %v780, %v986
        %v993 = vadd.f32 %v781, %v988
        %v994 = vxor.u32 %v990, 2147483648
        %v995 = vmul.f32 %v994, 1.442695
        %v996 = vpow.pop %v995
        %v997 = vadd.f32 %v996, 1.0
        %v998 = vrcp.pop %v997
        %v999 = vmul.f32 1.0, %v998
        %v1000 = vxor.u32 %v991, 2147483648
        %v1001 = vmul.f32 %v1000, 1.442695
        %v1002 = vpow.pop %v1001
        %v1003 = vadd.f32 %v1002, 1.0
        %v1004 = vrcp.pop %v1003
        %v1005 = vmul.f32 1.0, %v1004
        %v1006 = vtanh.pop %v992
        %v1007 = vxor.u32 %v993, 2147483648
        %v1008 = vmul.f32 %v1007, 1.442695
        %v1009 = vpow.pop %v1008
        %v1010 = vadd.f32 %v1009, 1.0
        %v1011 = vrcp.pop %v1010
        %v1012 = vmul.f32 1.0, %v1011
        %v1013 = vmul.f32 %v1005, %v847
        %v1014 = vmul.f32 %v999, %v1006
        %v1015 = vadd.f32 %v1013, %v1014
        %v1016 = vtanh.pop %v1015
        %v1017 = vmul.f32 %v1012, %v1016
        %1018 = vst [vmem:[#allocation3] sm:$0xff] %v1017
        %1019 = vst [vmem:[#allocation4] sm:$0xff] %v1015
        %v1020 = vld [vmem:[%s324] sm:$0xff]
        %v1021 = vadd.f32 %v1020, %v1017
        %1022 = vst [vmem:[%s324] sm:$0xff] %v1021
        %s1023 = smul.u32 %s22, 6
        %s1024 = ssub.s32 1, %s22
        %s1025 = sadd.s32 %s1023, %s1024
        %s1026 = smul.u32 %s1025, 8
        %s1027 = sshra.s32 %s1026, 3
        %s1028 = sand.u32 %s1026, 7
        %s1029 = smul.u32 %s1027, 4
        %s1030 = smul.addr %s1029, 8
        %s1031 = scalar_lea.vmem [#allocation2], %s1030
        %v1032 = vld [vmem:[%s1031] sm:$0xff]
        %v1033 = vld [vmem:[%s1031 + $0x8] sm:$0xff]
        %v1034 = vld [vmem:[%s1031 + $0x10] sm:$0xff]
        %v1035 = vld [vmem:[%s1031 + $0x18] sm:$0xff]
        %v1036 = vld [vmem:[%s251] sm:$0xff]
        %v1037 = vld [vmem:[%s251 + $0x8] sm:$0xff]
        %v1038 = vld [vmem:[%s251 + $0x10] sm:$0xff]
        %v1039 = vld [vmem:[%s251 + $0x18] sm:$0xff]
        %v1040 = vld [vmem:[%s251 + $0x20] sm:$0xff]
        %v1041 = vld [vmem:[%s251 + $0x28] sm:$0xff]
        %v1042 = vld [vmem:[%s251 + $0x30] sm:$0xff]
        %v1043 = vld [vmem:[%s251 + $0x38] sm:$0xff]
        %v1044 = vld [vmem:[%s251 + $0x40] sm:$0xff]
        %v1045 = vld [vmem:[%s251 + $0x48] sm:$0xff]
        %v1046 = vld [vmem:[%s251 + $0x50] sm:$0xff]
        %v1047 = vld [vmem:[%s251 + $0x58] sm:$0xff]
        %v1048 = vld [vmem:[%s251 + $0x60] sm:$0xff]
        %v1049 = vld [vmem:[%s251 + $0x68] sm:$0xff]
        %v1050 = vld [vmem:[%s251 + $0x70] sm:$0xff]
        %v1051 = vld [vmem:[%s251 + $0x78] sm:$0xff]
        %v1052 = vld [vmem:[%s251 + $0x80] sm:$0xff]
        %v1053 = vld [vmem:[%s251 + $0x88] sm:$0xff]
        %v1054 = vld [vmem:[%s251 + $0x90] sm:$0xff]
        %v1055 = vld [vmem:[%s251 + $0x98] sm:$0xff]
        %v1056 = vld [vmem:[%s251 + $0xa0] sm:$0xff]
        %v1057 = vld [vmem:[%s251 + $0xa8] sm:$0xff]
        %v1058 = vld [vmem:[%s251 + $0xb0] sm:$0xff]
        %v1059 = vld [vmem:[%s251 + $0xb8] sm:$0xff]
        %v1060 = vld [vmem:[%s251 + $0xc0] sm:$0xff]
        %v1061 = vld [vmem:[%s251 + $0xc8] sm:$0xff]
        %v1062 = vld [vmem:[%s251 + $0xd0] sm:$0xff]
        %v1063 = vld [vmem:[%s251 + $0xd8] sm:$0xff]
        %v1064 = vld [vmem:[%s251 + $0xe0] sm:$0xff]
        %v1065 = vld [vmem:[%s251 + $0xe8] sm:$0xff]
        %v1066 = vld [vmem:[%s251 + $0xf0] sm:$0xff]
        %v1067 = vld [vmem:[%s251 + $0xf8] sm:$0xff]
        %v1068 = vld [vmem:[%s251 + $0x100] sm:$0xff]
        %v1069 = vld [vmem:[%s251 + $0x108] sm:$0xff]
        %v1070 = vld [vmem:[%s251 + $0x110] sm:$0xff]
        %v1071 = vld [vmem:[%s251 + $0x118] sm:$0xff]
        %v1072 = vld [vmem:[%s251 + $0x120] sm:$0xff]
        %v1073 = vld [vmem:[%s251 + $0x128] sm:$0xff]
        %v1074 = vld [vmem:[%s251 + $0x130] sm:$0xff]
        %v1075 = vld [vmem:[%s251 + $0x138] sm:$0xff]
        %v1076 = vld [vmem:[%s251 + $0x140] sm:$0xff]
        %v1077 = vld [vmem:[%s251 + $0x148] sm:$0xff]
        %v1078 = vld [vmem:[%s251 + $0x150] sm:$0xff]
        %v1079 = vld [vmem:[%s251 + $0x158] sm:$0xff]
        %v1080 = vld [vmem:[%s251 + $0x160] sm:$0xff]
        %v1081 = vld [vmem:[%s251 + $0x168] sm:$0xff]
        %v1082 = vld [vmem:[%s251 + $0x170] sm:$0xff]
        %v1083 = vld [vmem:[%s251 + $0x178] sm:$0xff]
        %v1084 = vld [vmem:[%s251 + $0x180] sm:$0xff]
        %v1085 = vld [vmem:[%s251 + $0x188] sm:$0xff]
        %v1086 = vld [vmem:[%s251 + $0x190] sm:$0xff]
        %v1087 = vld [vmem:[%s251 + $0x198] sm:$0xff]
        %v1088 = vld [vmem:[%s251 + $0x1a0] sm:$0xff]
        %v1089 = vld [vmem:[%s251 + $0x1a8] sm:$0xff]
        %v1090 = vld [vmem:[%s251 + $0x1b0] sm:$0xff]
        %v1091 = vld [vmem:[%s251 + $0x1b8] sm:$0xff]
        %v1092 = vld [vmem:[%s251 + $0x1c0] sm:$0xff]
        %v1093 = vld [vmem:[%s251 + $0x1c8] sm:$0xff]
        %v1094 = vld [vmem:[%s251 + $0x1d0] sm:$0xff]
        %v1095 = vld [vmem:[%s251 + $0x1d8] sm:$0xff]
        %v1096 = vld [vmem:[%s251 + $0x1e0] sm:$0xff]
        %v1097 = vld [vmem:[%s251 + $0x1e8] sm:$0xff]
        %v1098 = vld [vmem:[%s251 + $0x1f0] sm:$0xff]
        %v1099 = vld [vmem:[%s251 + $0x1f8] sm:$0xff]
        %v1100 = vld [vmem:[#allocation3] sm:$0xff]
        %v1101 = vld [vmem:[#allocation4] sm:$0xff]
        %1102 = vmatprep.subr.mxu0 %v1037
        %1103 = vmatpush1.msra.mxu0 %v1036
        %1104 = vmatprep.subr.mxu0 %v1041
        %1105 = vmatpush1.msra.mxu0 %v1040
        %1106 = vmatprep.subr.mxu0 %v1045
        %1107 = vmatpush1.msra.mxu0 %v1044
        %1108 = vmatprep.subr.mxu0 %v1049
        %1109 = vmatpush1.msra.mxu0 %v1048
        %1110 = vmatprep.subr.mxu0 %v1053
        %1111 = vmatpush1.msra.mxu0 %v1052
        %1112 = vmatprep.subr.mxu0 %v1057
        %1113 = vmatpush1.msra.mxu0 %v1056
        %1114 = vmatprep.subr.mxu0 %v1061
        %1115 = vmatpush1.msra.mxu0 %v1060
        %1116 = vmatprep.subr.mxu0 %v1065
        %1117 = vmatpush1.msra.mxu0 %v1064
        %1118 = vmatprep.subr.mxu0 %v1069
        %1119 = vmatpush1.msra.mxu0 %v1068
        %1120 = vmatprep.subr.mxu0 %v1073
        %1121 = vmatpush1.msra.mxu0 %v1072
        %1122 = vmatprep.subr.mxu0 %v1077
        %1123 = vmatpush1.msra.mxu0 %v1076
        %1124 = vmatprep.subr.mxu0 %v1081
        %1125 = vmatpush1.msra.mxu0 %v1080
        %1126 = vmatprep.subr.mxu0 %v1085
        %1127 = vmatpush1.msra.mxu0 %v1084
        %1128 = vmatprep.subr.mxu0 %v1089
        %1129 = vmatpush1.msra.mxu0 %v1088
        %1130 = vmatprep.subr.mxu0 %v1093
        %1131 = vmatpush1.msra.mxu0 %v1092
        %1132 = vmatprep.subr.mxu0 %v1097
        %1133 = vmatpush1.msra.mxu0 %v1096
        %1134 = vmatprep.subr.mxu0 0.0
        %1135 = vmatpush1.msra.mxu0 0.0
        %1136 = vmatprep.subr.mxu0 0.0
        %1137 = vmatpush1.msra.mxu0 0.0
        %1138 = vmatprep.subr.mxu0 0.0
        %1139 = vmatpush1.msra.mxu0 0.0
        %1140 = vmatprep.subr.mxu0 0.0
        %1141 = vmatpush1.msra.mxu0 0.0
        %1142 = vmatprep.subr.mxu0 0.0
        %1143 = vmatpush1.msra.mxu0 0.0
        %1144 = vmatprep.subr.mxu0 0.0
        %1145 = vmatpush1.msra.mxu0 0.0
        %1146 = vmatprep.subr.mxu0 0.0
        %1147 = vmatpush1.msra.mxu0 0.0
        %1148 = vmatprep.subr.mxu0 0.0
        %1149 = vmatpush1.msra.mxu0 0.0
        %1150 = vmatprep.subr.mxu0 0.0
        %1151 = vmatpush1.msra.mxu0 0.0
        %1152 = vmatprep.subr.mxu0 0.0
        %1153 = vmatpush1.msra.mxu0 0.0
        %1154 = vmatprep.subr.mxu0 0.0
        %1155 = vmatpush1.msra.mxu0 0.0
        %1156 = vmatprep.subr.mxu0 0.0
        %1157 = vmatpush1.msra.mxu0 0.0
        %1158 = vmatprep.subr.mxu0 0.0
        %1159 = vmatpush1.msra.mxu0 0.0
        %1160 = vmatprep.subr.mxu0 0.0
        %1161 = vmatpush1.msra.mxu0 0.0
        %1162 = vmatprep.subr.mxu0 0.0
        %1163 = vmatpush1.msra.mxu0 0.0
        %1164 = vmatprep.subr.mxu0 0.0
        %1165 = vmatpush1.msra.mxu0 0.0
        %1166 = vmatprep.mubr.f32.mxu0 0.0
        %1167 = vmatmul.mubr.f32.gmra.mrb[0].mxu0 %v1100
        %v1168 = vpop.f32.mrb[0].mxu0
        %v1169 = vadd.f32 0.0, %v1168
        %v1170 = vpop.f32.mrb[0].mxu0
        %v1171 = vadd.f32 0.0, %v1170
        %1172 = vdwg.mxu0
        %1173 = vmatprep.subr.mxu0 %v1039
        %1174 = vmatpush1.msra.mxu0 %v1038
        %1175 = vmatprep.subr.mxu0 %v1043
        %1176 = vmatpush1.msra.mxu0 %v1042
        %1177 = vmatprep.subr.mxu0 %v1047
        %1178 = vmatpush1.msra.mxu0 %v1046
        %1179 = vmatprep.subr.mxu0 %v1051
        %1180 = vmatpush1.msra.mxu0 %v1050
        %1181 = vmatprep.subr.mxu0 %v1055
        %1182 = vmatpush1.msra.mxu0 %v1054
        %1183 = vmatprep.subr.mxu0 %v1059
        %1184 = vmatpush1.msra.mxu0 %v1058
        %1185 = vmatprep.subr.mxu0 %v1063
        %1186 = vmatpush1.msra.mxu0 %v1062
        %1187 = vmatprep.subr.mxu0 %v1067
        %1188 = vmatpush1.msra.mxu0 %v1066
        %1189 = vmatprep.subr.mxu0 %v1071
        %1190 = vmatpush1.msra.mxu0 %v1070
        %1191 = vmatprep.subr.mxu0 %v1075
        %1192 = vmatpush1.msra.mxu0 %v1074
        %1193 = vmatprep.subr.mxu0 %v1079
        %1194 = vmatpush1.msra.mxu0 %v1078
        %1195 = vmatprep.subr.mxu0 %v1083
        %1196 = vmatpush1.msra.mxu0 %v1082
        %1197 = vmatprep.subr.mxu0 %v1087
        %1198 = vmatpush1.msra.mxu0 %v1086
        %1199 = vmatprep.subr.mxu0 %v1091
        %1200 = vmatpush1.msra.mxu0 %v1090
        %1201 = vmatprep.subr.mxu0 %v1095
        %1202 = vmatpush1.msra.mxu0 %v1094
        %1203 = vmatprep.subr.mxu0 %v1099
        %1204 = vmatpush1.msra.mxu0 %v1098
        %1205 = vmatprep.subr.mxu0 0.0
        %1206 = vmatpush1.msra.mxu0 0.0
        %1207 = vmatprep.subr.mxu0 0.0
        %1208 = vmatpush1.msra.mxu0 0.0
        %1209 = vmatprep.subr.mxu0 0.0
        %1210 = vmatpush1.msra.mxu0 0.0
        %1211 = vmatprep.subr.mxu0 0.0
        %1212 = vmatpush1.msra.mxu0 0.0
        %1213 = vmatprep.subr.mxu0 0.0
        %1214 = vmatpush1.msra.mxu0 0.0
        %1215 = vmatprep.subr.mxu0 0.0
        %1216 = vmatpush1.msra.mxu0 0.0
        %1217 = vmatprep.subr.mxu0 0.0
        %1218 = vmatpush1.msra.mxu0 0.0
        %1219 = vmatprep.subr.mxu0 0.0
        %1220 = vmatpush1.msra.mxu0 0.0
        %1221 = vmatprep.subr.mxu0 0.0
        %1222 = vmatpush1.msra.mxu0 0.0
        %1223 = vmatprep.subr.mxu0 0.0
        %1224 = vmatpush1.msra.mxu0 0.0
        %1225 = vmatprep.subr.mxu0 0.0
        %1226 = vmatpush1.msra.mxu0 0.0
        %1227 = vmatprep.subr.mxu0 0.0
        %1228 = vmatpush1.msra.mxu0 0.0
        %1229 = vmatprep.subr.mxu0 0.0
        %1230 = vmatpush1.msra.mxu0 0.0
        %1231 = vmatprep.subr.mxu0 0.0
        %1232 = vmatpush1.msra.mxu0 0.0
        %1233 = vmatprep.subr.mxu0 0.0
        %1234 = vmatpush1.msra.mxu0 0.0
        %1235 = vmatprep.subr.mxu0 0.0
        %1236 = vmatpush1.msra.mxu0 0.0
        %1237 = vmatprep.mubr.f32.mxu0 0.0
        %1238 = vmatmul.mubr.f32.gmra.mrb[0].mxu0 %v1100
        %v1239 = vpop.f32.mrb[0].mxu0
        %v1240 = vadd.f32 0.0, %v1239
        %v1241 = vpop.f32.mrb[0].mxu0
        %v1242 = vadd.f32 0.0, %v1241
        %1243 = vdwg.mxu0
        %v1244 = vadd.f32 %v1032, %v1169
        %v1245 = vadd.f32 %v1033, %v1171
        %v1246 = vadd.f32 %v1034, %v1240
        %v1247 = vadd.f32 %v1035, %v1242
        %v1248 = vxor.u32 %v1244, 2147483648
        %v1249 = vmul.f32 %v1248, 1.442695
        %v1250 = vpow.pop %v1249
        %v1251 = vadd.f32 %v1250, 1.0
        %v1252 = vrcp.pop %v1251
        %v1253 = vmul.f32 1.0, %v1252
        %v1254 = vxor.u32 %v1245, 2147483648
        %v1255 = vmul.f32 %v1254, 1.442695
        %v1256 = vpow.pop %v1255
        %v1257 = vadd.f32 %v1256, 1.0
        %v1258 = vrcp.pop %v1257
        %v1259 = vmul.f32 1.0, %v1258
        %v1260 = vtanh.pop %v1246
        %v1261 = vxor.u32 %v1247, 2147483648
        %v1262 = vmul.f32 %v1261, 1.442695
        %v1263 = vpow.pop %v1262
        %v1264 = vadd.f32 %v1263, 1.0
        %v1265 = vrcp.pop %v1264
        %v1266 = vmul.f32 1.0, %v1265
        %v1267 = vmul.f32 %v1259, %v1101
        %v1268 = vmul.f32 %v1253, %v1260
        %v1269 = vadd.f32 %v1267, %v1268
        %v1270 = vtanh.pop %v1269
        %v1271 = vmul.f32 %v1266, %v1270
        %1272 = vst [vmem:[#allocation3] sm:$0xff] %v1271
        %1273 = vst [vmem:[#allocation4] sm:$0xff] %v1269
        %v1274 = vld [vmem:[%s324] sm:$0xff]
        %v1275 = vadd.f32 %v1274, %v1271
        %1276 = vst [vmem:[%s324] sm:$0xff] %v1275
        %s1277 = smul.u32 %s22, 5
        %s1278 = smul.u32 %s1024, 2
        %s1279 = sadd.s32 %s1277, %s1278
        %s1280 = smul.u32 %s1279, 8
        %s1281 = sshra.s32 %s1280, 3
        %s1282 = sand.u32 %s1280, 7
        %s1283 = smul.u32 %s1281, 4
        %s1284 = smul.addr %s1283, 8
        %s1285 = scalar_lea.vmem [#allocation2], %s1284
        %v1286 = vld [vmem:[%s1285] sm:$0xff]
        %v1287 = vld [vmem:[%s1285 + $0x8] sm:$0xff]
        %v1288 = vld [vmem:[%s1285 + $0x10] sm:$0xff]
        %v1289 = vld [vmem:[%s1285 + $0x18] sm:$0xff]
        %v1290 = vld [vmem:[%s251] sm:$0xff]
        %v1291 = vld [vmem:[%s251 + $0x8] sm:$0xff]
        %v1292 = vld [vmem:[%s251 + $0x10] sm:$0xff]
        %v1293 = vld [vmem:[%s251 + $0x18] sm:$0xff]
        %v1294 = vld [vmem:[%s251 + $0x20] sm:$0xff]
        %v1295 = vld [vmem:[%s251 + $0x28] sm:$0xff]
        %v1296 = vld [vmem:[%s251 + $0x30] sm:$0xff]
        %v1297 = vld [vmem:[%s251 + $0x38] sm:$0xff]
        %v1298 = vld [vmem:[%s251 + $0x40] sm:$0xff]
        %v1299 = vld [vmem:[%s251 + $0x48] sm:$0xff]
        %v1300 = vld [vmem:[%s251 + $0x50] sm:$0xff]
        %v1301 = vld [vmem:[%s251 + $0x58] sm:$0xff]
        %v1302 = vld [vmem:[%s251 + $0x60] sm:$0xff]
        %v1303 = vld [vmem:[%s251 + $0x68] sm:$0xff]
        %v1304 = vld [vmem:[%s251 + $0x70] sm:$0xff]
        %v1305 = vld [vmem:[%s251 + $0x78] sm:$0xff]
        %v1306 = vld [vmem:[%s251 + $0x80] sm:$0xff]
        %v1307 = vld [vmem:[%s251 + $0x88] sm:$0xff]
        %v1308 = vld [vmem:[%s251 + $0x90] sm:$0xff]
        %v1309 = vld [vmem:[%s251 + $0x98] sm:$0xff]
        %v1310 = vld [vmem:[%s251 + $0xa0] sm:$0xff]
        %v1311 = vld [vmem:[%s251 + $0xa8] sm:$0xff]
        %v1312 = vld [vmem:[%s251 + $0xb0] sm:$0xff]
        %v1313 = vld [vmem:[%s251 + $0xb8] sm:$0xff]
        %v1314 = vld [vmem:[%s251 + $0xc0] sm:$0xff]
        %v1315 = vld [vmem:[%s251 + $0xc8] sm:$0xff]
        %v1316 = vld [vmem:[%s251 + $0xd0] sm:$0xff]
        %v1317 = vld [vmem:[%s251 + $0xd8] sm:$0xff]
        %v1318 = vld [vmem:[%s251 + $0xe0] sm:$0xff]
        %v1319 = vld [vmem:[%s251 + $0xe8] sm:$0xff]
        %v1320 = vld [vmem:[%s251 + $0xf0] sm:$0xff]
        %v1321 = vld [vmem:[%s251 + $0xf8] sm:$0xff]
        %v1322 = vld [vmem:[%s251 + $0x100] sm:$0xff]
        %v1323 = vld [vmem:[%s251 + $0x108] sm:$0xff]
        %v1324 = vld [vmem:[%s251 + $0x110] sm:$0xff]
        %v1325 = vld [vmem:[%s251 + $0x118] sm:$0xff]
        %v1326 = vld [vmem:[%s251 + $0x120] sm:$0xff]
        %v1327 = vld [vmem:[%s251 + $0x128] sm:$0xff]
        %v1328 = vld [vmem:[%s251 + $0x130] sm:$0xff]
        %v1329 = vld [vmem:[%s251 + $0x138] sm:$0xff]
        %v1330 = vld [vmem:[%s251 + $0x140] sm:$0xff]
        %v1331 = vld [vmem:[%s251 + $0x148] sm:$0xff]
        %v1332 = vld [vmem:[%s251 + $0x150] sm:$0xff]
        %v1333 = vld [vmem:[%s251 + $0x158] sm:$0xff]
        %v1334 = vld [vmem:[%s251 + $0x160] sm:$0xff]
        %v1335 = vld [vmem:[%s251 + $0x168] sm:$0xff]
        %v1336 = vld [vmem:[%s251 + $0x170] sm:$0xff]
        %v1337 = vld [vmem:[%s251 + $0x178] sm:$0xff]
        %v1338 = vld [vmem:[%s251 + $0x180] sm:$0xff]
        %v1339 = vld [vmem:[%s251 + $0x188] sm:$0xff]
        %v1340 = vld [vmem:[%s251 + $0x190] sm:$0xff]
        %v1341 = vld [vmem:[%s251 + $0x198] sm:$0xff]
        %v1342 = vld [vmem:[%s251 + $0x1a0] sm:$0xff]
        %v1343 = vld [vmem:[%s251 + $0x1a8] sm:$0xff]
        %v1344 = vld [vmem:[%s251 + $0x1b0] sm:$0xff]
        %v1345 = vld [vmem:[%s251 + $0x1b8] sm:$0xff]
        %v1346 = vld [vmem:[%s251 + $0x1c0] sm:$0xff]
        %v1347 = vld [vmem:[%s251 + $0x1c8] sm:$0xff]
        %v1348 = vld [vmem:[%s251 + $0x1d0] sm:$0xff]
        %v1349 = vld [vmem:[%s251 + $0x1d8] sm:$0xff]
        %v1350 = vld [vmem:[%s251 + $0x1e0] sm:$0xff]
        %v1351 = vld [vmem:[%s251 + $0x1e8] sm:$0xff]
        %v1352 = vld [vmem:[%s251 + $0x1f0] sm:$0xff]
        %v1353 = vld [vmem:[%s251 + $0x1f8] sm:$0xff]
        %v1354 = vld [vmem:[#allocation3] sm:$0xff]
        %v1355 = vld [vmem:[#allocation4] sm:$0xff]
        %1356 = vmatprep.subr.mxu0 %v1291
        %1357 = vmatpush1.msra.mxu0 %v1290
        %1358 = vmatprep.subr.mxu0 %v1295
        %1359 = vmatpush1.msra.mxu0 %v1294
        %1360 = vmatprep.subr.mxu0 %v1299
        %1361 = vmatpush1.msra.mxu0 %v1298
        %1362 = vmatprep.subr.mxu0 %v1303
        %1363 = vmatpush1.msra.mxu0 %v1302
        %1364 = vmatprep.subr.mxu0 %v1307
        %1365 = vmatpush1.msra.mxu0 %v1306
        %1366 = vmatprep.subr.mxu0 %v1311
        %1367 = vmatpush1.msra.mxu0 %v1310
        %1368 = vmatprep.subr.mxu0 %v1315
        %1369 = vmatpush1.msra.mxu0 %v1314
        %1370 = vmatprep.subr.mxu0 %v1319
        %1371 = vmatpush1.msra.mxu0 %v1318
        %1372 = vmatprep.subr.mxu0 %v1323
        %1373 = vmatpush1.msra.mxu0 %v1322
        %1374 = vmatprep.subr.mxu0 %v1327
        %1375 = vmatpush1.msra.mxu0 %v1326
        %1376 = vmatprep.subr.mxu0 %v1331
        %1377 = vmatpush1.msra.mxu0 %v1330
        %1378 = vmatprep.subr.mxu0 %v1335
        %1379 = vmatpush1.msra.mxu0 %v1334
        %1380 = vmatprep.subr.mxu0 %v1339
        %1381 = vmatpush1.msra.mxu0 %v1338
        %1382 = vmatprep.subr.mxu0 %v1343
        %1383 = vmatpush1.msra.mxu0 %v1342
        %1384 = vmatprep.subr.mxu0 %v1347
        %1385 = vmatpush1.msra.mxu0 %v1346
        %1386 = vmatprep.subr.mxu0 %v1351
        %1387 = vmatpush1.msra.mxu0 %v1350
        %1388 = vmatprep.subr.mxu0 0.0
        %1389 = vmatpush1.msra.mxu0 0.0
        %1390 = vmatprep.subr.mxu0 0.0
        %1391 = vmatpush1.msra.mxu0 0.0
        %1392 = vmatprep.subr.mxu0 0.0
        %1393 = vmatpush1.msra.mxu0 0.0
        %1394 = vmatprep.subr.mxu0 0.0
        %1395 = vmatpush1.msra.mxu0 0.0
        %1396 = vmatprep.subr.mxu0 0.0
        %1397 = vmatpush1.msra.mxu0 0.0
        %1398 = vmatprep.subr.mxu0 0.0
        %1399 = vmatpush1.msra.mxu0 0.0
        %1400 = vmatprep.subr.mxu0 0.0
        %1401 = vmatpush1.msra.mxu0 0.0
        %1402 = vmatprep.subr.mxu0 0.0
        %1403 = vmatpush1.msra.mxu0 0.0
        %1404 = vmatprep.subr.mxu0 0.0
        %1405 = vmatpush1.msra.mxu0 0.0
        %1406 = vmatprep.subr.mxu0 0.0
        %1407 = vmatpush1.msra.mxu0 0.0
        %1408 = vmatprep.subr.mxu0 0.0
        %1409 = vmatpush1.msra.mxu0 0.0
        %1410 = vmatprep.subr.mxu0 0.0
        %1411 = vmatpush1.msra.mxu0 0.0
        %1412 = vmatprep.subr.mxu0 0.0
        %1413 = vmatpush1.msra.mxu0 0.0
        %1414 = vmatprep.subr.mxu0 0.0
        %1415 = vmatpush1.msra.mxu0 0.0
        %1416 = vmatprep.subr.mxu0 0.0
        %1417 = vmatpush1.msra.mxu0 0.0
        %1418 = vmatprep.subr.mxu0 0.0
        %1419 = vmatpush1.msra.mxu0 0.0
        %1420 = vmatprep.mubr.f32.mxu0 0.0
        %1421 = vmatmul.mubr.f32.gmra.mrb[0].mxu0 %v1354
        %v1422 = vpop.f32.mrb[0].mxu0
        %v1423 = vadd.f32 0.0, %v1422
        %v1424 = vpop.f32.mrb[0].mxu0
        %v1425 = vadd.f32 0.0, %v1424
        %1426 = vdwg.mxu0
        %1427 = vmatprep.subr.mxu0 %v1293
        %1428 = vmatpush1.msra.mxu0 %v1292
        %1429 = vmatprep.subr.mxu0 %v1297
        %1430 = vmatpush1.msra.mxu0 %v1296
        %1431 = vmatprep.subr.mxu0 %v1301
        %1432 = vmatpush1.msra.mxu0 %v1300
        %1433 = vmatprep.subr.mxu0 %v1305
        %1434 = vmatpush1.msra.mxu0 %v1304
        %1435 = vmatprep.subr.mxu0 %v1309
        %1436 = vmatpush1.msra.mxu0 %v1308
        %1437 = vmatprep.subr.mxu0 %v1313
        %1438 = vmatpush1.msra.mxu0 %v1312
        %1439 = vmatprep.subr.mxu0 %v1317
        %1440 = vmatpush1.msra.mxu0 %v1316
        %1441 = vmatprep.subr.mxu0 %v1321
        %1442 = vmatpush1.msra.mxu0 %v1320
        %1443 = vmatprep.subr.mxu0 %v1325
        %1444 = vmatpush1.msra.mxu0 %v1324
        %1445 = vmatprep.subr.mxu0 %v1329
        %1446 = vmatpush1.msra.mxu0 %v1328
        %1447 = vmatprep.subr.mxu0 %v1333
        %1448 = vmatpush1.msra.mxu0 %v1332
        %1449 = vmatprep.subr.mxu0 %v1337
        %1450 = vmatpush1.msra.mxu0 %v1336
        %1451 = vmatprep.subr.mxu0 %v1341
        %1452 = vmatpush1.msra.mxu0 %v1340
        %1453 = vmatprep.subr.mxu0 %v1345
        %1454 = vmatpush1.msra.mxu0 %v1344
        %1455 = vmatprep.subr.mxu0 %v1349
        %1456 = vmatpush1.msra.mxu0 %v1348
        %1457 = vmatprep.subr.mxu0 %v1353
        %1458 = vmatpush1.msra.mxu0 %v1352
        %1459 = vmatprep.subr.mxu0 0.0
        %1460 = vmatpush1.msra.mxu0 0.0
        %1461 = vmatprep.subr.mxu0 0.0
        %1462 = vmatpush1.msra.mxu0 0.0
        %1463 = vmatprep.subr.mxu0 0.0
        %1464 = vmatpush1.msra.mxu0 0.0
        %1465 = vmatprep.subr.mxu0 0.0
        %1466 = vmatpush1.msra.mxu0 0.0
        %1467 = vmatprep.subr.mxu0 0.0
        %1468 = vmatpush1.msra.mxu0 0.0
        %1469 = vmatprep.subr.mxu0 0.0
        %1470 = vmatpush1.msra.mxu0 0.0
        %1471 = vmatprep.subr.mxu0 0.0
        %1472 = vmatpush1.msra.mxu0 0.0
        %1473 = vmatprep.subr.mxu0 0.0
        %1474 = vmatpush1.msra.mxu0 0.0
        %1475 = vmatprep.subr.mxu0 0.0
        %1476 = vmatpush1.msra.mxu0 0.0
        %1477 = vmatprep.subr.mxu0 0.0
        %1478 = vmatpush1.msra.mxu0 0.0
        %1479 = vmatprep.subr.mxu0 0.0
        %1480 = vmatpush1.msra.mxu0 0.0
        %1481 = vmatprep.subr.mxu0 0.0
        %1482 = vmatpush1.msra.mxu0 0.0
        %1483 = vmatprep.subr.mxu0 0.0
        %1484 = vmatpush1.msra.mxu0 0.0
        %1485 = vmatprep.subr.mxu0 0.0
        %1486 = vmatpush1.msra.mxu0 0.0
        %1487 = vmatprep.subr.mxu0 0.0
        %1488 = vmatpush1.msra.mxu0 0.0
        %1489 = vmatprep.subr.mxu0 0.0
        %1490 = vmatpush1.msra.mxu0 0.0
        %1491 = vmatprep.mubr.f32.mxu0 0.0
        %1492 = vmatmul.mubr.f32.gmra.mrb[0].mxu0 %v1354
        %v1493 = vpop.f32.mrb[0].mxu0
        %v1494 = vadd.f32 0.0, %v1493
        %v1495 = vpop.f32.mrb[0].mxu0
        %v1496 = vadd.f32 0.0, %v1495
        %1497 = vdwg.mxu0
        %v1498 = vadd.f32 %v1286, %v1423
        %v1499 = vadd.f32 %v1287, %v1425
        %v1500 = vadd.f32 %v1288, %v1494
        %v1501 = vadd.f32 %v1289, %v1496
        %v1502 = vxor.u32 %v1498, 2147483648
        %v1503 = vmul.f32 %v1502, 1.442695
        %v1504 = vpow.pop %v1503
        %v1505 = vadd.f32 %v1504, 1.0
        %v1506 = vrcp.pop %v1505
        %v1507 = vmul.f32 1.0, %v1506
        %v1508 = vxor.u32 %v1499, 2147483648
        %v1509 = vmul.f32 %v1508, 1.442695
        %v1510 = vpow.pop %v1509
        %v1511 = vadd.f32 %v1510, 1.0
        %v1512 = vrcp.pop %v1511
        %v1513 = vmul.f32 1.0, %v1512
        %v1514 = vtanh.pop %v1500
        %v1515 = vxor.u32 %v1501, 2147483648
        %v1516 = vmul.f32 %v1515, 1.442695
        %v1517 = vpow.pop %v1516
        %v1518 = vadd.f32 %v1517, 1.0
        %v1519 = vrcp.pop %v1518
        %v1520 = vmul.f32 1.0, %v1519
        %v1521 = vmul.f32 %v1513, %v1355
        %v1522 = vmul.f32 %v1507, %v1514
        %v1523 = vadd.f32 %v1521, %v1522
        %v1524 = vtanh.pop %v1523
        %v1525 = vmul.f32 %v1520, %v1524
        %1526 = vst [vmem:[#allocation3] sm:$0xff] %v1525
        %1527 = vst [vmem:[#allocation4] sm:$0xff] %v1523
        %v1528 = vld [vmem:[%s324] sm:$0xff]
        %v1529 = vadd.f32 %v1528, %v1525
        %1530 = vst [vmem:[%s324] sm:$0xff] %v1529
        %s1531 = smul.u32 %s22, 4
        %s1532 = smul.u32 %s1024, 3
        %s1533 = sadd.s32 %s1531, %s1532
        %s1534 = smul.u32 %s1533, 8
        %s1535 = sshra.s32 %s1534, 3
        %s1536 = sand.u32 %s1534, 7
        %s1537 = smul.u32 %s1535, 4
        %s1538 = smul.addr %s1537, 8
        %s1539 = scalar_lea.vmem [#allocation2], %s1538
        %v1540 = vld [vmem:[%s1539] sm:$0xff]
        %v1541 = vld [vmem:[%s1539 + $0x8] sm:$0xff]
        %v1542 = vld [vmem:[%s1539 + $0x10] sm:$0xff]
        %v1543 = vld [vmem:[%s1539 + $0x18] sm:$0xff]
        %v1544 = vld [vmem:[%s251] sm:$0xff]
        %v1545 = vld [vmem:[%s251 + $0x8] sm:$0xff]
        %v1546 = vld [vmem:[%s251 + $0x10] sm:$0xff]
        %v1547 = vld [vmem:[%s251 + $0x18] sm:$0xff]
        %v1548 = vld [vmem:[%s251 + $0x20] sm:$0xff]
        %v1549 = vld [vmem:[%s251 + $0x28] sm:$0xff]
        %v1550 = vld [vmem:[%s251 + $0x30] sm:$0xff]
        %v1551 = vld [vmem:[%s251 + $0x38] sm:$0xff]
        %v1552 = vld [vmem:[%s251 + $0x40] sm:$0xff]
        %v1553 = vld [vmem:[%s251 + $0x48] sm:$0xff]
        %v1554 = vld [vmem:[%s251 + $0x50] sm:$0xff]
        %v1555 = vld [vmem:[%s251 + $0x58] sm:$0xff]
        %v1556 = vld [vmem:[%s251 + $0x60] sm:$0xff]
        %v1557 = vld [vmem:[%s251 + $0x68] sm:$0xff]
        %v1558 = vld [vmem:[%s251 + $0x70] sm:$0xff]
        %v1559 = vld [vmem:[%s251 + $0x78] sm:$0xff]
        %v1560 = vld [vmem:[%s251 + $0x80] sm:$0xff]
        %v1561 = vld [vmem:[%s251 + $0x88] sm:$0xff]
        %v1562 = vld [vmem:[%s251 + $0x90] sm:$0xff]
        %v1563 = vld [vmem:[%s251 + $0x98] sm:$0xff]
        %v1564 = vld [vmem:[%s251 + $0xa0] sm:$0xff]
        %v1565 = vld [vmem:[%s251 + $0xa8] sm:$0xff]
        %v1566 = vld [vmem:[%s251 + $0xb0] sm:$0xff]
        %v1567 = vld [vmem:[%s251 + $0xb8] sm:$0xff]
        %v1568 = vld [vmem:[%s251 + $0xc0] sm:$0xff]
        %v1569 = vld [vmem:[%s251 + $0xc8] sm:$0xff]
        %v1570 = vld [vmem:[%s251 + $0xd0] sm:$0xff]
        %v1571 = vld [vmem:[%s251 + $0xd8] sm:$0xff]
        %v1572 = vld [vmem:[%s251 + $0xe0] sm:$0xff]
        %v1573 = vld [vmem:[%s251 + $0xe8] sm:$0xff]
        %v1574 = vld [vmem:[%s251 + $0xf0] sm:$0xff]
        %v1575 = vld [vmem:[%s251 + $0xf8] sm:$0xff]
        %v1576 = vld [vmem:[%s251 + $0x100] sm:$0xff]
        %v1577 = vld [vmem:[%s251 + $0x108] sm:$0xff]
        %v1578 = vld [vmem:[%s251 + $0x110] sm:$0xff]
        %v1579 = vld [vmem:[%s251 + $0x118] sm:$0xff]
        %v1580 = vld [vmem:[%s251 + $0x120] sm:$0xff]
        %v1581 = vld [vmem:[%s251 + $0x128] sm:$0xff]
        %v1582 = vld [vmem:[%s251 + $0x130] sm:$0xff]
        %v1583 = vld [vmem:[%s251 + $0x138] sm:$0xff]
        %v1584 = vld [vmem:[%s251 + $0x140] sm:$0xff]
        %v1585 = vld [vmem:[%s251 + $0x148] sm:$0xff]
        %v1586 = vld [vmem:[%s251 + $0x150] sm:$0xff]
        %v1587 = vld [vmem:[%s251 + $0x158] sm:$0xff]
        %v1588 = vld [vmem:[%s251 + $0x160] sm:$0xff]
        %v1589 = vld [vmem:[%s251 + $0x168] sm:$0xff]
        %v1590 = vld [vmem:[%s251 + $0x170] sm:$0xff]
        %v1591 = vld [vmem:[%s251 + $0x178] sm:$0xff]
        %v1592 = vld [vmem:[%s251 + $0x180] sm:$0xff]
        %v1593 = vld [vmem:[%s251 + $0x188] sm:$0xff]
        %v1594 = vld [vmem:[%s251 + $0x190] sm:$0xff]
        %v1595 = vld [vmem:[%s251 + $0x198] sm:$0xff]
        %v1596 = vld [vmem:[%s251 + $0x1a0] sm:$0xff]
        %v1597 = vld [vmem:[%s251 + $0x1a8] sm:$0xff]
        %v1598 = vld [vmem:[%s251 + $0x1b0] sm:$0xff]
        %v1599 = vld [vmem:[%s251 + $0x1b8] sm:$0xff]
        %v1600 = vld [vmem:[%s251 + $0x1c0] sm:$0xff]
        %v1601 = vld [vmem:[%s251 + $0x1c8] sm:$0xff]
        %v1602 = vld [vmem:[%s251 + $0x1d0] sm:$0xff]
        %v1603 = vld [vmem:[%s251 + $0x1d8] sm:$0xff]
        %v1604 = vld [vmem:[%s251 + $0x1e0] sm:$0xff]
        %v1605 = vld [vmem:[%s251 + $0x1e8] sm:$0xff]
        %v1606 = vld [vmem:[%s251 + $0x1f0] sm:$0xff]
        %v1607 = vld [vmem:[%s251 + $0x1f8] sm:$0xff]
        %v1608 = vld [vmem:[#allocation3] sm:$0xff]
        %v1609 = vld [vmem:[#allocation4] sm:$0xff]
        %1610 = vmatprep.subr.mxu0 %v1545
        %1611 = vmatpush1.msra.mxu0 %v1544
        %1612 = vmatprep.subr.mxu0 %v1549
        %1613 = vmatpush1.msra.mxu0 %v1548
        %1614 = vmatprep.subr.mxu0 %v1553
        %1615 = vmatpush1.msra.mxu0 %v1552
        %1616 = vmatprep.subr.mxu0 %v1557
        %1617 = vmatpush1.msra.mxu0 %v1556
        %1618 = vmatprep.subr.mxu0 %v1561
        %1619 = vmatpush1.msra.mxu0 %v1560
        %1620 = vmatprep.subr.mxu0 %v1565
        %1621 = vmatpush1.msra.mxu0 %v1564
        %1622 = vmatprep.subr.mxu0 %v1569
        %1623 = vmatpush1.msra.mxu0 %v1568
        %1624 = vmatprep.subr.mxu0 %v1573
        %1625 = vmatpush1.msra.mxu0 %v1572
        %1626 = vmatprep.subr.mxu0 %v1577
        %1627 = vmatpush1.msra.mxu0 %v1576
        %1628 = vmatprep.subr.mxu0 %v1581
        %1629 = vmatpush1.msra.mxu0 %v1580
        %1630 = vmatprep.subr.mxu0 %v1585
        %1631 = vmatpush1.msra.mxu0 %v1584
        %1632 = vmatprep.subr.mxu0 %v1589
        %1633 = vmatpush1.msra.mxu0 %v1588
        %1634 = vmatprep.subr.mxu0 %v1593
        %1635 = vmatpush1.msra.mxu0 %v1592
        %1636 = vmatprep.subr.mxu0 %v1597
        %1637 = vmatpush1.msra.mxu0 %v1596
        %1638 = vmatprep.subr.mxu0 %v1601
        %1639 = vmatpush1.msra.mxu0 %v1600
        %1640 = vmatprep.subr.mxu0 %v1605
        %1641 = vmatpush1.msra.mxu0 %v1604
        %1642 = vmatprep.subr.mxu0 0.0
        %1643 = vmatpush1.msra.mxu0 0.0
        %1644 = vmatprep.subr.mxu0 0.0
        %1645 = vmatpush1.msra.mxu0 0.0
        %1646 = vmatprep.subr.mxu0 0.0
        %1647 = vmatpush1.msra.mxu0 0.0
        %1648 = vmatprep.subr.mxu0 0.0
        %1649 = vmatpush1.msra.mxu0 0.0
        %1650 = vmatprep.subr.mxu0 0.0
        %1651 = vmatpush1.msra.mxu0 0.0
        %1652 = vmatprep.subr.mxu0 0.0
        %1653 = vmatpush1.msra.mxu0 0.0
        %1654 = vmatprep.subr.mxu0 0.0
        %1655 = vmatpush1.msra.mxu0 0.0
        %1656 = vmatprep.subr.mxu0 0.0
        %1657 = vmatpush1.msra.mxu0 0.0
        %1658 = vmatprep.subr.mxu0 0.0
        %1659 = vmatpush1.msra.mxu0 0.0
        %1660 = vmatprep.subr.mxu0 0.0
        %1661 = vmatpush1.msra.mxu0 0.0
        %1662 = vmatprep.subr.mxu0 0.0
        %1663 = vmatpush1.msra.mxu0 0.0
        %1664 = vmatprep.subr.mxu0 0.0
        %1665 = vmatpush1.msra.mxu0 0.0
        %1666 = vmatprep.subr.mxu0 0.0
        %1667 = vmatpush1.msra.mxu0 0.0
        %1668 = vmatprep.subr.mxu0 0.0
        %1669 = vmatpush1.msra.mxu0 0.0
        %1670 = vmatprep.subr.mxu0 0.0
        %1671 = vmatpush1.msra.mxu0 0.0
        %1672 = vmatprep.subr.mxu0 0.0
        %1673 = vmatpush1.msra.mxu0 0.0
        %1674 = vmatprep.mubr.f32.mxu0 0.0
        %1675 = vmatmul.mubr.f32.gmra.mrb[0].mxu0 %v1608
        %v1676 = vpop.f32.mrb[0].mxu0
        %v1677 = vadd.f32 0.0, %v1676
        %v1678 = vpop.f32.mrb[0].mxu0
        %v1679 = vadd.f32 0.0, %v1678
        %1680 = vdwg.mxu0
        %1681 = vmatprep.subr.mxu0 %v1547
        %1682 = vmatpush1.msra.mxu0 %v1546
        %1683 = vmatprep.subr.mxu0 %v1551
        %1684 = vmatpush1.msra.mxu0 %v1550
        %1685 = vmatprep.subr.mxu0 %v1555
        %1686 = vmatpush1.msra.mxu0 %v1554
        %1687 = vmatprep.subr.mxu0 %v1559
        %1688 = vmatpush1.msra.mxu0 %v1558
        %1689 = vmatprep.subr.mxu0 %v1563
        %1690 = vmatpush1.msra.mxu0 %v1562
        %1691 = vmatprep.subr.mxu0 %v1567
        %1692 = vmatpush1.msra.mxu0 %v1566
        %1693 = vmatprep.subr.mxu0 %v1571
        %1694 = vmatpush1.msra.mxu0 %v1570
        %1695 = vmatprep.subr.mxu0 %v1575
        %1696 = vmatpush1.msra.mxu0 %v1574
        %1697 = vmatprep.subr.mxu0 %v1579
        %1698 = vmatpush1.msra.mxu0 %v1578
        %1699 = vmatprep.subr.mxu0 %v1583
        %1700 = vmatpush1.msra.mxu0 %v1582
        %1701 = vmatprep.subr.mxu0 %v1587
        %1702 = vmatpush1.msra.mxu0 %v1586
        %1703 = vmatprep.subr.mxu0 %v1591
        %1704 = vmatpush1.msra.mxu0 %v1590
        %1705 = vmatprep.subr.mxu0 %v1595
        %1706 = vmatpush1.msra.mxu0 %v1594
        %1707 = vmatprep.subr.mxu0 %v1599
        %1708 = vmatpush1.msra.mxu0 %v1598
        %1709 = vmatprep.subr.mxu0 %v1603
        %1710 = vmatpush1.msra.mxu0 %v1602
        %1711 = vmatprep.subr.mxu0 %v1607
        %1712 = vmatpush1.msra.mxu0 %v1606
        %1713 = vmatprep.subr.mxu0 0.0
        %1714 = vmatpush1.msra.mxu0 0.0
        %1715 = vmatprep.subr.mxu0 0.0
        %1716 = vmatpush1.msra.mxu0 0.0
        %1717 = vmatprep.subr.mxu0 0.0
        %1718 = vmatpush1.msra.mxu0 0.0
        %1719 = vmatprep.subr.mxu0 0.0
        %1720 = vmatpush1.msra.mxu0 0.0
        %1721 = vmatprep.subr.mxu0 0.0
        %1722 = vmatpush1.msra.mxu0 0.0
        %1723 = vmatprep.subr.mxu0 0.0
        %1724 = vmatpush1.msra.mxu0 0.0
        %1725 = vmatprep.subr.mxu0 0.0
        %1726 = vmatpush1.msra.mxu0 0.0
        %1727 = vmatprep.subr.mxu0 0.0
        %1728 = vmatpush1.msra.mxu0 0.0
        %1729 = vmatprep.subr.mxu0 0.0
        %1730 = vmatpush1.msra.mxu0 0.0
        %1731 = vmatprep.subr.mxu0 0.0
        %1732 = vmatpush1.msra.mxu0 0.0
        %1733 = vmatprep.subr.mxu0 0.0
        %1734 = vmatpush1.msra.mxu0 0.0
        %1735 = vmatprep.subr.mxu0 0.0
        %1736 = vmatpush1.msra.mxu0 0.0
        %1737 = vmatprep.subr.mxu0 0.0
        %1738 = vmatpush1.msra.mxu0 0.0
        %1739 = vmatprep.subr.mxu0 0.0
        %1740 = vmatpush1.msra.mxu0 0.0
        %1741 = vmatprep.subr.mxu0 0.0
        %1742 = vmatpush1.msra.mxu0 0.0
        %1743 = vmatprep.subr.mxu0 0.0
        %1744 = vmatpush1.msra.mxu0 0.0
        %1745 = vmatprep.mubr.f32.mxu0 0.0
        %1746 = vmatmul.mubr.f32.gmra.mrb[0].mxu0 %v1608
        %v1747 = vpop.f32.mrb[0].mxu0
        %v1748 = vadd.f32 0.0, %v1747
        %v1749 = vpop.f32.mrb[0].mxu0
        %v1750 = vadd.f32 0.0, %v1749
        %1751 = vdwg.mxu0
        %v1752 = vadd.f32 %v1540, %v1677
        %v1753 = vadd.f32 %v1541, %v1679
        %v1754 = vadd.f32 %v1542, %v1748
        %v1755 = vadd.f32 %v1543, %v1750
        %v1756 = vxor.u32 %v1752, 2147483648
        %v1757 = vmul.f32 %v1756, 1.442695
        %v1758 = vpow.pop %v1757
        %v1759 = vadd.f32 %v1758, 1.0
        %v1760 = vrcp.pop %v1759
        %v1761 = vmul.f32 1.0, %v1760
        %v1762 = vxor.u32 %v1753, 2147483648
        %v1763 = vmul.f32 %v1762, 1.442695
        %v1764 = vpow.pop %v1763
        %v1765 = vadd.f32 %v1764, 1.0
        %v1766 = vrcp.pop %v1765
        %v1767 = vmul.f32 1.0, %v1766
        %v1768 = vtanh.pop %v1754
        %v1769 = vxor.u32 %v1755, 2147483648
        %v1770 = vmul.f32 %v1769, 1.442695
        %v1771 = vpow.pop %v1770
        %v1772 = vadd.f32 %v1771, 1.0
        %v1773 = vrcp.pop %v1772
        %v1774 = vmul.f32 1.0, %v1773
        %v1775 = vmul.f32 %v1767, %v1609
        %v1776 = vmul.f32 %v1761, %v1768
        %v1777 = vadd.f32 %v1775, %v1776
        %v1778 = vtanh.pop %v1777
        %v1779 = vmul.f32 %v1774, %v1778
        %1780 = vst [vmem:[#allocation3] sm:$0xff] %v1779
        %1781 = vst [vmem:[#allocation4] sm:$0xff] %v1777
        %v1782 = vld [vmem:[%s324] sm:$0xff]
        %v1783 = vadd.f32 %v1782, %v1779
        %1784 = vst [vmem:[%s324] sm:$0xff] %v1783
        %s1785 = smul.u32 %s22, 3
        %s1786 = smul.u32 %s1024, 4
        %s1787 = sadd.s32 %s1785, %s1786
        %s1788 = smul.u32 %s1787, 8
        %s1789 = sshra.s32 %s1788, 3
        %s1790 = sand.u32 %s1788, 7
        %s1791 = smul.u32 %s1789, 4
        %s1792 = smul.addr %s1791, 8
        %s1793 = scalar_lea.vmem [#allocation2], %s1792
        %v1794 = vld [vmem:[%s1793] sm:$0xff]
        %v1795 = vld [vmem:[%s1793 + $0x8] sm:$0xff]
        %v1796 = vld [vmem:[%s1793 + $0x10] sm:$0xff]
        %v1797 = vld [vmem:[%s1793 + $0x18] sm:$0xff]
        %v1798 = vld [vmem:[%s251] sm:$0xff]
        %v1799 = vld [vmem:[%s251 + $0x8] sm:$0xff]
        %v1800 = vld [vmem:[%s251 + $0x10] sm:$0xff]
        %v1801 = vld [vmem:[%s251 + $0x18] sm:$0xff]
        %v1802 = vld [vmem:[%s251 + $0x20] sm:$0xff]
        %v1803 = vld [vmem:[%s251 + $0x28] sm:$0xff]
        %v1804 = vld [vmem:[%s251 + $0x30] sm:$0xff]
        %v1805 = vld [vmem:[%s251 + $0x38] sm:$0xff]
        %v1806 = vld [vmem:[%s251 + $0x40] sm:$0xff]
        %v1807 = vld [vmem:[%s251 + $0x48] sm:$0xff]
        %v1808 = vld [vmem:[%s251 + $0x50] sm:$0xff]
        %v1809 = vld [vmem:[%s251 + $0x58] sm:$0xff]
        %v1810 = vld [vmem:[%s251 + $0x60] sm:$0xff]
        %v1811 = vld [vmem:[%s251 + $0x68] sm:$0xff]
        %v1812 = vld [vmem:[%s251 + $0x70] sm:$0xff]
        %v1813 = vld [vmem:[%s251 + $0x78] sm:$0xff]
        %v1814 = vld [vmem:[%s251 + $0x80] sm:$0xff]
        %v1815 = vld [vmem:[%s251 + $0x88] sm:$0xff]
        %v1816 = vld [vmem:[%s251 + $0x90] sm:$0xff]
        %v1817 = vld [vmem:[%s251 + $0x98] sm:$0xff]
        %v1818 = vld [vmem:[%s251 + $0xa0] sm:$0xff]
        %v1819 = vld [vmem:[%s251 + $0xa8] sm:$0xff]
        %v1820 = vld [vmem:[%s251 + $0xb0] sm:$0xff]
        %v1821 = vld [vmem:[%s251 + $0xb8] sm:$0xff]
        %v1822 = vld [vmem:[%s251 + $0xc0] sm:$0xff]
        %v1823 = vld [vmem:[%s251 + $0xc8] sm:$0xff]
        %v1824 = vld [vmem:[%s251 + $0xd0] sm:$0xff]
        %v1825 = vld [vmem:[%s251 + $0xd8] sm:$0xff]
        %v1826 = vld [vmem:[%s251 + $0xe0] sm:$0xff]
        %v1827 = vld [vmem:[%s251 + $0xe8] sm:$0xff]
        %v1828 = vld [vmem:[%s251 + $0xf0] sm:$0xff]
        %v1829 = vld [vmem:[%s251 + $0xf8] sm:$0xff]
        %v1830 = vld [vmem:[%s251 + $0x100] sm:$0xff]
        %v1831 = vld [vmem:[%s251 + $0x108] sm:$0xff]
        %v1832 = vld [vmem:[%s251 + $0x110] sm:$0xff]
        %v1833 = vld [vmem:[%s251 + $0x118] sm:$0xff]
        %v1834 = vld [vmem:[%s251 + $0x120] sm:$0xff]
        %v1835 = vld [vmem:[%s251 + $0x128] sm:$0xff]
        %v1836 = vld [vmem:[%s251 + $0x130] sm:$0xff]
        %v1837 = vld [vmem:[%s251 + $0x138] sm:$0xff]
        %v1838 = vld [vmem:[%s251 + $0x140] sm:$0xff]
        %v1839 = vld [vmem:[%s251 + $0x148] sm:$0xff]
        %v1840 = vld [vmem:[%s251 + $0x150] sm:$0xff]
        %v1841 = vld [vmem:[%s251 + $0x158] sm:$0xff]
        %v1842 = vld [vmem:[%s251 + $0x160] sm:$0xff]
        %v1843 = vld [vmem:[%s251 + $0x168] sm:$0xff]
        %v1844 = vld [vmem:[%s251 + $0x170] sm:$0xff]
        %v1845 = vld [vmem:[%s251 + $0x178] sm:$0xff]
        %v1846 = vld [vmem:[%s251 + $0x180] sm:$0xff]
        %v1847 = vld [vmem:[%s251 + $0x188] sm:$0xff]
        %v1848 = vld [vmem:[%s251 + $0x190] sm:$0xff]
        %v1849 = vld [vmem:[%s251 + $0x198] sm:$0xff]
        %v1850 = vld [vmem:[%s251 + $0x1a0] sm:$0xff]
        %v1851 = vld [vmem:[%s251 + $0x1a8] sm:$0xff]
        %v1852 = vld [vmem:[%s251 + $0x1b0] sm:$0xff]
        %v1853 = vld [vmem:[%s251 + $0x1b8] sm:$0xff]
        %v1854 = vld [vmem:[%s251 + $0x1c0] sm:$0xff]
        %v1855 = vld [vmem:[%s251 + $0x1c8] sm:$0xff]
        %v1856 = vld [vmem:[%s251 + $0x1d0] sm:$0xff]
        %v1857 = vld [vmem:[%s251 + $0x1d8] sm:$0xff]
        %v1858 = vld [vmem:[%s251 + $0x1e0] sm:$0xff]
        %v1859 = vld [vmem:[%s251 + $0x1e8] sm:$0xff]
        %v1860 = vld [vmem:[%s251 + $0x1f0] sm:$0xff]
        %v1861 = vld [vmem:[%s251 + $0x1f8] sm:$0xff]
        %v1862 = vld [vmem:[#allocation3] sm:$0xff]
        %v1863 = vld [vmem:[#allocation4] sm:$0xff]
        %1864 = vmatprep.subr.mxu0 %v1799
        %1865 = vmatpush1.msra.mxu0 %v1798
        %1866 = vmatprep.subr.mxu0 %v1803
        %1867 = vmatpush1.msra.mxu0 %v1802
        %1868 = vmatprep.subr.mxu0 %v1807
        %1869 = vmatpush1.msra.mxu0 %v1806
        %1870 = vmatprep.subr.mxu0 %v1811
        %1871 = vmatpush1.msra.mxu0 %v1810
        %1872 = vmatprep.subr.mxu0 %v1815
        %1873 = vmatpush1.msra.mxu0 %v1814
        %1874 = vmatprep.subr.mxu0 %v1819
        %1875 = vmatpush1.msra.mxu0 %v1818
        %1876 = vmatprep.subr.mxu0 %v1823
        %1877 = vmatpush1.msra.mxu0 %v1822
        %1878 = vmatprep.subr.mxu0 %v1827
        %1879 = vmatpush1.msra.mxu0 %v1826
        %1880 = vmatprep.subr.mxu0 %v1831
        %1881 = vmatpush1.msra.mxu0 %v1830
        %1882 = vmatprep.subr.mxu0 %v1835
        %1883 = vmatpush1.msra.mxu0 %v1834
        %1884 = vmatprep.subr.mxu0 %v1839
        %1885 = vmatpush1.msra.mxu0 %v1838
        %1886 = vmatprep.subr.mxu0 %v1843
        %1887 = vmatpush1.msra.mxu0 %v1842
        %1888 = vmatprep.subr.mxu0 %v1847
        %1889 = vmatpush1.msra.mxu0 %v1846
        %1890 = vmatprep.subr.mxu0 %v1851
        %1891 = vmatpush1.msra.mxu0 %v1850
        %1892 = vmatprep.subr.mxu0 %v1855
        %1893 = vmatpush1.msra.mxu0 %v1854
        %1894 = vmatprep.subr.mxu0 %v1859
        %1895 = vmatpush1.msra.mxu0 %v1858
        %1896 = vmatprep.subr.mxu0 0.0
        %1897 = vmatpush1.msra.mxu0 0.0
        %1898 = vmatprep.subr.mxu0 0.0
        %1899 = vmatpush1.msra.mxu0 0.0
        %1900 = vmatprep.subr.mxu0 0.0
        %1901 = vmatpush1.msra.mxu0 0.0
        %1902 = vmatprep.subr.mxu0 0.0
        %1903 = vmatpush1.msra.mxu0 0.0
        %1904 = vmatprep.subr.mxu0 0.0
        %1905 = vmatpush1.msra.mxu0 0.0
        %1906 = vmatprep.subr.mxu0 0.0
        %1907 = vmatpush1.msra.mxu0 0.0
        %1908 = vmatprep.subr.mxu0 0.0
        %1909 = vmatpush1.msra.mxu0 0.0
        %1910 = vmatprep.subr.mxu0 0.0
        %1911 = vmatpush1.msra.mxu0 0.0
        %1912 = vmatprep.subr.mxu0 0.0
        %1913 = vmatpush1.msra.mxu0 0.0
        %1914 = vmatprep.subr.mxu0 0.0
        %1915 = vmatpush1.msra.mxu0 0.0
        %1916 = vmatprep.subr.mxu0 0.0
        %1917 = vmatpush1.msra.mxu0 0.0
        %1918 = vmatprep.subr.mxu0 0.0
        %1919 = vmatpush1.msra.mxu0 0.0
        %1920 = vmatprep.subr.mxu0 0.0
        %1921 = vmatpush1.msra.mxu0 0.0
        %1922 = vmatprep.subr.mxu0 0.0
        %1923 = vmatpush1.msra.mxu0 0.0
        %1924 = vmatprep.subr.mxu0 0.0
        %1925 = vmatpush1.msra.mxu0 0.0
        %1926 = vmatprep.subr.mxu0 0.0
        %1927 = vmatpush1.msra.mxu0 0.0
        %1928 = vmatprep.mubr.f32.mxu0 0.0
        %1929 = vmatmul.mubr.f32.gmra.mrb[0].mxu0 %v1862
        %v1930 = vpop.f32.mrb[0].mxu0
        %v1931 = vadd.f32 0.0, %v1930
        %v1932 = vpop.f32.mrb[0].mxu0
        %v1933 = vadd.f32 0.0, %v1932
        %1934 = vdwg.mxu0
        %1935 = vmatprep.subr.mxu0 %v1801
        %1936 = vmatpush1.msra.mxu0 %v1800
        %1937 = vmatprep.subr.mxu0 %v1805
        %1938 = vmatpush1.msra.mxu0 %v1804
        %1939 = vmatprep.subr.mxu0 %v1809
        %1940 = vmatpush1.msra.mxu0 %v1808
        %1941 = vmatprep.subr.mxu0 %v1813
        %1942 = vmatpush1.msra.mxu0 %v1812
        %1943 = vmatprep.subr.mxu0 %v1817
        %1944 = vmatpush1.msra.mxu0 %v1816
        %1945 = vmatprep.subr.mxu0 %v1821
        %1946 = vmatpush1.msra.mxu0 %v1820
        %1947 = vmatprep.subr.mxu0 %v1825
        %1948 = vmatpush1.msra.mxu0 %v1824
        %1949 = vmatprep.subr.mxu0 %v1829
        %1950 = vmatpush1.msra.mxu0 %v1828
        %1951 = vmatprep.subr.mxu0 %v1833
        %1952 = vmatpush1.msra.mxu0 %v1832
        %1953 = vmatprep.subr.mxu0 %v1837
        %1954 = vmatpush1.msra.mxu0 %v1836
        %1955 = vmatprep.subr.mxu0 %v1841
        %1956 = vmatpush1.msra.mxu0 %v1840
        %1957 = vmatprep.subr.mxu0 %v1845
        %1958 = vmatpush1.msra.mxu0 %v1844
        %1959 = vmatprep.subr.mxu0 %v1849
        %1960 = vmatpush1.msra.mxu0 %v1848
        %1961 = vmatprep.subr.mxu0 %v1853
        %1962 = vmatpush1.msra.mxu0 %v1852
        %1963 = vmatprep.subr.mxu0 %v1857
        %1964 = vmatpush1.msra.mxu0 %v1856
        %1965 = vmatprep.subr.mxu0 %v1861
        %1966 = vmatpush1.msra.mxu0 %v1860
        %1967 = vmatprep.subr.mxu0 0.0
        %1968 = vmatpush1.msra.mxu0 0.0
        %1969 = vmatprep.subr.mxu0 0.0
        %1970 = vmatpush1.msra.mxu0 0.0
        %1971 = vmatprep.subr.mxu0 0.0
        %1972 = vmatpush1.msra.mxu0 0.0
        %1973 = vmatprep.subr.mxu0 0.0
        %1974 = vmatpush1.msra.mxu0 0.0
        %1975 = vmatprep.subr.mxu0 0.0
        %1976 = vmatpush1.msra.mxu0 0.0
        %1977 = vmatprep.subr.mxu0 0.0
        %1978 = vmatpush1.msra.mxu0 0.0
        %1979 = vmatprep.subr.mxu0 0.0
        %1980 = vmatpush1.msra.mxu0 0.0
        %1981 = vmatprep.subr.mxu0 0.0
        %1982 = vmatpush1.msra.mxu0 0.0
        %1983 = vmatprep.subr.mxu0 0.0
        %1984 = vmatpush1.msra.mxu0 0.0
        %1985 = vmatprep.subr.mxu0 0.0
        %1986 = vmatpush1.msra.mxu0 0.0
        %1987 = vmatprep.subr.mxu0 0.0
        %1988 = vmatpush1.msra.mxu0 0.0
        %1989 = vmatprep.subr.mxu0 0.0
        %1990 = vmatpush1.msra.mxu0 0.0
        %1991 = vmatprep.subr.mxu0 0.0
        %1992 = vmatpush1.msra.mxu0 0.0
        %1993 = vmatprep.subr.mxu0 0.0
        %1994 = vmatpush1.msra.mxu0 0.0
        %1995 = vmatprep.subr.mxu0 0.0
        %1996 = vmatpush1.msra.mxu0 0.0
        %1997 = vmatprep.subr.mxu0 0.0
        %1998 = vmatpush1.msra.mxu0 0.0
        %1999 = vmatprep.mubr.f32.mxu0 0.0
        %2000 = vmatmul.mubr.f32.gmra.mrb[0].mxu0 %v1862
        %v2001 = vpop.f32.mrb[0].mxu0
        %v2002 = vadd.f32 0.0, %v2001
        %v2003 = vpop.f32.mrb[0].mxu0
        %v2004 = vadd.f32 0.0, %v2003
        %2005 = vdwg.mxu0
        %v2006 = vadd.f32 %v1794, %v1931
        %v2007 = vadd.f32 %v1795, %v1933
        %v2008 = vadd.f32 %v1796, %v2002
        %v2009 = vadd.f32 %v1797, %v2004
        %v2010 = vxor.u32 %v2006, 2147483648
        %v2011 = vmul.f32 %v2010, 1.442695
        %v2012 = vpow.pop %v2011
        %v2013 = vadd.f32 %v2012, 1.0
        %v2014 = vrcp.pop %v2013
        %v2015 = vmul.f32 1.0, %v2014
        %v2016 = vxor.u32 %v2007, 2147483648
        %v2017 = vmul.f32 %v2016, 1.442695
        %v2018 = vpow.pop %v2017
        %v2019 = vadd.f32 %v2018, 1.0
        %v2020 = vrcp.pop %v2019
        %v2021 = vmul.f32 1.0, %v2020
        %v2022 = vtanh.pop %v2008
        %v2023 = vxor.u32 %v2009, 2147483648
        %v2024 = vmul.f32 %v2023, 1.442695
        %v2025 = vpow.pop %v2024
        %v2026 = vadd.f32 %v2025, 1.0
        %v2027 = vrcp.pop %v2026
        %v2028 = vmul.f32 1.0, %v2027
        %v2029 = vmul.f32 %v2021, %v1863
        %v2030 = vmul.f32 %v2015, %v2022
        %v2031 = vadd.f32 %v2029, %v2030
        %v2032 = vtanh.pop %v2031
        %v2033 = vmul.f32 %v2028, %v2032
        %2034 = vst [vmem:[#allocation3] sm:$0xff] %v2033
        %2035 = vst [vmem:[#allocation4] sm:$0xff] %v2031
        %v2036 = vld [vmem:[%s324] sm:$0xff]
        %v2037 = vadd.f32 %v2036, %v2033
        %2038 = vst [vmem:[%s324] sm:$0xff] %v2037
        %s2039 = smul.u32 %s22, 2
        %s2040 = smul.u32 %s1024, 5
        %s2041 = sadd.s32 %s2039, %s2040
        %s2042 = smul.u32 %s2041, 8
        %s2043 = sshra.s32 %s2042, 3
        %s2044 = sand.u32 %s2042, 7
        %s2045 = smul.u32 %s2043, 4
        %s2046 = smul.addr %s2045, 8
        %s2047 = scalar_lea.vmem [#allocation2], %s2046
        %v2048 = vld [vmem:[%s2047] sm:$0xff]
        %v2049 = vld [vmem:[%s2047 + $0x8] sm:$0xff]
        %v2050 = vld [vmem:[%s2047 + $0x10] sm:$0xff]
        %v2051 = vld [vmem:[%s2047 + $0x18] sm:$0xff]
        %v2052 = vld [vmem:[%s251] sm:$0xff]
        %v2053 = vld [vmem:[%s251 + $0x8] sm:$0xff]
        %v2054 = vld [vmem:[%s251 + $0x10] sm:$0xff]
        %v2055 = vld [vmem:[%s251 + $0x18] sm:$0xff]
        %v2056 = vld [vmem:[%s251 + $0x20] sm:$0xff]
        %v2057 = vld [vmem:[%s251 + $0x28] sm:$0xff]
        %v2058 = vld [vmem:[%s251 + $0x30] sm:$0xff]
        %v2059 = vld [vmem:[%s251 + $0x38] sm:$0xff]
        %v2060 = vld [vmem:[%s251 + $0x40] sm:$0xff]
        %v2061 = vld [vmem:[%s251 + $0x48] sm:$0xff]
        %v2062 = vld [vmem:[%s251 + $0x50] sm:$0xff]
        %v2063 = vld [vmem:[%s251 + $0x58] sm:$0xff]
        %v2064 = vld [vmem:[%s251 + $0x60] sm:$0xff]
        %v2065 = vld [vmem:[%s251 + $0x68] sm:$0xff]
        %v2066 = vld [vmem:[%s251 + $0x70] sm:$0xff]
        %v2067 = vld [vmem:[%s251 + $0x78] sm:$0xff]
        %v2068 = vld [vmem:[%s251 + $0x80] sm:$0xff]
        %v2069 = vld [vmem:[%s251 + $0x88] sm:$0xff]
        %v2070 = vld [vmem:[%s251 + $0x90] sm:$0xff]
        %v2071 = vld [vmem:[%s251 + $0x98] sm:$0xff]
        %v2072 = vld [vmem:[%s251 + $0xa0] sm:$0xff]
        %v2073 = vld [vmem:[%s251 + $0xa8] sm:$0xff]
        %v2074 = vld [vmem:[%s251 + $0xb0] sm:$0xff]
        %v2075 = vld [vmem:[%s251 + $0xb8] sm:$0xff]
        %v2076 = vld [vmem:[%s251 + $0xc0] sm:$0xff]
        %v2077 = vld [vmem:[%s251 + $0xc8] sm:$0xff]
        %v2078 = vld [vmem:[%s251 + $0xd0] sm:$0xff]
        %v2079 = vld [vmem:[%s251 + $0xd8] sm:$0xff]
        %v2080 = vld [vmem:[%s251 + $0xe0] sm:$0xff]
        %v2081 = vld [vmem:[%s251 + $0xe8] sm:$0xff]
        %v2082 = vld [vmem:[%s251 + $0xf0] sm:$0xff]
        %v2083 = vld [vmem:[%s251 + $0xf8] sm:$0xff]
        %v2084 = vld [vmem:[%s251 + $0x100] sm:$0xff]
        %v2085 = vld [vmem:[%s251 + $0x108] sm:$0xff]
        %v2086 = vld [vmem:[%s251 + $0x110] sm:$0xff]
        %v2087 = vld [vmem:[%s251 + $0x118] sm:$0xff]
        %v2088 = vld [vmem:[%s251 + $0x120] sm:$0xff]
        %v2089 = vld [vmem:[%s251 + $0x128] sm:$0xff]
        %v2090 = vld [vmem:[%s251 + $0x130] sm:$0xff]
        %v2091 = vld [vmem:[%s251 + $0x138] sm:$0xff]
        %v2092 = vld [vmem:[%s251 + $0x140] sm:$0xff]
        %v2093 = vld [vmem:[%s251 + $0x148] sm:$0xff]
        %v2094 = vld [vmem:[%s251 + $0x150] sm:$0xff]
        %v2095 = vld [vmem:[%s251 + $0x158] sm:$0xff]
        %v2096 = vld [vmem:[%s251 + $0x160] sm:$0xff]
        %v2097 = vld [vmem:[%s251 + $0x168] sm:$0xff]
        %v2098 = vld [vmem:[%s251 + $0x170] sm:$0xff]
        %v2099 = vld [vmem:[%s251 + $0x178] sm:$0xff]
        %v2100 = vld [vmem:[%s251 + $0x180] sm:$0xff]
        %v2101 = vld [vmem:[%s251 + $0x188] sm:$0xff]
        %v2102 = vld [vmem:[%s251 + $0x190] sm:$0xff]
        %v2103 = vld [vmem:[%s251 + $0x198] sm:$0xff]
        %v2104 = vld [vmem:[%s251 + $0x1a0] sm:$0xff]
        %v2105 = vld [vmem:[%s251 + $0x1a8] sm:$0xff]
        %v2106 = vld [vmem:[%s251 + $0x1b0] sm:$0xff]
        %v2107 = vld [vmem:[%s251 + $0x1b8] sm:$0xff]
        %v2108 = vld [vmem:[%s251 + $0x1c0] sm:$0xff]
        %v2109 = vld [vmem:[%s251 + $0x1c8] sm:$0xff]
        %v2110 = vld [vmem:[%s251 + $0x1d0] sm:$0xff]
        %v2111 = vld [vmem:[%s251 + $0x1d8] sm:$0xff]
        %v2112 = vld [vmem:[%s251 + $0x1e0] sm:$0xff]
        %v2113 = vld [vmem:[%s251 + $0x1e8] sm:$0xff]
        %v2114 = vld [vmem:[%s251 + $0x1f0] sm:$0xff]
        %v2115 = vld [vmem:[%s251 + $0x1f8] sm:$0xff]
        %v2116 = vld [vmem:[#allocation3] sm:$0xff]
        %v2117 = vld [vmem:[#allocation4] sm:$0xff]
        %2118 = vmatprep.subr.mxu0 %v2053
        %2119 = vmatpush1.msra.mxu0 %v2052
        %2120 = vmatprep.subr.mxu0 %v2057
        %2121 = vmatpush1.msra.mxu0 %v2056
        %2122 = vmatprep.subr.mxu0 %v2061
        %2123 = vmatpush1.msra.mxu0 %v2060
        %2124 = vmatprep.subr.mxu0 %v2065
        %2125 = vmatpush1.msra.mxu0 %v2064
        %2126 = vmatprep.subr.mxu0 %v2069
        %2127 = vmatpush1.msra.mxu0 %v2068
        %2128 = vmatprep.subr.mxu0 %v2073
        %2129 = vmatpush1.msra.mxu0 %v2072
        %2130 = vmatprep.subr.mxu0 %v2077
        %2131 = vmatpush1.msra.mxu0 %v2076
        %2132 = vmatprep.subr.mxu0 %v2081
        %2133 = vmatpush1.msra.mxu0 %v2080
        %2134 = vmatprep.subr.mxu0 %v2085
        %2135 = vmatpush1.msra.mxu0 %v2084
        %2136 = vmatprep.subr.mxu0 %v2089
        %2137 = vmatpush1.msra.mxu0 %v2088
        %2138 = vmatprep.subr.mxu0 %v2093
        %2139 = vmatpush1.msra.mxu0 %v2092
        %2140 = vmatprep.subr.mxu0 %v2097
        %2141 = vmatpush1.msra.mxu0 %v2096
        %2142 = vmatprep.subr.mxu0 %v2101
        %2143 = vmatpush1.msra.mxu0 %v2100
        %2144 = vmatprep.subr.mxu0 %v2105
        %2145 = vmatpush1.msra.mxu0 %v2104
        %2146 = vmatprep.subr.mxu0 %v2109
        %2147 = vmatpush1.msra.mxu0 %v2108
        %2148 = vmatprep.subr.mxu0 %v2113
        %2149 = vmatpush1.msra.mxu0 %v2112
        %2150 = vmatprep.subr.mxu0 0.0
        %2151 = vmatpush1.msra.mxu0 0.0
        %2152 = vmatprep.subr.mxu0 0.0
        %2153 = vmatpush1.msra.mxu0 0.0
        %2154 = vmatprep.subr.mxu0 0.0
        %2155 = vmatpush1.msra.mxu0 0.0
        %2156 = vmatprep.subr.mxu0 0.0
        %2157 = vmatpush1.msra.mxu0 0.0
        %2158 = vmatprep.subr.mxu0 0.0
        %2159 = vmatpush1.msra.mxu0 0.0
        %2160 = vmatprep.subr.mxu0 0.0
        %2161 = vmatpush1.msra.mxu0 0.0
        %2162 = vmatprep.subr.mxu0 0.0
        %2163 = vmatpush1.msra.mxu0 0.0
        %2164 = vmatprep.subr.mxu0 0.0
        %2165 = vmatpush1.msra.mxu0 0.0
        %2166 = vmatprep.subr.mxu0 0.0
        %2167 = vmatpush1.msra.mxu0 0.0
        %2168 = vmatprep.subr.mxu0 0.0
        %2169 = vmatpush1.msra.mxu0 0.0
        %2170 = vmatprep.subr.mxu0 0.0
        %2171 = vmatpush1.msra.mxu0 0.0
        %2172 = vmatprep.subr.mxu0 0.0
        %2173 = vmatpush1.msra.mxu0 0.0
        %2174 = vmatprep.subr.mxu0 0.0
        %2175 = vmatpush1.msra.mxu0 0.0
        %2176 = vmatprep.subr.mxu0 0.0
        %2177 = vmatpush1.msra.mxu0 0.0
        %2178 = vmatprep.subr.mxu0 0.0
        %2179 = vmatpush1.msra.mxu0 0.0
        %2180 = vmatprep.subr.mxu0 0.0
        %2181 = vmatpush1.msra.mxu0 0.0
        %2182 = vmatprep.mubr.f32.mxu0 0.0
        %2183 = vmatmul.mubr.f32.gmra.mrb[0].mxu0 %v2116
        %v2184 = vpop.f32.mrb[0].mxu0
        %v2185 = vadd.f32 0.0, %v2184
        %v2186 = vpop.f32.mrb[0].mxu0
        %v2187 = vadd.f32 0.0, %v2186
        %2188 = vdwg.mxu0
        %2189 = vmatprep.subr.mxu0 %v2055
        %2190 = vmatpush1.msra.mxu0 %v2054
        %2191 = vmatprep.subr.mxu0 %v2059
        %2192 = vmatpush1.msra.mxu0 %v2058
        %2193 = vmatprep.subr.mxu0 %v2063
        %2194 = vmatpush1.msra.mxu0 %v2062
        %2195 = vmatprep.subr.mxu0 %v2067
        %2196 = vmatpush1.msra.mxu0 %v2066
        %2197 = vmatprep.subr.mxu0 %v2071
        %2198 = vmatpush1.msra.mxu0 %v2070
        %2199 = vmatprep.subr.mxu0 %v2075
        %2200 = vmatpush1.msra.mxu0 %v2074
        %2201 = vmatprep.subr.mxu0 %v2079
        %2202 = vmatpush1.msra.mxu0 %v2078
        %2203 = vmatprep.subr.mxu0 %v2083
        %2204 = vmatpush1.msra.mxu0 %v2082
        %2205 = vmatprep.subr.mxu0 %v2087
        %2206 = vmatpush1.msra.mxu0 %v2086
        %2207 = vmatprep.subr.mxu0 %v2091
        %2208 = vmatpush1.msra.mxu0 %v2090
        %2209 = vmatprep.subr.mxu0 %v2095
        %2210 = vmatpush1.msra.mxu0 %v2094
        %2211 = vmatprep.subr.mxu0 %v2099
        %2212 = vmatpush1.msra.mxu0 %v2098
        %2213 = vmatprep.subr.mxu0 %v2103
        %2214 = vmatpush1.msra.mxu0 %v2102
        %2215 = vmatprep.subr.mxu0 %v2107
        %2216 = vmatpush1.msra.mxu0 %v2106
        %2217 = vmatprep.subr.mxu0 %v2111
        %2218 = vmatpush1.msra.mxu0 %v2110
        %2219 = vmatprep.subr.mxu0 %v2115
        %2220 = vmatpush1.msra.mxu0 %v2114
        %2221 = vmatprep.subr.mxu0 0.0
        %2222 = vmatpush1.msra.mxu0 0.0
        %2223 = vmatprep.subr.mxu0 0.0
        %2224 = vmatpush1.msra.mxu0 0.0
        %2225 = vmatprep.subr.mxu0 0.0
        %2226 = vmatpush1.msra.mxu0 0.0
        %2227 = vmatprep.subr.mxu0 0.0
        %2228 = vmatpush1.msra.mxu0 0.0
        %2229 = vmatprep.subr.mxu0 0.0
        %2230 = vmatpush1.msra.mxu0 0.0
        %2231 = vmatprep.subr.mxu0 0.0
        %2232 = vmatpush1.msra.mxu0 0.0
        %2233 = vmatprep.subr.mxu0 0.0
        %2234 = vmatpush1.msra.mxu0 0.0
        %2235 = vmatprep.subr.mxu0 0.0
        %2236 = vmatpush1.msra.mxu0 0.0
        %2237 = vmatprep.subr.mxu0 0.0
        %2238 = vmatpush1.msra.mxu0 0.0
        %2239 = vmatprep.subr.mxu0 0.0
        %2240 = vmatpush1.msra.mxu0 0.0
        %2241 = vmatprep.subr.mxu0 0.0
        %2242 = vmatpush1.msra.mxu0 0.0
        %2243 = vmatprep.subr.mxu0 0.0
        %2244 = vmatpush1.msra.mxu0 0.0
        %2245 = vmatprep.subr.mxu0 0.0
        %2246 = vmatpush1.msra.mxu0 0.0
        %2247 = vmatprep.subr.mxu0 0.0
        %2248 = vmatpush1.msra.mxu0 0.0
        %2249 = vmatprep.subr.mxu0 0.0
        %2250 = vmatpush1.msra.mxu0 0.0
        %2251 = vmatprep.subr.mxu0 0.0
        %2252 = vmatpush1.msra.mxu0 0.0
        %2253 = vmatprep.mubr.f32.mxu0 0.0
        %2254 = vmatmul.mubr.f32.gmra.mrb[0].mxu0 %v2116
        %v2255 = vpop.f32.mrb[0].mxu0
        %v2256 = vadd.f32 0.0, %v2255
        %v2257 = vpop.f32.mrb[0].mxu0
        %v2258 = vadd.f32 0.0, %v2257
        %2259 = vdwg.mxu0
        %v2260 = vadd.f32 %v2048, %v2185
        %v2261 = vadd.f32 %v2049, %v2187
        %v2262 = vadd.f32 %v2050, %v2256
        %v2263 = vadd.f32 %v2051, %v2258
        %v2264 = vxor.u32 %v2260, 2147483648
        %v2265 = vmul.f32 %v2264, 1.442695
        %v2266 = vpow.pop %v2265
        %v2267 = vadd.f32 %v2266, 1.0
        %v2268 = vrcp.pop %v2267
        %v2269 = vmul.f32 1.0, %v2268
        %v2270 = vxor.u32 %v2261, 2147483648
        %v2271 = vmul.f32 %v2270, 1.442695
        %v2272 = vpow.pop %v2271
        %v2273 = vadd.f32 %v2272, 1.0
        %v2274 = vrcp.pop %v2273
        %v2275 = vmul.f32 1.0, %v2274
        %v2276 = vtanh.pop %v2262
        %v2277 = vxor.u32 %v2263, 2147483648
        %v2278 = vmul.f32 %v2277, 1.442695
        %v2279 = vpow.pop %v2278
        %v2280 = vadd.f32 %v2279, 1.0
        %v2281 = vrcp.pop %v2280
        %v2282 = vmul.f32 1.0, %v2281
        %v2283 = vmul.f32 %v2275, %v2117
        %v2284 = vmul.f32 %v2269, %v2276
        %v2285 = vadd.f32 %v2283, %v2284
        %v2286 = vtanh.pop %v2285
        %v2287 = vmul.f32 %v2282, %v2286
        %2288 = vst [vmem:[#allocation3] sm:$0xff] %v2287
        %2289 = vst [vmem:[#allocation4] sm:$0xff] %v2285
        %v2290 = vld [vmem:[%s324] sm:$0xff]
        %v2291 = vadd.f32 %v2290, %v2287
        %2292 = vst [vmem:[%s324] sm:$0xff] %v2291
        %s2293 = smul.u32 %s1024, 6
        %s2294 = sadd.s32 %s22, %s2293
        %s2295 = smul.u32 %s2294, 8
        %s2296 = sshra.s32 %s2295, 3
        %s2297 = sand.u32 %s2295, 7
        %s2298 = smul.u32 %s2296, 4
        %s2299 = smul.addr %s2298, 8
        %s2300 = scalar_lea.vmem [#allocation2], %s2299
        %v2301 = vld [vmem:[%s2300] sm:$0xff]
        %v2302 = vld [vmem:[%s2300 + $0x8] sm:$0xff]
        %v2303 = vld [vmem:[%s2300 + $0x10] sm:$0xff]
        %v2304 = vld [vmem:[%s2300 + $0x18] sm:$0xff]
        %v2305 = vld [vmem:[%s251] sm:$0xff]
        %v2306 = vld [vmem:[%s251 + $0x8] sm:$0xff]
        %v2307 = vld [vmem:[%s251 + $0x10] sm:$0xff]
        %v2308 = vld [vmem:[%s251 + $0x18] sm:$0xff]
        %v2309 = vld [vmem:[%s251 + $0x20] sm:$0xff]
        %v2310 = vld [vmem:[%s251 + $0x28] sm:$0xff]
        %v2311 = vld [vmem:[%s251 + $0x30] sm:$0xff]
        %v2312 = vld [vmem:[%s251 + $0x38] sm:$0xff]
        %v2313 = vld [vmem:[%s251 + $0x40] sm:$0xff]
        %v2314 = vld [vmem:[%s251 + $0x48] sm:$0xff]
        %v2315 = vld [vmem:[%s251 + $0x50] sm:$0xff]
        %v2316 = vld [vmem:[%s251 + $0x58] sm:$0xff]
        %v2317 = vld [vmem:[%s251 + $0x60] sm:$0xff]
        %v2318 = vld [vmem:[%s251 + $0x68] sm:$0xff]
        %v2319 = vld [vmem:[%s251 + $0x70] sm:$0xff]
        %v2320 = vld [vmem:[%s251 + $0x78] sm:$0xff]
        %v2321 = vld [vmem:[%s251 + $0x80] sm:$0xff]
        %v2322 = vld [vmem:[%s251 + $0x88] sm:$0xff]
        %v2323 = vld [vmem:[%s251 + $0x90] sm:$0xff]
        %v2324 = vld [vmem:[%s251 + $0x98] sm:$0xff]
        %v2325 = vld [vmem:[%s251 + $0xa0] sm:$0xff]
        %v2326 = vld [vmem:[%s251 + $0xa8] sm:$0xff]
        %v2327 = vld [vmem:[%s251 + $0xb0] sm:$0xff]
        %v2328 = vld [vmem:[%s251 + $0xb8] sm:$0xff]
        %v2329 = vld [vmem:[%s251 + $0xc0] sm:$0xff]
        %v2330 = vld [vmem:[%s251 + $0xc8] sm:$0xff]
        %v2331 = vld [vmem:[%s251 + $0xd0] sm:$0xff]
        %v2332 = vld [vmem:[%s251 + $0xd8] sm:$0xff]
        %v2333 = vld [vmem:[%s251 + $0xe0] sm:$0xff]
        %v2334 = vld [vmem:[%s251 + $0xe8] sm:$0xff]
        %v2335 = vld [vmem:[%s251 + $0xf0] sm:$0xff]
        %v2336 = vld [vmem:[%s251 + $0xf8] sm:$0xff]
        %v2337 = vld [vmem:[%s251 + $0x100] sm:$0xff]
        %v2338 = vld [vmem:[%s251 + $0x108] sm:$0xff]
        %v2339 = vld [vmem:[%s251 + $0x110] sm:$0xff]
        %v2340 = vld [vmem:[%s251 + $0x118] sm:$0xff]
        %v2341 = vld [vmem:[%s251 + $0x120] sm:$0xff]
        %v2342 = vld [vmem:[%s251 + $0x128] sm:$0xff]
        %v2343 = vld [vmem:[%s251 + $0x130] sm:$0xff]
        %v2344 = vld [vmem:[%s251 + $0x138] sm:$0xff]
        %v2345 = vld [vmem:[%s251 + $0x140] sm:$0xff]
        %v2346 = vld [vmem:[%s251 + $0x148] sm:$0xff]
        %v2347 = vld [vmem:[%s251 + $0x150] sm:$0xff]
        %v2348 = vld [vmem:[%s251 + $0x158] sm:$0xff]
        %v2349 = vld [vmem:[%s251 + $0x160] sm:$0xff]
        %v2350 = vld [vmem:[%s251 + $0x168] sm:$0xff]
        %v2351 = vld [vmem:[%s251 + $0x170] sm:$0xff]
        %v2352 = vld [vmem:[%s251 + $0x178] sm:$0xff]
        %v2353 = vld [vmem:[%s251 + $0x180] sm:$0xff]
        %v2354 = vld [vmem:[%s251 + $0x188] sm:$0xff]
        %v2355 = vld [vmem:[%s251 + $0x190] sm:$0xff]
        %v2356 = vld [vmem:[%s251 + $0x198] sm:$0xff]
        %v2357 = vld [vmem:[%s251 + $0x1a0] sm:$0xff]
        %v2358 = vld [vmem:[%s251 + $0x1a8] sm:$0xff]
        %v2359 = vld [vmem:[%s251 + $0x1b0] sm:$0xff]
        %v2360 = vld [vmem:[%s251 + $0x1b8] sm:$0xff]
        %v2361 = vld [vmem:[%s251 + $0x1c0] sm:$0xff]
        %v2362 = vld [vmem:[%s251 + $0x1c8] sm:$0xff]
        %v2363 = vld [vmem:[%s251 + $0x1d0] sm:$0xff]
        %v2364 = vld [vmem:[%s251 + $0x1d8] sm:$0xff]
        %v2365 = vld [vmem:[%s251 + $0x1e0] sm:$0xff]
        %v2366 = vld [vmem:[%s251 + $0x1e8] sm:$0xff]
        %v2367 = vld [vmem:[%s251 + $0x1f0] sm:$0xff]
        %v2368 = vld [vmem:[%s251 + $0x1f8] sm:$0xff]
        %v2369 = vld [vmem:[#allocation3] sm:$0xff]
        %v2370 = vld [vmem:[#allocation4] sm:$0xff]
        %2371 = vmatprep.subr.mxu0 %v2306
        %2372 = vmatpush1.msra.mxu0 %v2305
        %2373 = vmatprep.subr.mxu0 %v2310
        %2374 = vmatpush1.msra.mxu0 %v2309
        %2375 = vmatprep.subr.mxu0 %v2314
        %2376 = vmatpush1.msra.mxu0 %v2313
        %2377 = vmatprep.subr.mxu0 %v2318
        %2378 = vmatpush1.msra.mxu0 %v2317
        %2379 = vmatprep.subr.mxu0 %v2322
        %2380 = vmatpush1.msra.mxu0 %v2321
        %2381 = vmatprep.subr.mxu0 %v2326
        %2382 = vmatpush1.msra.mxu0 %v2325
        %2383 = vmatprep.subr.mxu0 %v2330
        %2384 = vmatpush1.msra.mxu0 %v2329
        %2385 = vmatprep.subr.mxu0 %v2334
        %2386 = vmatpush1.msra.mxu0 %v2333
        %2387 = vmatprep.subr.mxu0 %v2338
        %2388 = vmatpush1.msra.mxu0 %v2337
        %2389 = vmatprep.subr.mxu0 %v2342
        %2390 = vmatpush1.msra.mxu0 %v2341
        %2391 = vmatprep.subr.mxu0 %v2346
        %2392 = vmatpush1.msra.mxu0 %v2345
        %2393 = vmatprep.subr.mxu0 %v2350
        %2394 = vmatpush1.msra.mxu0 %v2349
        %2395 = vmatprep.subr.mxu0 %v2354
        %2396 = vmatpush1.msra.mxu0 %v2353
        %2397 = vmatprep.subr.mxu0 %v2358
        %2398 = vmatpush1.msra.mxu0 %v2357
        %2399 = vmatprep.subr.mxu0 %v2362
        %2400 = vmatpush1.msra.mxu0 %v2361
        %2401 = vmatprep.subr.mxu0 %v2366
        %2402 = vmatpush1.msra.mxu0 %v2365
        %2403 = vmatprep.subr.mxu0 0.0
        %2404 = vmatpush1.msra.mxu0 0.0
        %2405 = vmatprep.subr.mxu0 0.0
        %2406 = vmatpush1.msra.mxu0 0.0
        %2407 = vmatprep.subr.mxu0 0.0
        %2408 = vmatpush1.msra.mxu0 0.0
        %2409 = vmatprep.subr.mxu0 0.0
        %2410 = vmatpush1.msra.mxu0 0.0
        %2411 = vmatprep.subr.mxu0 0.0
        %2412 = vmatpush1.msra.mxu0 0.0
        %2413 = vmatprep.subr.mxu0 0.0
        %2414 = vmatpush1.msra.mxu0 0.0
        %2415 = vmatprep.subr.mxu0 0.0
        %2416 = vmatpush1.msra.mxu0 0.0
        %2417 = vmatprep.subr.mxu0 0.0
        %2418 = vmatpush1.msra.mxu0 0.0
        %2419 = vmatprep.subr.mxu0 0.0
        %2420 = vmatpush1.msra.mxu0 0.0
        %2421 = vmatprep.subr.mxu0 0.0
        %2422 = vmatpush1.msra.mxu0 0.0
        %2423 = vmatprep.subr.mxu0 0.0
        %2424 = vmatpush1.msra.mxu0 0.0
        %2425 = vmatprep.subr.mxu0 0.0
        %2426 = vmatpush1.msra.mxu0 0.0
        %2427 = vmatprep.subr.mxu0 0.0
        %2428 = vmatpush1.msra.mxu0 0.0
        %2429 = vmatprep.subr.mxu0 0.0
        %2430 = vmatpush1.msra.mxu0 0.0
        %2431 = vmatprep.subr.mxu0 0.0
        %2432 = vmatpush1.msra.mxu0 0.0
        %2433 = vmatprep.subr.mxu0 0.0
        %2434 = vmatpush1.msra.mxu0 0.0
        %2435 = vmatprep.mubr.f32.mxu0 0.0
        %2436 = vmatmul.mubr.f32.gmra.mrb[0].mxu0 %v2369
        %v2437 = vpop.f32.mrb[0].mxu0
        %v2438 = vadd.f32 0.0, %v2437
        %v2439 = vpop.f32.mrb[0].mxu0
        %v2440 = vadd.f32 0.0, %v2439
        %2441 = vdwg.mxu0
        %2442 = vmatprep.subr.mxu0 %v2308
        %2443 = vmatpush1.msra.mxu0 %v2307
        %2444 = vmatprep.subr.mxu0 %v2312
        %2445 = vmatpush1.msra.mxu0 %v2311
        %2446 = vmatprep.subr.mxu0 %v2316
        %2447 = vmatpush1.msra.mxu0 %v2315
        %2448 = vmatprep.subr.mxu0 %v2320
        %2449 = vmatpush1.msra.mxu0 %v2319
        %2450 = vmatprep.subr.mxu0 %v2324
        %2451 = vmatpush1.msra.mxu0 %v2323
        %2452 = vmatprep.subr.mxu0 %v2328
        %2453 = vmatpush1.msra.mxu0 %v2327
        %2454 = vmatprep.subr.mxu0 %v2332
        %2455 = vmatpush1.msra.mxu0 %v2331
        %2456 = vmatprep.subr.mxu0 %v2336
        %2457 = vmatpush1.msra.mxu0 %v2335
        %2458 = vmatprep.subr.mxu0 %v2340
        %2459 = vmatpush1.msra.mxu0 %v2339
        %2460 = vmatprep.subr.mxu0 %v2344
        %2461 = vmatpush1.msra.mxu0 %v2343
        %2462 = vmatprep.subr.mxu0 %v2348
        %2463 = vmatpush1.msra.mxu0 %v2347
        %2464 = vmatprep.subr.mxu0 %v2352
        %2465 = vmatpush1.msra.mxu0 %v2351
        %2466 = vmatprep.subr.mxu0 %v2356
        %2467 = vmatpush1.msra.mxu0 %v2355
        %2468 = vmatprep.subr.mxu0 %v2360
        %2469 = vmatpush1.msra.mxu0 %v2359
        %2470 = vmatprep.subr.mxu0 %v2364
        %2471 = vmatpush1.msra.mxu0 %v2363
        %2472 = vmatprep.subr.mxu0 %v2368
        %2473 = vmatpush1.msra.mxu0 %v2367
        %2474 = vmatprep.subr.mxu0 0.0
        %2475 = vmatpush1.msra.mxu0 0.0
        %2476 = vmatprep.subr.mxu0 0.0
        %2477 = vmatpush1.msra.mxu0 0.0
        %2478 = vmatprep.subr.mxu0 0.0
        %2479 = vmatpush1.msra.mxu0 0.0
        %2480 = vmatprep.subr.mxu0 0.0
        %2481 = vmatpush1.msra.mxu0 0.0
        %2482 = vmatprep.subr.mxu0 0.0
        %2483 = vmatpush1.msra.mxu0 0.0
        %2484 = vmatprep.subr.mxu0 0.0
        %2485 = vmatpush1.msra.mxu0 0.0
        %2486 = vmatprep.subr.mxu0 0.0
        %2487 = vmatpush1.msra.mxu0 0.0
        %2488 = vmatprep.subr.mxu0 0.0
        %2489 = vmatpush1.msra.mxu0 0.0
        %2490 = vmatprep.subr.mxu0 0.0
        %2491 = vmatpush1.msra.mxu0 0.0
        %2492 = vmatprep.subr.mxu0 0.0
        %2493 = vmatpush1.msra.mxu0 0.0
        %2494 = vmatprep.subr.mxu0 0.0
        %2495 = vmatpush1.msra.mxu0 0.0
        %2496 = vmatprep.subr.mxu0 0.0
        %2497 = vmatpush1.msra.mxu0 0.0
        %2498 = vmatprep.subr.mxu0 0.0
        %2499 = vmatpush1.msra.mxu0 0.0
        %2500 = vmatprep.subr.mxu0 0.0
        %2501 = vmatpush1.msra.mxu0 0.0
        %2502 = vmatprep.subr.mxu0 0.0
        %2503 = vmatpush1.msra.mxu0 0.0
        %2504 = vmatprep.subr.mxu0 0.0
        %2505 = vmatpush1.msra.mxu0 0.0
        %2506 = vmatprep.mubr.f32.mxu0 0.0
        %2507 = vmatmul.mubr.f32.gmra.mrb[0].mxu0 %v2369
        %v2508 = vpop.f32.mrb[0].mxu0
        %v2509 = vadd.f32 0.0, %v2508
        %v2510 = vpop.f32.mrb[0].mxu0
        %v2511 = vadd.f32 0.0, %v2510
        %2512 = vdwg.mxu0
        %v2513 = vadd.f32 %v2301, %v2438
        %v2514 = vadd.f32 %v2302, %v2440
        %v2515 = vadd.f32 %v2303, %v2509
        %v2516 = vadd.f32 %v2304, %v2511
        %v2517 = vxor.u32 %v2513, 2147483648
        %v2518 = vmul.f32 %v2517, 1.442695
        %v2519 = vpow.pop %v2518
        %v2520 = vadd.f32 %v2519, 1.0
        %v2521 = vrcp.pop %v2520
        %v2522 = vmul.f32 1.0, %v2521
        %v2523 = vxor.u32 %v2514, 2147483648
        %v2524 = vmul.f32 %v2523, 1.442695
        %v2525 = vpow.pop %v2524
        %v2526 = vadd.f32 %v2525, 1.0
        %v2527 = vrcp.pop %v2526
        %v2528 = vmul.f32 1.0, %v2527
        %v2529 = vtanh.pop %v2515
        %v2530 = vxor.u32 %v2516, 2147483648
        %v2531 = vmul.f32 %v2530, 1.442695
        %v2532 = vpow.pop %v2531
        %v2533 = vadd.f32 %v2532, 1.0
        %v2534 = vrcp.pop %v2533
        %v2535 = vmul.f32 1.0, %v2534
        %v2536 = vmul.f32 %v2528, %v2370
        %v2537 = vmul.f32 %v2522, %v2529
        %v2538 = vadd.f32 %v2536, %v2537
        %v2539 = vtanh.pop %v2538
        %v2540 = vmul.f32 %v2535, %v2539
        %2541 = vst [vmem:[#allocation3] sm:$0xff] %v2540
        %2542 = vst [vmem:[#allocation4] sm:$0xff] %v2538
        %v2543 = vld [vmem:[%s324] sm:$0xff]
        %v2544 = vadd.f32 %v2543, %v2540
        %2545 = vst [vmem:[%s324] sm:$0xff] %v2544
        %s2546 = smul.u32 %s1024, 56
        %s2547 = sshra.s32 %s2546, 3
        %s2548 = sand.u32 %s2546, 7
        %s2549 = smul.u32 %s2547, 4
        %s2550 = smul.addr %s2549, 8
        %s2551 = scalar_lea.vmem [#allocation2], %s2550
        %v2552 = vld [vmem:[%s2551] sm:$0xff]
        %v2553 = vld [vmem:[%s2551 + $0x8] sm:$0xff]
        %v2554 = vld [vmem:[%s2551 + $0x10] sm:$0xff]
        %v2555 = vld [vmem:[%s2551 + $0x18] sm:$0xff]
        %v2556 = vld [vmem:[%s251] sm:$0xff]
        %v2557 = vld [vmem:[%s251 + $0x8] sm:$0xff]
        %v2558 = vld [vmem:[%s251 + $0x10] sm:$0xff]
        %v2559 = vld [vmem:[%s251 + $0x18] sm:$0xff]
        %v2560 = vld [vmem:[%s251 + $0x20] sm:$0xff]
        %v2561 = vld [vmem:[%s251 + $0x28] sm:$0xff]
        %v2562 = vld [vmem:[%s251 + $0x30] sm:$0xff]
        %v2563 = vld [vmem:[%s251 + $0x38] sm:$0xff]
        %v2564 = vld [vmem:[%s251 + $0x40] sm:$0xff]
        %v2565 = vld [vmem:[%s251 + $0x48] sm:$0xff]
        %v2566 = vld [vmem:[%s251 + $0x50] sm:$0xff]
        %v2567 = vld [vmem:[%s251 + $0x58] sm:$0xff]
        %v2568 = vld [vmem:[%s251 + $0x60] sm:$0xff]
        %v2569 = vld [vmem:[%s251 + $0x68] sm:$0xff]
        %v2570 = vld [vmem:[%s251 + $0x70] sm:$0xff]
        %v2571 = vld [vmem:[%s251 + $0x78] sm:$0xff]
        %v2572 = vld [vmem:[%s251 + $0x80] sm:$0xff]
        %v2573 = vld [vmem:[%s251 + $0x88] sm:$0xff]
        %v2574 = vld [vmem:[%s251 + $0x90] sm:$0xff]
        %v2575 = vld [vmem:[%s251 + $0x98] sm:$0xff]
        %v2576 = vld [vmem:[%s251 + $0xa0] sm:$0xff]
        %v2577 = vld [vmem:[%s251 + $0xa8] sm:$0xff]
        %v2578 = vld [vmem:[%s251 + $0xb0] sm:$0xff]
        %v2579 = vld [vmem:[%s251 + $0xb8] sm:$0xff]
        %v2580 = vld [vmem:[%s251 + $0xc0] sm:$0xff]
        %v2581 = vld [vmem:[%s251 + $0xc8] sm:$0xff]
        %v2582 = vld [vmem:[%s251 + $0xd0] sm:$0xff]
        %v2583 = vld [vmem:[%s251 + $0xd8] sm:$0xff]
        %v2584 = vld [vmem:[%s251 + $0xe0] sm:$0xff]
        %v2585 = vld [vmem:[%s251 + $0xe8] sm:$0xff]
        %v2586 = vld [vmem:[%s251 + $0xf0] sm:$0xff]
        %v2587 = vld [vmem:[%s251 + $0xf8] sm:$0xff]
        %v2588 = vld [vmem:[%s251 + $0x100] sm:$0xff]
        %v2589 = vld [vmem:[%s251 + $0x108] sm:$0xff]
        %v2590 = vld [vmem:[%s251 + $0x110] sm:$0xff]
        %v2591 = vld [vmem:[%s251 + $0x118] sm:$0xff]
        %v2592 = vld [vmem:[%s251 + $0x120] sm:$0xff]
        %v2593 = vld [vmem:[%s251 + $0x128] sm:$0xff]
        %v2594 = vld [vmem:[%s251 + $0x130] sm:$0xff]
        %v2595 = vld [vmem:[%s251 + $0x138] sm:$0xff]
        %v2596 = vld [vmem:[%s251 + $0x140] sm:$0xff]
        %v2597 = vld [vmem:[%s251 + $0x148] sm:$0xff]
        %v2598 = vld [vmem:[%s251 + $0x150] sm:$0xff]
        %v2599 = vld [vmem:[%s251 + $0x158] sm:$0xff]
        %v2600 = vld [vmem:[%s251 + $0x160] sm:$0xff]
        %v2601 = vld [vmem:[%s251 + $0x168] sm:$0xff]
        %v2602 = vld [vmem:[%s251 + $0x170] sm:$0xff]
        %v2603 = vld [vmem:[%s251 + $0x178] sm:$0xff]
        %v2604 = vld [vmem:[%s251 + $0x180] sm:$0xff]
        %v2605 = vld [vmem:[%s251 + $0x188] sm:$0xff]
        %v2606 = vld [vmem:[%s251 + $0x190] sm:$0xff]
        %v2607 = vld [vmem:[%s251 + $0x198] sm:$0xff]
        %v2608 = vld [vmem:[%s251 + $0x1a0] sm:$0xff]
        %v2609 = vld [vmem:[%s251 + $0x1a8] sm:$0xff]
        %v2610 = vld [vmem:[%s251 + $0x1b0] sm:$0xff]
        %v2611 = vld [vmem:[%s251 + $0x1b8] sm:$0xff]
        %v2612 = vld [vmem:[%s251 + $0x1c0] sm:$0xff]
        %v2613 = vld [vmem:[%s251 + $0x1c8] sm:$0xff]
        %v2614 = vld [vmem:[%s251 + $0x1d0] sm:$0xff]
        %v2615 = vld [vmem:[%s251 + $0x1d8] sm:$0xff]
        %v2616 = vld [vmem:[%s251 + $0x1e0] sm:$0xff]
        %v2617 = vld [vmem:[%s251 + $0x1e8] sm:$0xff]
        %v2618 = vld [vmem:[%s251 + $0x1f0] sm:$0xff]
        %v2619 = vld [vmem:[%s251 + $0x1f8] sm:$0xff]
        %v2620 = vld [vmem:[#allocation3] sm:$0xff]
        %v2621 = vld [vmem:[#allocation4] sm:$0xff]
        %2622 = vmatprep.subr.mxu0 %v2557
        %2623 = vmatpush1.msra.mxu0 %v2556
        %2624 = vmatprep.subr.mxu0 %v2561
        %2625 = vmatpush1.msra.mxu0 %v2560
        %2626 = vmatprep.subr.mxu0 %v2565
        %2627 = vmatpush1.msra.mxu0 %v2564
        %2628 = vmatprep.subr.mxu0 %v2569
        %2629 = vmatpush1.msra.mxu0 %v2568
        %2630 = vmatprep.subr.mxu0 %v2573
        %2631 = vmatpush1.msra.mxu0 %v2572
        %2632 = vmatprep.subr.mxu0 %v2577
        %2633 = vmatpush1.msra.mxu0 %v2576
        %2634 = vmatprep.subr.mxu0 %v2581
        %2635 = vmatpush1.msra.mxu0 %v2580
        %2636 = vmatprep.subr.mxu0 %v2585
        %2637 = vmatpush1.msra.mxu0 %v2584
        %2638 = vmatprep.subr.mxu0 %v2589
        %2639 = vmatpush1.msra.mxu0 %v2588
        %2640 = vmatprep.subr.mxu0 %v2593
        %2641 = vmatpush1.msra.mxu0 %v2592
        %2642 = vmatprep.subr.mxu0 %v2597
        %2643 = vmatpush1.msra.mxu0 %v2596
        %2644 = vmatprep.subr.mxu0 %v2601
        %2645 = vmatpush1.msra.mxu0 %v2600
        %2646 = vmatprep.subr.mxu0 %v2605
        %2647 = vmatpush1.msra.mxu0 %v2604
        %2648 = vmatprep.subr.mxu0 %v2609
        %2649 = vmatpush1.msra.mxu0 %v2608
        %2650 = vmatprep.subr.mxu0 %v2613
        %2651 = vmatpush1.msra.mxu0 %v2612
        %2652 = vmatprep.subr.mxu0 %v2617
        %2653 = vmatpush1.msra.mxu0 %v2616
        %2654 = vmatprep.subr.mxu0 0.0
        %2655 = vmatpush1.msra.mxu0 0.0
        %2656 = vmatprep.subr.mxu0 0.0
        %2657 = vmatpush1.msra.mxu0 0.0
        %2658 = vmatprep.subr.mxu0 0.0
        %2659 = vmatpush1.msra.mxu0 0.0
        %2660 = vmatprep.subr.mxu0 0.0
        %2661 = vmatpush1.msra.mxu0 0.0
        %2662 = vmatprep.subr.mxu0 0.0
        %2663 = vmatpush1.msra.mxu0 0.0
        %2664 = vmatprep.subr.mxu0 0.0
        %2665 = vmatpush1.msra.mxu0 0.0
        %2666 = vmatprep.subr.mxu0 0.0
        %2667 = vmatpush1.msra.mxu0 0.0
        %2668 = vmatprep.subr.mxu0 0.0
        %2669 = vmatpush1.msra.mxu0 0.0
        %2670 = vmatprep.subr.mxu0 0.0
        %2671 = vmatpush1.msra.mxu0 0.0
        %2672 = vmatprep.subr.mxu0 0.0
        %2673 = vmatpush1.msra.mxu0 0.0
        %2674 = vmatprep.subr.mxu0 0.0
        %2675 = vmatpush1.msra.mxu0 0.0
        %2676 = vmatprep.subr.mxu0 0.0
        %2677 = vmatpush1.msra.mxu0 0.0
        %2678 = vmatprep.subr.mxu0 0.0
        %2679 = vmatpush1.msra.mxu0 0.0
        %2680 = vmatprep.subr.mxu0 0.0
        %2681 = vmatpush1.msra.mxu0 0.0
        %2682 = vmatprep.subr.mxu0 0.0
        %2683 = vmatpush1.msra.mxu0 0.0
        %2684 = vmatprep.subr.mxu0 0.0
        %2685 = vmatpush1.msra.mxu0 0.0
        %2686 = vmatprep.mubr.f32.mxu0 0.0
        %2687 = vmatmul.mubr.f32.gmra.mrb[0].mxu0 %v2620
        %v2688 = vpop.f32.mrb[0].mxu0
        %v2689 = vadd.f32 0.0, %v2688
        %v2690 = vpop.f32.mrb[0].mxu0
        %v2691 = vadd.f32 0.0, %v2690
        %2692 = vdwg.mxu0
        %2693 = vmatprep.subr.mxu0 %v2559
        %2694 = vmatpush1.msra.mxu0 %v2558
        %2695 = vmatprep.subr.mxu0 %v2563
        %2696 = vmatpush1.msra.mxu0 %v2562
        %2697 = vmatprep.subr.mxu0 %v2567
        %2698 = vmatpush1.msra.mxu0 %v2566
        %2699 = vmatprep.subr.mxu0 %v2571
        %2700 = vmatpush1.msra.mxu0 %v2570
        %2701 = vmatprep.subr.mxu0 %v2575
        %2702 = vmatpush1.msra.mxu0 %v2574
        %2703 = vmatprep.subr.mxu0 %v2579
        %2704 = vmatpush1.msra.mxu0 %v2578
        %2705 = vmatprep.subr.mxu0 %v2583
        %2706 = vmatpush1.msra.mxu0 %v2582
        %2707 = vmatprep.subr.mxu0 %v2587
        %2708 = vmatpush1.msra.mxu0 %v2586
        %2709 = vmatprep.subr.mxu0 %v2591
        %2710 = vmatpush1.msra.mxu0 %v2590
        %2711 = vmatprep.subr.mxu0 %v2595
        %2712 = vmatpush1.msra.mxu0 %v2594
        %2713 = vmatprep.subr.mxu0 %v2599
        %2714 = vmatpush1.msra.mxu0 %v2598
        %2715 = vmatprep.subr.mxu0 %v2603
        %2716 = vmatpush1.msra.mxu0 %v2602
        %2717 = vmatprep.subr.mxu0 %v2607
        %2718 = vmatpush1.msra.mxu0 %v2606
        %2719 = vmatprep.subr.mxu0 %v2611
        %2720 = vmatpush1.msra.mxu0 %v2610
        %2721 = vmatprep.subr.mxu0 %v2615
        %2722 = vmatpush1.msra.mxu0 %v2614
        %2723 = vmatprep.subr.mxu0 %v2619
        %2724 = vmatpush1.msra.mxu0 %v2618
        %2725 = vmatprep.subr.mxu0 0.0
        %2726 = vmatpush1.msra.mxu0 0.0
        %2727 = vmatprep.subr.mxu0 0.0
        %2728 = vmatpush1.msra.mxu0 0.0
        %2729 = vmatprep.subr.mxu0 0.0
        %2730 = vmatpush1.msra.mxu0 0.0
        %2731 = vmatprep.subr.mxu0 0.0
        %2732 = vmatpush1.msra.mxu0 0.0
        %2733 = vmatprep.subr.mxu0 0.0
        %2734 = vmatpush1.msra.mxu0 0.0
        %2735 = vmatprep.subr.mxu0 0.0
        %2736 = vmatpush1.msra.mxu0 0.0
        %2737 = vmatprep.subr.mxu0 0.0
        %2738 = vmatpush1.msra.mxu0 0.0
        %2739 = vmatprep.subr.mxu0 0.0
        %2740 = vmatpush1.msra.mxu0 0.0
        %2741 = vmatprep.subr.mxu0 0.0
        %2742 = vmatpush1.msra.mxu0 0.0
        %2743 = vmatprep.subr.mxu0 0.0
        %2744 = vmatpush1.msra.mxu0 0.0
        %2745 = vmatprep.subr.mxu0 0.0
        %2746 = vmatpush1.msra.mxu0 0.0
        %2747 = vmatprep.subr.mxu0 0.0
        %2748 = vmatpush1.msra.mxu0 0.0
        %2749 = vmatprep.subr.mxu0 0.0
        %2750 = vmatpush1.msra.mxu0 0.0
        %2751 = vmatprep.subr.mxu0 0.0
        %2752 = vmatpush1.msra.mxu0 0.0
        %2753 = vmatprep.subr.mxu0 0.0
        %2754 = vmatpush1.msra.mxu0 0.0
        %2755 = vmatprep.subr.mxu0 0.0
        %2756 = vmatpush1.msra.mxu0 0.0
        %2757 = vmatprep.mubr.f32.mxu0 0.0
        %2758 = vmatmul.mubr.f32.gmra.mrb[0].mxu0 %v2620
        %v2759 = vpop.f32.mrb[0].mxu0
        %v2760 = vadd.f32 0.0, %v2759
        %v2761 = vpop.f32.mrb[0].mxu0
        %v2762 = vadd.f32 0.0, %v2761
        %2763 = vdwg.mxu0
        %v2764 = vadd.f32 %v2552, %v2689
        %v2765 = vadd.f32 %v2553, %v2691
        %v2766 = vadd.f32 %v2554, %v2760
        %v2767 = vadd.f32 %v2555, %v2762
        %v2768 = vxor.u32 %v2764, 2147483648
        %v2769 = vmul.f32 %v2768, 1.442695
        %v2770 = vpow.pop %v2769
        %v2771 = vadd.f32 %v2770, 1.0
        %v2772 = vrcp.pop %v2771
        %v2773 = vmul.f32 1.0, %v2772
        %v2774 = vxor.u32 %v2765, 2147483648
        %v2775 = vmul.f32 %v2774, 1.442695
        %v2776 = vpow.pop %v2775
        %v2777 = vadd.f32 %v2776, 1.0
        %v2778 = vrcp.pop %v2777
        %v2779 = vmul.f32 1.0, %v2778
        %v2780 = vtanh.pop %v2766
        %v2781 = vxor.u32 %v2767, 2147483648
        %v2782 = vmul.f32 %v2781, 1.442695
        %v2783 = vpow.pop %v2782
        %v2784 = vadd.f32 %v2783, 1.0
        %v2785 = vrcp.pop %v2784
        %v2786 = vmul.f32 1.0, %v2785
        %v2787 = vmul.f32 %v2779, %v2621
        %v2788 = vmul.f32 %v2773, %v2780
        %v2789 = vadd.f32 %v2787, %v2788
        %v2790 = vtanh.pop %v2789
        %v2791 = vmul.f32 %v2786, %v2790
        %2792 = vst [vmem:[#allocation3] sm:$0xff] %v2791
        %2793 = vst [vmem:[#allocation4] sm:$0xff] %v2789
        %v2794 = vld [vmem:[%s324] sm:$0xff]
        %v2795 = vadd.f32 %v2794, %v2791
        %2796 = vst [vmem:[%s324] sm:$0xff] %v2795
        %p2797 = scmp.lt.s32.totalorder %s22, 1
        %s2798 = scalar_select %p2797, %s22, 1
        %s2799 = smul.addr %s2798, 8
        %s2800 = scalar_lea.vmem %s4, %s2799
        // Predicated region
        $region45: #{forward.4} parent=35 // pred_check
          %p2801 = pneg %p162
        $region46: #{forward.4} parent=35 // pred_check_branch
          %2803 = sbr.rel (%p2801) target = $region48
        $region47: #{forward.4} parent=35 // pred_region
          _
        $region48: #{forward.4} parent=35 // pred_fallthru
          _
      $region36: #{forward.4} parent=5 // pred_fallthru
        _
      %p2804 = scmp.le.s32.totalorder 2, %s13
      // Predicated region
      $region49: #{forward.4} parent=5 // pred_check
        %p2805 = pneg %p2804
      $region50: #{forward.4} parent=5 // pred_check_branch
        %2807 = sbr.rel (%p2805) target = $region52
      $region51: #{forward.4} parent=5 // pred_region
        %s2808 = ssub.s32 %s13, 2
        // Predicated region
        $region53: #{forward.4} parent=51 // pred_check
          %p2809 = pneg %p168
        $region54: #{forward.4} parent=51 // pred_check_branch
          %2811 = sbr.rel (%p2809) target = $region56
        $region55: #{forward.4} parent=51 // pred_region
          %p2812 = scmp.lt.s32.totalorder %s24, 1
          %s2813 = scalar_select %p2812, %s24, 1
          %s2814 = smul.addr %s2813, 8
          %s2815 = scalar_lea.vmem %s4, %s2814
        $region56: #{forward.4} parent=51 // pred_fallthru
          _
      $region52: #{forward.4} parent=5 // pred_fallthru
        _
    $region6: #{forward.4} parent=1 // loop_footer
      %s17 = sadd.s32 1, %s13
    $region7: #{forward.4} parent=1 // loop_footer_branch
      %12 = sbr.rel target = $region3
    $region8: #{forward.4} parent=1 // loop_exit
      _
    %2816 = vsyncpa [#allocation6], 1
    %s2817 = scalar_lea.sflag [#allocation6], 1
    %2818 = vsyncpa %s2817, 1

</llo_original>
